<compile_context>
chip_gen: v5e
topology: v5e:2x2
jax: 0.10.0
libtpu: 0.0.40
codegen_flags: <defaults>
</compile_context>

<pallas_src>
import functools

import jax
import jax.numpy as jnp
from jax.experimental import pallas as pl
from jax.experimental.pallas import tpu as pltpu

_EPS = 1e-5   # torch.nn.BatchNorm2d default eps
_LANE = 128   # pad channel dims to a multiple of the TPU lane width


# ------------------------------ kernel ---------------------------------------


def _bn_train(z, g, b, rows, relu):
    """Training-mode BatchNorm over the rows of a (rows, C) tensor.

    One-pass statistics (sum + sum-of-squares, f32 accumulation), biased
    variance, then affine -- matches a freshly constructed nn.BatchNorm2d.
    """
    inv_n = 1.0 / rows
    s1 = jnp.sum(z, axis=0, keepdims=True)
    s2 = jnp.sum(z * z, axis=0, keepdims=True)
    mu = s1 * inv_n
    var = jnp.maximum(s2 * inv_n - mu * mu, 0.0)       # clamp tiny negatives
    y = (z - mu) * jax.lax.rsqrt(var + _EPS) * g + b
    return jnp.maximum(y, 0.0) if relu else y


def _bottleneck_kernel(*refs, n, h, w, stride, has_projection, mm_dtype):
    if has_projection:
        (x_ref, w1_ref, g1_ref, b1_ref,
         w2_ref, g2_ref, b2_ref,
         w3_ref, g3_ref, b3_ref,
         ws_ref, gs_ref, bs_ref,
         o_ref, y1p_ref, acc_ref) = refs
    else:
        (x_ref, w1_ref, g1_ref, b1_ref,
         w2_ref, g2_ref, b2_ref,
         w3_ref, g3_ref, b3_ref,
         o_ref, y1p_ref, acc_ref) = refs

    cin_p = x_ref.shape[-1]
    cmid_p = w1_ref.shape[-1]
    ho = (h + 2 - 3) // stride + 1
    wo = (w + 2 - 3) // stride + 1
    rows1 = n * h * w
    rows2 = n * ho * wo

    x4 = x_ref[...]                                    # (n, h, w, cin_p) f32
    x2d = x4.reshape(rows1, cin_p)

    # ---- stage 1: 1x1 conv + BN + ReLU (always stride 1) ---------------------
    z1 = jnp.dot(x2d.astype(mm_dtype), w1_ref[...],
                 preferred_element_type=jnp.float32)
    y1 = _bn_train(z1, g1_ref[...], b1_ref[...], rows1, relu=True)

    # Stage-1 output goes into a zero-padded NHWC VMEM scratch (halo = 1) so the
    # 3x3 conv can be expressed as 9 shifted-window matmuls (no HBM im2col).
    y1p_ref[...] = jnp.zeros_like(y1p_ref)
    y1p_ref[:, 1:h + 1, 1:w + 1, :] = y1.reshape(n, h, w, cmid_p)

    # ---- stage 2: 3x3 conv (stride, pad=1) as 9 accumulated matmuls ----------
    acc_ref[...] = jnp.zeros_like(acc_ref)
    for ky in range(3):
        for kx in range(3):
            if stride == 1:
                win = y1p_ref[:, ky:ky + ho, kx:kx + wo, :]
            else:
                win = jax.lax.slice(
                    y1p_ref[...],
                    (0, ky, kx, 0),
                    (n, ky + (ho - 1) * stride + 1,
                     kx + (wo - 1) * stride + 1, cmid_p),
                    (1, stride, stride, 1))
            acc_ref[...] += jnp.dot(
                win.reshape(rows2, cmid_p).astype(mm_dtype),
                w2_ref[ky, kx],
                preferred_element_type=jnp.float32)
    y2 = _bn_train(acc_ref[...], g2_ref[...], b2_ref[...], rows2, relu=True)

    # ---- stage 3: 1x1 conv + BN ----------------------------------------------
    z3 = jnp.dot(y2.astype(mm_dtype), w3_ref[...],
                 preferred_element_type=jnp.float32)
    r = _bn_train(z3, g3_ref[...], b3_ref[...], rows2, relu=False)

    # ---- shortcut -------------------------------------------------------------
    if has_projection:
        if stride == 1:
            xs = x2d
        else:
            xs = jax.lax.slice(
                x4, (0, 0, 0, 0),
                (n, (ho - 1) * stride + 1, (wo - 1) * stride + 1, cin_p),
                (1, stride, stride, 1)).reshape(rows2, cin_p)
        zs = jnp.dot(xs.astype(mm_dtype), ws_ref[...],
                     preferred_element_type=jnp.float32)
        s = _bn_train(zs, gs_ref[...], bs_ref[...], rows2, relu=False)
    else:
        s = x2d        # identity shortcut (stride == 1 and cin == cout)

    o_ref[...] = jnp.maximum(r + s, 0.0)


# --------------------------- pallas_call wrapper ------------------------------


def _ceil_to(v, m):
    return (v + m - 1) // m * m


def _pad_mat(a, rows, cols, dtype):
    a = jnp.asarray(a, jnp.float32)
    return jnp.pad(a, ((0, rows - a.shape[0]), (0, cols - a.shape[1]))).astype(dtype)


def _pad_vec(v, cols, fill):
    v = jnp.asarray(v, jnp.float32)
    return jnp.pad(v, (0, cols - v.shape[0]), constant_values=fill).reshape(1, cols)


def bottleneck_forward(x_nchw, params, stride=1, matmul_dtype=jnp.float32):
    """BottleNeck forward (training-mode BN). x_nchw: (N, Cin, H, W) -> NCHW."""
    x = jnp.transpose(x_nchw, (0, 2, 3, 1)).astype(jnp.float32)      # NHWC
    n, h, w, cin = x.shape
    cmid = params["w1"].shape[1]
    cout = params["w3"].shape[1]
    has_projection = "ws" in params
    if not has_projection:
        assert stride == 1 and cin == cout, "identity shortcut needs stride=1, cin==cout"

    ho = (h + 2 - 3) // stride + 1
    wo = (w + 2 - 3) // stride + 1

    cin_p = _ceil_to(cin, _LANE)
    cmid_p = _ceil_to(cmid, _LANE)
    cout_p = _ceil_to(cout, _LANE)

    # Lane-dense, zero-padded operands. Padded channels are provably zero
    # through every conv / BN / ReLU stage and get sliced off at the end.
    xp = jnp.pad(x, ((0, 0), (0, 0), (0, 0), (0, cin_p - cin)))
    w2p = jnp.pad(jnp.asarray(params["w2"], jnp.float32),
                  ((0, 0), (0, 0), (0, cmid_p - cmid), (0, cmid_p - cmid))
                  ).astype(matmul_dtype)

    args = [
        xp,
        _pad_mat(params["w1"], cin_p, cmid_p, matmul_dtype),
        _pad_vec(params["g1"], cmid_p, 1.0), _pad_vec(params["b1"], cmid_p, 0.0),
        w2p,
        _pad_vec(params["g2"], cmid_p, 1.0), _pad_vec(params["b2"], cmid_p, 0.0),
        _pad_mat(params["w3"], cmid_p, cout_p, matmul_dtype),
        _pad_vec(params["g3"], cout_p, 1.0), _pad_vec(params["b3"], cout_p, 0.0),
    ]
    if has_projection:
        args += [
            _pad_mat(params["ws"], cin_p, cout_p, matmul_dtype),
            _pad_vec(params["gs"], cout_p, 1.0), _pad_vec(params["bs"], cout_p, 0.0),
        ]
    # (no dummy shortcut operands when the shortcut is the identity)

    kernel = functools.partial(
        _bottleneck_kernel, n=n, h=h, w=w, stride=stride,
        has_projection=has_projection, mm_dtype=matmul_dtype)

    out2d = pl.pallas_call(
        kernel,
        grid=(1,),
        in_specs=[pl.BlockSpec(a.shape, lambda i, nd=a.ndim: (0,) * nd)
                  for a in args],
        out_specs=pl.BlockSpec((n * ho * wo, cout_p), lambda i: (0, 0)),
        out_shape=jax.ShapeDtypeStruct((n * ho * wo, cout_p), jnp.float32),
        scratch_shapes=[
            pltpu.VMEM((n, h + 2, w + 2, cmid_p), jnp.float32),   # padded stage-1 act
            pltpu.VMEM((n * ho * wo, cmid_p), jnp.float32),       # 3x3 accumulator
        ],
        compiler_params=pltpu.CompilerParams(
            dimension_semantics=("arbitrary",),
            vmem_limit_bytes=48 * 1024 * 1024),
    )(*args)

    out = out2d[:, :cout].reshape(n, ho, wo, cout)
    return jnp.transpose(out, (0, 3, 1, 2))                          # NCHW


# ----------------------------- pure-JAX reference ----------------------------


def bottleneck_reference(x_nchw, params, stride=1):
    x = jnp.transpose(x_nchw, (0, 2, 3, 1)).astype(jnp.float32)

    def bn(z, g, b):
        mu = jnp.mean(z, axis=(0, 1, 2), keepdims=True)
        var = jnp.mean(jnp.square(z - mu), axis=(0, 1, 2), keepdims=True)
        return (z - mu) * jax.lax.rsqrt(var + _EPS) * g + b

    def conv(z, wgt, s, pad):
        return jax.lax.conv_general_dilated(
            z, wgt, (s, s), pad, dimension_numbers=("NHWC", "HWIO", "NHWC"))

    cin = x.shape[-1]
    cmid = params["w1"].shape[1]
    cout = params["w3"].shape[1]

    y = conv(x, params["w1"].reshape(1, 1, cin, cmid), 1, "VALID")
    y = jnp.maximum(bn(y, params["g1"], params["b1"]), 0.0)
    y = conv(y, params["w2"], stride, [(1, 1), (1, 1)])
    y = jnp.maximum(bn(y, params["g2"], params["b2"]), 0.0)
    y = conv(y, params["w3"].reshape(1, 1, cmid, cout), 1, "VALID")
    y = bn(y, params["g3"], params["b3"])
    if "ws" in params:
        s = conv(x, params["ws"].reshape(1, 1, cin, cout), stride, "VALID")
        s = bn(s, params["gs"], params["bs"])
    else:
        s = x
    return jnp.transpose(jnp.maximum(y + s, 0.0), (0, 3, 1, 2))


# ----------------------------------- main ------------------------------------


if __name__ == "__main__":
    key = jax.random.PRNGKey(0)

    def make_case(k, n, cin, hw, cmid, projection):
        cout = cmid * 4
        ks = jax.random.split(k, 5)
        x = jax.random.normal(ks[0], (n, cin, hw, hw), jnp.float32)
        params = {
            "w1": 0.1 * jax.random.normal(ks[1], (cin, cmid), jnp.float32),
            "g1": jnp.ones((cmid,), jnp.float32), "b1": jnp.zeros((cmid,), jnp.float32),
            "w2": 0.1 * jax.random.normal(ks[2], (3, 3, cmid, cmid), jnp.float32),
            "g2": jnp.ones((cmid,), jnp.float32), "b2": jnp.zeros((cmid,), jnp.float32),
            "w3": 0.1 * jax.random.normal(ks[3], (cmid, cout), jnp.float32),
            "g3": jnp.ones((cout,), jnp.float32), "b3": jnp.zeros((cout,), jnp.float32),
        }
        if projection:
            params["ws"] = 0.1 * jax.random.normal(ks[4], (cin, cout), jnp.float32)
            params["gs"] = jnp.ones((cout,), jnp.float32)
            params["bs"] = jnp.zeros((cout,), jnp.float32)
        return x, params

    cases = [
        # BottleNeck(4, 4, stride=1): projection shortcut (4 != 4*4).
        ("projection", make_case(jax.random.fold_in(key, 0), 2, 4, 16, 4, True)),
        # BottleNeck(16, 4, stride=1): identity shortcut (16 == 4*4).
        ("identity", make_case(jax.random.fold_in(key, 1), 2, 16, 16, 4, False)),
    ]

    for name, (x, params) in cases:
        ref = bottleneck_reference(x, params, stride=1)

        out = jax.block_until_ready(bottleneck_forward(x, params, stride=1))
        assert out.shape == ref.shape, (name, out.shape, ref.shape)
        err = float(jnp.max(jnp.abs(out - ref)))
        assert err < 1e-3, (name, "f32", err)

        # bf16 MXU operands, f32 accumulation + f32 BN math (perf path).
        out_bf = jax.block_until_ready(
            bottleneck_forward(x, params, stride=1, matmul_dtype=jnp.bfloat16))
        err_bf = float(jnp.max(jnp.abs(out_bf - ref)))
        assert err_bf < 0.25, (name, "bf16", err_bf)

    print("KERNEL_OK")
</pallas_src>

<mosaic_0001>
module attributes {stable_mosaic.version = 11 : i64} {
  func.func @_bottleneck_kernel(%arg0: i32, %arg1: memref<2x16x16x128xf32, #tpu.memory_space<vmem>>, %arg2: memref<128x128xf32, #tpu.memory_space<vmem>>, %arg3: memref<1x128xf32, #tpu.memory_space<vmem>>, %arg4: memref<1x128xf32, #tpu.memory_space<vmem>>, %arg5: memref<3x3x128x128xf32, #tpu.memory_space<vmem>>, %arg6: memref<1x128xf32, #tpu.memory_space<vmem>>, %arg7: memref<1x128xf32, #tpu.memory_space<vmem>>, %arg8: memref<128x128xf32, #tpu.memory_space<vmem>>, %arg9: memref<1x128xf32, #tpu.memory_space<vmem>>, %arg10: memref<1x128xf32, #tpu.memory_space<vmem>>, %arg11: memref<128x128xf32, #tpu.memory_space<vmem>>, %arg12: memref<1x128xf32, #tpu.memory_space<vmem>>, %arg13: memref<1x128xf32, #tpu.memory_space<vmem>>, %arg14: memref<512x128xf32, #tpu.memory_space<vmem>>, %arg15: memref<2x18x18x128xf32, #tpu.memory_space<vmem>>, %arg16: memref<512x128xf32, #tpu.memory_space<vmem>>) attributes {dimension_semantics = [#tpu.dimension_semantics<arbitrary>], iteration_bounds = array<i64: 1>, scalar_prefetch = 0 : i64, scratch_operands = 2 : i64, tpu.core_type = #tpu.core_type<tc>, window_params = [{pipeline_mode = #tpu.pipeline_mode<synchronous>, transform_indices = @transform_0, window_bounds = array<i64: 2, 16, 16, 128>}, {pipeline_mode = #tpu.pipeline_mode<synchronous>, transform_indices = @transform_1, window_bounds = array<i64: 128, 128>}, {pipeline_mode = #tpu.pipeline_mode<synchronous>, transform_indices = @transform_2, window_bounds = array<i64: 1, 128>}, {pipeline_mode = #tpu.pipeline_mode<synchronous>, transform_indices = @transform_3, window_bounds = array<i64: 1, 128>}, {pipeline_mode = #tpu.pipeline_mode<synchronous>, transform_indices = @transform_4, window_bounds = array<i64: 3, 3, 128, 128>}, {pipeline_mode = #tpu.pipeline_mode<synchronous>, transform_indices = @transform_5, window_bounds = array<i64: 1, 128>}, {pipeline_mode = #tpu.pipeline_mode<synchronous>, transform_indices = @transform_6, window_bounds = array<i64: 1, 128>}, {pipeline_mode = #tpu.pipeline_mode<synchronous>, transform_indices = @transform_7, window_bounds = array<i64: 128, 128>}, {pipeline_mode = #tpu.pipeline_mode<synchronous>, transform_indices = @transform_8, window_bounds = array<i64: 1, 128>}, {pipeline_mode = #tpu.pipeline_mode<synchronous>, transform_indices = @transform_9, window_bounds = array<i64: 1, 128>}, {pipeline_mode = #tpu.pipeline_mode<synchronous>, transform_indices = @transform_10, window_bounds = array<i64: 128, 128>}, {pipeline_mode = #tpu.pipeline_mode<synchronous>, transform_indices = @transform_11, window_bounds = array<i64: 1, 128>}, {pipeline_mode = #tpu.pipeline_mode<synchronous>, transform_indices = @transform_12, window_bounds = array<i64: 1, 128>}, {pipeline_mode = #tpu.pipeline_mode<synchronous>, transform_indices = @transform_13, window_bounds = array<i64: 512, 128>}]} {
    %c0 = arith.constant 0 : index
    %c0_0 = arith.constant 0 : index
    %c0_1 = arith.constant 0 : index
    %c0_2 = arith.constant 0 : index
    %0 = vector.load %arg1[%c0, %c0_0, %c0_1, %c0_2] : memref<2x16x16x128xf32, #tpu.memory_space<vmem>>, vector<2x16x16x128xf32>
    %1 = vector.shape_cast %0 : vector<2x16x16x128xf32> to vector<512x128xf32>
    %c0_3 = arith.constant 0 : index
    %c0_4 = arith.constant 0 : index
    %2 = vector.load %arg2[%c0_3, %c0_4] : memref<128x128xf32, #tpu.memory_space<vmem>>, vector<128x128xf32>
    %cst = arith.constant dense<0.000000e+00> : vector<512x128xf32>
    %3 = tpu.matmul %1, %2, %cst {dimension_numbers = #tpu.dot_dimension_numbers<[1], [0], [0], [1], [0, 0, 1, 1], [], []>} : vector<512x128xf32>, vector<128x128xf32>, vector<512x128xf32> -> vector<512x128xf32>
    %c0_5 = arith.constant 0 : index
    %c0_6 = arith.constant 0 : index
    %4 = vector.load %arg3[%c0_5, %c0_6] : memref<1x128xf32, #tpu.memory_space<vmem>>, vector<1x128xf32>
    %c0_7 = arith.constant 0 : index
    %c0_8 = arith.constant 0 : index
    %5 = vector.load %arg4[%c0_7, %c0_8] : memref<1x128xf32, #tpu.memory_space<vmem>>, vector<1x128xf32>
    %cst_9 = arith.constant dense<0.000000e+00> : vector<128xf32>
    %6 = vector.multi_reduction <add>, %3, %cst_9 [0] : vector<512x128xf32> to vector<128xf32>
    %7 = vector.shape_cast %6 : vector<128xf32> to vector<1x128xf32>
    %8 = arith.mulf %3, %3 : vector<512x128xf32>
    %cst_10 = arith.constant dense<0.000000e+00> : vector<128xf32>
    %9 = vector.multi_reduction <add>, %8, %cst_10 [0] : vector<512x128xf32> to vector<128xf32>
    %10 = vector.shape_cast %9 : vector<128xf32> to vector<1x128xf32>
    %cst_11 = arith.constant 0.001953125 : f32
    %11 = vector.broadcast %cst_11 : f32 to vector<1x128xf32>
    %12 = arith.mulf %7, %11 : vector<1x128xf32>
    %cst_12 = arith.constant 0.001953125 : f32
    %13 = vector.broadcast %cst_12 : f32 to vector<1x128xf32>
    %14 = arith.mulf %10, %13 : vector<1x128xf32>
    %15 = arith.mulf %12, %12 : vector<1x128xf32>
    %16 = arith.subf %14, %15 : vector<1x128xf32>
    %cst_13 = arith.constant 0.000000e+00 : f32
    %17 = vector.broadcast %cst_13 : f32 to vector<1x128xf32>
    %18 = arith.maximumf %16, %17 : vector<1x128xf32>
    %19 = vector.broadcast %12 : vector<1x128xf32> to vector<512x128xf32>
    %20 = arith.subf %3, %19 : vector<512x128xf32>
    %cst_14 = arith.constant 9.99999974E-6 : f32
    %21 = vector.broadcast %cst_14 : f32 to vector<1x128xf32>
    %22 = arith.addf %18, %21 : vector<1x128xf32>
    %23 = math.rsqrt %22 : vector<1x128xf32>
    %24 = vector.broadcast %23 : vector<1x128xf32> to vector<512x128xf32>
    %25 = arith.mulf %20, %24 : vector<512x128xf32>
    %26 = vector.broadcast %4 : vector<1x128xf32> to vector<512x128xf32>
    %27 = arith.mulf %25, %26 : vector<512x128xf32>
    %28 = vector.broadcast %5 : vector<1x128xf32> to vector<512x128xf32>
    %29 = arith.addf %27, %28 : vector<512x128xf32>
    %cst_15 = arith.constant 0.000000e+00 : f32
    %30 = vector.broadcast %cst_15 : f32 to vector<512x128xf32>
    %31 = arith.maximumf %29, %30 : vector<512x128xf32>
    %cst_16 = arith.constant 0.000000e+00 : f32
    %32 = vector.broadcast %cst_16 : f32 to vector<2x18x18x128xf32>
    %c0_17 = arith.constant 0 : index
    %c0_18 = arith.constant 0 : index
    %c0_19 = arith.constant 0 : index
    %c0_20 = arith.constant 0 : index
    %33 = vector.load %arg15[%c0_17, %c0_18, %c0_19, %c0_20] : memref<2x18x18x128xf32, #tpu.memory_space<vmem>>, vector<2x18x18x128xf32>
    tpu.vector_store %arg15[%c0_17, %c0_18, %c0_19, %c0_20], %32 {strides = array<i32>} : memref<2x18x18x128xf32, #tpu.memory_space<vmem>>, vector<2x18x18x128xf32>,
    %34 = vector.shape_cast %31 : vector<512x128xf32> to vector<2x16x16x128xf32>
    %c0_21 = arith.constant 0 : index
    %c1 = arith.constant 1 : index
    %c1_22 = arith.constant 1 : index
    %c0_23 = arith.constant 0 : index
    %35 = vector.load %arg15[%c0_21, %c1, %c1_22, %c0_23] : memref<2x18x18x128xf32, #tpu.memory_space<vmem>>, vector<2x16x16x128xf32>
    tpu.vector_store %arg15[%c0_21, %c1, %c1_22, %c0_23], %34 {strides = array<i32>} : memref<2x18x18x128xf32, #tpu.memory_space<vmem>>, vector<2x16x16x128xf32>,
    %cst_24 = arith.constant 0.000000e+00 : f32
    %36 = vector.broadcast %cst_24 : f32 to vector<512x128xf32>
    %c0_25 = arith.constant 0 : index
    %c0_26 = arith.constant 0 : index
    %37 = vector.load %arg16[%c0_25, %c0_26] : memref<512x128xf32, #tpu.memory_space<vmem>>, vector<512x128xf32>
    tpu.vector_store %arg16[%c0_25, %c0_26], %36 {strides = array<i32>} : memref<512x128xf32, #tpu.memory_space<vmem>>, vector<512x128xf32>,
    %c0_27 = arith.constant 0 : index
    %c0_28 = arith.constant 0 : index
    %c0_29 = arith.constant 0 : index
    %c0_30 = arith.constant 0 : index
    %38 = vector.load %arg15[%c0_27, %c0_28, %c0_29, %c0_30] : memref<2x18x18x128xf32, #tpu.memory_space<vmem>>, vector<2x16x16x128xf32>
    %c0_31 = arith.constant 0 : index
    %c0_32 = arith.constant 0 : index
    %39 = vector.load %arg16[%c0_31, %c0_32] : memref<512x128xf32, #tpu.memory_space<vmem>>, vector<512x128xf32>
    %40 = vector.shape_cast %38 : vector<2x16x16x128xf32> to vector<512x128xf32>
    %c0_33 = arith.constant 0 : index
    %c0_34 = arith.constant 0 : index
    %c0_35 = arith.constant 0 : index
    %c0_36 = arith.constant 0 : index
    %41 = vector.load %arg5[%c0_33, %c0_34, %c0_35, %c0_36] : memref<3x3x128x128xf32, #tpu.memory_space<vmem>>, vector<1x1x128x128xf32>
    %42 = vector.shape_cast %41 : vector<1x1x128x128xf32> to vector<128x128xf32>
    %cst_37 = arith.constant dense<0.000000e+00> : vector<512x128xf32>
    %43 = tpu.matmul %40, %42, %cst_37 {dimension_numbers = #tpu.dot_dimension_numbers<[1], [0], [0], [1], [0, 0, 1, 1], [], []>} : vector<512x128xf32>, vector<128x128xf32>, vector<512x128xf32> -> vector<512x128xf32>
    %44 = arith.addf %39, %43 : vector<512x128xf32>
    %c0_38 = arith.constant 0 : index
    %c0_39 = arith.constant 0 : index
    %45 = vector.load %arg16[%c0_38, %c0_39] : memref<512x128xf32, #tpu.memory_space<vmem>>, vector<512x128xf32>
    tpu.vector_store %arg16[%c0_38, %c0_39], %44 {strides = array<i32>} : memref<512x128xf32, #tpu.memory_space<vmem>>, vector<512x128xf32>,
    %c0_40 = arith.constant 0 : index
    %c0_41 = arith.constant 0 : index
    %c1_42 = arith.constant 1 : index
    %c0_43 = arith.constant 0 : index
    %46 = vector.load %arg15[%c0_40, %c0_41, %c1_42, %c0_43] : memref<2x18x18x128xf32, #tpu.memory_space<vmem>>, vector<2x16x16x128xf32>
    %c0_44 = arith.constant 0 : index
    %c0_45 = arith.constant 0 : index
    %47 = vector.load %arg16[%c0_44, %c0_45] : memref<512x128xf32, #tpu.memory_space<vmem>>, vector<512x128xf32>
    %48 = vector.shape_cast %46 : vector<2x16x16x128xf32> to vector<512x128xf32>
    %c0_46 = arith.constant 0 : index
    %c1_47 = arith.constant 1 : index
    %c0_48 = arith.constant 0 : index
    %c0_49 = arith.constant 0 : index
    %49 = vector.load %arg5[%c0_46, %c1_47, %c0_48, %c0_49] : memref<3x3x128x128xf32, #tpu.memory_space<vmem>>, vector<1x1x128x128xf32>
    %50 = vector.shape_cast %49 : vector<1x1x128x128xf32> to vector<128x128xf32>
    %cst_50 = arith.constant dense<0.000000e+00> : vector<512x128xf32>
    %51 = tpu.matmul %48, %50, %cst_50 {dimension_numbers = #tpu.dot_dimension_numbers<[1], [0], [0], [1], [0, 0, 1, 1], [], []>} : vector<512x128xf32>, vector<128x128xf32>, vector<512x128xf32> -> vector<512x128xf32>
    %52 = arith.addf %47, %51 : vector<512x128xf32>
    %c0_51 = arith.constant 0 : index
    %c0_52 = arith.constant 0 : index
    %53 = vector.load %arg16[%c0_51, %c0_52] : memref<512x128xf32, #tpu.memory_space<vmem>>, vector<512x128xf32>
    tpu.vector_store %arg16[%c0_51, %c0_52], %52 {strides = array<i32>} : memref<512x128xf32, #tpu.memory_space<vmem>>, vector<512x128xf32>,
    %c0_53 = arith.constant 0 : index
    %c0_54 = arith.constant 0 : index
    %c2 = arith.constant 2 : index
    %c0_55 = arith.constant 0 : index
    %54 = vector.load %arg15[%c0_53, %c0_54, %c2, %c0_55] : memref<2x18x18x128xf32, #tpu.memory_space<vmem>>, vector<2x16x16x128xf32>
    %c0_56 = arith.constant 0 : index
    %c0_57 = arith.constant 0 : index
    %55 = vector.load %arg16[%c0_56, %c0_57] : memref<512x128xf32, #tpu.memory_space<vmem>>, vector<512x128xf32>
    %56 = vector.shape_cast %54 : vector<2x16x16x128xf32> to vector<512x128xf32>
    %c0_58 = arith.constant 0 : index
    %c2_59 = arith.constant 2 : index
    %c0_60 = arith.constant 0 : index
    %c0_61 = arith.constant 0 : index
    %57 = vector.load %arg5[%c0_58, %c2_59, %c0_60, %c0_61] : memref<3x3x128x128xf32, #tpu.memory_space<vmem>>, vector<1x1x128x128xf32>
    %58 = vector.shape_cast %57 : vector<1x1x128x128xf32> to vector<128x128xf32>
    %cst_62 = arith.constant dense<0.000000e+00> : vector<512x128xf32>
    %59 = tpu.matmul %56, %58, %cst_62 {dimension_numbers = #tpu.dot_dimension_numbers<[1], [0], [0], [1], [0, 0, 1, 1], [], []>} : vector<512x128xf32>, vector<128x128xf32>, vector<512x128xf32> -> vector<512x128xf32>
    %60 = arith.addf %55, %59 : vector<512x128xf32>
    %c0_63 = arith.constant 0 : index
    %c0_64 = arith.constant 0 : index
    %61 = vector.load %arg16[%c0_63, %c0_64] : memref<512x128xf32, #tpu.memory_space<vmem>>, vector<512x128xf32>
    tpu.vector_store %arg16[%c0_63, %c0_64], %60 {strides = array<i32>} : memref<512x128xf32, #tpu.memory_space<vmem>>, vector<512x128xf32>,
    %c0_65 = arith.constant 0 : index
    %c1_66 = arith.constant 1 : index
    %c0_67 = arith.constant 0 : index
    %c0_68 = arith.constant 0 : index
    %62 = vector.load %arg15[%c0_65, %c1_66, %c0_67, %c0_68] : memref<2x18x18x128xf32, #tpu.memory_space<vmem>>, vector<2x16x16x128xf32>
    %c0_69 = arith.constant 0 : index
    %c0_70 = arith.constant 0 : index
    %63 = vector.load %arg16[%c0_69, %c0_70] : memref<512x128xf32, #tpu.memory_space<vmem>>, vector<512x128xf32>
    %64 = vector.shape_cast %62 : vector<2x16x16x128xf32> to vector<512x128xf32>
    %c1_71 = arith.constant 1 : index
    %c0_72 = arith.constant 0 : index
    %c0_73 = arith.constant 0 : index
    %c0_74 = arith.constant 0 : index
    %65 = vector.load %arg5[%c1_71, %c0_72, %c0_73, %c0_74] : memref<3x3x128x128xf32, #tpu.memory_space<vmem>>, vector<1x1x128x128xf32>
    %66 = vector.shape_cast %65 : vector<1x1x128x128xf32> to vector<128x128xf32>
    %cst_75 = arith.constant dense<0.000000e+00> : vector<512x128xf32>
    %67 = tpu.matmul %64, %66, %cst_75 {dimension_numbers = #tpu.dot_dimension_numbers<[1], [0], [0], [1], [0, 0, 1, 1], [], []>} : vector<512x128xf32>, vector<128x128xf32>, vector<512x128xf32> -> vector<512x128xf32>
    %68 = arith.addf %63, %67 : vector<512x128xf32>
    %c0_76 = arith.constant 0 : index
    %c0_77 = arith.constant 0 : index
    %69 = vector.load %arg16[%c0_76, %c0_77] : memref<512x128xf32, #tpu.memory_space<vmem>>, vector<512x128xf32>
    tpu.vector_store %arg16[%c0_76, %c0_77], %68 {strides = array<i32>} : memref<512x128xf32, #tpu.memory_space<vmem>>, vector<512x128xf32>,
    %c0_78 = arith.constant 0 : index
    %c1_79 = arith.constant 1 : index
    %c1_80 = arith.constant 1 : index
    %c0_81 = arith.constant 0 : index
    %70 = vector.load %arg15[%c0_78, %c1_79, %c1_80, %c0_81] : memref<2x18x18x128xf32, #tpu.memory_space<vmem>>, vector<2x16x16x128xf32>
    %c0_82 = arith.constant 0 : index
    %c0_83 = arith.constant 0 : index
    %71 = vector.load %arg16[%c0_82, %c0_83] : memref<512x128xf32, #tpu.memory_space<vmem>>, vector<512x128xf32>
    %72 = vector.shape_cast %70 : vector<2x16x16x128xf32> to vector<512x128xf32>
    %c1_84 = arith.constant 1 : index
    %c1_85 = arith.constant 1 : index
    %c0_86 = arith.constant 0 : index
    %c0_87 = arith.constant 0 : index
    %73 = vector.load %arg5[%c1_84, %c1_85, %c0_86, %c0_87] : memref<3x3x128x128xf32, #tpu.memory_space<vmem>>, vector<1x1x128x128xf32>
    %74 = vector.shape_cast %73 : vector<1x1x128x128xf32> to vector<128x128xf32>
    %cst_88 = arith.constant dense<0.000000e+00> : vector<512x128xf32>
    %75 = tpu.matmul %72, %74, %cst_88 {dimension_numbers = #tpu.dot_dimension_numbers<[1], [0], [0], [1], [0, 0, 1, 1], [], []>} : vector<512x128xf32>, vector<128x128xf32>, vector<512x128xf32> -> vector<512x128xf32>
    %76 = arith.addf %71, %75 : vector<512x128xf32>
    %c0_89 = arith.constant 0 : index
    %c0_90 = arith.constant 0 : index
    %77 = vector.load %arg16[%c0_89, %c0_90] : memref<512x128xf32, #tpu.memory_space<vmem>>, vector<512x128xf32>
    tpu.vector_store %arg16[%c0_89, %c0_90], %76 {strides = array<i32>} : memref<512x128xf32, #tpu.memory_space<vmem>>, vector<512x128xf32>,
    %c0_91 = arith.constant 0 : index
    %c1_92 = arith.constant 1 : index
    %c2_93 = arith.constant 2 : index
    %c0_94 = arith.constant 0 : index
    %78 = vector.load %arg15[%c0_91, %c1_92, %c2_93, %c0_94] : memref<2x18x18x128xf32, #tpu.memory_space<vmem>>, vector<2x16x16x128xf32>
    %c0_95 = arith.constant 0 : index
    %c0_96 = arith.constant 0 : index
    %79 = vector.load %arg16[%c0_95, %c0_96] : memref<512x128xf32, #tpu.memory_space<vmem>>, vector<512x128xf32>
    %80 = vector.shape_cast %78 : vector<2x16x16x128xf32> to vector<512x128xf32>
    %c1_97 = arith.constant 1 : index
    %c2_98 = arith.constant 2 : index
    %c0_99 = arith.constant 0 : index
    %c0_100 = arith.constant 0 : index
    %81 = vector.load %arg5[%c1_97, %c2_98, %c0_99, %c0_100] : memref<3x3x128x128xf32, #tpu.memory_space<vmem>>, vector<1x1x128x128xf32>
    %82 = vector.shape_cast %81 : vector<1x1x128x128xf32> to vector<128x128xf32>
    %cst_101 = arith.constant dense<0.000000e+00> : vector<512x128xf32>
    %83 = tpu.matmul %80, %82, %cst_101 {dimension_numbers = #tpu.dot_dimension_numbers<[1], [0], [0], [1], [0, 0, 1, 1], [], []>} : vector<512x128xf32>, vector<128x128xf32>, vector<512x128xf32> -> vector<512x128xf32>
    %84 = arith.addf %79, %83 : vector<512x128xf32>
    %c0_102 = arith.constant 0 : index
    %c0_103 = arith.constant 0 : index
    %85 = vector.load %arg16[%c0_102, %c0_103] : memref<512x128xf32, #tpu.memory_space<vmem>>, vector<512x128xf32>
    tpu.vector_store %arg16[%c0_102, %c0_103], %84 {strides = array<i32>} : memref<512x128xf32, #tpu.memory_space<vmem>>, vector<512x128xf32>,
    %c0_104 = arith.constant 0 : index
    %c2_105 = arith.constant 2 : index
    %c0_106 = arith.constant 0 : index
    %c0_107 = arith.constant 0 : index
    %86 = vector.load %arg15[%c0_104, %c2_105, %c0_106, %c0_107] : memref<2x18x18x128xf32, #tpu.memory_space<vmem>>, vector<2x16x16x128xf32>
    %c0_108 = arith.constant 0 : index
    %c0_109 = arith.constant 0 : index
    %87 = vector.load %arg16[%c0_108, %c0_109] : memref<512x128xf32, #tpu.memory_space<vmem>>, vector<512x128xf32>
    %88 = vector.shape_cast %86 : vector<2x16x16x128xf32> to vector<512x128xf32>
    %c2_110 = arith.constant 2 : index
    %c0_111 = arith.constant 0 : index
    %c0_112 = arith.constant 0 : index
    %c0_113 = arith.constant 0 : index
    %89 = vector.load %arg5[%c2_110, %c0_111, %c0_112, %c0_113] : memref<3x3x128x128xf32, #tpu.memory_space<vmem>>, vector<1x1x128x128xf32>
    %90 = vector.shape_cast %89 : vector<1x1x128x128xf32> to vector<128x128xf32>
    %cst_114 = arith.constant dense<0.000000e+00> : vector<512x128xf32>
    %91 = tpu.matmul %88, %90, %cst_114 {dimension_numbers = #tpu.dot_dimension_numbers<[1], [0], [0], [1], [0, 0, 1, 1], [], []>} : vector<512x128xf32>, vector<128x128xf32>, vector<512x128xf32> -> vector<512x128xf32>
    %92 = arith.addf %87, %91 : vector<512x128xf32>
    %c0_115 = arith.constant 0 : index
    %c0_116 = arith.constant 0 : index
    %93 = vector.load %arg16[%c0_115, %c0_116] : memref<512x128xf32, #tpu.memory_space<vmem>>, vector<512x128xf32>
    tpu.vector_store %arg16[%c0_115, %c0_116], %92 {strides = array<i32>} : memref<512x128xf32, #tpu.memory_space<vmem>>, vector<512x128xf32>,
    %c0_117 = arith.constant 0 : index
    %c2_118 = arith.constant 2 : index
    %c1_119 = arith.constant 1 : index
    %c0_120 = arith.constant 0 : index
    %94 = vector.load %arg15[%c0_117, %c2_118, %c1_119, %c0_120] : memref<2x18x18x128xf32, #tpu.memory_space<vmem>>, vector<2x16x16x128xf32>
    %c0_121 = arith.constant 0 : index
    %c0_122 = arith.constant 0 : index
    %95 = vector.load %arg16[%c0_121, %c0_122] : memref<512x128xf32, #tpu.memory_space<vmem>>, vector<512x128xf32>
    %96 = vector.shape_cast %94 : vector<2x16x16x128xf32> to vector<512x128xf32>
    %c2_123 = arith.constant 2 : index
    %c1_124 = arith.constant 1 : index
    %c0_125 = arith.constant 0 : index
    %c0_126 = arith.constant 0 : index
    %97 = vector.load %arg5[%c2_123, %c1_124, %c0_125, %c0_126] : memref<3x3x128x128xf32, #tpu.memory_space<vmem>>, vector<1x1x128x128xf32>
    %98 = vector.shape_cast %97 : vector<1x1x128x128xf32> to vector<128x128xf32>
    %cst_127 = arith.constant dense<0.000000e+00> : vector<512x128xf32>
    %99 = tpu.matmul %96, %98, %cst_127 {dimension_numbers = #tpu.dot_dimension_numbers<[1], [0], [0], [1], [0, 0, 1, 1], [], []>} : vector<512x128xf32>, vector<128x128xf32>, vector<512x128xf32> -> vector<512x128xf32>
    %100 = arith.addf %95, %99 : vector<512x128xf32>
    %c0_128 = arith.constant 0 : index
    %c0_129 = arith.constant 0 : index
    %101 = vector.load %arg16[%c0_128, %c0_129] : memref<512x128xf32, #tpu.memory_space<vmem>>, vector<512x128xf32>
    tpu.vector_store %arg16[%c0_128, %c0_129], %100 {strides = array<i32>} : memref<512x128xf32, #tpu.memory_space<vmem>>, vector<512x128xf32>,
    %c0_130 = arith.constant 0 : index
    %c2_131 = arith.constant 2 : index
    %c2_132 = arith.constant 2 : index
    %c0_133 = arith.constant 0 : index
    %102 = vector.load %arg15[%c0_130, %c2_131, %c2_132, %c0_133] : memref<2x18x18x128xf32, #tpu.memory_space<vmem>>, vector<2x16x16x128xf32>
    %c0_134 = arith.constant 0 : index
    %c0_135 = arith.constant 0 : index
    %103 = vector.load %arg16[%c0_134, %c0_135] : memref<512x128xf32, #tpu.memory_space<vmem>>, vector<512x128xf32>
    %104 = vector.shape_cast %102 : vector<2x16x16x128xf32> to vector<512x128xf32>
    %c2_136 = arith.constant 2 : index
    %c2_137 = arith.constant 2 : index
    %c0_138 = arith.constant 0 : index
    %c0_139 = arith.constant 0 : index
    %105 = vector.load %arg5[%c2_136, %c2_137, %c0_138, %c0_139] : memref<3x3x128x128xf32, #tpu.memory_space<vmem>>, vector<1x1x128x128xf32>
    %106 = vector.shape_cast %105 : vector<1x1x128x128xf32> to vector<128x128xf32>
    %cst_140 = arith.constant dense<0.000000e+00> : vector<512x128xf32>
    %107 = tpu.matmul %104, %106, %cst_140 {dimension_numbers = #tpu.dot_dimension_numbers<[1], [0], [0], [1], [0, 0, 1, 1], [], []>} : vector<512x128xf32>, vector<128x128xf32>, vector<512x128xf32> -> vector<512x128xf32>
    %108 = arith.addf %103, %107 : vector<512x128xf32>
    %c0_141 = arith.constant 0 : index
    %c0_142 = arith.constant 0 : index
    %109 = vector.load %arg16[%c0_141, %c0_142] : memref<512x128xf32, #tpu.memory_space<vmem>>, vector<512x128xf32>
    tpu.vector_store %arg16[%c0_141, %c0_142], %108 {strides = array<i32>} : memref<512x128xf32, #tpu.memory_space<vmem>>, vector<512x128xf32>,
    %c0_143 = arith.constant 0 : index
    %c0_144 = arith.constant 0 : index
    %110 = vector.load %arg16[%c0_143, %c0_144] : memref<512x128xf32, #tpu.memory_space<vmem>>, vector<512x128xf32>
    %c0_145 = arith.constant 0 : index
    %c0_146 = arith.constant 0 : index
    %111 = vector.load %arg6[%c0_145, %c0_146] : memref<1x128xf32, #tpu.memory_space<vmem>>, vector<1x128xf32>
    %c0_147 = arith.constant 0 : index
    %c0_148 = arith.constant 0 : index
    %112 = vector.load %arg7[%c0_147, %c0_148] : memref<1x128xf32, #tpu.memory_space<vmem>>, vector<1x128xf32>
    %cst_149 = arith.constant dense<0.000000e+00> : vector<128xf32>
    %113 = vector.multi_reduction <add>, %110, %cst_149 [0] : vector<512x128xf32> to vector<128xf32>
    %114 = vector.shape_cast %113 : vector<128xf32> to vector<1x128xf32>
    %115 = arith.mulf %110, %110 : vector<512x128xf32>
    %cst_150 = arith.constant dense<0.000000e+00> : vector<128xf32>
    %116 = vector.multi_reduction <add>, %115, %cst_150 [0] : vector<512x128xf32> to vector<128xf32>
    %117 = vector.shape_cast %116 : vector<128xf32> to vector<1x128xf32>
    %cst_151 = arith.constant 0.001953125 : f32
    %118 = vector.broadcast %cst_151 : f32 to vector<1x128xf32>
    %119 = arith.mulf %114, %118 : vector<1x128xf32>
    %cst_152 = arith.constant 0.001953125 : f32
    %120 = vector.broadcast %cst_152 : f32 to vector<1x128xf32>
    %121 = arith.mulf %117, %120 : vector<1x128xf32>
    %122 = arith.mulf %119, %119 : vector<1x128xf32>
    %123 = arith.subf %121, %122 : vector<1x128xf32>
    %cst_153 = arith.constant 0.000000e+00 : f32
    %124 = vector.broadcast %cst_153 : f32 to vector<1x128xf32>
    %125 = arith.maximumf %123, %124 : vector<1x128xf32>
    %126 = vector.broadcast %119 : vector<1x128xf32> to vector<512x128xf32>
    %127 = arith.subf %110, %126 : vector<512x128xf32>
    %cst_154 = arith.constant 9.99999974E-6 : f32
    %128 = vector.broadcast %cst_154 : f32 to vector<1x128xf32>
    %129 = arith.addf %125, %128 : vector<1x128xf32>
    %130 = math.rsqrt %129 : vector<1x128xf32>
    %131 = vector.broadcast %130 : vector<1x128xf32> to vector<512x128xf32>
    %132 = arith.mulf %127, %131 : vector<512x128xf32>
    %133 = vector.broadcast %111 : vector<1x128xf32> to vector<512x128xf32>
    %134 = arith.mulf %132, %133 : vector<512x128xf32>
    %135 = vector.broadcast %112 : vector<1x128xf32> to vector<512x128xf32>
    %136 = arith.addf %134, %135 : vector<512x128xf32>
    %cst_155 = arith.constant 0.000000e+00 : f32
    %137 = vector.broadcast %cst_155 : f32 to vector<512x128xf32>
    %138 = arith.maximumf %136, %137 : vector<512x128xf32>
    %c0_156 = arith.constant 0 : index
    %c0_157 = arith.constant 0 : index
    %139 = vector.load %arg8[%c0_156, %c0_157] : memref<128x128xf32, #tpu.memory_space<vmem>>, vector<128x128xf32>
    %cst_158 = arith.constant dense<0.000000e+00> : vector<512x128xf32>
    %140 = tpu.matmul %138, %139, %cst_158 {dimension_numbers = #tpu.dot_dimension_numbers<[1], [0], [0], [1], [0, 0, 1, 1], [], []>} : vector<512x128xf32>, vector<128x128xf32>, vector<512x128xf32> -> vector<512x128xf32>
    %c0_159 = arith.constant 0 : index
    %c0_160 = arith.constant 0 : index
    %141 = vector.load %arg9[%c0_159, %c0_160] : memref<1x128xf32, #tpu.memory_space<vmem>>, vector<1x128xf32>
    %c0_161 = arith.constant 0 : index
    %c0_162 = arith.constant 0 : index
    %142 = vector.load %arg10[%c0_161, %c0_162] : memref<1x128xf32, #tpu.memory_space<vmem>>, vector<1x128xf32>
    %cst_163 = arith.constant dense<0.000000e+00> : vector<128xf32>
    %143 = vector.multi_reduction <add>, %140, %cst_163 [0] : vector<512x128xf32> to vector<128xf32>
    %144 = vector.shape_cast %143 : vector<128xf32> to vector<1x128xf32>
    %145 = arith.mulf %140, %140 : vector<512x128xf32>
    %cst_164 = arith.constant dense<0.000000e+00> : vector<128xf32>
    %146 = vector.multi_reduction <add>, %145, %cst_164 [0] : vector<512x128xf32> to vector<128xf32>
    %147 = vector.shape_cast %146 : vector<128xf32> to vector<1x128xf32>
    %cst_165 = arith.constant 0.001953125 : f32
    %148 = vector.broadcast %cst_165 : f32 to vector<1x128xf32>
    %149 = arith.mulf %144, %148 : vector<1x128xf32>
    %cst_166 = arith.constant 0.001953125 : f32
    %150 = vector.broadcast %cst_166 : f32 to vector<1x128xf32>
    %151 = arith.mulf %147, %150 : vector<1x128xf32>
    %152 = arith.mulf %149, %149 : vector<1x128xf32>
    %153 = arith.subf %151, %152 : vector<1x128xf32>
    %cst_167 = arith.constant 0.000000e+00 : f32
    %154 = vector.broadcast %cst_167 : f32 to vector<1x128xf32>
    %155 = arith.maximumf %153, %154 : vector<1x128xf32>
    %156 = vector.broadcast %149 : vector<1x128xf32> to vector<512x128xf32>
    %157 = arith.subf %140, %156 : vector<512x128xf32>
    %cst_168 = arith.constant 9.99999974E-6 : f32
    %158 = vector.broadcast %cst_168 : f32 to vector<1x128xf32>
    %159 = arith.addf %155, %158 : vector<1x128xf32>
    %160 = math.rsqrt %159 : vector<1x128xf32>
    %161 = vector.broadcast %160 : vector<1x128xf32> to vector<512x128xf32>
    %162 = arith.mulf %157, %161 : vector<512x128xf32>
    %163 = vector.broadcast %141 : vector<1x128xf32> to vector<512x128xf32>
    %164 = arith.mulf %162, %163 : vector<512x128xf32>
    %165 = vector.broadcast %142 : vector<1x128xf32> to vector<512x128xf32>
    %166 = arith.addf %164, %165 : vector<512x128xf32>
    %c0_169 = arith.constant 0 : index
    %c0_170 = arith.constant 0 : index
    %167 = vector.load %arg11[%c0_169, %c0_170] : memref<128x128xf32, #tpu.memory_space<vmem>>, vector<128x128xf32>
    %cst_171 = arith.constant dense<0.000000e+00> : vector<512x128xf32>
    %168 = tpu.matmul %1, %167, %cst_171 {dimension_numbers = #tpu.dot_dimension_numbers<[1], [0], [0], [1], [0, 0, 1, 1], [], []>} : vector<512x128xf32>, vector<128x128xf32>, vector<512x128xf32> -> vector<512x128xf32>
    %c0_172 = arith.constant 0 : index
    %c0_173 = arith.constant 0 : index
    %169 = vector.load %arg12[%c0_172, %c0_173] : memref<1x128xf32, #tpu.memory_space<vmem>>, vector<1x128xf32>
    %c0_174 = arith.constant 0 : index
    %c0_175 = arith.constant 0 : index
    %170 = vector.load %arg13[%c0_174, %c0_175] : memref<1x128xf32, #tpu.memory_space<vmem>>, vector<1x128xf32>
    %cst_176 = arith.constant dense<0.000000e+00> : vector<128xf32>
    %171 = vector.multi_reduction <add>, %168, %cst_176 [0] : vector<512x128xf32> to vector<128xf32>
    %172 = vector.shape_cast %171 : vector<128xf32> to vector<1x128xf32>
    %173 = arith.mulf %168, %168 : vector<512x128xf32>
    %cst_177 = arith.constant dense<0.000000e+00> : vector<128xf32>
    %174 = vector.multi_reduction <add>, %173, %cst_177 [0] : vector<512x128xf32> to vector<128xf32>
    %175 = vector.shape_cast %174 : vector<128xf32> to vector<1x128xf32>
    %cst_178 = arith.constant 0.001953125 : f32
    %176 = vector.broadcast %cst_178 : f32 to vector<1x128xf32>
    %177 = arith.mulf %172, %176 : vector<1x128xf32>
    %cst_179 = arith.constant 0.001953125 : f32
    %178 = vector.broadcast %cst_179 : f32 to vector<1x128xf32>
    %179 = arith.mulf %175, %178 : vector<1x128xf32>
    %180 = arith.mulf %177, %177 : vector<1x128xf32>
    %181 = arith.subf %179, %180 : vector<1x128xf32>
    %cst_180 = arith.constant 0.000000e+00 : f32
    %182 = vector.broadcast %cst_180 : f32 to vector<1x128xf32>
    %183 = arith.maximumf %181, %182 : vector<1x128xf32>
    %184 = vector.broadcast %177 : vector<1x128xf32> to vector<512x128xf32>
    %185 = arith.subf %168, %184 : vector<512x128xf32>
    %cst_181 = arith.constant 9.99999974E-6 : f32
    %186 = vector.broadcast %cst_181 : f32 to vector<1x128xf32>
    %187 = arith.addf %183, %186 : vector<1x128xf32>
    %188 = math.rsqrt %187 : vector<1x128xf32>
    %189 = vector.broadcast %188 : vector<1x128xf32> to vector<512x128xf32>
    %190 = arith.mulf %185, %189 : vector<512x128xf32>
    %191 = vector.broadcast %169 : vector<1x128xf32> to vector<512x128xf32>
    %192 = arith.mulf %190, %191 : vector<512x128xf32>
    %193 = vector.broadcast %170 : vector<1x128xf32> to vector<512x128xf32>
    %194 = arith.addf %192, %193 : vector<512x128xf32>
    %195 = arith.addf %166, %194 : vector<512x128xf32>
    %cst_182 = arith.constant 0.000000e+00 : f32
    %196 = vector.broadcast %cst_182 : f32 to vector<512x128xf32>
    %197 = arith.maximumf %195, %196 : vector<512x128xf32>
    %c0_183 = arith.constant 0 : index
    %c0_184 = arith.constant 0 : index
    %198 = vector.load %arg14[%c0_183, %c0_184] : memref<512x128xf32, #tpu.memory_space<vmem>>, vector<512x128xf32>
    tpu.vector_store %arg14[%c0_183, %c0_184], %197 {strides = array<i32>} : memref<512x128xf32, #tpu.memory_space<vmem>>, vector<512x128xf32>,
    return
  }
  func.func @transform_0(%arg0: i32) -> (i32, i32, i32, i32) {
    %c0_i32 = arith.constant 0 : i32
    %c0_i32_0 = arith.constant 0 : i32
    %c0_i32_1 = arith.constant 0 : i32
    %c0_i32_2 = arith.constant 0 : i32
    %c0_i32_3 = arith.constant 0 : i32
    return %c0_i32, %c0_i32_0, %c0_i32_1, %c0_i32_2 : i32, i32, i32, i32
  }
  func.func @transform_1(%arg0: i32) -> (i32, i32) {
    %c0_i32 = arith.constant 0 : i32
    %c0_i32_0 = arith.constant 0 : i32
    %c0_i32_1 = arith.constant 0 : i32
    return %c0_i32, %c0_i32_0 : i32, i32
  }
  func.func @transform_2(%arg0: i32) -> (i32, i32) {
    %c0_i32 = arith.constant 0 : i32
    %c0_i32_0 = arith.constant 0 : i32
    %c0_i32_1 = arith.constant 0 : i32
    return %c0_i32, %c0_i32_0 : i32, i32
  }
  func.func @transform_3(%arg0: i32) -> (i32, i32) {
    %c0_i32 = arith.constant 0 : i32
    %c0_i32_0 = arith.constant 0 : i32
    %c0_i32_1 = arith.constant 0 : i32
    return %c0_i32, %c0_i32_0 : i32, i32
  }
  func.func @transform_4(%arg0: i32) -> (i32, i32, i32, i32) {
    %c0_i32 = arith.constant 0 : i32
    %c0_i32_0 = arith.constant 0 : i32
    %c0_i32_1 = arith.constant 0 : i32
    %c0_i32_2 = arith.constant 0 : i32
    %c0_i32_3 = arith.constant 0 : i32
    return %c0_i32, %c0_i32_0, %c0_i32_1, %c0_i32_2 : i32, i32, i32, i32
  }
  func.func @transform_5(%arg0: i32) -> (i32, i32) {
    %c0_i32 = arith.constant 0 : i32
    %c0_i32_0 = arith.constant 0 : i32
    %c0_i32_1 = arith.constant 0 : i32
    return %c0_i32, %c0_i32_0 : i32, i32
  }
  func.func @transform_6(%arg0: i32) -> (i32, i32) {
    %c0_i32 = arith.constant 0 : i32
    %c0_i32_0 = arith.constant 0 : i32
    %c0_i32_1 = arith.constant 0 : i32
    return %c0_i32, %c0_i32_0 : i32, i32
  }
  func.func @transform_7(%arg0: i32) -> (i32, i32) {
    %c0_i32 = arith.constant 0 : i32
    %c0_i32_0 = arith.constant 0 : i32
    %c0_i32_1 = arith.constant 0 : i32
    return %c0_i32, %c0_i32_0 : i32, i32
  }
  func.func @transform_8(%arg0: i32) -> (i32, i32) {
    %c0_i32 = arith.constant 0 : i32
    %c0_i32_0 = arith.constant 0 : i32
    %c0_i32_1 = arith.constant 0 : i32
    return %c0_i32, %c0_i32_0 : i32, i32
  }
  func.func @transform_9(%arg0: i32) -> (i32, i32) {
    %c0_i32 = arith.constant 0 : i32
    %c0_i32_0 = arith.constant 0 : i32
    %c0_i32_1 = arith.constant 0 : i32
    return %c0_i32, %c0_i32_0 : i32, i32
  }
  func.func @transform_10(%arg0: i32) -> (i32, i32) {
    %c0_i32 = arith.constant 0 : i32
    %c0_i32_0 = arith.constant 0 : i32
    %c0_i32_1 = arith.constant 0 : i32
    return %c0_i32, %c0_i32_0 : i32, i32
  }
  func.func @transform_11(%arg0: i32) -> (i32, i32) {
    %c0_i32 = arith.constant 0 : i32
    %c0_i32_0 = arith.constant 0 : i32
    %c0_i32_1 = arith.constant 0 : i32
    return %c0_i32, %c0_i32_0 : i32, i32
  }
  func.func @transform_12(%arg0: i32) -> (i32, i32) {
    %c0_i32 = arith.constant 0 : i32
    %c0_i32_0 = arith.constant 0 : i32
    %c0_i32_1 = arith.constant 0 : i32
    return %c0_i32, %c0_i32_0 : i32, i32
  }
  func.func @transform_13(%arg0: i32) -> (i32, i32) {
    %c0_i32 = arith.constant 0 : i32
    %c0_i32_0 = arith.constant 0 : i32
    %c0_i32_1 = arith.constant 0 : i32
    return %c0_i32, %c0_i32_0 : i32, i32
  }
}

</mosaic_0001>

<llo_original>
// kernel: tpu_custom_call.1
$region0: #{tpu_custom_call.1}
  #allocation0 [shape = 'u32[]', space=smem, size = 0x4, offset = 0x4, fixed_abs, tag = 'smem constant byte address 0x4 - core index']
  #allocation1 [shape = 'u32[72,128]{1,0:T(1,128)}', space=vmem, size = 0x9000, scoped, tag = 'internal scratch']
  #allocation2 [shape = 'f32[2,18,18,128]{3,2,1,0:T(8,128)}', space=vmem, size = 0x6c000, scoped, tag = 'scratch operand']
  #allocation3 [shape = 'f32[512,128]{1,0:T(8,128)}', space=vmem, size = 0x40000, scoped, tag = 'scratch operand']
  %s0 = inlined_call_operand.hbm [shape: f32[2,16,16,128], index: 0, kind: input, shape index: {}]
  %s1 = inlined_call_operand.hbm [shape: f32[128,128], index: 1, kind: input, shape index: {}]
  %s2 = inlined_call_operand.vmem [shape: f32[1,128], index: 2, kind: input, shape index: {}]
  %s3 = inlined_call_operand.vmem [shape: f32[1,128], index: 3, kind: input, shape index: {}]
  %s4 = inlined_call_operand.hbm [shape: f32[3,3,128,128], index: 4, kind: input, shape index: {}]
  %s5 = inlined_call_operand.vmem [shape: f32[1,128], index: 5, kind: input, shape index: {}]
  %s6 = inlined_call_operand.vmem [shape: f32[1,128], index: 6, kind: input, shape index: {}]
  %s7 = inlined_call_operand.hbm [shape: f32[128,128], index: 7, kind: input, shape index: {}]
  %s8 = inlined_call_operand.vmem [shape: f32[1,128], index: 8, kind: input, shape index: {}]
  %s9 = inlined_call_operand.vmem [shape: f32[1,128], index: 9, kind: input, shape index: {}]
  %s10 = inlined_call_operand.hbm [shape: f32[128,128], index: 10, kind: input, shape index: {}]
  %s11 = inlined_call_operand.vmem [shape: f32[1,128], index: 11, kind: input, shape index: {}]
  %s12 = inlined_call_operand.vmem [shape: f32[1,128], index: 12, kind: input, shape index: {}]
  %s13 = inlined_call_operand.hbm [shape: f32[512,128], index: 13, kind: output, shape index: {}]
  %s14 = sld [smem:[#allocation0]]
  $region82: #{tpu_custom_call.1} parent=0
    _
  %s16 = ssub.s32 1, %s14
  %s17 = scalar_select 0, %s16, %s14
  $region1: #{tpu_custom_call.1} parent=0
    #allocation4 [shape = 'u8[262144]{0}', space=vmem, size = 0x40000, scoped, tag = 'input window, operand 0, single buffered']
    #allocation5 [shape = 's32[1]{0}', space=sflag, size = 0x4, scoped, tag = 'scoped memory for tpu_custom_call.1']
    #allocation6 [shape = 's32[1]{0}', space=sflag, size = 0x4, scoped, tag = 'scoped memory for tpu_custom_call.1']
    #allocation7 [shape = 'u8[65536]{0}', space=vmem, size = 0x10000, scoped, tag = 'input window, operand 1, single buffered']
    #allocation8 [shape = 's32[1]{0}', space=sflag, size = 0x4, scoped, tag = 'scoped memory for tpu_custom_call.1']
    #allocation9 [shape = 'u8[589824]{0}', space=vmem, size = 0x90000, scoped, tag = 'input window, operand 4, single buffered']
    #allocation10 [shape = 'u8[65536]{0}', space=vmem, size = 0x10000, scoped, tag = 'input window, operand 7, single buffered']
    #allocation11 [shape = 's32[1]{0}', space=sflag, size = 0x4, scoped, tag = 'scoped memory for tpu_custom_call.1']
    #allocation12 [shape = 'u8[65536]{0}', space=vmem, size = 0x10000, scoped, tag = 'input window, operand 10, single buffered']
    #allocation13 [shape = 'u8[262144]{0}', space=vmem, size = 0x40000, scoped, tag = 'output window, operand 0, single buffered']
    %18 = vsyncpa [#allocation5], 0
    %19 = vsyncpa [#allocation8], 0
    %20 = vsyncpa [#allocation11], 0
    %21 = vsyncpa [#allocation6], 0
    // Predicated region
    $region2: #{tpu_custom_call.1} parent=1 // pred_check
      _
    $region3: #{tpu_custom_call.1} parent=1 // pred_check_branch
      %23 = sbr.rel (0) target = $region5
    $region4: #{tpu_custom_call.1} parent=1 // pred_region
      %25 = vsyncadd [#allocation5], 0
      %s26 = sshll.u32 %s0, 4
      %s27 = int_to_ptr.hbm [resolvable:$true] %s26
      %s28 = sshll.u32 [#allocation4], 4
      %s29 = int_to_ptr.vmem [resolvable:$true] %s28
      %34 = dma.hbm_to_vmem [thread:$0]  %s27, 8192, %s29, [#allocation5], 128, 128, 8
    $region5: #{tpu_custom_call.1} parent=1 // pred_fallthru
      _
    // Predicated region
    $region6: #{tpu_custom_call.1} parent=1 // pred_check
      _
    $region7: #{tpu_custom_call.1} parent=1 // pred_check_branch
      %36 = sbr.rel (0) target = $region9
    $region8: #{tpu_custom_call.1} parent=1 // pred_region
      %38 = vsyncadd [#allocation8], 0
      %s39 = sshll.u32 %s1, 4
      %s40 = int_to_ptr.hbm [resolvable:$true] %s39
      %s41 = sshll.u32 [#allocation7], 4
      %s42 = int_to_ptr.vmem [resolvable:$true] %s41
      %47 = dma.hbm_to_vmem [thread:$0]  %s40, 2048, %s42, [#allocation8], 128, 128, 8
    $region9: #{tpu_custom_call.1} parent=1 // pred_fallthru
      _
    // Predicated region
    $region10: #{tpu_custom_call.1} parent=1 // pred_check
      _
    $region11: #{tpu_custom_call.1} parent=1 // pred_check_branch
      %49 = sbr.rel (0) target = $region13
    $region12: #{tpu_custom_call.1} parent=1 // pred_region
      _
    $region13: #{tpu_custom_call.1} parent=1 // pred_fallthru
      _
    // Predicated region
    $region14: #{tpu_custom_call.1} parent=1 // pred_check
      _
    $region15: #{tpu_custom_call.1} parent=1 // pred_check_branch
      %51 = sbr.rel (0) target = $region17
    $region16: #{tpu_custom_call.1} parent=1 // pred_region
      _
    $region17: #{tpu_custom_call.1} parent=1 // pred_fallthru
      _
    // Predicated region
    $region18: #{tpu_custom_call.1} parent=1 // pred_check
      _
    $region19: #{tpu_custom_call.1} parent=1 // pred_check_branch
      %53 = sbr.rel (0) target = $region21
    $region20: #{tpu_custom_call.1} parent=1 // pred_region
      %55 = vsyncadd [#allocation8], 0
      %s56 = sshll.u32 %s4, 4
      %s57 = int_to_ptr.hbm [resolvable:$true] %s56
      %s58 = sshll.u32 [#allocation9], 4
      %s59 = int_to_ptr.vmem [resolvable:$true] %s58
      %64 = dma.hbm_to_vmem [thread:$0]  %s57, 18432, %s59, [#allocation8], 128, 128, 8
    $region21: #{tpu_custom_call.1} parent=1 // pred_fallthru
      _
    // Predicated region
    $region22: #{tpu_custom_call.1} parent=1 // pred_check
      _
    $region23: #{tpu_custom_call.1} parent=1 // pred_check_branch
      %66 = sbr.rel (0) target = $region25
    $region24: #{tpu_custom_call.1} parent=1 // pred_region
      _
    $region25: #{tpu_custom_call.1} parent=1 // pred_fallthru
      _
    // Predicated region
    $region26: #{tpu_custom_call.1} parent=1 // pred_check
      _
    $region27: #{tpu_custom_call.1} parent=1 // pred_check_branch
      %68 = sbr.rel (0) target = $region29
    $region28: #{tpu_custom_call.1} parent=1 // pred_region
      _
    $region29: #{tpu_custom_call.1} parent=1 // pred_fallthru
      _
    // Predicated region
    $region30: #{tpu_custom_call.1} parent=1 // pred_check
      _
    $region31: #{tpu_custom_call.1} parent=1 // pred_check_branch
      %70 = sbr.rel (0) target = $region33
    $region32: #{tpu_custom_call.1} parent=1 // pred_region
      %72 = vsyncadd [#allocation11], 0
      %s73 = sshll.u32 %s7, 4
      %s74 = int_to_ptr.hbm [resolvable:$true] %s73
      %s75 = sshll.u32 [#allocation10], 4
      %s76 = int_to_ptr.vmem [resolvable:$true] %s75
      %81 = dma.hbm_to_vmem [thread:$0]  %s74, 2048, %s76, [#allocation11], 128, 128, 8
    $region33: #{tpu_custom_call.1} parent=1 // pred_fallthru
      _
    // Predicated region
    $region34: #{tpu_custom_call.1} parent=1 // pred_check
      _
    $region35: #{tpu_custom_call.1} parent=1 // pred_check_branch
      %83 = sbr.rel (0) target = $region37
    $region36: #{tpu_custom_call.1} parent=1 // pred_region
      _
    $region37: #{tpu_custom_call.1} parent=1 // pred_fallthru
      _
    // Predicated region
    $region38: #{tpu_custom_call.1} parent=1 // pred_check
      _
    $region39: #{tpu_custom_call.1} parent=1 // pred_check_branch
      %85 = sbr.rel (0) target = $region41
    $region40: #{tpu_custom_call.1} parent=1 // pred_region
      _
    $region41: #{tpu_custom_call.1} parent=1 // pred_fallthru
      _
    // Predicated region
    $region42: #{tpu_custom_call.1} parent=1 // pred_check
      _
    $region43: #{tpu_custom_call.1} parent=1 // pred_check_branch
      %87 = sbr.rel (0) target = $region45
    $region44: #{tpu_custom_call.1} parent=1 // pred_region
      %89 = vsyncadd [#allocation11], 0
      %s90 = sshll.u32 %s10, 4
      %s91 = int_to_ptr.hbm [resolvable:$true] %s90
      %s92 = sshll.u32 [#allocation12], 4
      %s93 = int_to_ptr.vmem [resolvable:$true] %s92
      %98 = dma.hbm_to_vmem [thread:$0]  %s91, 2048, %s93, [#allocation11], 128, 128, 8
    $region45: #{tpu_custom_call.1} parent=1 // pred_fallthru
      _
    // Predicated region
    $region46: #{tpu_custom_call.1} parent=1 // pred_check
      _
    $region47: #{tpu_custom_call.1} parent=1 // pred_check_branch
      %100 = sbr.rel (0) target = $region49
    $region48: #{tpu_custom_call.1} parent=1 // pred_region
      _
    $region49: #{tpu_custom_call.1} parent=1 // pred_fallthru
      _
    // Predicated region
    $region50: #{tpu_custom_call.1} parent=1 // pred_check
      _
    $region51: #{tpu_custom_call.1} parent=1 // pred_check_branch
      %102 = sbr.rel (0) target = $region53
    $region52: #{tpu_custom_call.1} parent=1 // pred_region
      _
    $region53: #{tpu_custom_call.1} parent=1 // pred_fallthru
      _
    // Predicated region
    $region54: #{tpu_custom_call.1} parent=1 // pred_check
      _
    $region55: #{tpu_custom_call.1} parent=1 // pred_check_branch
      %104 = sbr.rel (0) target = $region57
    $region56: #{tpu_custom_call.1} parent=1 // pred_region
      %106 = dma.done [#allocation5], 8192
    $region57: #{tpu_custom_call.1} parent=1 // pred_fallthru
      _
    // Predicated region
    $region58: #{tpu_custom_call.1} parent=1 // pred_check
      _
    $region59: #{tpu_custom_call.1} parent=1 // pred_check_branch
      %108 = sbr.rel (0) target = $region61
    $region60: #{tpu_custom_call.1} parent=1 // pred_region
      %110 = dma.done [#allocation8], 2048
    $region61: #{tpu_custom_call.1} parent=1 // pred_fallthru
      _
    // Predicated region
    $region62: #{tpu_custom_call.1} parent=1 // pred_check
      _
    $region63: #{tpu_custom_call.1} parent=1 // pred_check_branch
      %112 = sbr.rel (0) target = $region65
    $region64: #{tpu_custom_call.1} parent=1 // pred_region
      %114 = dma.done [#allocation8], 18432
    $region65: #{tpu_custom_call.1} parent=1 // pred_fallthru
      _
    // Predicated region
    $region66: #{tpu_custom_call.1} parent=1 // pred_check
      _
    $region67: #{tpu_custom_call.1} parent=1 // pred_check_branch
      %116 = sbr.rel (0) target = $region69
    $region68: #{tpu_custom_call.1} parent=1 // pred_region
      %118 = dma.done [#allocation11], 2048
    $region69: #{tpu_custom_call.1} parent=1 // pred_fallthru
      _
    // Predicated region
    $region70: #{tpu_custom_call.1} parent=1 // pred_check
      _
    $region71: #{tpu_custom_call.1} parent=1 // pred_check_branch
      %120 = sbr.rel (0) target = $region73
    $region72: #{tpu_custom_call.1} parent=1 // pred_region
      %122 = dma.done [#allocation11], 2048
    $region73: #{tpu_custom_call.1} parent=1 // pred_fallthru
      _
    %v123 = vld [vmem:[#allocation4] sm:$0xff]
    %v124 = vld [vmem:[#allocation4 + $0x8] sm:$0xff]
    %v125 = vld [vmem:[#allocation4 + $0x10] sm:$0xff]
    %v126 = vld [vmem:[#allocation4 + $0x18] sm:$0xff]
    %v127 = vld [vmem:[#allocation4 + $0x20] sm:$0xff]
    %v128 = vld [vmem:[#allocation4 + $0x28] sm:$0xff]
    %v129 = vld [vmem:[#allocation4 + $0x30] sm:$0xff]
    %v130 = vld [vmem:[#allocation4 + $0x38] sm:$0xff]
    %v131 = vld [vmem:[#allocation4 + $0x40] sm:$0xff]
    %v132 = vld [vmem:[#allocation4 + $0x48] sm:$0xff]
    %v133 = vld [vmem:[#allocation4 + $0x50] sm:$0xff]
    %v134 = vld [vmem:[#allocation4 + $0x58] sm:$0xff]
    %v135 = vld [vmem:[#allocation4 + $0x60] sm:$0xff]
    %v136 = vld [vmem:[#allocation4 + $0x68] sm:$0xff]
    %v137 = vld [vmem:[#allocation4 + $0x70] sm:$0xff]
    %v138 = vld [vmem:[#allocation4 + $0x78] sm:$0xff]
    %v139 = vld [vmem:[#allocation4 + $0x80] sm:$0xff]
    %v140 = vld [vmem:[#allocation4 + $0x88] sm:$0xff]
    %v141 = vld [vmem:[#allocation4 + $0x90] sm:$0xff]
    %v142 = vld [vmem:[#allocation4 + $0x98] sm:$0xff]
    %v143 = vld [vmem:[#allocation4 + $0xa0] sm:$0xff]
    %v144 = vld [vmem:[#allocation4 + $0xa8] sm:$0xff]
    %v145 = vld [vmem:[#allocation4 + $0xb0] sm:$0xff]
    %v146 = vld [vmem:[#allocation4 + $0xb8] sm:$0xff]
    %v147 = vld [vmem:[#allocation4 + $0xc0] sm:$0xff]
    %v148 = vld [vmem:[#allocation4 + $0xc8] sm:$0xff]
    %v149 = vld [vmem:[#allocation4 + $0xd0] sm:$0xff]
    %v150 = vld [vmem:[#allocation4 + $0xd8] sm:$0xff]
    %v151 = vld [vmem:[#allocation4 + $0xe0] sm:$0xff]
    %v152 = vld [vmem:[#allocation4 + $0xe8] sm:$0xff]
    %v153 = vld [vmem:[#allocation4 + $0xf0] sm:$0xff]
    %v154 = vld [vmem:[#allocation4 + $0xf8] sm:$0xff]
    %v155 = vld [vmem:[#allocation4 + $0x100] sm:$0xff]
    %v156 = vld [vmem:[#allocation4 + $0x108] sm:$0xff]
    %v157 = vld [vmem:[#allocation4 + $0x110] sm:$0xff]
    %v158 = vld [vmem:[#allocation4 + $0x118] sm:$0xff]
    %v159 = vld [vmem:[#allocation4 + $0x120] sm:$0xff]
    %v160 = vld [vmem:[#allocation4 + $0x128] sm:$0xff]
    %v161 = vld [vmem:[#allocation4 + $0x130] sm:$0xff]
    %v162 = vld [vmem:[#allocation4 + $0x138] sm:$0xff]
    %v163 = vld [vmem:[#allocation4 + $0x140] sm:$0xff]
    %v164 = vld [vmem:[#allocation4 + $0x148] sm:$0xff]
    %v165 = vld [vmem:[#allocation4 + $0x150] sm:$0xff]
    %v166 = vld [vmem:[#allocation4 + $0x158] sm:$0xff]
    %v167 = vld [vmem:[#allocation4 + $0x160] sm:$0xff]
    %v168 = vld [vmem:[#allocation4 + $0x168] sm:$0xff]
    %v169 = vld [vmem:[#allocation4 + $0x170] sm:$0xff]
    %v170 = vld [vmem:[#allocation4 + $0x178] sm:$0xff]
    %v171 = vld [vmem:[#allocation4 + $0x180] sm:$0xff]
    %v172 = vld [vmem:[#allocation4 + $0x188] sm:$0xff]
    %v173 = vld [vmem:[#allocation4 + $0x190] sm:$0xff]
    %v174 = vld [vmem:[#allocation4 + $0x198] sm:$0xff]
    %v175 = vld [vmem:[#allocation4 + $0x1a0] sm:$0xff]
    %v176 = vld [vmem:[#allocation4 + $0x1a8] sm:$0xff]
    %v177 = vld [vmem:[#allocation4 + $0x1b0] sm:$0xff]
    %v178 = vld [vmem:[#allocation4 + $0x1b8] sm:$0xff]
    %v179 = vld [vmem:[#allocation4 + $0x1c0] sm:$0xff]
    %v180 = vld [vmem:[#allocation4 + $0x1c8] sm:$0xff]
    %v181 = vld [vmem:[#allocation4 + $0x1d0] sm:$0xff]
    %v182 = vld [vmem:[#allocation4 + $0x1d8] sm:$0xff]
    %v183 = vld [vmem:[#allocation4 + $0x1e0] sm:$0xff]
    %v184 = vld [vmem:[#allocation4 + $0x1e8] sm:$0xff]
    %v185 = vld [vmem:[#allocation4 + $0x1f0] sm:$0xff]
    %v186 = vld [vmem:[#allocation4 + $0x1f8] sm:$0xff]
    %v187 = vld [vmem:[#allocation7] sm:$0xff]
    %v188 = vld [vmem:[#allocation7 + $0x8] sm:$0xff]
    %v189 = vld [vmem:[#allocation7 + $0x10] sm:$0xff]
    %v190 = vld [vmem:[#allocation7 + $0x18] sm:$0xff]
    %v191 = vld [vmem:[#allocation7 + $0x20] sm:$0xff]
    %v192 = vld [vmem:[#allocation7 + $0x28] sm:$0xff]
    %v193 = vld [vmem:[#allocation7 + $0x30] sm:$0xff]
    %v194 = vld [vmem:[#allocation7 + $0x38] sm:$0xff]
    %v195 = vld [vmem:[#allocation7 + $0x40] sm:$0xff]
    %v196 = vld [vmem:[#allocation7 + $0x48] sm:$0xff]
    %v197 = vld [vmem:[#allocation7 + $0x50] sm:$0xff]
    %v198 = vld [vmem:[#allocation7 + $0x58] sm:$0xff]
    %v199 = vld [vmem:[#allocation7 + $0x60] sm:$0xff]
    %v200 = vld [vmem:[#allocation7 + $0x68] sm:$0xff]
    %v201 = vld [vmem:[#allocation7 + $0x70] sm:$0xff]
    %v202 = vld [vmem:[#allocation7 + $0x78] sm:$0xff]
    %203 = vmatpush.msra.mxu0 %v202
    %204 = vmatpush.msra.mxu0 %v201
    %205 = vmatpush.msra.mxu0 %v200
    %206 = vmatpush.msra.mxu0 %v199
    %207 = vmatpush.msra.mxu0 %v198
    %208 = vmatpush.msra.mxu0 %v197
    %209 = vmatpush.msra.mxu0 %v196
    %210 = vmatpush.msra.mxu0 %v195
    %211 = vmatpush.msra.mxu0 %v194
    %212 = vmatpush.msra.mxu0 %v193
    %213 = vmatpush.msra.mxu0 %v192
    %214 = vmatpush.msra.mxu0 %v191
    %215 = vmatpush.msra.mxu0 %v190
    %216 = vmatpush.msra.mxu0 %v189
    %217 = vmatpush.msra.mxu0 %v188
    %218 = vmatpush.msra.mxu0 %v187
    %219 = vmatmul.f32.gmra.mxu0 %v123
    %v220 = vpop.f32.mrf.mxu0
    %v221 = vadd.f32 0.0, %v220
    %222 = vmatmul.f32.gmra.mxu0 %v124
    %v223 = vpop.f32.mrf.mxu0
    %v224 = vadd.f32 0.0, %v223
    %225 = vmatmul.f32.gmra.mxu0 %v125
    %v226 = vpop.f32.mrf.mxu0
    %v227 = vadd.f32 0.0, %v226
    %228 = vmatmul.f32.gmra.mxu0 %v126
    %v229 = vpop.f32.mrf.mxu0
    %v230 = vadd.f32 0.0, %v229
    %231 = vmatmul.f32.gmra.mxu0 %v127
    %v232 = vpop.f32.mrf.mxu0
    %v233 = vadd.f32 0.0, %v232
    %234 = vmatmul.f32.gmra.mxu0 %v128
    %v235 = vpop.f32.mrf.mxu0
    %v236 = vadd.f32 0.0, %v235
    %237 = vmatmul.f32.gmra.mxu0 %v129
    %v238 = vpop.f32.mrf.mxu0
    %v239 = vadd.f32 0.0, %v238
    %240 = vmatmul.f32.gmra.mxu0 %v130
    %v241 = vpop.f32.mrf.mxu0
    %v242 = vadd.f32 0.0, %v241
    %243 = vmatmul.f32.gmra.mxu0 %v131
    %v244 = vpop.f32.mrf.mxu0
    %v245 = vadd.f32 0.0, %v244
    %246 = vmatmul.f32.gmra.mxu0 %v132
    %v247 = vpop.f32.mrf.mxu0
    %v248 = vadd.f32 0.0, %v247
    %249 = vmatmul.f32.gmra.mxu0 %v133
    %v250 = vpop.f32.mrf.mxu0
    %v251 = vadd.f32 0.0, %v250
    %252 = vmatmul.f32.gmra.mxu0 %v134
    %v253 = vpop.f32.mrf.mxu0
    %v254 = vadd.f32 0.0, %v253
    %255 = vmatmul.f32.gmra.mxu0 %v135
    %v256 = vpop.f32.mrf.mxu0
    %v257 = vadd.f32 0.0, %v256
    %258 = vmatmul.f32.gmra.mxu0 %v136
    %v259 = vpop.f32.mrf.mxu0
    %v260 = vadd.f32 0.0, %v259
    %261 = vmatmul.f32.gmra.mxu0 %v137
    %v262 = vpop.f32.mrf.mxu0
    %v263 = vadd.f32 0.0, %v262
    %264 = vmatmul.f32.gmra.mxu0 %v138
    %v265 = vpop.f32.mrf.mxu0
    %v266 = vadd.f32 0.0, %v265
    %267 = vmatmul.f32.gmra.mxu0 %v139
    %v268 = vpop.f32.mrf.mxu0
    %v269 = vadd.f32 0.0, %v268
    %270 = vmatmul.f32.gmra.mxu0 %v140
    %v271 = vpop.f32.mrf.mxu0
    %v272 = vadd.f32 0.0, %v271
    %273 = vmatmul.f32.gmra.mxu0 %v141
    %v274 = vpop.f32.mrf.mxu0
    %v275 = vadd.f32 0.0, %v274
    %276 = vmatmul.f32.gmra.mxu0 %v142
    %v277 = vpop.f32.mrf.mxu0
    %v278 = vadd.f32 0.0, %v277
    %279 = vmatmul.f32.gmra.mxu0 %v143
    %v280 = vpop.f32.mrf.mxu0
    %v281 = vadd.f32 0.0, %v280
    %282 = vmatmul.f32.gmra.mxu0 %v144
    %v283 = vpop.f32.mrf.mxu0
    %v284 = vadd.f32 0.0, %v283
    %285 = vmatmul.f32.gmra.mxu0 %v145
    %v286 = vpop.f32.mrf.mxu0
    %v287 = vadd.f32 0.0, %v286
    %288 = vmatmul.f32.gmra.mxu0 %v146
    %v289 = vpop.f32.mrf.mxu0
    %v290 = vadd.f32 0.0, %v289
    %291 = vmatmul.f32.gmra.mxu0 %v147
    %v292 = vpop.f32.mrf.mxu0
    %v293 = vadd.f32 0.0, %v292
    %294 = vmatmul.f32.gmra.mxu0 %v148
    %v295 = vpop.f32.mrf.mxu0
    %v296 = vadd.f32 0.0, %v295
    %297 = vmatmul.f32.gmra.mxu0 %v149
    %v298 = vpop.f32.mrf.mxu0
    %v299 = vadd.f32 0.0, %v298
    %300 = vmatmul.f32.gmra.mxu0 %v150
    %v301 = vpop.f32.mrf.mxu0
    %v302 = vadd.f32 0.0, %v301
    %303 = vmatmul.f32.gmra.mxu0 %v151
    %v304 = vpop.f32.mrf.mxu0
    %v305 = vadd.f32 0.0, %v304
    %306 = vmatmul.f32.gmra.mxu0 %v152
    %v307 = vpop.f32.mrf.mxu0
    %v308 = vadd.f32 0.0, %v307
    %309 = vmatmul.f32.gmra.mxu0 %v153
    %v310 = vpop.f32.mrf.mxu0
    %v311 = vadd.f32 0.0, %v310
    %312 = vmatmul.f32.gmra.mxu0 %v154
    %v313 = vpop.f32.mrf.mxu0
    %v314 = vadd.f32 0.0, %v313
    %315 = vmatmul.f32.gmra.mxu0 %v155
    %v316 = vpop.f32.mrf.mxu0
    %v317 = vadd.f32 0.0, %v316
    %318 = vmatmul.f32.gmra.mxu0 %v156
    %v319 = vpop.f32.mrf.mxu0
    %v320 = vadd.f32 0.0, %v319
    %321 = vmatmul.f32.gmra.mxu0 %v157
    %v322 = vpop.f32.mrf.mxu0
    %v323 = vadd.f32 0.0, %v322
    %324 = vmatmul.f32.gmra.mxu0 %v158
    %v325 = vpop.f32.mrf.mxu0
    %v326 = vadd.f32 0.0, %v325
    %327 = vmatmul.f32.gmra.mxu0 %v159
    %v328 = vpop.f32.mrf.mxu0
    %v329 = vadd.f32 0.0, %v328
    %330 = vmatmul.f32.gmra.mxu0 %v160
    %v331 = vpop.f32.mrf.mxu0
    %v332 = vadd.f32 0.0, %v331
    %333 = vmatmul.f32.gmra.mxu0 %v161
    %v334 = vpop.f32.mrf.mxu0
    %v335 = vadd.f32 0.0, %v334
    %336 = vmatmul.f32.gmra.mxu0 %v162
    %v337 = vpop.f32.mrf.mxu0
    %v338 = vadd.f32 0.0, %v337
    %339 = vmatmul.f32.gmra.mxu0 %v163
    %v340 = vpop.f32.mrf.mxu0
    %v341 = vadd.f32 0.0, %v340
    %342 = vmatmul.f32.gmra.mxu0 %v164
    %v343 = vpop.f32.mrf.mxu0
    %v344 = vadd.f32 0.0, %v343
    %345 = vmatmul.f32.gmra.mxu0 %v165
    %v346 = vpop.f32.mrf.mxu0
    %v347 = vadd.f32 0.0, %v346
    %348 = vmatmul.f32.gmra.mxu0 %v166
    %v349 = vpop.f32.mrf.mxu0
    %v350 = vadd.f32 0.0, %v349
    %351 = vmatmul.f32.gmra.mxu0 %v167
    %v352 = vpop.f32.mrf.mxu0
    %v353 = vadd.f32 0.0, %v352
    %354 = vmatmul.f32.gmra.mxu0 %v168
    %v355 = vpop.f32.mrf.mxu0
    %v356 = vadd.f32 0.0, %v355
    %357 = vmatmul.f32.gmra.mxu0 %v169
    %v358 = vpop.f32.mrf.mxu0
    %v359 = vadd.f32 0.0, %v358
    %360 = vmatmul.f32.gmra.mxu0 %v170
    %v361 = vpop.f32.mrf.mxu0
    %v362 = vadd.f32 0.0, %v361
    %363 = vmatmul.f32.gmra.mxu0 %v171
    %v364 = vpop.f32.mrf.mxu0
    %v365 = vadd.f32 0.0, %v364
    %366 = vmatmul.f32.gmra.mxu0 %v172
    %v367 = vpop.f32.mrf.mxu0
    %v368 = vadd.f32 0.0, %v367
    %369 = vmatmul.f32.gmra.mxu0 %v173
    %v370 = vpop.f32.mrf.mxu0
    %v371 = vadd.f32 0.0, %v370
    %372 = vmatmul.f32.gmra.mxu0 %v174
    %v373 = vpop.f32.mrf.mxu0
    %v374 = vadd.f32 0.0, %v373
    %375 = vmatmul.f32.gmra.mxu0 %v175
    %v376 = vpop.f32.mrf.mxu0
    %v377 = vadd.f32 0.0, %v376
    %378 = vmatmul.f32.gmra.mxu0 %v176
    %v379 = vpop.f32.mrf.mxu0
    %v380 = vadd.f32 0.0, %v379
    %381 = vmatmul.f32.gmra.mxu0 %v177
    %v382 = vpop.f32.mrf.mxu0
    %v383 = vadd.f32 0.0, %v382
    %384 = vmatmul.f32.gmra.mxu0 %v178
    %v385 = vpop.f32.mrf.mxu0
    %v386 = vadd.f32 0.0, %v385
    %387 = vmatmul.f32.gmra.mxu0 %v179
    %v388 = vpop.f32.mrf.mxu0
    %v389 = vadd.f32 0.0, %v388
    %390 = vmatmul.f32.gmra.mxu0 %v180
    %v391 = vpop.f32.mrf.mxu0
    %v392 = vadd.f32 0.0, %v391
    %393 = vmatmul.f32.gmra.mxu0 %v181
    %v394 = vpop.f32.mrf.mxu0
    %v395 = vadd.f32 0.0, %v394
    %396 = vmatmul.f32.gmra.mxu0 %v182
    %v397 = vpop.f32.mrf.mxu0
    %v398 = vadd.f32 0.0, %v397
    %399 = vmatmul.f32.gmra.mxu0 %v183
    %v400 = vpop.f32.mrf.mxu0
    %v401 = vadd.f32 0.0, %v400
    %402 = vmatmul.f32.gmra.mxu0 %v184
    %v403 = vpop.f32.mrf.mxu0
    %v404 = vadd.f32 0.0, %v403
    %405 = vmatmul.f32.gmra.mxu0 %v185
    %v406 = vpop.f32.mrf.mxu0
    %v407 = vadd.f32 0.0, %v406
    %408 = vmatmul.f32.gmra.mxu0 %v186
    %v409 = vpop.f32.mrf.mxu0
    %v410 = vadd.f32 0.0, %v409
    %411 = vdwg.mxu0
    %v412 = vld [vmem:[%s2] sm:$0x1]
    %v413 = vld [vmem:[%s3] sm:$0x1]
    %v414 = vadd.f32 %v221, %v224
    %v415 = vadd.f32 %v414, %v227
    %v416 = vadd.f32 %v415, %v230
    %v417 = vadd.f32 %v416, %v233
    %v418 = vadd.f32 %v417, %v236
    %v419 = vadd.f32 %v418, %v239
    %v420 = vadd.f32 %v419, %v242
    %v421 = vadd.f32 %v420, %v245
    %v422 = vadd.f32 %v421, %v248
    %v423 = vadd.f32 %v422, %v251
    %v424 = vadd.f32 %v423, %v254
    %v425 = vadd.f32 %v424, %v257
    %v426 = vadd.f32 %v425, %v260
    %v427 = vadd.f32 %v426, %v263
    %v428 = vadd.f32 %v427, %v266
    %v429 = vadd.f32 %v428, %v269
    %v430 = vadd.f32 %v429, %v272
    %v431 = vadd.f32 %v430, %v275
    %v432 = vadd.f32 %v431, %v278
    %v433 = vadd.f32 %v432, %v281
    %v434 = vadd.f32 %v433, %v284
    %v435 = vadd.f32 %v434, %v287
    %v436 = vadd.f32 %v435, %v290
    %v437 = vadd.f32 %v436, %v293
    %v438 = vadd.f32 %v437, %v296
    %v439 = vadd.f32 %v438, %v299
    %v440 = vadd.f32 %v439, %v302
    %v441 = vadd.f32 %v440, %v305
    %v442 = vadd.f32 %v441, %v308
    %v443 = vadd.f32 %v442, %v311
    %v444 = vadd.f32 %v443, %v314
    %v445 = vadd.f32 %v444, %v317
    %v446 = vadd.f32 %v445, %v320
    %v447 = vadd.f32 %v446, %v323
    %v448 = vadd.f32 %v447, %v326
    %v449 = vadd.f32 %v448, %v329
    %v450 = vadd.f32 %v449, %v332
    %v451 = vadd.f32 %v450, %v335
    %v452 = vadd.f32 %v451, %v338
    %v453 = vadd.f32 %v452, %v341
    %v454 = vadd.f32 %v453, %v344
    %v455 = vadd.f32 %v454, %v347
    %v456 = vadd.f32 %v455, %v350
    %v457 = vadd.f32 %v456, %v353
    %v458 = vadd.f32 %v457, %v356
    %v459 = vadd.f32 %v458, %v359
    %v460 = vadd.f32 %v459, %v362
    %v461 = vadd.f32 %v460, %v365
    %v462 = vadd.f32 %v461, %v368
    %v463 = vadd.f32 %v462, %v371
    %v464 = vadd.f32 %v463, %v374
    %v465 = vadd.f32 %v464, %v377
    %v466 = vadd.f32 %v465, %v380
    %v467 = vadd.f32 %v466, %v383
    %v468 = vadd.f32 %v467, %v386
    %v469 = vadd.f32 %v468, %v389
    %v470 = vadd.f32 %v469, %v392
    %v471 = vadd.f32 %v470, %v395
    %v472 = vadd.f32 %v471, %v398
    %v473 = vadd.f32 %v472, %v401
    %v474 = vadd.f32 %v473, %v404
    %v475 = vadd.f32 %v474, %v407
    %v476 = vadd.f32 %v475, %v410
    %v477 = vrot.slane %v476, 4
    %v478 = vadd.f32 %v476, %v477
    %v479 = vrot.slane %v478, 2
    %v480 = vadd.f32 %v478, %v479
    %v481 = vrot.slane %v480, 1
    %v482 = vadd.f32 %v480, %v481
    %v483 = vmul.f32 %v221, %v221
    %v484 = vmul.f32 %v224, %v224
    %v485 = vmul.f32 %v227, %v227
    %v486 = vmul.f32 %v230, %v230
    %v487 = vmul.f32 %v233, %v233
    %v488 = vmul.f32 %v236, %v236
    %v489 = vmul.f32 %v239, %v239
    %v490 = vmul.f32 %v242, %v242
    %v491 = vmul.f32 %v245, %v245
    %v492 = vmul.f32 %v248, %v248
    %v493 = vmul.f32 %v251, %v251
    %v494 = vmul.f32 %v254, %v254
    %v495 = vmul.f32 %v257, %v257
    %v496 = vmul.f32 %v260, %v260
    %v497 = vmul.f32 %v263, %v263
    %v498 = vmul.f32 %v266, %v266
    %v499 = vmul.f32 %v269, %v269
    %v500 = vmul.f32 %v272, %v272
    %v501 = vmul.f32 %v275, %v275
    %v502 = vmul.f32 %v278, %v278
    %v503 = vmul.f32 %v281, %v281
    %v504 = vmul.f32 %v284, %v284
    %v505 = vmul.f32 %v287, %v287
    %v506 = vmul.f32 %v290, %v290
    %v507 = vmul.f32 %v293, %v293
    %v508 = vmul.f32 %v296, %v296
    %v509 = vmul.f32 %v299, %v299
    %v510 = vmul.f32 %v302, %v302
    %v511 = vmul.f32 %v305, %v305
    %v512 = vmul.f32 %v308, %v308
    %v513 = vmul.f32 %v311, %v311
    %v514 = vmul.f32 %v314, %v314
    %v515 = vmul.f32 %v317, %v317
    %v516 = vmul.f32 %v320, %v320
    %v517 = vmul.f32 %v323, %v323
    %v518 = vmul.f32 %v326, %v326
    %v519 = vmul.f32 %v329, %v329
    %v520 = vmul.f32 %v332, %v332
    %v521 = vmul.f32 %v335, %v335
    %v522 = vmul.f32 %v338, %v338
    %v523 = vmul.f32 %v341, %v341
    %v524 = vmul.f32 %v344, %v344
    %v525 = vmul.f32 %v347, %v347
    %v526 = vmul.f32 %v350, %v350
    %v527 = vmul.f32 %v353, %v353
    %v528 = vmul.f32 %v356, %v356
    %v529 = vmul.f32 %v359, %v359
    %v530 = vmul.f32 %v362, %v362
    %v531 = vmul.f32 %v365, %v365
    %v532 = vmul.f32 %v368, %v368
    %v533 = vmul.f32 %v371, %v371
    %v534 = vmul.f32 %v374, %v374
    %v535 = vmul.f32 %v377, %v377
    %v536 = vmul.f32 %v380, %v380
    %v537 = vmul.f32 %v383, %v383
    %v538 = vmul.f32 %v386, %v386
    %v539 = vmul.f32 %v389, %v389
    %v540 = vmul.f32 %v392, %v392
    %v541 = vmul.f32 %v395, %v395
    %v542 = vmul.f32 %v398, %v398
    %v543 = vmul.f32 %v401, %v401
    %v544 = vmul.f32 %v404, %v404
    %v545 = vmul.f32 %v407, %v407
    %v546 = vmul.f32 %v410, %v410
    %v547 = vadd.f32 %v483, %v484
    %v548 = vadd.f32 %v547, %v485
    %v549 = vadd.f32 %v548, %v486
    %v550 = vadd.f32 %v549, %v487
    %v551 = vadd.f32 %v550, %v488
    %v552 = vadd.f32 %v551, %v489
    %v553 = vadd.f32 %v552, %v490
    %v554 = vadd.f32 %v553, %v491
    %v555 = vadd.f32 %v554, %v492
    %v556 = vadd.f32 %v555, %v493
    %v557 = vadd.f32 %v556, %v494
    %v558 = vadd.f32 %v557, %v495
    %v559 = vadd.f32 %v558, %v496
    %v560 = vadd.f32 %v559, %v497
    %v561 = vadd.f32 %v560, %v498
    %v562 = vadd.f32 %v561, %v499
    %v563 = vadd.f32 %v562, %v500
    %v564 = vadd.f32 %v563, %v501
    %v565 = vadd.f32 %v564, %v502
    %v566 = vadd.f32 %v565, %v503
    %v567 = vadd.f32 %v566, %v504
    %v568 = vadd.f32 %v567, %v505
    %v569 = vadd.f32 %v568, %v506
    %v570 = vadd.f32 %v569, %v507
    %v571 = vadd.f32 %v570, %v508
    %v572 = vadd.f32 %v571, %v509
    %v573 = vadd.f32 %v572, %v510
    %v574 = vadd.f32 %v573, %v511
    %v575 = vadd.f32 %v574, %v512
    %v576 = vadd.f32 %v575, %v513
    %v577 = vadd.f32 %v576, %v514
    %v578 = vadd.f32 %v577, %v515
    %v579 = vadd.f32 %v578, %v516
    %v580 = vadd.f32 %v579, %v517
    %v581 = vadd.f32 %v580, %v518
    %v582 = vadd.f32 %v581, %v519
    %v583 = vadd.f32 %v582, %v520
    %v584 = vadd.f32 %v583, %v521
    %v585 = vadd.f32 %v584, %v522
    %v586 = vadd.f32 %v585, %v523
    %v587 = vadd.f32 %v586, %v524
    %v588 = vadd.f32 %v587, %v525
    %v589 = vadd.f32 %v588, %v526
    %v590 = vadd.f32 %v589, %v527
    %v591 = vadd.f32 %v590, %v528
    %v592 = vadd.f32 %v591, %v529
    %v593 = vadd.f32 %v592, %v530
    %v594 = vadd.f32 %v593, %v531
    %v595 = vadd.f32 %v594, %v532
    %v596 = vadd.f32 %v595, %v533
    %v597 = vadd.f32 %v596, %v534
    %v598 = vadd.f32 %v597, %v535
    %v599 = vadd.f32 %v598, %v536
    %v600 = vadd.f32 %v599, %v537
    %v601 = vadd.f32 %v600, %v538
    %v602 = vadd.f32 %v601, %v539
    %v603 = vadd.f32 %v602, %v540
    %v604 = vadd.f32 %v603, %v541
    %v605 = vadd.f32 %v604, %v542
    %v606 = vadd.f32 %v605, %v543
    %v607 = vadd.f32 %v606, %v544
    %v608 = vadd.f32 %v607, %v545
    %v609 = vadd.f32 %v608, %v546
    %v610 = vrot.slane %v609, 4
    %v611 = vadd.f32 %v609, %v610
    %v612 = vrot.slane %v611, 2
    %v613 = vadd.f32 %v611, %v612
    %v614 = vrot.slane %v613, 1
    %v615 = vadd.f32 %v613, %v614
    %v616 = vmul.f32 %v482, 0.001953125
    %v617 = vmul.f32 %v615, 0.001953125
    %v618 = vmul.f32 %v616, %v616
    %v619 = vsub.f32 %v617, %v618
    %v620 = vmax.f32 %v619, 0.0
    %v621 = vsub.f32 %v221, %v616
    %v622 = vsub.f32 %v224, %v616
    %v623 = vsub.f32 %v227, %v616
    %v624 = vsub.f32 %v230, %v616
    %v625 = vsub.f32 %v233, %v616
    %v626 = vsub.f32 %v236, %v616
    %v627 = vsub.f32 %v239, %v616
    %v628 = vsub.f32 %v242, %v616
    %v629 = vsub.f32 %v245, %v616
    %v630 = vsub.f32 %v248, %v616
    %v631 = vsub.f32 %v251, %v616
    %v632 = vsub.f32 %v254, %v616
    %v633 = vsub.f32 %v257, %v616
    %v634 = vsub.f32 %v260, %v616
    %v635 = vsub.f32 %v263, %v616
    %v636 = vsub.f32 %v266, %v616
    %v637 = vsub.f32 %v269, %v616
    %v638 = vsub.f32 %v272, %v616
    %v639 = vsub.f32 %v275, %v616
    %v640 = vsub.f32 %v278, %v616
    %v641 = vsub.f32 %v281, %v616
    %v642 = vsub.f32 %v284, %v616
    %v643 = vsub.f32 %v287, %v616
    %v644 = vsub.f32 %v290, %v616
    %v645 = vsub.f32 %v293, %v616
    %v646 = vsub.f32 %v296, %v616
    %v647 = vsub.f32 %v299, %v616
    %v648 = vsub.f32 %v302, %v616
    %v649 = vsub.f32 %v305, %v616
    %v650 = vsub.f32 %v308, %v616
    %v651 = vsub.f32 %v311, %v616
    %v652 = vsub.f32 %v314, %v616
    %v653 = vsub.f32 %v317, %v616
    %v654 = vsub.f32 %v320, %v616
    %v655 = vsub.f32 %v323, %v616
    %v656 = vsub.f32 %v326, %v616
    %v657 = vsub.f32 %v329, %v616
    %v658 = vsub.f32 %v332, %v616
    %v659 = vsub.f32 %v335, %v616
    %v660 = vsub.f32 %v338, %v616
    %v661 = vsub.f32 %v341, %v616
    %v662 = vsub.f32 %v344, %v616
    %v663 = vsub.f32 %v347, %v616
    %v664 = vsub.f32 %v350, %v616
    %v665 = vsub.f32 %v353, %v616
    %v666 = vsub.f32 %v356, %v616
    %v667 = vsub.f32 %v359, %v616
    %v668 = vsub.f32 %v362, %v616
    %v669 = vsub.f32 %v365, %v616
    %v670 = vsub.f32 %v368, %v616
    %v671 = vsub.f32 %v371, %v616
    %v672 = vsub.f32 %v374, %v616
    %v673 = vsub.f32 %v377, %v616
    %v674 = vsub.f32 %v380, %v616
    %v675 = vsub.f32 %v383, %v616
    %v676 = vsub.f32 %v386, %v616
    %v677 = vsub.f32 %v389, %v616
    %v678 = vsub.f32 %v392, %v616
    %v679 = vsub.f32 %v395, %v616
    %v680 = vsub.f32 %v398, %v616
    %v681 = vsub.f32 %v401, %v616
    %v682 = vsub.f32 %v404, %v616
    %v683 = vsub.f32 %v407, %v616
    %v684 = vsub.f32 %v410, %v616
    %v685 = vadd.f32 %v620, 1e-05
    %v686 = vrsqrt.pop %v685
    %v687 = vmul.f32 %v686, %v685
    %v688 = vmul.f32 %v687, %v686
    %v689 = vmul.f32 0.5, %v688
    %v690 = vsub.f32 1.5, %v689
    %v691 = vmul.f32 %v686, %v690
    %vm692 = vweird.f32 %v685
    %vm693 = vweird.f32 %v686
    %vm694 = vmor %vm692, %vm693
    %v695 = vsel %vm694, %v686, %v691
    %v696 = vmul.f32 %v621, %v695
    %v697 = vmul.f32 %v622, %v695
    %v698 = vmul.f32 %v623, %v695
    %v699 = vmul.f32 %v624, %v695
    %v700 = vmul.f32 %v625, %v695
    %v701 = vmul.f32 %v626, %v695
    %v702 = vmul.f32 %v627, %v695
    %v703 = vmul.f32 %v628, %v695
    %v704 = vmul.f32 %v629, %v695
    %v705 = vmul.f32 %v630, %v695
    %v706 = vmul.f32 %v631, %v695
    %v707 = vmul.f32 %v632, %v695
    %v708 = vmul.f32 %v633, %v695
    %v709 = vmul.f32 %v634, %v695
    %v710 = vmul.f32 %v635, %v695
    %v711 = vmul.f32 %v636, %v695
    %v712 = vmul.f32 %v637, %v695
    %v713 = vmul.f32 %v638, %v695
    %v714 = vmul.f32 %v639, %v695
    %v715 = vmul.f32 %v640, %v695
    %v716 = vmul.f32 %v641, %v695
    %v717 = vmul.f32 %v642, %v695
    %v718 = vmul.f32 %v643, %v695
    %v719 = vmul.f32 %v644, %v695
    %v720 = vmul.f32 %v645, %v695
    %v721 = vmul.f32 %v646, %v695
    %v722 = vmul.f32 %v647, %v695
    %v723 = vmul.f32 %v648, %v695
    %v724 = vmul.f32 %v649, %v695
    %v725 = vmul.f32 %v650, %v695
    %v726 = vmul.f32 %v651, %v695
    %v727 = vmul.f32 %v652, %v695
    %v728 = vmul.f32 %v653, %v695
    %v729 = vmul.f32 %v654, %v695
    %v730 = vmul.f32 %v655, %v695
    %v731 = vmul.f32 %v656, %v695
    %v732 = vmul.f32 %v657, %v695
    %v733 = vmul.f32 %v658, %v695
    %v734 = vmul.f32 %v659, %v695
    %v735 = vmul.f32 %v660, %v695
    %v736 = vmul.f32 %v661, %v695
    %v737 = vmul.f32 %v662, %v695
    %v738 = vmul.f32 %v663, %v695
    %v739 = vmul.f32 %v664, %v695
    %v740 = vmul.f32 %v665, %v695
    %v741 = vmul.f32 %v666, %v695
    %v742 = vmul.f32 %v667, %v695
    %v743 = vmul.f32 %v668, %v695
    %v744 = vmul.f32 %v669, %v695
    %v745 = vmul.f32 %v670, %v695
    %v746 = vmul.f32 %v671, %v695
    %v747 = vmul.f32 %v672, %v695
    %v748 = vmul.f32 %v673, %v695
    %v749 = vmul.f32 %v674, %v695
    %v750 = vmul.f32 %v675, %v695
    %v751 = vmul.f32 %v676, %v695
    %v752 = vmul.f32 %v677, %v695
    %v753 = vmul.f32 %v678, %v695
    %v754 = vmul.f32 %v679, %v695
    %v755 = vmul.f32 %v680, %v695
    %v756 = vmul.f32 %v681, %v695
    %v757 = vmul.f32 %v682, %v695
    %v758 = vmul.f32 %v683, %v695
    %v759 = vmul.f32 %v684, %v695
    %v761 = vperm.slane %v412, 0
    %v763 = vmul.f32 %v696, %v761
    %v764 = vmul.f32 %v697, %v761
    %v765 = vmul.f32 %v698, %v761
    %v766 = vmul.f32 %v699, %v761
    %v767 = vmul.f32 %v700, %v761
    %v768 = vmul.f32 %v701, %v761
    %v769 = vmul.f32 %v702, %v761
    %v770 = vmul.f32 %v703, %v761
    %v771 = vmul.f32 %v704, %v761
    %v772 = vmul.f32 %v705, %v761
    %v773 = vmul.f32 %v706, %v761
    %v774 = vmul.f32 %v707, %v761
    %v775 = vmul.f32 %v708, %v761
    %v776 = vmul.f32 %v709, %v761
    %v777 = vmul.f32 %v710, %v761
    %v778 = vmul.f32 %v711, %v761
    %v779 = vmul.f32 %v712, %v761
    %v780 = vmul.f32 %v713, %v761
    %v781 = vmul.f32 %v714, %v761
    %v782 = vmul.f32 %v715, %v761
    %v783 = vmul.f32 %v716, %v761
    %v784 = vmul.f32 %v717, %v761
    %v785 = vmul.f32 %v718, %v761
    %v786 = vmul.f32 %v719, %v761
    %v787 = vmul.f32 %v720, %v761
    %v788 = vmul.f32 %v721, %v761
    %v789 = vmul.f32 %v722, %v761
    %v790 = vmul.f32 %v723, %v761
    %v791 = vmul.f32 %v724, %v761
    %v792 = vmul.f32 %v725, %v761
    %v793 = vmul.f32 %v726, %v761
    %v794 = vmul.f32 %v727, %v761
    %v795 = vmul.f32 %v728, %v761
    %v796 = vmul.f32 %v729, %v761
    %v797 = vmul.f32 %v730, %v761
    %v798 = vmul.f32 %v731, %v761
    %v799 = vmul.f32 %v732, %v761
    %v800 = vmul.f32 %v733, %v761
    %v801 = vmul.f32 %v734, %v761
    %v802 = vmul.f32 %v735, %v761
    %v803 = vmul.f32 %v736, %v761
    %v804 = vmul.f32 %v737, %v761
    %v805 = vmul.f32 %v738, %v761
    %v806 = vmul.f32 %v739, %v761
    %v807 = vmul.f32 %v740, %v761
    %v808 = vmul.f32 %v741, %v761
    %v809 = vmul.f32 %v742, %v761
    %v810 = vmul.f32 %v743, %v761
    %v811 = vmul.f32 %v744, %v761
    %v812 = vmul.f32 %v745, %v761
    %v813 = vmul.f32 %v746, %v761
    %v814 = vmul.f32 %v747, %v761
    %v815 = vmul.f32 %v748, %v761
    %v816 = vmul.f32 %v749, %v761
    %v817 = vmul.f32 %v750, %v761
    %v818 = vmul.f32 %v751, %v761
    %v819 = vmul.f32 %v752, %v761
    %v820 = vmul.f32 %v753, %v761
    %v821 = vmul.f32 %v754, %v761
    %v822 = vmul.f32 %v755, %v761
    %v823 = vmul.f32 %v756, %v761
    %v824 = vmul.f32 %v757, %v761
    %v825 = vmul.f32 %v758, %v761
    %v826 = vmul.f32 %v759, %v761
    %v828 = vperm.slane %v413, 0
    %v830 = vadd.f32 %v763, %v828
    %v831 = vadd.f32 %v764, %v828
    %v832 = vadd.f32 %v765, %v828
    %v833 = vadd.f32 %v766, %v828
    %v834 = vadd.f32 %v767, %v828
    %v835 = vadd.f32 %v768, %v828
    %v836 = vadd.f32 %v769, %v828
    %v837 = vadd.f32 %v770, %v828
    %v838 = vadd.f32 %v771, %v828
    %v839 = vadd.f32 %v772, %v828
    %v840 = vadd.f32 %v773, %v828
    %v841 = vadd.f32 %v774, %v828
    %v842 = vadd.f32 %v775, %v828
    %v843 = vadd.f32 %v776, %v828
    %v844 = vadd.f32 %v777, %v828
    %v845 = vadd.f32 %v778, %v828
    %v846 = vadd.f32 %v779, %v828
    %v847 = vadd.f32 %v780, %v828
    %v848 = vadd.f32 %v781, %v828
    %v849 = vadd.f32 %v782, %v828
    %v850 = vadd.f32 %v783, %v828
    %v851 = vadd.f32 %v784, %v828
    %v852 = vadd.f32 %v785, %v828
    %v853 = vadd.f32 %v786, %v828
    %v854 = vadd.f32 %v787, %v828
    %v855 = vadd.f32 %v788, %v828
    %v856 = vadd.f32 %v789, %v828
    %v857 = vadd.f32 %v790, %v828
    %v858 = vadd.f32 %v791, %v828
    %v859 = vadd.f32 %v792, %v828
    %v860 = vadd.f32 %v793, %v828
    %v861 = vadd.f32 %v794, %v828
    %v862 = vadd.f32 %v795, %v828
    %v863 = vadd.f32 %v796, %v828
    %v864 = vadd.f32 %v797, %v828
    %v865 = vadd.f32 %v798, %v828
    %v866 = vadd.f32 %v799, %v828
    %v867 = vadd.f32 %v800, %v828
    %v868 = vadd.f32 %v801, %v828
    %v869 = vadd.f32 %v802, %v828
    %v870 = vadd.f32 %v803, %v828
    %v871 = vadd.f32 %v804, %v828
    %v872 = vadd.f32 %v805, %v828
    %v873 = vadd.f32 %v806, %v828
    %v874 = vadd.f32 %v807, %v828
    %v875 = vadd.f32 %v808, %v828
    %v876 = vadd.f32 %v809, %v828
    %v877 = vadd.f32 %v810, %v828
    %v878 = vadd.f32 %v811, %v828
    %v879 = vadd.f32 %v812, %v828
    %v880 = vadd.f32 %v813, %v828
    %v881 = vadd.f32 %v814, %v828
    %v882 = vadd.f32 %v815, %v828
    %v883 = vadd.f32 %v816, %v828
    %v884 = vadd.f32 %v817, %v828
    %v885 = vadd.f32 %v818, %v828
    %v886 = vadd.f32 %v819, %v828
    %v887 = vadd.f32 %v820, %v828
    %v888 = vadd.f32 %v821, %v828
    %v889 = vadd.f32 %v822, %v828
    %v890 = vadd.f32 %v823, %v828
    %v891 = vadd.f32 %v824, %v828
    %v892 = vadd.f32 %v825, %v828
    %v893 = vadd.f32 %v826, %v828
    %v894 = vmax.f32 %v830, 0.0
    %v895 = vmax.f32 %v831, 0.0
    %v896 = vmax.f32 %v832, 0.0
    %v897 = vmax.f32 %v833, 0.0
    %v898 = vmax.f32 %v834, 0.0
    %v899 = vmax.f32 %v835, 0.0
    %v900 = vmax.f32 %v836, 0.0
    %v901 = vmax.f32 %v837, 0.0
    %v902 = vmax.f32 %v838, 0.0
    %v903 = vmax.f32 %v839, 0.0
    %v904 = vmax.f32 %v840, 0.0
    %v905 = vmax.f32 %v841, 0.0
    %v906 = vmax.f32 %v842, 0.0
    %v907 = vmax.f32 %v843, 0.0
    %v908 = vmax.f32 %v844, 0.0
    %v909 = vmax.f32 %v845, 0.0
    %v910 = vmax.f32 %v846, 0.0
    %v911 = vmax.f32 %v847, 0.0
    %v912 = vmax.f32 %v848, 0.0
    %v913 = vmax.f32 %v849, 0.0
    %v914 = vmax.f32 %v850, 0.0
    %v915 = vmax.f32 %v851, 0.0
    %v916 = vmax.f32 %v852, 0.0
    %v917 = vmax.f32 %v853, 0.0
    %v918 = vmax.f32 %v854, 0.0
    %v919 = vmax.f32 %v855, 0.0
    %v920 = vmax.f32 %v856, 0.0
    %v921 = vmax.f32 %v857, 0.0
    %v922 = vmax.f32 %v858, 0.0
    %v923 = vmax.f32 %v859, 0.0
    %v924 = vmax.f32 %v860, 0.0
    %v925 = vmax.f32 %v861, 0.0
    %v926 = vmax.f32 %v862, 0.0
    %v927 = vmax.f32 %v863, 0.0
    %v928 = vmax.f32 %v864, 0.0
    %v929 = vmax.f32 %v865, 0.0
    %v930 = vmax.f32 %v866, 0.0
    %v931 = vmax.f32 %v867, 0.0
    %v932 = vmax.f32 %v868, 0.0
    %v933 = vmax.f32 %v869, 0.0
    %v934 = vmax.f32 %v870, 0.0
    %v935 = vmax.f32 %v871, 0.0
    %v936 = vmax.f32 %v872, 0.0
    %v937 = vmax.f32 %v873, 0.0
    %v938 = vmax.f32 %v874, 0.0
    %v939 = vmax.f32 %v875, 0.0
    %v940 = vmax.f32 %v876, 0.0
    %v941 = vmax.f32 %v877, 0.0
    %v942 = vmax.f32 %v878, 0.0
    %v943 = vmax.f32 %v879, 0.0
    %v944 = vmax.f32 %v880, 0.0
    %v945 = vmax.f32 %v881, 0.0
    %v946 = vmax.f32 %v882, 0.0
    %v947 = vmax.f32 %v883, 0.0
    %v948 = vmax.f32 %v884, 0.0
    %v949 = vmax.f32 %v885, 0.0
    %v950 = vmax.f32 %v886, 0.0
    %v951 = vmax.f32 %v887, 0.0
    %v952 = vmax.f32 %v888, 0.0
    %v953 = vmax.f32 %v889, 0.0
    %v954 = vmax.f32 %v890, 0.0
    %v955 = vmax.f32 %v891, 0.0
    %v956 = vmax.f32 %v892, 0.0
    %v957 = vmax.f32 %v893, 0.0
    %958 = vst [vmem:[#allocation2] sm:$0xff] 0.0
    %959 = vst [vmem:[#allocation2 + $0x8] sm:$0xff] 0.0
    %960 = vst [vmem:[#allocation2 + $0x10] sm:$0x3] 0.0
    %961 = vst [vmem:[#allocation2 + $0x18] sm:$0xff] 0.0
    %962 = vst [vmem:[#allocation2 + $0x20] sm:$0xff] 0.0
    %963 = vst [vmem:[#allocation2 + $0x28] sm:$0x3] 0.0
    %964 = vst [vmem:[#allocation2 + $0x30] sm:$0xff] 0.0
    %965 = vst [vmem:[#allocation2 + $0x38] sm:$0xff] 0.0
    %966 = vst [vmem:[#allocation2 + $0x40] sm:$0x3] 0.0
    %967 = vst [vmem:[#allocation2 + $0x48] sm:$0xff] 0.0
    %968 = vst [vmem:[#allocation2 + $0x50] sm:$0xff] 0.0
    %969 = vst [vmem:[#allocation2 + $0x58] sm:$0x3] 0.0
    %970 = vst [vmem:[#allocation2 + $0x60] sm:$0xff] 0.0
    %971 = vst [vmem:[#allocation2 + $0x68] sm:$0xff] 0.0
    %972 = vst [vmem:[#allocation2 + $0x70] sm:$0x3] 0.0
    %973 = vst [vmem:[#allocation2 + $0x78] sm:$0xff] 0.0
    %974 = vst [vmem:[#allocation2 + $0x80] sm:$0xff] 0.0
    %975 = vst [vmem:[#allocation2 + $0x88] sm:$0x3] 0.0
    %976 = vst [vmem:[#allocation2 + $0x90] sm:$0xff] 0.0
    %977 = vst [vmem:[#allocation2 + $0x98] sm:$0xff] 0.0
    %978 = vst [vmem:[#allocation2 + $0xa0] sm:$0x3] 0.0
    %979 = vst [vmem:[#allocation2 + $0xa8] sm:$0xff] 0.0
    %980 = vst [vmem:[#allocation2 + $0xb0] sm:$0xff] 0.0
    %981 = vst [vmem:[#allocation2 + $0xb8] sm:$0x3] 0.0
    %982 = vst [vmem:[#allocation2 + $0xc0] sm:$0xff] 0.0
    %983 = vst [vmem:[#allocation2 + $0xc8] sm:$0xff] 0.0
    %984 = vst [vmem:[#allocation2 + $0xd0] sm:$0x3] 0.0
    %985 = vst [vmem:[#allocation2 + $0xd8] sm:$0xff] 0.0
    %986 = vst [vmem:[#allocation2 + $0xe0] sm:$0xff] 0.0
    %987 = vst [vmem:[#allocation2 + $0xe8] sm:$0x3] 0.0
    %988 = vst [vmem:[#allocation2 + $0xf0] sm:$0xff] 0.0
    %989 = vst [vmem:[#allocation2 + $0xf8] sm:$0xff] 0.0
    %990 = vst [vmem:[#allocation2 + $0x100] sm:$0x3] 0.0
    %991 = vst [vmem:[#allocation2 + $0x108] sm:$0xff] 0.0
    %992 = vst [vmem:[#allocation2 + $0x110] sm:$0xff] 0.0
    %993 = vst [vmem:[#allocation2 + $0x118] sm:$0x3] 0.0
    %994 = vst [vmem:[#allocation2 + $0x120] sm:$0xff] 0.0
    %995 = vst [vmem:[#allocation2 + $0x128] sm:$0xff] 0.0
    %996 = vst [vmem:[#allocation2 + $0x130] sm:$0x3] 0.0
    %997 = vst [vmem:[#allocation2 + $0x138] sm:$0xff] 0.0
    %998 = vst [vmem:[#allocation2 + $0x140] sm:$0xff] 0.0
    %999 = vst [vmem:[#allocation2 + $0x148] sm:$0x3] 0.0
    %1000 = vst [vmem:[#allocation2 + $0x150] sm:$0xff] 0.0
    %1001 = vst [vmem:[#allocation2 + $0x158] sm:$0xff] 0.0
    %1002 = vst [vmem:[#allocation2 + $0x160] sm:$0x3] 0.0
    %1003 = vst [vmem:[#allocation2 + $0x168] sm:$0xff] 0.0
    %1004 = vst [vmem:[#allocation2 + $0x170] sm:$0xff] 0.0
    %1005 = vst [vmem:[#allocation2 + $0x178] sm:$0x3] 0.0
    %1006 = vst [vmem:[#allocation2 + $0x180] sm:$0xff] 0.0
    %1007 = vst [vmem:[#allocation2 + $0x188] sm:$0xff] 0.0
    %1008 = vst [vmem:[#allocation2 + $0x190] sm:$0x3] 0.0
    %1009 = vst [vmem:[#allocation2 + $0x198] sm:$0xff] 0.0
    %1010 = vst [vmem:[#allocation2 + $0x1a0] sm:$0xff] 0.0
    %1011 = vst [vmem:[#allocation2 + $0x1a8] sm:$0x3] 0.0
    %1012 = vst [vmem:[#allocation2 + $0x1b0] sm:$0xff] 0.0
    %1013 = vst [vmem:[#allocation2 + $0x1b8] sm:$0xff] 0.0
    %1014 = vst [vmem:[#allocation2 + $0x1c0] sm:$0x3] 0.0
    %1015 = vst [vmem:[#allocation2 + $0x1c8] sm:$0xff] 0.0
    %1016 = vst [vmem:[#allocation2 + $0x1d0] sm:$0xff] 0.0
    %1017 = vst [vmem:[#allocation2 + $0x1d8] sm:$0x3] 0.0
    %1018 = vst [vmem:[#allocation2 + $0x1e0] sm:$0xff] 0.0
    %1019 = vst [vmem:[#allocation2 + $0x1e8] sm:$0xff] 0.0
    %1020 = vst [vmem:[#allocation2 + $0x1f0] sm:$0x3] 0.0
    %1021 = vst [vmem:[#allocation2 + $0x1f8] sm:$0xff] 0.0
    %1022 = vst [vmem:[#allocation2 + $0x200] sm:$0xff] 0.0
    %1023 = vst [vmem:[#allocation2 + $0x208] sm:$0x3] 0.0
    %1024 = vst [vmem:[#allocation2 + $0x210] sm:$0xff] 0.0
    %1025 = vst [vmem:[#allocation2 + $0x218] sm:$0xff] 0.0
    %1026 = vst [vmem:[#allocation2 + $0x220] sm:$0x3] 0.0
    %1027 = vst [vmem:[#allocation2 + $0x228] sm:$0xff] 0.0
    %1028 = vst [vmem:[#allocation2 + $0x230] sm:$0xff] 0.0
    %1029 = vst [vmem:[#allocation2 + $0x238] sm:$0x3] 0.0
    %1030 = vst [vmem:[#allocation2 + $0x240] sm:$0xff] 0.0
    %1031 = vst [vmem:[#allocation2 + $0x248] sm:$0xff] 0.0
    %1032 = vst [vmem:[#allocation2 + $0x250] sm:$0x3] 0.0
    %1033 = vst [vmem:[#allocation2 + $0x258] sm:$0xff] 0.0
    %1034 = vst [vmem:[#allocation2 + $0x260] sm:$0xff] 0.0
    %1035 = vst [vmem:[#allocation2 + $0x268] sm:$0x3] 0.0
    %1036 = vst [vmem:[#allocation2 + $0x270] sm:$0xff] 0.0
    %1037 = vst [vmem:[#allocation2 + $0x278] sm:$0xff] 0.0
    %1038 = vst [vmem:[#allocation2 + $0x280] sm:$0x3] 0.0
    %1039 = vst [vmem:[#allocation2 + $0x288] sm:$0xff] 0.0
    %1040 = vst [vmem:[#allocation2 + $0x290] sm:$0xff] 0.0
    %1041 = vst [vmem:[#allocation2 + $0x298] sm:$0x3] 0.0
    %1042 = vst [vmem:[#allocation2 + $0x2a0] sm:$0xff] 0.0
    %1043 = vst [vmem:[#allocation2 + $0x2a8] sm:$0xff] 0.0
    %1044 = vst [vmem:[#allocation2 + $0x2b0] sm:$0x3] 0.0
    %1045 = vst [vmem:[#allocation2 + $0x2b8] sm:$0xff] 0.0
    %1046 = vst [vmem:[#allocation2 + $0x2c0] sm:$0xff] 0.0
    %1047 = vst [vmem:[#allocation2 + $0x2c8] sm:$0x3] 0.0
    %1048 = vst [vmem:[#allocation2 + $0x2d0] sm:$0xff] 0.0
    %1049 = vst [vmem:[#allocation2 + $0x2d8] sm:$0xff] 0.0
    %1050 = vst [vmem:[#allocation2 + $0x2e0] sm:$0x3] 0.0
    %1051 = vst [vmem:[#allocation2 + $0x2e8] sm:$0xff] 0.0
    %1052 = vst [vmem:[#allocation2 + $0x2f0] sm:$0xff] 0.0
    %1053 = vst [vmem:[#allocation2 + $0x2f8] sm:$0x3] 0.0
    %1054 = vst [vmem:[#allocation2 + $0x300] sm:$0xff] 0.0
    %1055 = vst [vmem:[#allocation2 + $0x308] sm:$0xff] 0.0
    %1056 = vst [vmem:[#allocation2 + $0x310] sm:$0x3] 0.0
    %1057 = vst [vmem:[#allocation2 + $0x318] sm:$0xff] 0.0
    %1058 = vst [vmem:[#allocation2 + $0x320] sm:$0xff] 0.0
    %1059 = vst [vmem:[#allocation2 + $0x328] sm:$0x3] 0.0
    %1060 = vst [vmem:[#allocation2 + $0x330] sm:$0xff] 0.0
    %1061 = vst [vmem:[#allocation2 + $0x338] sm:$0xff] 0.0
    %1062 = vst [vmem:[#allocation2 + $0x340] sm:$0x3] 0.0
    %1063 = vst [vmem:[#allocation2 + $0x348] sm:$0xff] 0.0
    %1064 = vst [vmem:[#allocation2 + $0x350] sm:$0xff] 0.0
    %1065 = vst [vmem:[#allocation2 + $0x358] sm:$0x3] 0.0
    %s1066 = scalar_lea.vmem [#allocation2], 24
    %1067 = vst [vmem:[%s1066 + $0x1] sm:$0xff] %v894
    %1068 = vst [vmem:[%s1066 + $0x9] sm:$0xff] %v895
    %1069 = vst [vmem:[%s1066 + $0x19] sm:$0xff] %v896
    %1070 = vst [vmem:[%s1066 + $0x21] sm:$0xff] %v897
    %1071 = vst [vmem:[%s1066 + $0x31] sm:$0xff] %v898
    %1072 = vst [vmem:[%s1066 + $0x39] sm:$0xff] %v899
    %1073 = vst [vmem:[%s1066 + $0x49] sm:$0xff] %v900
    %1074 = vst [vmem:[%s1066 + $0x51] sm:$0xff] %v901
    %1075 = vst [vmem:[%s1066 + $0x61] sm:$0xff] %v902
    %1076 = vst [vmem:[%s1066 + $0x69] sm:$0xff] %v903
    %1077 = vst [vmem:[%s1066 + $0x79] sm:$0xff] %v904
    %1078 = vst [vmem:[%s1066 + $0x81] sm:$0xff] %v905
    %1079 = vst [vmem:[%s1066 + $0x91] sm:$0xff] %v906
    %1080 = vst [vmem:[%s1066 + $0x99] sm:$0xff] %v907
    %1081 = vst [vmem:[%s1066 + $0xa9] sm:$0xff] %v908
    %1082 = vst [vmem:[%s1066 + $0xb1] sm:$0xff] %v909
    %1083 = vst [vmem:[%s1066 + $0xc1] sm:$0xff] %v910
    %1084 = vst [vmem:[%s1066 + $0xc9] sm:$0xff] %v911
    %1085 = vst [vmem:[%s1066 + $0xd9] sm:$0xff] %v912
    %1086 = vst [vmem:[%s1066 + $0xe1] sm:$0xff] %v913
    %1087 = vst [vmem:[%s1066 + $0xf1] sm:$0xff] %v914
    %1088 = vst [vmem:[%s1066 + $0xf9] sm:$0xff] %v915
    %1089 = vst [vmem:[%s1066 + $0x109] sm:$0xff] %v916
    %1090 = vst [vmem:[%s1066 + $0x111] sm:$0xff] %v917
    %1091 = vst [vmem:[%s1066 + $0x121] sm:$0xff] %v918
    %1092 = vst [vmem:[%s1066 + $0x129] sm:$0xff] %v919
    %1093 = vst [vmem:[%s1066 + $0x139] sm:$0xff] %v920
    %1094 = vst [vmem:[%s1066 + $0x141] sm:$0xff] %v921
    %1095 = vst [vmem:[%s1066 + $0x151] sm:$0xff] %v922
    %1096 = vst [vmem:[%s1066 + $0x159] sm:$0xff] %v923
    %1097 = vst [vmem:[%s1066 + $0x169] sm:$0xff] %v924
    %1098 = vst [vmem:[%s1066 + $0x171] sm:$0xff] %v925
    %1099 = vst [vmem:[%s1066 + $0x1b1] sm:$0xff] %v926
    %1100 = vst [vmem:[%s1066 + $0x1b9] sm:$0xff] %v927
    %1101 = vst [vmem:[%s1066 + $0x1c9] sm:$0xff] %v928
    %1102 = vst [vmem:[%s1066 + $0x1d1] sm:$0xff] %v929
    %1103 = vst [vmem:[%s1066 + $0x1e1] sm:$0xff] %v930
    %1104 = vst [vmem:[%s1066 + $0x1e9] sm:$0xff] %v931
    %1105 = vst [vmem:[%s1066 + $0x1f9] sm:$0xff] %v932
    %1106 = vst [vmem:[%s1066 + $0x201] sm:$0xff] %v933
    %1107 = vst [vmem:[%s1066 + $0x211] sm:$0xff] %v934
    %1108 = vst [vmem:[%s1066 + $0x219] sm:$0xff] %v935
    %1109 = vst [vmem:[%s1066 + $0x229] sm:$0xff] %v936
    %1110 = vst [vmem:[%s1066 + $0x231] sm:$0xff] %v937
    %1111 = vst [vmem:[%s1066 + $0x241] sm:$0xff] %v938
    %1112 = vst [vmem:[%s1066 + $0x249] sm:$0xff] %v939
    %1113 = vst [vmem:[%s1066 + $0x259] sm:$0xff] %v940
    %1114 = vst [vmem:[%s1066 + $0x261] sm:$0xff] %v941
    %1115 = vst [vmem:[%s1066 + $0x271] sm:$0xff] %v942
    %1116 = vst [vmem:[%s1066 + $0x279] sm:$0xff] %v943
    %1117 = vst [vmem:[%s1066 + $0x289] sm:$0xff] %v944
    %1118 = vst [vmem:[%s1066 + $0x291] sm:$0xff] %v945
    %1119 = vst [vmem:[%s1066 + $0x2a1] sm:$0xff] %v946
    %1120 = vst [vmem:[%s1066 + $0x2a9] sm:$0xff] %v947
    %1121 = vst [vmem:[%s1066 + $0x2b9] sm:$0xff] %v948
    %1122 = vst [vmem:[%s1066 + $0x2c1] sm:$0xff] %v949
    %1123 = vst [vmem:[%s1066 + $0x2d1] sm:$0xff] %v950
    %1124 = vst [vmem:[%s1066 + $0x2d9] sm:$0xff] %v951
    %1125 = vst [vmem:[%s1066 + $0x2e9] sm:$0xff] %v952
    %1126 = vst [vmem:[%s1066 + $0x2f1] sm:$0xff] %v953
    %1127 = vst [vmem:[%s1066 + $0x301] sm:$0xff] %v954
    %1128 = vst [vmem:[%s1066 + $0x309] sm:$0xff] %v955
    %1129 = vst [vmem:[%s1066 + $0x319] sm:$0xff] %v956
    %1130 = vst [vmem:[%s1066 + $0x321] sm:$0xff] %v957
    %1131 = vst [vmem:[#allocation3] sm:$0xff] 0.0
    %1132 = vst [vmem:[#allocation3 + $0x8] sm:$0xff] 0.0
    %1133 = vst [vmem:[#allocation3 + $0x10] sm:$0xff] 0.0
    %1134 = vst [vmem:[#allocation3 + $0x18] sm:$0xff] 0.0
    %1135 = vst [vmem:[#allocation3 + $0x20] sm:$0xff] 0.0
    %1136 = vst [vmem:[#allocation3 + $0x28] sm:$0xff] 0.0
    %1137 = vst [vmem:[#allocation3 + $0x30] sm:$0xff] 0.0
    %1138 = vst [vmem:[#allocation3 + $0x38] sm:$0xff] 0.0
    %1139 = vst [vmem:[#allocation3 + $0x40] sm:$0xff] 0.0
    %1140 = vst [vmem:[#allocation3 + $0x48] sm:$0xff] 0.0
    %1141 = vst [vmem:[#allocation3 + $0x50] sm:$0xff] 0.0
    %1142 = vst [vmem:[#allocation3 + $0x58] sm:$0xff] 0.0
    %1143 = vst [vmem:[#allocation3 + $0x60] sm:$0xff] 0.0
    %1144 = vst [vmem:[#allocation3 + $0x68] sm:$0xff] 0.0
    %1145 = vst [vmem:[#allocation3 + $0x70] sm:$0xff] 0.0
    %1146 = vst [vmem:[#allocation3 + $0x78] sm:$0xff] 0.0
    %1147 = vst [vmem:[#allocation3 + $0x80] sm:$0xff] 0.0
    %1148 = vst [vmem:[#allocation3 + $0x88] sm:$0xff] 0.0
    %1149 = vst [vmem:[#allocation3 + $0x90] sm:$0xff] 0.0
    %1150 = vst [vmem:[#allocation3 + $0x98] sm:$0xff] 0.0
    %1151 = vst [vmem:[#allocation3 + $0xa0] sm:$0xff] 0.0
    %1152 = vst [vmem:[#allocation3 + $0xa8] sm:$0xff] 0.0
    %1153 = vst [vmem:[#allocation3 + $0xb0] sm:$0xff] 0.0
    %1154 = vst [vmem:[#allocation3 + $0xb8] sm:$0xff] 0.0
    %1155 = vst [vmem:[#allocation3 + $0xc0] sm:$0xff] 0.0
    %1156 = vst [vmem:[#allocation3 + $0xc8] sm:$0xff] 0.0
    %1157 = vst [vmem:[#allocation3 + $0xd0] sm:$0xff] 0.0
    %1158 = vst [vmem:[#allocation3 + $0xd8] sm:$0xff] 0.0
    %1159 = vst [vmem:[#allocation3 + $0xe0] sm:$0xff] 0.0
    %1160 = vst [vmem:[#allocation3 + $0xe8] sm:$0xff] 0.0
    %1161 = vst [vmem:[#allocation3 + $0xf0] sm:$0xff] 0.0
    %1162 = vst [vmem:[#allocation3 + $0xf8] sm:$0xff] 0.0
    %1163 = vst [vmem:[#allocation3 + $0x100] sm:$0xff] 0.0
    %1164 = vst [vmem:[#allocation3 + $0x108] sm:$0xff] 0.0
    %1165 = vst [vmem:[#allocation3 + $0x110] sm:$0xff] 0.0
    %1166 = vst [vmem:[#allocation3 + $0x118] sm:$0xff] 0.0
    %1167 = vst [vmem:[#allocation3 + $0x120] sm:$0xff] 0.0
    %1168 = vst [vmem:[#allocation3 + $0x128] sm:$0xff] 0.0
    %1169 = vst [vmem:[#allocation3 + $0x130] sm:$0xff] 0.0
    %1170 = vst [vmem:[#allocation3 + $0x138] sm:$0xff] 0.0
    %1171 = vst [vmem:[#allocation3 + $0x140] sm:$0xff] 0.0
    %1172 = vst [vmem:[#allocation3 + $0x148] sm:$0xff] 0.0
    %1173 = vst [vmem:[#allocation3 + $0x150] sm:$0xff] 0.0
    %1174 = vst [vmem:[#allocation3 + $0x158] sm:$0xff] 0.0
    %1175 = vst [vmem:[#allocation3 + $0x160] sm:$0xff] 0.0
    %1176 = vst [vmem:[#allocation3 + $0x168] sm:$0xff] 0.0
    %1177 = vst [vmem:[#allocation3 + $0x170] sm:$0xff] 0.0
    %1178 = vst [vmem:[#allocation3 + $0x178] sm:$0xff] 0.0
    %1179 = vst [vmem:[#allocation3 + $0x180] sm:$0xff] 0.0
    %1180 = vst [vmem:[#allocation3 + $0x188] sm:$0xff] 0.0
    %1181 = vst [vmem:[#allocation3 + $0x190] sm:$0xff] 0.0
    %1182 = vst [vmem:[#allocation3 + $0x198] sm:$0xff] 0.0
    %1183 = vst [vmem:[#allocation3 + $0x1a0] sm:$0xff] 0.0
    %1184 = vst [vmem:[#allocation3 + $0x1a8] sm:$0xff] 0.0
    %1185 = vst [vmem:[#allocation3 + $0x1b0] sm:$0xff] 0.0
    %1186 = vst [vmem:[#allocation3 + $0x1b8] sm:$0xff] 0.0
    %1187 = vst [vmem:[#allocation3 + $0x1c0] sm:$0xff] 0.0
    %1188 = vst [vmem:[#allocation3 + $0x1c8] sm:$0xff] 0.0
    %1189 = vst [vmem:[#allocation3 + $0x1d0] sm:$0xff] 0.0
    %1190 = vst [vmem:[#allocation3 + $0x1d8] sm:$0xff] 0.0
    %1191 = vst [vmem:[#allocation3 + $0x1e0] sm:$0xff] 0.0
    %1192 = vst [vmem:[#allocation3 + $0x1e8] sm:$0xff] 0.0
    %1193 = vst [vmem:[#allocation3 + $0x1f0] sm:$0xff] 0.0
    %1194 = vst [vmem:[#allocation3 + $0x1f8] sm:$0xff] 0.0
    %v1195 = vld [vmem:[#allocation2] sm:$0xff]
    %v1196 = vld [vmem:[#allocation2 + $0x8] sm:$0xff]
    %v1197 = vld [vmem:[#allocation2 + $0x18] sm:$0xff]
    %v1198 = vld [vmem:[#allocation2 + $0x20] sm:$0xff]
    %v1199 = vld [vmem:[#allocation2 + $0x30] sm:$0xff]
    %v1200 = vld [vmem:[#allocation2 + $0x38] sm:$0xff]
    %v1201 = vld [vmem:[#allocation2 + $0x48] sm:$0xff]
    %v1202 = vld [vmem:[#allocation2 + $0x50] sm:$0xff]
    %v1203 = vld [vmem:[#allocation2 + $0x60] sm:$0xff]
    %v1204 = vld [vmem:[#allocation2 + $0x68] sm:$0xff]
    %v1205 = vld [vmem:[#allocation2 + $0x78] sm:$0xff]
    %v1206 = vld [vmem:[#allocation2 + $0x80] sm:$0xff]
    %v1207 = vld [vmem:[#allocation2 + $0x90] sm:$0xff]
    %v1208 = vld [vmem:[#allocation2 + $0x98] sm:$0xff]
    %v1209 = vld [vmem:[#allocation2 + $0xa8] sm:$0xff]
    %v1210 = vld [vmem:[#allocation2 + $0xb0] sm:$0xff]
    %v1211 = vld [vmem:[#allocation2 + $0xc0] sm:$0xff]
    %v1212 = vld [vmem:[#allocation2 + $0xc8] sm:$0xff]
    %v1213 = vld [vmem:[#allocation2 + $0xd8] sm:$0xff]
    %v1214 = vld [vmem:[#allocation2 + $0xe0] sm:$0xff]
    %v1215 = vld [vmem:[#allocation2 + $0xf0] sm:$0xff]
    %v1216 = vld [vmem:[#allocation2 + $0xf8] sm:$0xff]
    %v1217 = vld [vmem:[#allocation2 + $0x108] sm:$0xff]
    %v1218 = vld [vmem:[#allocation2 + $0x110] sm:$0xff]
    %v1219 = vld [vmem:[#allocation2 + $0x120] sm:$0xff]
    %v1220 = vld [vmem:[#allocation2 + $0x128] sm:$0xff]
    %v1221 = vld [vmem:[#allocation2 + $0x138] sm:$0xff]
    %v1222 = vld [vmem:[#allocation2 + $0x140] sm:$0xff]
    %v1223 = vld [vmem:[#allocation2 + $0x150] sm:$0xff]
    %v1224 = vld [vmem:[#allocation2 + $0x158] sm:$0xff]
    %v1225 = vld [vmem:[#allocation2 + $0x168] sm:$0xff]
    %v1226 = vld [vmem:[#allocation2 + $0x170] sm:$0xff]
    %v1227 = vld [vmem:[#allocation2 + $0x1b0] sm:$0xff]
    %v1228 = vld [vmem:[#allocation2 + $0x1b8] sm:$0xff]
    %v1229 = vld [vmem:[#allocation2 + $0x1c8] sm:$0xff]
    %v1230 = vld [vmem:[#allocation2 + $0x1d0] sm:$0xff]
    %v1231 = vld [vmem:[#allocation2 + $0x1e0] sm:$0xff]
    %v1232 = vld [vmem:[#allocation2 + $0x1e8] sm:$0xff]
    %v1233 = vld [vmem:[#allocation2 + $0x1f8] sm:$0xff]
    %v1234 = vld [vmem:[#allocation2 + $0x200] sm:$0xff]
    %v1235 = vld [vmem:[#allocation2 + $0x210] sm:$0xff]
    %v1236 = vld [vmem:[#allocation2 + $0x218] sm:$0xff]
    %v1237 = vld [vmem:[#allocation2 + $0x228] sm:$0xff]
    %v1238 = vld [vmem:[#allocation2 + $0x230] sm:$0xff]
    %v1239 = vld [vmem:[#allocation2 + $0x240] sm:$0xff]
    %v1240 = vld [vmem:[#allocation2 + $0x248] sm:$0xff]
    %v1241 = vld [vmem:[#allocation2 + $0x258] sm:$0xff]
    %v1242 = vld [vmem:[#allocation2 + $0x260] sm:$0xff]
    %v1243 = vld [vmem:[#allocation2 + $0x270] sm:$0xff]
    %v1244 = vld [vmem:[#allocation2 + $0x278] sm:$0xff]
    %v1245 = vld [vmem:[#allocation2 + $0x288] sm:$0xff]
    %v1246 = vld [vmem:[#allocation2 + $0x290] sm:$0xff]
    %v1247 = vld [vmem:[#allocation2 + $0x2a0] sm:$0xff]
    %v1248 = vld [vmem:[#allocation2 + $0x2a8] sm:$0xff]
    %v1249 = vld [vmem:[#allocation2 + $0x2b8] sm:$0xff]
    %v1250 = vld [vmem:[#allocation2 + $0x2c0] sm:$0xff]
    %v1251 = vld [vmem:[#allocation2 + $0x2d0] sm:$0xff]
    %v1252 = vld [vmem:[#allocation2 + $0x2d8] sm:$0xff]
    %v1253 = vld [vmem:[#allocation2 + $0x2e8] sm:$0xff]
    %v1254 = vld [vmem:[#allocation2 + $0x2f0] sm:$0xff]
    %v1255 = vld [vmem:[#allocation2 + $0x300] sm:$0xff]
    %v1256 = vld [vmem:[#allocation2 + $0x308] sm:$0xff]
    %v1257 = vld [vmem:[#allocation2 + $0x318] sm:$0xff]
    %v1258 = vld [vmem:[#allocation2 + $0x320] sm:$0xff]
    %v1259 = vld [vmem:[#allocation3] sm:$0xff]
    %v1260 = vld [vmem:[#allocation3 + $0x8] sm:$0xff]
    %v1261 = vld [vmem:[#allocation3 + $0x10] sm:$0xff]
    %v1262 = vld [vmem:[#allocation3 + $0x18] sm:$0xff]
    %v1263 = vld [vmem:[#allocation3 + $0x20] sm:$0xff]
    %v1264 = vld [vmem:[#allocation3 + $0x28] sm:$0xff]
    %v1265 = vld [vmem:[#allocation3 + $0x30] sm:$0xff]
    %v1266 = vld [vmem:[#allocation3 + $0x38] sm:$0xff]
    %v1267 = vld [vmem:[#allocation3 + $0x40] sm:$0xff]
    %v1268 = vld [vmem:[#allocation3 + $0x48] sm:$0xff]
    %v1269 = vld [vmem:[#allocation3 + $0x50] sm:$0xff]
    %v1270 = vld [vmem:[#allocation3 + $0x58] sm:$0xff]
    %v1271 = vld [vmem:[#allocation3 + $0x60] sm:$0xff]
    %v1272 = vld [vmem:[#allocation3 + $0x68] sm:$0xff]
    %v1273 = vld [vmem:[#allocation3 + $0x70] sm:$0xff]
    %v1274 = vld [vmem:[#allocation3 + $0x78] sm:$0xff]
    %v1275 = vld [vmem:[#allocation3 + $0x80] sm:$0xff]
    %v1276 = vld [vmem:[#allocation3 + $0x88] sm:$0xff]
    %v1277 = vld [vmem:[#allocation3 + $0x90] sm:$0xff]
    %v1278 = vld [vmem:[#allocation3 + $0x98] sm:$0xff]
    %v1279 = vld [vmem:[#allocation3 + $0xa0] sm:$0xff]
    %v1280 = vld [vmem:[#allocation3 + $0xa8] sm:$0xff]
    %v1281 = vld [vmem:[#allocation3 + $0xb0] sm:$0xff]
    %v1282 = vld [vmem:[#allocation3 + $0xb8] sm:$0xff]
    %v1283 = vld [vmem:[#allocation3 + $0xc0] sm:$0xff]
    %v1284 = vld [vmem:[#allocation3 + $0xc8] sm:$0xff]
    %v1285 = vld [vmem:[#allocation3 + $0xd0] sm:$0xff]
    %v1286 = vld [vmem:[#allocation3 + $0xd8] sm:$0xff]
    %v1287 = vld [vmem:[#allocation3 + $0xe0] sm:$0xff]
    %v1288 = vld [vmem:[#allocation3 + $0xe8] sm:$0xff]
    %v1289 = vld [vmem:[#allocation3 + $0xf0] sm:$0xff]
    %v1290 = vld [vmem:[#allocation3 + $0xf8] sm:$0xff]
    %v1291 = vld [vmem:[#allocation3 + $0x100] sm:$0xff]
    %v1292 = vld [vmem:[#allocation3 + $0x108] sm:$0xff]
    %v1293 = vld [vmem:[#allocation3 + $0x110] sm:$0xff]
    %v1294 = vld [vmem:[#allocation3 + $0x118] sm:$0xff]
    %v1295 = vld [vmem:[#allocation3 + $0x120] sm:$0xff]
    %v1296 = vld [vmem:[#allocation3 + $0x128] sm:$0xff]
    %v1297 = vld [vmem:[#allocation3 + $0x130] sm:$0xff]
    %v1298 = vld [vmem:[#allocation3 + $0x138] sm:$0xff]
    %v1299 = vld [vmem:[#allocation3 + $0x140] sm:$0xff]
    %v1300 = vld [vmem:[#allocation3 + $0x148] sm:$0xff]
    %v1301 = vld [vmem:[#allocation3 + $0x150] sm:$0xff]
    %v1302 = vld [vmem:[#allocation3 + $0x158] sm:$0xff]
    %v1303 = vld [vmem:[#allocation3 + $0x160] sm:$0xff]
    %v1304 = vld [vmem:[#allocation3 + $0x168] sm:$0xff]
    %v1305 = vld [vmem:[#allocation3 + $0x170] sm:$0xff]
    %v1306 = vld [vmem:[#allocation3 + $0x178] sm:$0xff]
    %v1307 = vld [vmem:[#allocation3 + $0x180] sm:$0xff]
    %v1308 = vld [vmem:[#allocation3 + $0x188] sm:$0xff]
    %v1309 = vld [vmem:[#allocation3 + $0x190] sm:$0xff]
    %v1310 = vld [vmem:[#allocation3 + $0x198] sm:$0xff]
    %v1311 = vld [vmem:[#allocation3 + $0x1a0] sm:$0xff]
    %v1312 = vld [vmem:[#allocation3 + $0x1a8] sm:$0xff]
    %v1313 = vld [vmem:[#allocation3 + $0x1b0] sm:$0xff]
    %v1314 = vld [vmem:[#allocation3 + $0x1b8] sm:$0xff]
    %v1315 = vld [vmem:[#allocation3 + $0x1c0] sm:$0xff]
    %v1316 = vld [vmem:[#allocation3 + $0x1c8] sm:$0xff]
    %v1317 = vld [vmem:[#allocation3 + $0x1d0] sm:$0xff]
    %v1318 = vld [vmem:[#allocation3 + $0x1d8] sm:$0xff]
    %v1319 = vld [vmem:[#allocation3 + $0x1e0] sm:$0xff]
    %v1320 = vld [vmem:[#allocation3 + $0x1e8] sm:$0xff]
    %v1321 = vld [vmem:[#allocation3 + $0x1f0] sm:$0xff]
    %v1322 = vld [vmem:[#allocation3 + $0x1f8] sm:$0xff]
    %v1323 = vld [vmem:[#allocation9] sm:$0xff]
    %v1324 = vld [vmem:[#allocation9 + $0x8] sm:$0xff]
    %v1325 = vld [vmem:[#allocation9 + $0x10] sm:$0xff]
    %v1326 = vld [vmem:[#allocation9 + $0x18] sm:$0xff]
    %v1327 = vld [vmem:[#allocation9 + $0x20] sm:$0xff]
    %v1328 = vld [vmem:[#allocation9 + $0x28] sm:$0xff]
    %v1329 = vld [vmem:[#allocation9 + $0x30] sm:$0xff]
    %v1330 = vld [vmem:[#allocation9 + $0x38] sm:$0xff]
    %v1331 = vld [vmem:[#allocation9 + $0x40] sm:$0xff]
    %v1332 = vld [vmem:[#allocation9 + $0x48] sm:$0xff]
    %v1333 = vld [vmem:[#allocation9 + $0x50] sm:$0xff]
    %v1334 = vld [vmem:[#allocation9 + $0x58] sm:$0xff]
    %v1335 = vld [vmem:[#allocation9 + $0x60] sm:$0xff]
    %v1336 = vld [vmem:[#allocation9 + $0x68] sm:$0xff]
    %v1337 = vld [vmem:[#allocation9 + $0x70] sm:$0xff]
    %v1338 = vld [vmem:[#allocation9 + $0x78] sm:$0xff]
    %1339 = vmatpush.msra.mxu0 %v1338
    %1340 = vmatpush.msra.mxu0 %v1337
    %1341 = vmatpush.msra.mxu0 %v1336
    %1342 = vmatpush.msra.mxu0 %v1335
    %1343 = vmatpush.msra.mxu0 %v1334
    %1344 = vmatpush.msra.mxu0 %v1333
    %1345 = vmatpush.msra.mxu0 %v1332
    %1346 = vmatpush.msra.mxu0 %v1331
    %1347 = vmatpush.msra.mxu0 %v1330
    %1348 = vmatpush.msra.mxu0 %v1329
    %1349 = vmatpush.msra.mxu0 %v1328
    %1350 = vmatpush.msra.mxu0 %v1327
    %1351 = vmatpush.msra.mxu0 %v1326
    %1352 = vmatpush.msra.mxu0 %v1325
    %1353 = vmatpush.msra.mxu0 %v1324
    %1354 = vmatpush.msra.mxu0 %v1323
    %1355 = vmatmul.f32.gmra.mxu0 %v1195
    %v1356 = vpop.f32.mrf.mxu0
    %v1357 = vadd.f32 0.0, %v1356
    %1358 = vmatmul.f32.gmra.mxu0 %v1196
    %v1359 = vpop.f32.mrf.mxu0
    %v1360 = vadd.f32 0.0, %v1359
    %1361 = vmatmul.f32.gmra.mxu0 %v1197
    %v1362 = vpop.f32.mrf.mxu0
    %v1363 = vadd.f32 0.0, %v1362
    %1364 = vmatmul.f32.gmra.mxu0 %v1198
    %v1365 = vpop.f32.mrf.mxu0
    %v1366 = vadd.f32 0.0, %v1365
    %1367 = vmatmul.f32.gmra.mxu0 %v1199
    %v1368 = vpop.f32.mrf.mxu0
    %v1369 = vadd.f32 0.0, %v1368
    %1370 = vmatmul.f32.gmra.mxu0 %v1200
    %v1371 = vpop.f32.mrf.mxu0
    %v1372 = vadd.f32 0.0, %v1371
    %1373 = vmatmul.f32.gmra.mxu0 %v1201
    %v1374 = vpop.f32.mrf.mxu0
    %v1375 = vadd.f32 0.0, %v1374
    %1376 = vmatmul.f32.gmra.mxu0 %v1202
    %v1377 = vpop.f32.mrf.mxu0
    %v1378 = vadd.f32 0.0, %v1377
    %1379 = vmatmul.f32.gmra.mxu0 %v1203
    %v1380 = vpop.f32.mrf.mxu0
    %v1381 = vadd.f32 0.0, %v1380
    %1382 = vmatmul.f32.gmra.mxu0 %v1204
    %v1383 = vpop.f32.mrf.mxu0
    %v1384 = vadd.f32 0.0, %v1383
    %1385 = vmatmul.f32.gmra.mxu0 %v1205
    %v1386 = vpop.f32.mrf.mxu0
    %v1387 = vadd.f32 0.0, %v1386
    %1388 = vmatmul.f32.gmra.mxu0 %v1206
    %v1389 = vpop.f32.mrf.mxu0
    %v1390 = vadd.f32 0.0, %v1389
    %1391 = vmatmul.f32.gmra.mxu0 %v1207
    %v1392 = vpop.f32.mrf.mxu0
    %v1393 = vadd.f32 0.0, %v1392
    %1394 = vmatmul.f32.gmra.mxu0 %v1208
    %v1395 = vpop.f32.mrf.mxu0
    %v1396 = vadd.f32 0.0, %v1395
    %1397 = vmatmul.f32.gmra.mxu0 %v1209
    %v1398 = vpop.f32.mrf.mxu0
    %v1399 = vadd.f32 0.0, %v1398
    %1400 = vmatmul.f32.gmra.mxu0 %v1210
    %v1401 = vpop.f32.mrf.mxu0
    %v1402 = vadd.f32 0.0, %v1401
    %1403 = vmatmul.f32.gmra.mxu0 %v1211
    %v1404 = vpop.f32.mrf.mxu0
    %v1405 = vadd.f32 0.0, %v1404
    %1406 = vmatmul.f32.gmra.mxu0 %v1212
    %v1407 = vpop.f32.mrf.mxu0
    %v1408 = vadd.f32 0.0, %v1407
    %1409 = vmatmul.f32.gmra.mxu0 %v1213
    %v1410 = vpop.f32.mrf.mxu0
    %v1411 = vadd.f32 0.0, %v1410
    %1412 = vmatmul.f32.gmra.mxu0 %v1214
    %v1413 = vpop.f32.mrf.mxu0
    %v1414 = vadd.f32 0.0, %v1413
    %1415 = vmatmul.f32.gmra.mxu0 %v1215
    %v1416 = vpop.f32.mrf.mxu0
    %v1417 = vadd.f32 0.0, %v1416
    %1418 = vmatmul.f32.gmra.mxu0 %v1216
    %v1419 = vpop.f32.mrf.mxu0
    %v1420 = vadd.f32 0.0, %v1419
    %1421 = vmatmul.f32.gmra.mxu0 %v1217
    %v1422 = vpop.f32.mrf.mxu0
    %v1423 = vadd.f32 0.0, %v1422
    %1424 = vmatmul.f32.gmra.mxu0 %v1218
    %v1425 = vpop.f32.mrf.mxu0
    %v1426 = vadd.f32 0.0, %v1425
    %1427 = vmatmul.f32.gmra.mxu0 %v1219
    %v1428 = vpop.f32.mrf.mxu0
    %v1429 = vadd.f32 0.0, %v1428
    %1430 = vmatmul.f32.gmra.mxu0 %v1220
    %v1431 = vpop.f32.mrf.mxu0
    %v1432 = vadd.f32 0.0, %v1431
    %1433 = vmatmul.f32.gmra.mxu0 %v1221
    %v1434 = vpop.f32.mrf.mxu0
    %v1435 = vadd.f32 0.0, %v1434
    %1436 = vmatmul.f32.gmra.mxu0 %v1222
    %v1437 = vpop.f32.mrf.mxu0
    %v1438 = vadd.f32 0.0, %v1437
    %1439 = vmatmul.f32.gmra.mxu0 %v1223
    %v1440 = vpop.f32.mrf.mxu0
    %v1441 = vadd.f32 0.0, %v1440
    %1442 = vmatmul.f32.gmra.mxu0 %v1224
    %v1443 = vpop.f32.mrf.mxu0
    %v1444 = vadd.f32 0.0, %v1443
    %1445 = vmatmul.f32.gmra.mxu0 %v1225
    %v1446 = vpop.f32.mrf.mxu0
    %v1447 = vadd.f32 0.0, %v1446
    %1448 = vmatmul.f32.gmra.mxu0 %v1226
    %v1449 = vpop.f32.mrf.mxu0
    %v1450 = vadd.f32 0.0, %v1449
    %1451 = vmatmul.f32.gmra.mxu0 %v1227
    %v1452 = vpop.f32.mrf.mxu0
    %v1453 = vadd.f32 0.0, %v1452
    %1454 = vmatmul.f32.gmra.mxu0 %v1228
    %v1455 = vpop.f32.mrf.mxu0
    %v1456 = vadd.f32 0.0, %v1455
    %1457 = vmatmul.f32.gmra.mxu0 %v1229
    %v1458 = vpop.f32.mrf.mxu0
    %v1459 = vadd.f32 0.0, %v1458
    %1460 = vmatmul.f32.gmra.mxu0 %v1230
    %v1461 = vpop.f32.mrf.mxu0
    %v1462 = vadd.f32 0.0, %v1461
    %1463 = vmatmul.f32.gmra.mxu0 %v1231
    %v1464 = vpop.f32.mrf.mxu0
    %v1465 = vadd.f32 0.0, %v1464
    %1466 = vmatmul.f32.gmra.mxu0 %v1232
    %v1467 = vpop.f32.mrf.mxu0
    %v1468 = vadd.f32 0.0, %v1467
    %1469 = vmatmul.f32.gmra.mxu0 %v1233
    %v1470 = vpop.f32.mrf.mxu0
    %v1471 = vadd.f32 0.0, %v1470
    %1472 = vmatmul.f32.gmra.mxu0 %v1234
    %v1473 = vpop.f32.mrf.mxu0
    %v1474 = vadd.f32 0.0, %v1473
    %1475 = vmatmul.f32.gmra.mxu0 %v1235
    %v1476 = vpop.f32.mrf.mxu0
    %v1477 = vadd.f32 0.0, %v1476
    %1478 = vmatmul.f32.gmra.mxu0 %v1236
    %v1479 = vpop.f32.mrf.mxu0
    %v1480 = vadd.f32 0.0, %v1479
    %1481 = vmatmul.f32.gmra.mxu0 %v1237
    %v1482 = vpop.f32.mrf.mxu0
    %v1483 = vadd.f32 0.0, %v1482
    %1484 = vmatmul.f32.gmra.mxu0 %v1238
    %v1485 = vpop.f32.mrf.mxu0
    %v1486 = vadd.f32 0.0, %v1485
    %1487 = vmatmul.f32.gmra.mxu0 %v1239
    %v1488 = vpop.f32.mrf.mxu0
    %v1489 = vadd.f32 0.0, %v1488
    %1490 = vmatmul.f32.gmra.mxu0 %v1240
    %v1491 = vpop.f32.mrf.mxu0
    %v1492 = vadd.f32 0.0, %v1491
    %1493 = vmatmul.f32.gmra.mxu0 %v1241
    %v1494 = vpop.f32.mrf.mxu0
    %v1495 = vadd.f32 0.0, %v1494
    %1496 = vmatmul.f32.gmra.mxu0 %v1242
    %v1497 = vpop.f32.mrf.mxu0
    %v1498 = vadd.f32 0.0, %v1497
    %1499 = vmatmul.f32.gmra.mxu0 %v1243
    %v1500 = vpop.f32.mrf.mxu0
    %v1501 = vadd.f32 0.0, %v1500
    %1502 = vmatmul.f32.gmra.mxu0 %v1244
    %v1503 = vpop.f32.mrf.mxu0
    %v1504 = vadd.f32 0.0, %v1503
    %1505 = vmatmul.f32.gmra.mxu0 %v1245
    %v1506 = vpop.f32.mrf.mxu0
    %v1507 = vadd.f32 0.0, %v1506
    %1508 = vmatmul.f32.gmra.mxu0 %v1246
    %v1509 = vpop.f32.mrf.mxu0
    %v1510 = vadd.f32 0.0, %v1509
    %1511 = vmatmul.f32.gmra.mxu0 %v1247
    %v1512 = vpop.f32.mrf.mxu0
    %v1513 = vadd.f32 0.0, %v1512
    %1514 = vmatmul.f32.gmra.mxu0 %v1248
    %v1515 = vpop.f32.mrf.mxu0
    %v1516 = vadd.f32 0.0, %v1515
    %1517 = vmatmul.f32.gmra.mxu0 %v1249
    %v1518 = vpop.f32.mrf.mxu0
    %v1519 = vadd.f32 0.0, %v1518
    %1520 = vmatmul.f32.gmra.mxu0 %v1250
    %v1521 = vpop.f32.mrf.mxu0
    %v1522 = vadd.f32 0.0, %v1521
    %1523 = vmatmul.f32.gmra.mxu0 %v1251
    %v1524 = vpop.f32.mrf.mxu0
    %v1525 = vadd.f32 0.0, %v1524
    %1526 = vmatmul.f32.gmra.mxu0 %v1252
    %v1527 = vpop.f32.mrf.mxu0
    %v1528 = vadd.f32 0.0, %v1527
    %1529 = vmatmul.f32.gmra.mxu0 %v1253
    %v1530 = vpop.f32.mrf.mxu0
    %v1531 = vadd.f32 0.0, %v1530
    %1532 = vmatmul.f32.gmra.mxu0 %v1254
    %v1533 = vpop.f32.mrf.mxu0
    %v1534 = vadd.f32 0.0, %v1533
    %1535 = vmatmul.f32.gmra.mxu0 %v1255
    %v1536 = vpop.f32.mrf.mxu0
    %v1537 = vadd.f32 0.0, %v1536
    %1538 = vmatmul.f32.gmra.mxu0 %v1256
    %v1539 = vpop.f32.mrf.mxu0
    %v1540 = vadd.f32 0.0, %v1539
    %1541 = vmatmul.f32.gmra.mxu0 %v1257
    %v1542 = vpop.f32.mrf.mxu0
    %v1543 = vadd.f32 0.0, %v1542
    %1544 = vmatmul.f32.gmra.mxu0 %v1258
    %v1545 = vpop.f32.mrf.mxu0
    %v1546 = vadd.f32 0.0, %v1545
    %1547 = vdwg.mxu0
    %v1548 = vadd.f32 %v1259, %v1357
    %v1549 = vadd.f32 %v1260, %v1360
    %v1550 = vadd.f32 %v1261, %v1363
    %v1551 = vadd.f32 %v1262, %v1366
    %v1552 = vadd.f32 %v1263, %v1369
    %v1553 = vadd.f32 %v1264, %v1372
    %v1554 = vadd.f32 %v1265, %v1375
    %v1555 = vadd.f32 %v1266, %v1378
    %v1556 = vadd.f32 %v1267, %v1381
    %v1557 = vadd.f32 %v1268, %v1384
    %v1558 = vadd.f32 %v1269, %v1387
    %v1559 = vadd.f32 %v1270, %v1390
    %v1560 = vadd.f32 %v1271, %v1393
    %v1561 = vadd.f32 %v1272, %v1396
    %v1562 = vadd.f32 %v1273, %v1399
    %v1563 = vadd.f32 %v1274, %v1402
    %v1564 = vadd.f32 %v1275, %v1405
    %v1565 = vadd.f32 %v1276, %v1408
    %v1566 = vadd.f32 %v1277, %v1411
    %v1567 = vadd.f32 %v1278, %v1414
    %v1568 = vadd.f32 %v1279, %v1417
    %v1569 = vadd.f32 %v1280, %v1420
    %v1570 = vadd.f32 %v1281, %v1423
    %v1571 = vadd.f32 %v1282, %v1426
    %v1572 = vadd.f32 %v1283, %v1429
    %v1573 = vadd.f32 %v1284, %v1432
    %v1574 = vadd.f32 %v1285, %v1435
    %v1575 = vadd.f32 %v1286, %v1438
    %v1576 = vadd.f32 %v1287, %v1441
    %v1577 = vadd.f32 %v1288, %v1444
    %v1578 = vadd.f32 %v1289, %v1447
    %v1579 = vadd.f32 %v1290, %v1450
    %v1580 = vadd.f32 %v1291, %v1453
    %v1581 = vadd.f32 %v1292, %v1456
    %v1582 = vadd.f32 %v1293, %v1459
    %v1583 = vadd.f32 %v1294, %v1462
    %v1584 = vadd.f32 %v1295, %v1465
    %v1585 = vadd.f32 %v1296, %v1468
    %v1586 = vadd.f32 %v1297, %v1471
    %v1587 = vadd.f32 %v1298, %v1474
    %v1588 = vadd.f32 %v1299, %v1477
    %v1589 = vadd.f32 %v1300, %v1480
    %v1590 = vadd.f32 %v1301, %v1483
    %v1591 = vadd.f32 %v1302, %v1486
    %v1592 = vadd.f32 %v1303, %v1489
    %v1593 = vadd.f32 %v1304, %v1492
    %v1594 = vadd.f32 %v1305, %v1495
    %v1595 = vadd.f32 %v1306, %v1498
    %v1596 = vadd.f32 %v1307, %v1501
    %v1597 = vadd.f32 %v1308, %v1504
    %v1598 = vadd.f32 %v1309, %v1507
    %v1599 = vadd.f32 %v1310, %v1510
    %v1600 = vadd.f32 %v1311, %v1513
    %v1601 = vadd.f32 %v1312, %v1516
    %v1602 = vadd.f32 %v1313, %v1519
    %v1603 = vadd.f32 %v1314, %v1522
    %v1604 = vadd.f32 %v1315, %v1525
    %v1605 = vadd.f32 %v1316, %v1528
    %v1606 = vadd.f32 %v1317, %v1531
    %v1607 = vadd.f32 %v1318, %v1534
    %v1608 = vadd.f32 %v1319, %v1537
    %v1609 = vadd.f32 %v1320, %v1540
    %v1610 = vadd.f32 %v1321, %v1543
    %v1611 = vadd.f32 %v1322, %v1546
    %1612 = vst [vmem:[#allocation3] sm:$0xff] %v1548
    %1613 = vst [vmem:[#allocation3 + $0x8] sm:$0xff] %v1549
    %1614 = vst [vmem:[#allocation3 + $0x10] sm:$0xff] %v1550
    %1615 = vst [vmem:[#allocation3 + $0x18] sm:$0xff] %v1551
    %1616 = vst [vmem:[#allocation3 + $0x20] sm:$0xff] %v1552
    %1617 = vst [vmem:[#allocation3 + $0x28] sm:$0xff] %v1553
    %1618 = vst [vmem:[#allocation3 + $0x30] sm:$0xff] %v1554
    %1619 = vst [vmem:[#allocation3 + $0x38] sm:$0xff] %v1555
    %1620 = vst [vmem:[#allocation3 + $0x40] sm:$0xff] %v1556
    %1621 = vst [vmem:[#allocation3 + $0x48] sm:$0xff] %v1557
    %1622 = vst [vmem:[#allocation3 + $0x50] sm:$0xff] %v1558
    %1623 = vst [vmem:[#allocation3 + $0x58] sm:$0xff] %v1559
    %1624 = vst [vmem:[#allocation3 + $0x60] sm:$0xff] %v1560
    %1625 = vst [vmem:[#allocation3 + $0x68] sm:$0xff] %v1561
    %1626 = vst [vmem:[#allocation3 + $0x70] sm:$0xff] %v1562
    %1627 = vst [vmem:[#allocation3 + $0x78] sm:$0xff] %v1563
    %1628 = vst [vmem:[#allocation3 + $0x80] sm:$0xff] %v1564
    %1629 = vst [vmem:[#allocation3 + $0x88] sm:$0xff] %v1565
    %1630 = vst [vmem:[#allocation3 + $0x90] sm:$0xff] %v1566
    %1631 = vst [vmem:[#allocation3 + $0x98] sm:$0xff] %v1567
    %1632 = vst [vmem:[#allocation3 + $0xa0] sm:$0xff] %v1568
    %1633 = vst [vmem:[#allocation3 + $0xa8] sm:$0xff] %v1569
    %1634 = vst [vmem:[#allocation3 + $0xb0] sm:$0xff] %v1570
    %1635 = vst [vmem:[#allocation3 + $0xb8] sm:$0xff] %v1571
    %1636 = vst [vmem:[#allocation3 + $0xc0] sm:$0xff] %v1572
    %1637 = vst [vmem:[#allocation3 + $0xc8] sm:$0xff] %v1573
    %1638 = vst [vmem:[#allocation3 + $0xd0] sm:$0xff] %v1574
    %1639 = vst [vmem:[#allocation3 + $0xd8] sm:$0xff] %v1575
    %1640 = vst [vmem:[#allocation3 + $0xe0] sm:$0xff] %v1576
    %1641 = vst [vmem:[#allocation3 + $0xe8] sm:$0xff] %v1577
    %1642 = vst [vmem:[#allocation3 + $0xf0] sm:$0xff] %v1578
    %1643 = vst [vmem:[#allocation3 + $0xf8] sm:$0xff] %v1579
    %1644 = vst [vmem:[#allocation3 + $0x100] sm:$0xff] %v1580
    %1645 = vst [vmem:[#allocation3 + $0x108] sm:$0xff] %v1581
    %1646 = vst [vmem:[#allocation3 + $0x110] sm:$0xff] %v1582
    %1647 = vst [vmem:[#allocation3 + $0x118] sm:$0xff] %v1583
    %1648 = vst [vmem:[#allocation3 + $0x120] sm:$0xff] %v1584
    %1649 = vst [vmem:[#allocation3 + $0x128] sm:$0xff] %v1585
    %1650 = vst [vmem:[#allocation3 + $0x130] sm:$0xff] %v1586
    %1651 = vst [vmem:[#allocation3 + $0x138] sm:$0xff] %v1587
    %1652 = vst [vmem:[#allocation3 + $0x140] sm:$0xff] %v1588
    %1653 = vst [vmem:[#allocation3 + $0x148] sm:$0xff] %v1589
    %1654 = vst [vmem:[#allocation3 + $0x150] sm:$0xff] %v1590
    %1655 = vst [vmem:[#allocation3 + $0x158] sm:$0xff] %v1591
    %1656 = vst [vmem:[#allocation3 + $0x160] sm:$0xff] %v1592
    %1657 = vst [vmem:[#allocation3 + $0x168] sm:$0xff] %v1593
    %1658 = vst [vmem:[#allocation3 + $0x170] sm:$0xff] %v1594
    %1659 = vst [vmem:[#allocation3 + $0x178] sm:$0xff] %v1595
    %1660 = vst [vmem:[#allocation3 + $0x180] sm:$0xff] %v1596
    %1661 = vst [vmem:[#allocation3 + $0x188] sm:$0xff] %v1597
    %1662 = vst [vmem:[#allocation3 + $0x190] sm:$0xff] %v1598
    %1663 = vst [vmem:[#allocation3 + $0x198] sm:$0xff] %v1599
    %1664 = vst [vmem:[#allocation3 + $0x1a0] sm:$0xff] %v1600
    %1665 = vst [vmem:[#allocation3 + $0x1a8] sm:$0xff] %v1601
    %1666 = vst [vmem:[#allocation3 + $0x1b0] sm:$0xff] %v1602
    %1667 = vst [vmem:[#allocation3 + $0x1b8] sm:$0xff] %v1603
    %1668 = vst [vmem:[#allocation3 + $0x1c0] sm:$0xff] %v1604
    %1669 = vst [vmem:[#allocation3 + $0x1c8] sm:$0xff] %v1605
    %1670 = vst [vmem:[#allocation3 + $0x1d0] sm:$0xff] %v1606
    %1671 = vst [vmem:[#allocation3 + $0x1d8] sm:$0xff] %v1607
    %1672 = vst [vmem:[#allocation3 + $0x1e0] sm:$0xff] %v1608
    %1673 = vst [vmem:[#allocation3 + $0x1e8] sm:$0xff] %v1609
    %1674 = vst [vmem:[#allocation3 + $0x1f0] sm:$0xff] %v1610
    %1675 = vst [vmem:[#allocation3 + $0x1f8] sm:$0xff] %v1611
    %v1676 = vld [vmem:[#allocation2 + $0x1] sm:$0xff]
    %v1677 = vld [vmem:[#allocation2 + $0x9] sm:$0xff]
    %v1678 = vld [vmem:[#allocation2 + $0x19] sm:$0xff]
    %v1679 = vld [vmem:[#allocation2 + $0x21] sm:$0xff]
    %v1680 = vld [vmem:[#allocation2 + $0x31] sm:$0xff]
    %v1681 = vld [vmem:[#allocation2 + $0x39] sm:$0xff]
    %v1682 = vld [vmem:[#allocation2 + $0x49] sm:$0xff]
    %v1683 = vld [vmem:[#allocation2 + $0x51] sm:$0xff]
    %v1684 = vld [vmem:[#allocation2 + $0x61] sm:$0xff]
    %v1685 = vld [vmem:[#allocation2 + $0x69] sm:$0xff]
    %v1686 = vld [vmem:[#allocation2 + $0x79] sm:$0xff]
    %v1687 = vld [vmem:[#allocation2 + $0x81] sm:$0xff]
    %v1688 = vld [vmem:[#allocation2 + $0x91] sm:$0xff]
    %v1689 = vld [vmem:[#allocation2 + $0x99] sm:$0xff]
    %v1690 = vld [vmem:[#allocation2 + $0xa9] sm:$0xff]
    %v1691 = vld [vmem:[#allocation2 + $0xb1] sm:$0xff]
    %v1692 = vld [vmem:[#allocation2 + $0xc1] sm:$0xff]
    %v1693 = vld [vmem:[#allocation2 + $0xc9] sm:$0xff]
    %v1694 = vld [vmem:[#allocation2 + $0xd9] sm:$0xff]
    %v1695 = vld [vmem:[#allocation2 + $0xe1] sm:$0xff]
    %v1696 = vld [vmem:[#allocation2 + $0xf1] sm:$0xff]
    %v1697 = vld [vmem:[#allocation2 + $0xf9] sm:$0xff]
    %v1698 = vld [vmem:[#allocation2 + $0x109] sm:$0xff]
    %v1699 = vld [vmem:[#allocation2 + $0x111] sm:$0xff]
    %v1700 = vld [vmem:[#allocation2 + $0x121] sm:$0xff]
    %v1701 = vld [vmem:[#allocation2 + $0x129] sm:$0xff]
    %v1702 = vld [vmem:[#allocation2 + $0x139] sm:$0xff]
    %v1703 = vld [vmem:[#allocation2 + $0x141] sm:$0xff]
    %v1704 = vld [vmem:[#allocation2 + $0x151] sm:$0xff]
    %v1705 = vld [vmem:[#allocation2 + $0x159] sm:$0xff]
    %v1706 = vld [vmem:[#allocation2 + $0x169] sm:$0xff]
    %v1707 = vld [vmem:[#allocation2 + $0x171] sm:$0xff]
    %v1708 = vld [vmem:[#allocation2 + $0x1b1] sm:$0xff]
    %v1709 = vld [vmem:[#allocation2 + $0x1b9] sm:$0xff]
    %v1710 = vld [vmem:[#allocation2 + $0x1c9] sm:$0xff]
    %v1711 = vld [vmem:[#allocation2 + $0x1d1] sm:$0xff]
    %v1712 = vld [vmem:[#allocation2 + $0x1e1] sm:$0xff]
    %v1713 = vld [vmem:[#allocation2 + $0x1e9] sm:$0xff]
    %v1714 = vld [vmem:[#allocation2 + $0x1f9] sm:$0xff]
    %v1715 = vld [vmem:[#allocation2 + $0x201] sm:$0xff]
    %v1716 = vld [vmem:[#allocation2 + $0x211] sm:$0xff]
    %v1717 = vld [vmem:[#allocation2 + $0x219] sm:$0xff]
    %v1718 = vld [vmem:[#allocation2 + $0x229] sm:$0xff]
    %v1719 = vld [vmem:[#allocation2 + $0x231] sm:$0xff]
    %v1720 = vld [vmem:[#allocation2 + $0x241] sm:$0xff]
    %v1721 = vld [vmem:[#allocation2 + $0x249] sm:$0xff]
    %v1722 = vld [vmem:[#allocation2 + $0x259] sm:$0xff]
    %v1723 = vld [vmem:[#allocation2 + $0x261] sm:$0xff]
    %v1724 = vld [vmem:[#allocation2 + $0x271] sm:$0xff]
    %v1725 = vld [vmem:[#allocation2 + $0x279] sm:$0xff]
    %v1726 = vld [vmem:[#allocation2 + $0x289] sm:$0xff]
    %v1727 = vld [vmem:[#allocation2 + $0x291] sm:$0xff]
    %v1728 = vld [vmem:[#allocation2 + $0x2a1] sm:$0xff]
    %v1729 = vld [vmem:[#allocation2 + $0x2a9] sm:$0xff]
    %v1730 = vld [vmem:[#allocation2 + $0x2b9] sm:$0xff]
    %v1731 = vld [vmem:[#allocation2 + $0x2c1] sm:$0xff]
    %v1732 = vld [vmem:[#allocation2 + $0x2d1] sm:$0xff]
    %v1733 = vld [vmem:[#allocation2 + $0x2d9] sm:$0xff]
    %v1734 = vld [vmem:[#allocation2 + $0x2e9] sm:$0xff]
    %v1735 = vld [vmem:[#allocation2 + $0x2f1] sm:$0xff]
    %v1736 = vld [vmem:[#allocation2 + $0x301] sm:$0xff]
    %v1737 = vld [vmem:[#allocation2 + $0x309] sm:$0xff]
    %v1738 = vld [vmem:[#allocation2 + $0x319] sm:$0xff]
    %v1739 = vld [vmem:[#allocation2 + $0x321] sm:$0xff]
    %v1740 = vld [vmem:[#allocation3] sm:$0xff]
    %v1741 = vld [vmem:[#allocation3 + $0x8] sm:$0xff]
    %v1742 = vld [vmem:[#allocation3 + $0x10] sm:$0xff]
    %v1743 = vld [vmem:[#allocation3 + $0x18] sm:$0xff]
    %v1744 = vld [vmem:[#allocation3 + $0x20] sm:$0xff]
    %v1745 = vld [vmem:[#allocation3 + $0x28] sm:$0xff]
    %v1746 = vld [vmem:[#allocation3 + $0x30] sm:$0xff]
    %v1747 = vld [vmem:[#allocation3 + $0x38] sm:$0xff]
    %v1748 = vld [vmem:[#allocation3 + $0x40] sm:$0xff]
    %v1749 = vld [vmem:[#allocation3 + $0x48] sm:$0xff]
    %v1750 = vld [vmem:[#allocation3 + $0x50] sm:$0xff]
    %v1751 = vld [vmem:[#allocation3 + $0x58] sm:$0xff]
    %v1752 = vld [vmem:[#allocation3 + $0x60] sm:$0xff]
    %v1753 = vld [vmem:[#allocation3 + $0x68] sm:$0xff]
    %v1754 = vld [vmem:[#allocation3 + $0x70] sm:$0xff]
    %v1755 = vld [vmem:[#allocation3 + $0x78] sm:$0xff]
    %v1756 = vld [vmem:[#allocation3 + $0x80] sm:$0xff]
    %v1757 = vld [vmem:[#allocation3 + $0x88] sm:$0xff]
    %v1758 = vld [vmem:[#allocation3 + $0x90] sm:$0xff]
    %v1759 = vld [vmem:[#allocation3 + $0x98] sm:$0xff]
    %v1760 = vld [vmem:[#allocation3 + $0xa0] sm:$0xff]
    %v1761 = vld [vmem:[#allocation3 + $0xa8] sm:$0xff]
    %v1762 = vld [vmem:[#allocation3 + $0xb0] sm:$0xff]
    %v1763 = vld [vmem:[#allocation3 + $0xb8] sm:$0xff]
    %v1764 = vld [vmem:[#allocation3 + $0xc0] sm:$0xff]
    %v1765 = vld [vmem:[#allocation3 + $0xc8] sm:$0xff]
    %v1766 = vld [vmem:[#allocation3 + $0xd0] sm:$0xff]
    %v1767 = vld [vmem:[#allocation3 + $0xd8] sm:$0xff]
    %v1768 = vld [vmem:[#allocation3 + $0xe0] sm:$0xff]
    %v1769 = vld [vmem:[#allocation3 + $0xe8] sm:$0xff]
    %v1770 = vld [vmem:[#allocation3 + $0xf0] sm:$0xff]
    %v1771 = vld [vmem:[#allocation3 + $0xf8] sm:$0xff]
    %v1772 = vld [vmem:[#allocation3 + $0x100] sm:$0xff]
    %v1773 = vld [vmem:[#allocation3 + $0x108] sm:$0xff]
    %v1774 = vld [vmem:[#allocation3 + $0x110] sm:$0xff]
    %v1775 = vld [vmem:[#allocation3 + $0x118] sm:$0xff]
    %v1776 = vld [vmem:[#allocation3 + $0x120] sm:$0xff]
    %v1777 = vld [vmem:[#allocation3 + $0x128] sm:$0xff]
    %v1778 = vld [vmem:[#allocation3 + $0x130] sm:$0xff]
    %v1779 = vld [vmem:[#allocation3 + $0x138] sm:$0xff]
    %v1780 = vld [vmem:[#allocation3 + $0x140] sm:$0xff]
    %v1781 = vld [vmem:[#allocation3 + $0x148] sm:$0xff]
    %v1782 = vld [vmem:[#allocation3 + $0x150] sm:$0xff]
    %v1783 = vld [vmem:[#allocation3 + $0x158] sm:$0xff]
    %v1784 = vld [vmem:[#allocation3 + $0x160] sm:$0xff]
    %v1785 = vld [vmem:[#allocation3 + $0x168] sm:$0xff]
    %v1786 = vld [vmem:[#allocation3 + $0x170] sm:$0xff]
    %v1787 = vld [vmem:[#allocation3 + $0x178] sm:$0xff]
    %v1788 = vld [vmem:[#allocation3 + $0x180] sm:$0xff]
    %v1789 = vld [vmem:[#allocation3 + $0x188] sm:$0xff]
    %v1790 = vld [vmem:[#allocation3 + $0x190] sm:$0xff]
    %v1791 = vld [vmem:[#allocation3 + $0x198] sm:$0xff]
    %v1792 = vld [vmem:[#allocation3 + $0x1a0] sm:$0xff]
    %v1793 = vld [vmem:[#allocation3 + $0x1a8] sm:$0xff]
    %v1794 = vld [vmem:[#allocation3 + $0x1b0] sm:$0xff]
    %v1795 = vld [vmem:[#allocation3 + $0x1b8] sm:$0xff]
    %v1796 = vld [vmem:[#allocation3 + $0x1c0] sm:$0xff]
    %v1797 = vld [vmem:[#allocation3 + $0x1c8] sm:$0xff]
    %v1798 = vld [vmem:[#allocation3 + $0x1d0] sm:$0xff]
    %v1799 = vld [vmem:[#allocation3 + $0x1d8] sm:$0xff]
    %v1800 = vld [vmem:[#allocation3 + $0x1e0] sm:$0xff]
    %v1801 = vld [vmem:[#allocation3 + $0x1e8] sm:$0xff]
    %v1802 = vld [vmem:[#allocation3 + $0x1f0] sm:$0xff]
    %v1803 = vld [vmem:[#allocation3 + $0x1f8] sm:$0xff]
    %s1804 = scalar_lea.vmem [#allocation9], 128
    %v1805 = vld [vmem:[%s1804] sm:$0xff]
    %v1806 = vld [vmem:[%s1804 + $0x8] sm:$0xff]
    %v1807 = vld [vmem:[%s1804 + $0x10] sm:$0xff]
    %v1808 = vld [vmem:[%s1804 + $0x18] sm:$0xff]
    %v1809 = vld [vmem:[%s1804 + $0x20] sm:$0xff]
    %v1810 = vld [vmem:[%s1804 + $0x28] sm:$0xff]
    %v1811 = vld [vmem:[%s1804 + $0x30] sm:$0xff]
    %v1812 = vld [vmem:[%s1804 + $0x38] sm:$0xff]
    %v1813 = vld [vmem:[%s1804 + $0x40] sm:$0xff]
    %v1814 = vld [vmem:[%s1804 + $0x48] sm:$0xff]
    %v1815 = vld [vmem:[%s1804 + $0x50] sm:$0xff]
    %v1816 = vld [vmem:[%s1804 + $0x58] sm:$0xff]
    %v1817 = vld [vmem:[%s1804 + $0x60] sm:$0xff]
    %v1818 = vld [vmem:[%s1804 + $0x68] sm:$0xff]
    %v1819 = vld [vmem:[%s1804 + $0x70] sm:$0xff]
    %v1820 = vld [vmem:[%s1804 + $0x78] sm:$0xff]
    %1821 = vmatpush.msra.mxu0 %v1820
    %1822 = vmatpush.msra.mxu0 %v1819
    %1823 = vmatpush.msra.mxu0 %v1818
    %1824 = vmatpush.msra.mxu0 %v1817
    %1825 = vmatpush.msra.mxu0 %v1816
    %1826 = vmatpush.msra.mxu0 %v1815
    %1827 = vmatpush.msra.mxu0 %v1814
    %1828 = vmatpush.msra.mxu0 %v1813
    %1829 = vmatpush.msra.mxu0 %v1812
    %1830 = vmatpush.msra.mxu0 %v1811
    %1831 = vmatpush.msra.mxu0 %v1810
    %1832 = vmatpush.msra.mxu0 %v1809
    %1833 = vmatpush.msra.mxu0 %v1808
    %1834 = vmatpush.msra.mxu0 %v1807
    %1835 = vmatpush.msra.mxu0 %v1806
    %1836 = vmatpush.msra.mxu0 %v1805
    %1837 = vmatmul.f32.gmra.mxu0 %v1676
    %v1838 = vpop.f32.mrf.mxu0
    %v1839 = vadd.f32 0.0, %v1838
    %1840 = vmatmul.f32.gmra.mxu0 %v1677
    %v1841 = vpop.f32.mrf.mxu0
    %v1842 = vadd.f32 0.0, %v1841
    %1843 = vmatmul.f32.gmra.mxu0 %v1678
    %v1844 = vpop.f32.mrf.mxu0
    %v1845 = vadd.f32 0.0, %v1844
    %1846 = vmatmul.f32.gmra.mxu0 %v1679
    %v1847 = vpop.f32.mrf.mxu0
    %v1848 = vadd.f32 0.0, %v1847
    %1849 = vmatmul.f32.gmra.mxu0 %v1680
    %v1850 = vpop.f32.mrf.mxu0
    %v1851 = vadd.f32 0.0, %v1850
    %1852 = vmatmul.f32.gmra.mxu0 %v1681
    %v1853 = vpop.f32.mrf.mxu0
    %v1854 = vadd.f32 0.0, %v1853
    %1855 = vmatmul.f32.gmra.mxu0 %v1682
    %v1856 = vpop.f32.mrf.mxu0
    %v1857 = vadd.f32 0.0, %v1856
    %1858 = vmatmul.f32.gmra.mxu0 %v1683
    %v1859 = vpop.f32.mrf.mxu0
    %v1860 = vadd.f32 0.0, %v1859
    %1861 = vmatmul.f32.gmra.mxu0 %v1684
    %v1862 = vpop.f32.mrf.mxu0
    %v1863 = vadd.f32 0.0, %v1862
    %1864 = vmatmul.f32.gmra.mxu0 %v1685
    %v1865 = vpop.f32.mrf.mxu0
    %v1866 = vadd.f32 0.0, %v1865
    %1867 = vmatmul.f32.gmra.mxu0 %v1686
    %v1868 = vpop.f32.mrf.mxu0
    %v1869 = vadd.f32 0.0, %v1868
    %1870 = vmatmul.f32.gmra.mxu0 %v1687
    %v1871 = vpop.f32.mrf.mxu0
    %v1872 = vadd.f32 0.0, %v1871
    %1873 = vmatmul.f32.gmra.mxu0 %v1688
    %v1874 = vpop.f32.mrf.mxu0
    %v1875 = vadd.f32 0.0, %v1874
    %1876 = vmatmul.f32.gmra.mxu0 %v1689
    %v1877 = vpop.f32.mrf.mxu0
    %v1878 = vadd.f32 0.0, %v1877
    %1879 = vmatmul.f32.gmra.mxu0 %v1690
    %v1880 = vpop.f32.mrf.mxu0
    %v1881 = vadd.f32 0.0, %v1880
    %1882 = vmatmul.f32.gmra.mxu0 %v1691
    %v1883 = vpop.f32.mrf.mxu0
    %v1884 = vadd.f32 0.0, %v1883
    %1885 = vmatmul.f32.gmra.mxu0 %v1692
    %v1886 = vpop.f32.mrf.mxu0
    %v1887 = vadd.f32 0.0, %v1886
    %1888 = vmatmul.f32.gmra.mxu0 %v1693
    %v1889 = vpop.f32.mrf.mxu0
    %v1890 = vadd.f32 0.0, %v1889
    %1891 = vmatmul.f32.gmra.mxu0 %v1694
    %v1892 = vpop.f32.mrf.mxu0
    %v1893 = vadd.f32 0.0, %v1892
    %1894 = vmatmul.f32.gmra.mxu0 %v1695
    %v1895 = vpop.f32.mrf.mxu0
    %v1896 = vadd.f32 0.0, %v1895
    %1897 = vmatmul.f32.gmra.mxu0 %v1696
    %v1898 = vpop.f32.mrf.mxu0
    %v1899 = vadd.f32 0.0, %v1898
    %1900 = vmatmul.f32.gmra.mxu0 %v1697
    %v1901 = vpop.f32.mrf.mxu0
    %v1902 = vadd.f32 0.0, %v1901
    %1903 = vmatmul.f32.gmra.mxu0 %v1698
    %v1904 = vpop.f32.mrf.mxu0
    %v1905 = vadd.f32 0.0, %v1904
    %1906 = vmatmul.f32.gmra.mxu0 %v1699
    %v1907 = vpop.f32.mrf.mxu0
    %v1908 = vadd.f32 0.0, %v1907
    %1909 = vmatmul.f32.gmra.mxu0 %v1700
    %v1910 = vpop.f32.mrf.mxu0
    %v1911 = vadd.f32 0.0, %v1910
    %1912 = vmatmul.f32.gmra.mxu0 %v1701
    %v1913 = vpop.f32.mrf.mxu0
    %v1914 = vadd.f32 0.0, %v1913
    %1915 = vmatmul.f32.gmra.mxu0 %v1702
    %v1916 = vpop.f32.mrf.mxu0
    %v1917 = vadd.f32 0.0, %v1916
    %1918 = vmatmul.f32.gmra.mxu0 %v1703
    %v1919 = vpop.f32.mrf.mxu0
    %v1920 = vadd.f32 0.0, %v1919
    %1921 = vmatmul.f32.gmra.mxu0 %v1704
    %v1922 = vpop.f32.mrf.mxu0
    %v1923 = vadd.f32 0.0, %v1922
    %1924 = vmatmul.f32.gmra.mxu0 %v1705
    %v1925 = vpop.f32.mrf.mxu0
    %v1926 = vadd.f32 0.0, %v1925
    %1927 = vmatmul.f32.gmra.mxu0 %v1706
    %v1928 = vpop.f32.mrf.mxu0
    %v1929 = vadd.f32 0.0, %v1928
    %1930 = vmatmul.f32.gmra.mxu0 %v1707
    %v1931 = vpop.f32.mrf.mxu0
    %v1932 = vadd.f32 0.0, %v1931
    %1933 = vmatmul.f32.gmra.mxu0 %v1708
    %v1934 = vpop.f32.mrf.mxu0
    %v1935 = vadd.f32 0.0, %v1934
    %1936 = vmatmul.f32.gmra.mxu0 %v1709
    %v1937 = vpop.f32.mrf.mxu0
    %v1938 = vadd.f32 0.0, %v1937
    %1939 = vmatmul.f32.gmra.mxu0 %v1710
    %v1940 = vpop.f32.mrf.mxu0
    %v1941 = vadd.f32 0.0, %v1940
    %1942 = vmatmul.f32.gmra.mxu0 %v1711
    %v1943 = vpop.f32.mrf.mxu0
    %v1944 = vadd.f32 0.0, %v1943
    %1945 = vmatmul.f32.gmra.mxu0 %v1712
    %v1946 = vpop.f32.mrf.mxu0
    %v1947 = vadd.f32 0.0, %v1946
    %1948 = vmatmul.f32.gmra.mxu0 %v1713
    %v1949 = vpop.f32.mrf.mxu0
    %v1950 = vadd.f32 0.0, %v1949
    %1951 = vmatmul.f32.gmra.mxu0 %v1714
    %v1952 = vpop.f32.mrf.mxu0
    %v1953 = vadd.f32 0.0, %v1952
    %1954 = vmatmul.f32.gmra.mxu0 %v1715
    %v1955 = vpop.f32.mrf.mxu0
    %v1956 = vadd.f32 0.0, %v1955
    %1957 = vmatmul.f32.gmra.mxu0 %v1716
    %v1958 = vpop.f32.mrf.mxu0
    %v1959 = vadd.f32 0.0, %v1958
    %1960 = vmatmul.f32.gmra.mxu0 %v1717
    %v1961 = vpop.f32.mrf.mxu0
    %v1962 = vadd.f32 0.0, %v1961
    %1963 = vmatmul.f32.gmra.mxu0 %v1718
    %v1964 = vpop.f32.mrf.mxu0
    %v1965 = vadd.f32 0.0, %v1964
    %1966 = vmatmul.f32.gmra.mxu0 %v1719
    %v1967 = vpop.f32.mrf.mxu0
    %v1968 = vadd.f32 0.0, %v1967
    %1969 = vmatmul.f32.gmra.mxu0 %v1720
    %v1970 = vpop.f32.mrf.mxu0
    %v1971 = vadd.f32 0.0, %v1970
    %1972 = vmatmul.f32.gmra.mxu0 %v1721
    %v1973 = vpop.f32.mrf.mxu0
    %v1974 = vadd.f32 0.0, %v1973
    %1975 = vmatmul.f32.gmra.mxu0 %v1722
    %v1976 = vpop.f32.mrf.mxu0
    %v1977 = vadd.f32 0.0, %v1976
    %1978 = vmatmul.f32.gmra.mxu0 %v1723
    %v1979 = vpop.f32.mrf.mxu0
    %v1980 = vadd.f32 0.0, %v1979
    %1981 = vmatmul.f32.gmra.mxu0 %v1724
    %v1982 = vpop.f32.mrf.mxu0
    %v1983 = vadd.f32 0.0, %v1982
    %1984 = vmatmul.f32.gmra.mxu0 %v1725
    %v1985 = vpop.f32.mrf.mxu0
    %v1986 = vadd.f32 0.0, %v1985
    %1987 = vmatmul.f32.gmra.mxu0 %v1726
    %v1988 = vpop.f32.mrf.mxu0
    %v1989 = vadd.f32 0.0, %v1988
    %1990 = vmatmul.f32.gmra.mxu0 %v1727
    %v1991 = vpop.f32.mrf.mxu0
    %v1992 = vadd.f32 0.0, %v1991
    %1993 = vmatmul.f32.gmra.mxu0 %v1728
    %v1994 = vpop.f32.mrf.mxu0
    %v1995 = vadd.f32 0.0, %v1994
    %1996 = vmatmul.f32.gmra.mxu0 %v1729
    %v1997 = vpop.f32.mrf.mxu0
    %v1998 = vadd.f32 0.0, %v1997
    %1999 = vmatmul.f32.gmra.mxu0 %v1730
    %v2000 = vpop.f32.mrf.mxu0
    %v2001 = vadd.f32 0.0, %v2000
    %2002 = vmatmul.f32.gmra.mxu0 %v1731
    %v2003 = vpop.f32.mrf.mxu0
    %v2004 = vadd.f32 0.0, %v2003
    %2005 = vmatmul.f32.gmra.mxu0 %v1732
    %v2006 = vpop.f32.mrf.mxu0
    %v2007 = vadd.f32 0.0, %v2006
    %2008 = vmatmul.f32.gmra.mxu0 %v1733
    %v2009 = vpop.f32.mrf.mxu0
    %v2010 = vadd.f32 0.0, %v2009
    %2011 = vmatmul.f32.gmra.mxu0 %v1734
    %v2012 = vpop.f32.mrf.mxu0
    %v2013 = vadd.f32 0.0, %v2012
    %2014 = vmatmul.f32.gmra.mxu0 %v1735
    %v2015 = vpop.f32.mrf.mxu0
    %v2016 = vadd.f32 0.0, %v2015
    %2017 = vmatmul.f32.gmra.mxu0 %v1736
    %v2018 = vpop.f32.mrf.mxu0
    %v2019 = vadd.f32 0.0, %v2018
    %2020 = vmatmul.f32.gmra.mxu0 %v1737
    %v2021 = vpop.f32.mrf.mxu0
    %v2022 = vadd.f32 0.0, %v2021
    %2023 = vmatmul.f32.gmra.mxu0 %v1738
    %v2024 = vpop.f32.mrf.mxu0
    %v2025 = vadd.f32 0.0, %v2024
    %2026 = vmatmul.f32.gmra.mxu0 %v1739
    %v2027 = vpop.f32.mrf.mxu0
    %v2028 = vadd.f32 0.0, %v2027
    %2029 = vdwg.mxu0
    %v2030 = vadd.f32 %v1740, %v1839
    %v2031 = vadd.f32 %v1741, %v1842
    %v2032 = vadd.f32 %v1742, %v1845
    %v2033 = vadd.f32 %v1743, %v1848
    %v2034 = vadd.f32 %v1744, %v1851
    %v2035 = vadd.f32 %v1745, %v1854
    %v2036 = vadd.f32 %v1746, %v1857
    %v2037 = vadd.f32 %v1747, %v1860
    %v2038 = vadd.f32 %v1748, %v1863
    %v2039 = vadd.f32 %v1749, %v1866
    %v2040 = vadd.f32 %v1750, %v1869
    %v2041 = vadd.f32 %v1751, %v1872
    %v2042 = vadd.f32 %v1752, %v1875
    %v2043 = vadd.f32 %v1753, %v1878
    %v2044 = vadd.f32 %v1754, %v1881
    %v2045 = vadd.f32 %v1755, %v1884
    %v2046 = vadd.f32 %v1756, %v1887
    %v2047 = vadd.f32 %v1757, %v1890
    %v2048 = vadd.f32 %v1758, %v1893
    %v2049 = vadd.f32 %v1759, %v1896
    %v2050 = vadd.f32 %v1760, %v1899
    %v2051 = vadd.f32 %v1761, %v1902
    %v2052 = vadd.f32 %v1762, %v1905
    %v2053 = vadd.f32 %v1763, %v1908
    %v2054 = vadd.f32 %v1764, %v1911
    %v2055 = vadd.f32 %v1765, %v1914
    %v2056 = vadd.f32 %v1766, %v1917
    %v2057 = vadd.f32 %v1767, %v1920
    %v2058 = vadd.f32 %v1768, %v1923
    %v2059 = vadd.f32 %v1769, %v1926
    %v2060 = vadd.f32 %v1770, %v1929
    %v2061 = vadd.f32 %v1771, %v1932
    %v2062 = vadd.f32 %v1772, %v1935
    %v2063 = vadd.f32 %v1773, %v1938
    %v2064 = vadd.f32 %v1774, %v1941
    %v2065 = vadd.f32 %v1775, %v1944
    %v2066 = vadd.f32 %v1776, %v1947
    %v2067 = vadd.f32 %v1777, %v1950
    %v2068 = vadd.f32 %v1778, %v1953
    %v2069 = vadd.f32 %v1779, %v1956
    %v2070 = vadd.f32 %v1780, %v1959
    %v2071 = vadd.f32 %v1781, %v1962
    %v2072 = vadd.f32 %v1782, %v1965
    %v2073 = vadd.f32 %v1783, %v1968
    %v2074 = vadd.f32 %v1784, %v1971
    %v2075 = vadd.f32 %v1785, %v1974
    %v2076 = vadd.f32 %v1786, %v1977
    %v2077 = vadd.f32 %v1787, %v1980
    %v2078 = vadd.f32 %v1788, %v1983
    %v2079 = vadd.f32 %v1789, %v1986
    %v2080 = vadd.f32 %v1790, %v1989
    %v2081 = vadd.f32 %v1791, %v1992
    %v2082 = vadd.f32 %v1792, %v1995
    %v2083 = vadd.f32 %v1793, %v1998
    %v2084 = vadd.f32 %v1794, %v2001
    %v2085 = vadd.f32 %v1795, %v2004
    %v2086 = vadd.f32 %v1796, %v2007
    %v2087 = vadd.f32 %v1797, %v2010
    %v2088 = vadd.f32 %v1798, %v2013
    %v2089 = vadd.f32 %v1799, %v2016
    %v2090 = vadd.f32 %v1800, %v2019
    %v2091 = vadd.f32 %v1801, %v2022
    %v2092 = vadd.f32 %v1802, %v2025
    %v2093 = vadd.f32 %v1803, %v2028
    %2094 = vst [vmem:[#allocation3] sm:$0xff] %v2030
    %2095 = vst [vmem:[#allocation3 + $0x8] sm:$0xff] %v2031
    %2096 = vst [vmem:[#allocation3 + $0x10] sm:$0xff] %v2032
    %2097 = vst [vmem:[#allocation3 + $0x18] sm:$0xff] %v2033
    %2098 = vst [vmem:[#allocation3 + $0x20] sm:$0xff] %v2034
    %2099 = vst [vmem:[#allocation3 + $0x28] sm:$0xff] %v2035
    %2100 = vst [vmem:[#allocation3 + $0x30] sm:$0xff] %v2036
    %2101 = vst [vmem:[#allocation3 + $0x38] sm:$0xff] %v2037
    %2102 = vst [vmem:[#allocation3 + $0x40] sm:$0xff] %v2038
    %2103 = vst [vmem:[#allocation3 + $0x48] sm:$0xff] %v2039
    %2104 = vst [vmem:[#allocation3 + $0x50] sm:$0xff] %v2040
    %2105 = vst [vmem:[#allocation3 + $0x58] sm:$0xff] %v2041
    %2106 = vst [vmem:[#allocation3 + $0x60] sm:$0xff] %v2042
    %2107 = vst [vmem:[#allocation3 + $0x68] sm:$0xff] %v2043
    %2108 = vst [vmem:[#allocation3 + $0x70] sm:$0xff] %v2044
    %2109 = vst [vmem:[#allocation3 + $0x78] sm:$0xff] %v2045
    %2110 = vst [vmem:[#allocation3 + $0x80] sm:$0xff] %v2046
    %2111 = vst [vmem:[#allocation3 + $0x88] sm:$0xff] %v2047
    %2112 = vst [vmem:[#allocation3 + $0x90] sm:$0xff] %v2048
    %2113 = vst [vmem:[#allocation3 + $0x98] sm:$0xff] %v2049
    %2114 = vst [vmem:[#allocation3 + $0xa0] sm:$0xff] %v2050
    %2115 = vst [vmem:[#allocation3 + $0xa8] sm:$0xff] %v2051
    %2116 = vst [vmem:[#allocation3 + $0xb0] sm:$0xff] %v2052
    %2117 = vst [vmem:[#allocation3 + $0xb8] sm:$0xff] %v2053
    %2118 = vst [vmem:[#allocation3 + $0xc0] sm:$0xff] %v2054
    %2119 = vst [vmem:[#allocation3 + $0xc8] sm:$0xff] %v2055
    %2120 = vst [vmem:[#allocation3 + $0xd0] sm:$0xff] %v2056
    %2121 = vst [vmem:[#allocation3 + $0xd8] sm:$0xff] %v2057
    %2122 = vst [vmem:[#allocation3 + $0xe0] sm:$0xff] %v2058
    %2123 = vst [vmem:[#allocation3 + $0xe8] sm:$0xff] %v2059
    %2124 = vst [vmem:[#allocation3 + $0xf0] sm:$0xff] %v2060
    %2125 = vst [vmem:[#allocation3 + $0xf8] sm:$0xff] %v2061
    %2126 = vst [vmem:[#allocation3 + $0x100] sm:$0xff] %v2062
    %2127 = vst [vmem:[#allocation3 + $0x108] sm:$0xff] %v2063
    %2128 = vst [vmem:[#allocation3 + $0x110] sm:$0xff] %v2064
    %2129 = vst [vmem:[#allocation3 + $0x118] sm:$0xff] %v2065
    %2130 = vst [vmem:[#allocation3 + $0x120] sm:$0xff] %v2066
    %2131 = vst [vmem:[#allocation3 + $0x128] sm:$0xff] %v2067
    %2132 = vst [vmem:[#allocation3 + $0x130] sm:$0xff] %v2068
    %2133 = vst [vmem:[#allocation3 + $0x138] sm:$0xff] %v2069
    %2134 = vst [vmem:[#allocation3 + $0x140] sm:$0xff] %v2070
    %2135 = vst [vmem:[#allocation3 + $0x148] sm:$0xff] %v2071
    %2136 = vst [vmem:[#allocation3 + $0x150] sm:$0xff] %v2072
    %2137 = vst [vmem:[#allocation3 + $0x158] sm:$0xff] %v2073
    %2138 = vst [vmem:[#allocation3 + $0x160] sm:$0xff] %v2074
    %2139 = vst [vmem:[#allocation3 + $0x168] sm:$0xff] %v2075
    %2140 = vst [vmem:[#allocation3 + $0x170] sm:$0xff] %v2076
    %2141 = vst [vmem:[#allocation3 + $0x178] sm:$0xff] %v2077
    %2142 = vst [vmem:[#allocation3 + $0x180] sm:$0xff] %v2078
    %2143 = vst [vmem:[#allocation3 + $0x188] sm:$0xff] %v2079
    %2144 = vst [vmem:[#allocation3 + $0x190] sm:$0xff] %v2080
    %2145 = vst [vmem:[#allocation3 + $0x198] sm:$0xff] %v2081
    %2146 = vst [vmem:[#allocation3 + $0x1a0] sm:$0xff] %v2082
    %2147 = vst [vmem:[#allocation3 + $0x1a8] sm:$0xff] %v2083
    %2148 = vst [vmem:[#allocation3 + $0x1b0] sm:$0xff] %v2084
    %2149 = vst [vmem:[#allocation3 + $0x1b8] sm:$0xff] %v2085
    %2150 = vst [vmem:[#allocation3 + $0x1c0] sm:$0xff] %v2086
    %2151 = vst [vmem:[#allocation3 + $0x1c8] sm:$0xff] %v2087
    %2152 = vst [vmem:[#allocation3 + $0x1d0] sm:$0xff] %v2088
    %2153 = vst [vmem:[#allocation3 + $0x1d8] sm:$0xff] %v2089
    %2154 = vst [vmem:[#allocation3 + $0x1e0] sm:$0xff] %v2090
    %2155 = vst [vmem:[#allocation3 + $0x1e8] sm:$0xff] %v2091
    %2156 = vst [vmem:[#allocation3 + $0x1f0] sm:$0xff] %v2092
    %2157 = vst [vmem:[#allocation3 + $0x1f8] sm:$0xff] %v2093
    %v2158 = vld [vmem:[#allocation2 + $0x2] sm:$0xff]
    %v2159 = vld [vmem:[#allocation2 + $0xa] sm:$0xff]
    %v2160 = vld [vmem:[#allocation2 + $0x1a] sm:$0xff]
    %v2161 = vld [vmem:[#allocation2 + $0x22] sm:$0xff]
    %v2162 = vld [vmem:[#allocation2 + $0x32] sm:$0xff]
    %v2163 = vld [vmem:[#allocation2 + $0x3a] sm:$0xff]
    %v2164 = vld [vmem:[#allocation2 + $0x4a] sm:$0xff]
    %v2165 = vld [vmem:[#allocation2 + $0x52] sm:$0xff]
    %v2166 = vld [vmem:[#allocation2 + $0x62] sm:$0xff]
    %v2167 = vld [vmem:[#allocation2 + $0x6a] sm:$0xff]
    %v2168 = vld [vmem:[#allocation2 + $0x7a] sm:$0xff]
    %v2169 = vld [vmem:[#allocation2 + $0x82] sm:$0xff]
    %v2170 = vld [vmem:[#allocation2 + $0x92] sm:$0xff]
    %v2171 = vld [vmem:[#allocation2 + $0x9a] sm:$0xff]
    %v2172 = vld [vmem:[#allocation2 + $0xaa] sm:$0xff]
    %v2173 = vld [vmem:[#allocation2 + $0xb2] sm:$0xff]
    %v2174 = vld [vmem:[#allocation2 + $0xc2] sm:$0xff]
    %v2175 = vld [vmem:[#allocation2 + $0xca] sm:$0xff]
    %v2176 = vld [vmem:[#allocation2 + $0xda] sm:$0xff]
    %v2177 = vld [vmem:[#allocation2 + $0xe2] sm:$0xff]
    %v2178 = vld [vmem:[#allocation2 + $0xf2] sm:$0xff]
    %v2179 = vld [vmem:[#allocation2 + $0xfa] sm:$0xff]
    %v2180 = vld [vmem:[#allocation2 + $0x10a] sm:$0xff]
    %v2181 = vld [vmem:[#allocation2 + $0x112] sm:$0xff]
    %v2182 = vld [vmem:[#allocation2 + $0x122] sm:$0xff]
    %v2183 = vld [vmem:[#allocation2 + $0x12a] sm:$0xff]
    %v2184 = vld [vmem:[#allocation2 + $0x13a] sm:$0xff]
    %v2185 = vld [vmem:[#allocation2 + $0x142] sm:$0xff]
    %v2186 = vld [vmem:[#allocation2 + $0x152] sm:$0xff]
    %v2187 = vld [vmem:[#allocation2 + $0x15a] sm:$0xff]
    %v2188 = vld [vmem:[#allocation2 + $0x16a] sm:$0xff]
    %v2189 = vld [vmem:[#allocation2 + $0x172] sm:$0xff]
    %v2190 = vld [vmem:[#allocation2 + $0x1b2] sm:$0xff]
    %v2191 = vld [vmem:[#allocation2 + $0x1ba] sm:$0xff]
    %v2192 = vld [vmem:[#allocation2 + $0x1ca] sm:$0xff]
    %v2193 = vld [vmem:[#allocation2 + $0x1d2] sm:$0xff]
    %v2194 = vld [vmem:[#allocation2 + $0x1e2] sm:$0xff]
    %v2195 = vld [vmem:[#allocation2 + $0x1ea] sm:$0xff]
    %v2196 = vld [vmem:[#allocation2 + $0x1fa] sm:$0xff]
    %v2197 = vld [vmem:[#allocation2 + $0x202] sm:$0xff]
    %v2198 = vld [vmem:[#allocation2 + $0x212] sm:$0xff]
    %v2199 = vld [vmem:[#allocation2 + $0x21a] sm:$0xff]
    %v2200 = vld [vmem:[#allocation2 + $0x22a] sm:$0xff]
    %v2201 = vld [vmem:[#allocation2 + $0x232] sm:$0xff]
    %v2202 = vld [vmem:[#allocation2 + $0x242] sm:$0xff]
    %v2203 = vld [vmem:[#allocation2 + $0x24a] sm:$0xff]
    %v2204 = vld [vmem:[#allocation2 + $0x25a] sm:$0xff]
    %v2205 = vld [vmem:[#allocation2 + $0x262] sm:$0xff]
    %v2206 = vld [vmem:[#allocation2 + $0x272] sm:$0xff]
    %v2207 = vld [vmem:[#allocation2 + $0x27a] sm:$0xff]
    %v2208 = vld [vmem:[#allocation2 + $0x28a] sm:$0xff]
    %v2209 = vld [vmem:[#allocation2 + $0x292] sm:$0xff]
    %v2210 = vld [vmem:[#allocation2 + $0x2a2] sm:$0xff]
    %v2211 = vld [vmem:[#allocation2 + $0x2aa] sm:$0xff]
    %v2212 = vld [vmem:[#allocation2 + $0x2ba] sm:$0xff]
    %v2213 = vld [vmem:[#allocation2 + $0x2c2] sm:$0xff]
    %v2214 = vld [vmem:[#allocation2 + $0x2d2] sm:$0xff]
    %v2215 = vld [vmem:[#allocation2 + $0x2da] sm:$0xff]
    %v2216 = vld [vmem:[#allocation2 + $0x2ea] sm:$0xff]
    %v2217 = vld [vmem:[#allocation2 + $0x2f2] sm:$0xff]
    %v2218 = vld [vmem:[#allocation2 + $0x302] sm:$0xff]
    %v2219 = vld [vmem:[#allocation2 + $0x30a] sm:$0xff]
    %v2220 = vld [vmem:[#allocation2 + $0x31a] sm:$0xff]
    %v2221 = vld [vmem:[#allocation2 + $0x322] sm:$0xff]
    %v2222 = vld [vmem:[#allocation3] sm:$0xff]
    %v2223 = vld [vmem:[#allocation3 + $0x8] sm:$0xff]
    %v2224 = vld [vmem:[#allocation3 + $0x10] sm:$0xff]
    %v2225 = vld [vmem:[#allocation3 + $0x18] sm:$0xff]
    %v2226 = vld [vmem:[#allocation3 + $0x20] sm:$0xff]
    %v2227 = vld [vmem:[#allocation3 + $0x28] sm:$0xff]
    %v2228 = vld [vmem:[#allocation3 + $0x30] sm:$0xff]
    %v2229 = vld [vmem:[#allocation3 + $0x38] sm:$0xff]
    %v2230 = vld [vmem:[#allocation3 + $0x40] sm:$0xff]
    %v2231 = vld [vmem:[#allocation3 + $0x48] sm:$0xff]
    %v2232 = vld [vmem:[#allocation3 + $0x50] sm:$0xff]
    %v2233 = vld [vmem:[#allocation3 + $0x58] sm:$0xff]
    %v2234 = vld [vmem:[#allocation3 + $0x60] sm:$0xff]
    %v2235 = vld [vmem:[#allocation3 + $0x68] sm:$0xff]
    %v2236 = vld [vmem:[#allocation3 + $0x70] sm:$0xff]
    %v2237 = vld [vmem:[#allocation3 + $0x78] sm:$0xff]
    %v2238 = vld [vmem:[#allocation3 + $0x80] sm:$0xff]
    %v2239 = vld [vmem:[#allocation3 + $0x88] sm:$0xff]
    %v2240 = vld [vmem:[#allocation3 + $0x90] sm:$0xff]
    %v2241 = vld [vmem:[#allocation3 + $0x98] sm:$0xff]
    %v2242 = vld [vmem:[#allocation3 + $0xa0] sm:$0xff]
    %v2243 = vld [vmem:[#allocation3 + $0xa8] sm:$0xff]
    %v2244 = vld [vmem:[#allocation3 + $0xb0] sm:$0xff]
    %v2245 = vld [vmem:[#allocation3 + $0xb8] sm:$0xff]
    %v2246 = vld [vmem:[#allocation3 + $0xc0] sm:$0xff]
    %v2247 = vld [vmem:[#allocation3 + $0xc8] sm:$0xff]
    %v2248 = vld [vmem:[#allocation3 + $0xd0] sm:$0xff]
    %v2249 = vld [vmem:[#allocation3 + $0xd8] sm:$0xff]
    %v2250 = vld [vmem:[#allocation3 + $0xe0] sm:$0xff]
    %v2251 = vld [vmem:[#allocation3 + $0xe8] sm:$0xff]
    %v2252 = vld [vmem:[#allocation3 + $0xf0] sm:$0xff]
    %v2253 = vld [vmem:[#allocation3 + $0xf8] sm:$0xff]
    %v2254 = vld [vmem:[#allocation3 + $0x100] sm:$0xff]
    %v2255 = vld [vmem:[#allocation3 + $0x108] sm:$0xff]
    %v2256 = vld [vmem:[#allocation3 + $0x110] sm:$0xff]
    %v2257 = vld [vmem:[#allocation3 + $0x118] sm:$0xff]
    %v2258 = vld [vmem:[#allocation3 + $0x120] sm:$0xff]
    %v2259 = vld [vmem:[#allocation3 + $0x128] sm:$0xff]
    %v2260 = vld [vmem:[#allocation3 + $0x130] sm:$0xff]
    %v2261 = vld [vmem:[#allocation3 + $0x138] sm:$0xff]
    %v2262 = vld [vmem:[#allocation3 + $0x140] sm:$0xff]
    %v2263 = vld [vmem:[#allocation3 + $0x148] sm:$0xff]
    %v2264 = vld [vmem:[#allocation3 + $0x150] sm:$0xff]
    %v2265 = vld [vmem:[#allocation3 + $0x158] sm:$0xff]
    %v2266 = vld [vmem:[#allocation3 + $0x160] sm:$0xff]
    %v2267 = vld [vmem:[#allocation3 + $0x168] sm:$0xff]
    %v2268 = vld [vmem:[#allocation3 + $0x170] sm:$0xff]
    %v2269 = vld [vmem:[#allocation3 + $0x178] sm:$0xff]
    %v2270 = vld [vmem:[#allocation3 + $0x180] sm:$0xff]
    %v2271 = vld [vmem:[#allocation3 + $0x188] sm:$0xff]
    %v2272 = vld [vmem:[#allocation3 + $0x190] sm:$0xff]
    %v2273 = vld [vmem:[#allocation3 + $0x198] sm:$0xff]
    %v2274 = vld [vmem:[#allocation3 + $0x1a0] sm:$0xff]
    %v2275 = vld [vmem:[#allocation3 + $0x1a8] sm:$0xff]
    %v2276 = vld [vmem:[#allocation3 + $0x1b0] sm:$0xff]
    %v2277 = vld [vmem:[#allocation3 + $0x1b8] sm:$0xff]
    %v2278 = vld [vmem:[#allocation3 + $0x1c0] sm:$0xff]
    %v2279 = vld [vmem:[#allocation3 + $0x1c8] sm:$0xff]
    %v2280 = vld [vmem:[#allocation3 + $0x1d0] sm:$0xff]
    %v2281 = vld [vmem:[#allocation3 + $0x1d8] sm:$0xff]
    %v2282 = vld [vmem:[#allocation3 + $0x1e0] sm:$0xff]
    %v2283 = vld [vmem:[#allocation3 + $0x1e8] sm:$0xff]
    %v2284 = vld [vmem:[#allocation3 + $0x1f0] sm:$0xff]
    %v2285 = vld [vmem:[#allocation3 + $0x1f8] sm:$0xff]
    %s2286 = scalar_lea.vmem [#allocation9], 256
    %v2287 = vld [vmem:[%s2286] sm:$0xff]
    %v2288 = vld [vmem:[%s2286 + $0x8] sm:$0xff]
    %v2289 = vld [vmem:[%s2286 + $0x10] sm:$0xff]
    %v2290 = vld [vmem:[%s2286 + $0x18] sm:$0xff]
    %v2291 = vld [vmem:[%s2286 + $0x20] sm:$0xff]
    %v2292 = vld [vmem:[%s2286 + $0x28] sm:$0xff]
    %v2293 = vld [vmem:[%s2286 + $0x30] sm:$0xff]
    %v2294 = vld [vmem:[%s2286 + $0x38] sm:$0xff]
    %v2295 = vld [vmem:[%s2286 + $0x40] sm:$0xff]
    %v2296 = vld [vmem:[%s2286 + $0x48] sm:$0xff]
    %v2297 = vld [vmem:[%s2286 + $0x50] sm:$0xff]
    %v2298 = vld [vmem:[%s2286 + $0x58] sm:$0xff]
    %v2299 = vld [vmem:[%s2286 + $0x60] sm:$0xff]
    %v2300 = vld [vmem:[%s2286 + $0x68] sm:$0xff]
    %v2301 = vld [vmem:[%s2286 + $0x70] sm:$0xff]
    %v2302 = vld [vmem:[%s2286 + $0x78] sm:$0xff]
    %2303 = vmatpush.msra.mxu0 %v2302
    %2304 = vmatpush.msra.mxu0 %v2301
    %2305 = vmatpush.msra.mxu0 %v2300
    %2306 = vmatpush.msra.mxu0 %v2299
    %2307 = vmatpush.msra.mxu0 %v2298
    %2308 = vmatpush.msra.mxu0 %v2297
    %2309 = vmatpush.msra.mxu0 %v2296
    %2310 = vmatpush.msra.mxu0 %v2295
    %2311 = vmatpush.msra.mxu0 %v2294
    %2312 = vmatpush.msra.mxu0 %v2293
    %2313 = vmatpush.msra.mxu0 %v2292
    %2314 = vmatpush.msra.mxu0 %v2291
    %2315 = vmatpush.msra.mxu0 %v2290
    %2316 = vmatpush.msra.mxu0 %v2289
    %2317 = vmatpush.msra.mxu0 %v2288
    %2318 = vmatpush.msra.mxu0 %v2287
    %2319 = vmatmul.f32.gmra.mxu0 %v2158
    %v2320 = vpop.f32.mrf.mxu0
    %v2321 = vadd.f32 0.0, %v2320
    %2322 = vmatmul.f32.gmra.mxu0 %v2159
    %v2323 = vpop.f32.mrf.mxu0
    %v2324 = vadd.f32 0.0, %v2323
    %2325 = vmatmul.f32.gmra.mxu0 %v2160
    %v2326 = vpop.f32.mrf.mxu0
    %v2327 = vadd.f32 0.0, %v2326
    %2328 = vmatmul.f32.gmra.mxu0 %v2161
    %v2329 = vpop.f32.mrf.mxu0
    %v2330 = vadd.f32 0.0, %v2329
    %2331 = vmatmul.f32.gmra.mxu0 %v2162
    %v2332 = vpop.f32.mrf.mxu0
    %v2333 = vadd.f32 0.0, %v2332
    %2334 = vmatmul.f32.gmra.mxu0 %v2163
    %v2335 = vpop.f32.mrf.mxu0
    %v2336 = vadd.f32 0.0, %v2335
    %2337 = vmatmul.f32.gmra.mxu0 %v2164
    %v2338 = vpop.f32.mrf.mxu0
    %v2339 = vadd.f32 0.0, %v2338
    %2340 = vmatmul.f32.gmra.mxu0 %v2165
    %v2341 = vpop.f32.mrf.mxu0
    %v2342 = vadd.f32 0.0, %v2341
    %2343 = vmatmul.f32.gmra.mxu0 %v2166
    %v2344 = vpop.f32.mrf.mxu0
    %v2345 = vadd.f32 0.0, %v2344
    %2346 = vmatmul.f32.gmra.mxu0 %v2167
    %v2347 = vpop.f32.mrf.mxu0
    %v2348 = vadd.f32 0.0, %v2347
    %2349 = vmatmul.f32.gmra.mxu0 %v2168
    %v2350 = vpop.f32.mrf.mxu0
    %v2351 = vadd.f32 0.0, %v2350
    %2352 = vmatmul.f32.gmra.mxu0 %v2169
    %v2353 = vpop.f32.mrf.mxu0
    %v2354 = vadd.f32 0.0, %v2353
    %2355 = vmatmul.f32.gmra.mxu0 %v2170
    %v2356 = vpop.f32.mrf.mxu0
    %v2357 = vadd.f32 0.0, %v2356
    %2358 = vmatmul.f32.gmra.mxu0 %v2171
    %v2359 = vpop.f32.mrf.mxu0
    %v2360 = vadd.f32 0.0, %v2359
    %2361 = vmatmul.f32.gmra.mxu0 %v2172
    %v2362 = vpop.f32.mrf.mxu0
    %v2363 = vadd.f32 0.0, %v2362
    %2364 = vmatmul.f32.gmra.mxu0 %v2173
    %v2365 = vpop.f32.mrf.mxu0
    %v2366 = vadd.f32 0.0, %v2365
    %2367 = vmatmul.f32.gmra.mxu0 %v2174
    %v2368 = vpop.f32.mrf.mxu0
    %v2369 = vadd.f32 0.0, %v2368
    %2370 = vmatmul.f32.gmra.mxu0 %v2175
    %v2371 = vpop.f32.mrf.mxu0
    %v2372 = vadd.f32 0.0, %v2371
    %2373 = vmatmul.f32.gmra.mxu0 %v2176
    %v2374 = vpop.f32.mrf.mxu0
    %v2375 = vadd.f32 0.0, %v2374
    %2376 = vmatmul.f32.gmra.mxu0 %v2177
    %v2377 = vpop.f32.mrf.mxu0
    %v2378 = vadd.f32 0.0, %v2377
    %2379 = vmatmul.f32.gmra.mxu0 %v2178
    %v2380 = vpop.f32.mrf.mxu0
    %v2381 = vadd.f32 0.0, %v2380
    %2382 = vmatmul.f32.gmra.mxu0 %v2179
    %v2383 = vpop.f32.mrf.mxu0
    %v2384 = vadd.f32 0.0, %v2383
    %2385 = vmatmul.f32.gmra.mxu0 %v2180
    %v2386 = vpop.f32.mrf.mxu0
    %v2387 = vadd.f32 0.0, %v2386
    %2388 = vmatmul.f32.gmra.mxu0 %v2181
    %v2389 = vpop.f32.mrf.mxu0
    %v2390 = vadd.f32 0.0, %v2389
    %2391 = vmatmul.f32.gmra.mxu0 %v2182
    %v2392 = vpop.f32.mrf.mxu0
    %v2393 = vadd.f32 0.0, %v2392
    %2394 = vmatmul.f32.gmra.mxu0 %v2183
    %v2395 = vpop.f32.mrf.mxu0
    %v2396 = vadd.f32 0.0, %v2395
    %2397 = vmatmul.f32.gmra.mxu0 %v2184
    %v2398 = vpop.f32.mrf.mxu0
    %v2399 = vadd.f32 0.0, %v2398
    %2400 = vmatmul.f32.gmra.mxu0 %v2185
    %v2401 = vpop.f32.mrf.mxu0
    %v2402 = vadd.f32 0.0, %v2401
    %2403 = vmatmul.f32.gmra.mxu0 %v2186
    %v2404 = vpop.f32.mrf.mxu0
    %v2405 = vadd.f32 0.0, %v2404
    %2406 = vmatmul.f32.gmra.mxu0 %v2187
    %v2407 = vpop.f32.mrf.mxu0
    %v2408 = vadd.f32 0.0, %v2407
    %2409 = vmatmul.f32.gmra.mxu0 %v2188
    %v2410 = vpop.f32.mrf.mxu0
    %v2411 = vadd.f32 0.0, %v2410
    %2412 = vmatmul.f32.gmra.mxu0 %v2189
    %v2413 = vpop.f32.mrf.mxu0
    %v2414 = vadd.f32 0.0, %v2413
    %2415 = vmatmul.f32.gmra.mxu0 %v2190
    %v2416 = vpop.f32.mrf.mxu0
    %v2417 = vadd.f32 0.0, %v2416
    %2418 = vmatmul.f32.gmra.mxu0 %v2191
    %v2419 = vpop.f32.mrf.mxu0
    %v2420 = vadd.f32 0.0, %v2419
    %2421 = vmatmul.f32.gmra.mxu0 %v2192
    %v2422 = vpop.f32.mrf.mxu0
    %v2423 = vadd.f32 0.0, %v2422
    %2424 = vmatmul.f32.gmra.mxu0 %v2193
    %v2425 = vpop.f32.mrf.mxu0
    %v2426 = vadd.f32 0.0, %v2425
    %2427 = vmatmul.f32.gmra.mxu0 %v2194
    %v2428 = vpop.f32.mrf.mxu0
    %v2429 = vadd.f32 0.0, %v2428
    %2430 = vmatmul.f32.gmra.mxu0 %v2195
    %v2431 = vpop.f32.mrf.mxu0
    %v2432 = vadd.f32 0.0, %v2431
    %2433 = vmatmul.f32.gmra.mxu0 %v2196
    %v2434 = vpop.f32.mrf.mxu0
    %v2435 = vadd.f32 0.0, %v2434
    %2436 = vmatmul.f32.gmra.mxu0 %v2197
    %v2437 = vpop.f32.mrf.mxu0
    %v2438 = vadd.f32 0.0, %v2437
    %2439 = vmatmul.f32.gmra.mxu0 %v2198
    %v2440 = vpop.f32.mrf.mxu0
    %v2441 = vadd.f32 0.0, %v2440
    %2442 = vmatmul.f32.gmra.mxu0 %v2199
    %v2443 = vpop.f32.mrf.mxu0
    %v2444 = vadd.f32 0.0, %v2443
    %2445 = vmatmul.f32.gmra.mxu0 %v2200
    %v2446 = vpop.f32.mrf.mxu0
    %v2447 = vadd.f32 0.0, %v2446
    %2448 = vmatmul.f32.gmra.mxu0 %v2201
    %v2449 = vpop.f32.mrf.mxu0
    %v2450 = vadd.f32 0.0, %v2449
    %2451 = vmatmul.f32.gmra.mxu0 %v2202
    %v2452 = vpop.f32.mrf.mxu0
    %v2453 = vadd.f32 0.0, %v2452
    %2454 = vmatmul.f32.gmra.mxu0 %v2203
    %v2455 = vpop.f32.mrf.mxu0
    %v2456 = vadd.f32 0.0, %v2455
    %2457 = vmatmul.f32.gmra.mxu0 %v2204
    %v2458 = vpop.f32.mrf.mxu0
    %v2459 = vadd.f32 0.0, %v2458
    %2460 = vmatmul.f32.gmra.mxu0 %v2205
    %v2461 = vpop.f32.mrf.mxu0
    %v2462 = vadd.f32 0.0, %v2461
    %2463 = vmatmul.f32.gmra.mxu0 %v2206
    %v2464 = vpop.f32.mrf.mxu0
    %v2465 = vadd.f32 0.0, %v2464
    %2466 = vmatmul.f32.gmra.mxu0 %v2207
    %v2467 = vpop.f32.mrf.mxu0
    %v2468 = vadd.f32 0.0, %v2467
    %2469 = vmatmul.f32.gmra.mxu0 %v2208
    %v2470 = vpop.f32.mrf.mxu0
    %v2471 = vadd.f32 0.0, %v2470
    %2472 = vmatmul.f32.gmra.mxu0 %v2209
    %v2473 = vpop.f32.mrf.mxu0
    %v2474 = vadd.f32 0.0, %v2473
    %2475 = vmatmul.f32.gmra.mxu0 %v2210
    %v2476 = vpop.f32.mrf.mxu0
    %v2477 = vadd.f32 0.0, %v2476
    %2478 = vmatmul.f32.gmra.mxu0 %v2211
    %v2479 = vpop.f32.mrf.mxu0
    %v2480 = vadd.f32 0.0, %v2479
    %2481 = vmatmul.f32.gmra.mxu0 %v2212
    %v2482 = vpop.f32.mrf.mxu0
    %v2483 = vadd.f32 0.0, %v2482
    %2484 = vmatmul.f32.gmra.mxu0 %v2213
    %v2485 = vpop.f32.mrf.mxu0
    %v2486 = vadd.f32 0.0, %v2485
    %2487 = vmatmul.f32.gmra.mxu0 %v2214
    %v2488 = vpop.f32.mrf.mxu0
    %v2489 = vadd.f32 0.0, %v2488
    %2490 = vmatmul.f32.gmra.mxu0 %v2215
    %v2491 = vpop.f32.mrf.mxu0
    %v2492 = vadd.f32 0.0, %v2491
    %2493 = vmatmul.f32.gmra.mxu0 %v2216
    %v2494 = vpop.f32.mrf.mxu0
    %v2495 = vadd.f32 0.0, %v2494
    %2496 = vmatmul.f32.gmra.mxu0 %v2217
    %v2497 = vpop.f32.mrf.mxu0
    %v2498 = vadd.f32 0.0, %v2497
    %2499 = vmatmul.f32.gmra.mxu0 %v2218
    %v2500 = vpop.f32.mrf.mxu0
    %v2501 = vadd.f32 0.0, %v2500
    %2502 = vmatmul.f32.gmra.mxu0 %v2219
    %v2503 = vpop.f32.mrf.mxu0
    %v2504 = vadd.f32 0.0, %v2503
    %2505 = vmatmul.f32.gmra.mxu0 %v2220
    %v2506 = vpop.f32.mrf.mxu0
    %v2507 = vadd.f32 0.0, %v2506
    %2508 = vmatmul.f32.gmra.mxu0 %v2221
    %v2509 = vpop.f32.mrf.mxu0
    %v2510 = vadd.f32 0.0, %v2509
    %2511 = vdwg.mxu0
    %v2512 = vadd.f32 %v2222, %v2321
    %v2513 = vadd.f32 %v2223, %v2324
    %v2514 = vadd.f32 %v2224, %v2327
    %v2515 = vadd.f32 %v2225, %v2330
    %v2516 = vadd.f32 %v2226, %v2333
    %v2517 = vadd.f32 %v2227, %v2336
    %v2518 = vadd.f32 %v2228, %v2339
    %v2519 = vadd.f32 %v2229, %v2342
    %v2520 = vadd.f32 %v2230, %v2345
    %v2521 = vadd.f32 %v2231, %v2348
    %v2522 = vadd.f32 %v2232, %v2351
    %v2523 = vadd.f32 %v2233, %v2354
    %v2524 = vadd.f32 %v2234, %v2357
    %v2525 = vadd.f32 %v2235, %v2360
    %v2526 = vadd.f32 %v2236, %v2363
    %v2527 = vadd.f32 %v2237, %v2366
    %v2528 = vadd.f32 %v2238, %v2369
    %v2529 = vadd.f32 %v2239, %v2372
    %v2530 = vadd.f32 %v2240, %v2375
    %v2531 = vadd.f32 %v2241, %v2378
    %v2532 = vadd.f32 %v2242, %v2381
    %v2533 = vadd.f32 %v2243, %v2384
    %v2534 = vadd.f32 %v2244, %v2387
    %v2535 = vadd.f32 %v2245, %v2390
    %v2536 = vadd.f32 %v2246, %v2393
    %v2537 = vadd.f32 %v2247, %v2396
    %v2538 = vadd.f32 %v2248, %v2399
    %v2539 = vadd.f32 %v2249, %v2402
    %v2540 = vadd.f32 %v2250, %v2405
    %v2541 = vadd.f32 %v2251, %v2408
    %v2542 = vadd.f32 %v2252, %v2411
    %v2543 = vadd.f32 %v2253, %v2414
    %v2544 = vadd.f32 %v2254, %v2417
    %v2545 = vadd.f32 %v2255, %v2420
    %v2546 = vadd.f32 %v2256, %v2423
    %v2547 = vadd.f32 %v2257, %v2426
    %v2548 = vadd.f32 %v2258, %v2429
    %v2549 = vadd.f32 %v2259, %v2432
    %v2550 = vadd.f32 %v2260, %v2435
    %v2551 = vadd.f32 %v2261, %v2438
    %v2552 = vadd.f32 %v2262, %v2441
    %v2553 = vadd.f32 %v2263, %v2444
    %v2554 = vadd.f32 %v2264, %v2447
    %v2555 = vadd.f32 %v2265, %v2450
    %v2556 = vadd.f32 %v2266, %v2453
    %v2557 = vadd.f32 %v2267, %v2456
    %v2558 = vadd.f32 %v2268, %v2459
    %v2559 = vadd.f32 %v2269, %v2462
    %v2560 = vadd.f32 %v2270, %v2465
    %v2561 = vadd.f32 %v2271, %v2468
    %v2562 = vadd.f32 %v2272, %v2471
    %v2563 = vadd.f32 %v2273, %v2474
    %v2564 = vadd.f32 %v2274, %v2477
    %v2565 = vadd.f32 %v2275, %v2480
    %v2566 = vadd.f32 %v2276, %v2483
    %v2567 = vadd.f32 %v2277, %v2486
    %v2568 = vadd.f32 %v2278, %v2489
    %v2569 = vadd.f32 %v2279, %v2492
    %v2570 = vadd.f32 %v2280, %v2495
    %v2571 = vadd.f32 %v2281, %v2498
    %v2572 = vadd.f32 %v2282, %v2501
    %v2573 = vadd.f32 %v2283, %v2504
    %v2574 = vadd.f32 %v2284, %v2507
    %v2575 = vadd.f32 %v2285, %v2510
    %2576 = vst [vmem:[#allocation3] sm:$0xff] %v2512
    %2577 = vst [vmem:[#allocation3 + $0x8] sm:$0xff] %v2513
    %2578 = vst [vmem:[#allocation3 + $0x10] sm:$0xff] %v2514
    %2579 = vst [vmem:[#allocation3 + $0x18] sm:$0xff] %v2515
    %2580 = vst [vmem:[#allocation3 + $0x20] sm:$0xff] %v2516
    %2581 = vst [vmem:[#allocation3 + $0x28] sm:$0xff] %v2517
    %2582 = vst [vmem:[#allocation3 + $0x30] sm:$0xff] %v2518
    %2583 = vst [vmem:[#allocation3 + $0x38] sm:$0xff] %v2519
    %2584 = vst [vmem:[#allocation3 + $0x40] sm:$0xff] %v2520
    %2585 = vst [vmem:[#allocation3 + $0x48] sm:$0xff] %v2521
    %2586 = vst [vmem:[#allocation3 + $0x50] sm:$0xff] %v2522
    %2587 = vst [vmem:[#allocation3 + $0x58] sm:$0xff] %v2523
    %2588 = vst [vmem:[#allocation3 + $0x60] sm:$0xff] %v2524
    %2589 = vst [vmem:[#allocation3 + $0x68] sm:$0xff] %v2525
    %2590 = vst [vmem:[#allocation3 + $0x70] sm:$0xff] %v2526
    %2591 = vst [vmem:[#allocation3 + $0x78] sm:$0xff] %v2527
    %2592 = vst [vmem:[#allocation3 + $0x80] sm:$0xff] %v2528
    %2593 = vst [vmem:[#allocation3 + $0x88] sm:$0xff] %v2529
    %2594 = vst [vmem:[#allocation3 + $0x90] sm:$0xff] %v2530
    %2595 = vst [vmem:[#allocation3 + $0x98] sm:$0xff] %v2531
    %2596 = vst [vmem:[#allocation3 + $0xa0] sm:$0xff] %v2532
    %2597 = vst [vmem:[#allocation3 + $0xa8] sm:$0xff] %v2533
    %2598 = vst [vmem:[#allocation3 + $0xb0] sm:$0xff] %v2534
    %2599 = vst [vmem:[#allocation3 + $0xb8] sm:$0xff] %v2535
    %2600 = vst [vmem:[#allocation3 + $0xc0] sm:$0xff] %v2536
    %2601 = vst [vmem:[#allocation3 + $0xc8] sm:$0xff] %v2537
    %2602 = vst [vmem:[#allocation3 + $0xd0] sm:$0xff] %v2538
    %2603 = vst [vmem:[#allocation3 + $0xd8] sm:$0xff] %v2539
    %2604 = vst [vmem:[#allocation3 + $0xe0] sm:$0xff] %v2540
    %2605 = vst [vmem:[#allocation3 + $0xe8] sm:$0xff] %v2541
    %2606 = vst [vmem:[#allocation3 + $0xf0] sm:$0xff] %v2542
    %2607 = vst [vmem:[#allocation3 + $0xf8] sm:$0xff] %v2543
    %2608 = vst [vmem:[#allocation3 + $0x100] sm:$0xff] %v2544
    %2609 = vst [vmem:[#allocation3 + $0x108] sm:$0xff] %v2545
    %2610 = vst [vmem:[#allocation3 + $0x110] sm:$0xff] %v2546
    %2611 = vst [vmem:[#allocation3 + $0x118] sm:$0xff] %v2547
    %2612 = vst [vmem:[#allocation3 + $0x120] sm:$0xff] %v2548
    %2613 = vst [vmem:[#allocation3 + $0x128] sm:$0xff] %v2549
    %2614 = vst [vmem:[#allocation3 + $0x130] sm:$0xff] %v2550
    %2615 = vst [vmem:[#allocation3 + $0x138] sm:$0xff] %v2551
    %2616 = vst [vmem:[#allocation3 + $0x140] sm:$0xff] %v2552
    %2617 = vst [vmem:[#allocation3 + $0x148] sm:$0xff] %v2553
    %2618 = vst [vmem:[#allocation3 + $0x150] sm:$0xff] %v2554
    %2619 = vst [vmem:[#allocation3 + $0x158] sm:$0xff] %v2555
    %2620 = vst [vmem:[#allocation3 + $0x160] sm:$0xff] %v2556
    %2621 = vst [vmem:[#allocation3 + $0x168] sm:$0xff] %v2557
    %2622 = vst [vmem:[#allocation3 + $0x170] sm:$0xff] %v2558
    %2623 = vst [vmem:[#allocation3 + $0x178] sm:$0xff] %v2559
    %2624 = vst [vmem:[#allocation3 + $0x180] sm:$0xff] %v2560
    %2625 = vst [vmem:[#allocation3 + $0x188] sm:$0xff] %v2561
    %2626 = vst [vmem:[#allocation3 + $0x190] sm:$0xff] %v2562
    %2627 = vst [vmem:[#allocation3 + $0x198] sm:$0xff] %v2563
    %2628 = vst [vmem:[#allocation3 + $0x1a0] sm:$0xff] %v2564
    %2629 = vst [vmem:[#allocation3 + $0x1a8] sm:$0xff] %v2565
    %2630 = vst [vmem:[#allocation3 + $0x1b0] sm:$0xff] %v2566
    %2631 = vst [vmem:[#allocation3 + $0x1b8] sm:$0xff] %v2567
    %2632 = vst [vmem:[#allocation3 + $0x1c0] sm:$0xff] %v2568
    %2633 = vst [vmem:[#allocation3 + $0x1c8] sm:$0xff] %v2569
    %2634 = vst [vmem:[#allocation3 + $0x1d0] sm:$0xff] %v2570
    %2635 = vst [vmem:[#allocation3 + $0x1d8] sm:$0xff] %v2571
    %2636 = vst [vmem:[#allocation3 + $0x1e0] sm:$0xff] %v2572
    %2637 = vst [vmem:[#allocation3 + $0x1e8] sm:$0xff] %v2573
    %2638 = vst [vmem:[#allocation3 + $0x1f0] sm:$0xff] %v2574
    %2639 = vst [vmem:[#allocation3 + $0x1f8] sm:$0xff] %v2575
    %v2640 = vld [vmem:[%s1066] sm:$0xff]
    %v2641 = vld [vmem:[%s1066 + $0x8] sm:$0xff]
    %v2642 = vld [vmem:[%s1066 + $0x18] sm:$0xff]
    %v2643 = vld [vmem:[%s1066 + $0x20] sm:$0xff]
    %v2644 = vld [vmem:[%s1066 + $0x30] sm:$0xff]
    %v2645 = vld [vmem:[%s1066 + $0x38] sm:$0xff]
    %v2646 = vld [vmem:[%s1066 + $0x48] sm:$0xff]
    %v2647 = vld [vmem:[%s1066 + $0x50] sm:$0xff]
    %v2648 = vld [vmem:[%s1066 + $0x60] sm:$0xff]
    %v2649 = vld [vmem:[%s1066 + $0x68] sm:$0xff]
    %v2650 = vld [vmem:[%s1066 + $0x78] sm:$0xff]
    %v2651 = vld [vmem:[%s1066 + $0x80] sm:$0xff]
    %v2652 = vld [vmem:[%s1066 + $0x90] sm:$0xff]
    %v2653 = vld [vmem:[%s1066 + $0x98] sm:$0xff]
    %v2654 = vld [vmem:[%s1066 + $0xa8] sm:$0xff]
    %v2655 = vld [vmem:[%s1066 + $0xb0] sm:$0xff]
    %v2656 = vld [vmem:[%s1066 + $0xc0] sm:$0xff]
    %v2657 = vld [vmem:[%s1066 + $0xc8] sm:$0xff]
    %v2658 = vld [vmem:[%s1066 + $0xd8] sm:$0xff]
    %v2659 = vld [vmem:[%s1066 + $0xe0] sm:$0xff]
    %v2660 = vld [vmem:[%s1066 + $0xf0] sm:$0xff]
    %v2661 = vld [vmem:[%s1066 + $0xf8] sm:$0xff]
    %v2662 = vld [vmem:[%s1066 + $0x108] sm:$0xff]
    %v2663 = vld [vmem:[%s1066 + $0x110] sm:$0xff]
    %v2664 = vld [vmem:[%s1066 + $0x120] sm:$0xff]
    %v2665 = vld [vmem:[%s1066 + $0x128] sm:$0xff]
    %v2666 = vld [vmem:[%s1066 + $0x138] sm:$0xff]
    %v2667 = vld [vmem:[%s1066 + $0x140] sm:$0xff]
    %v2668 = vld [vmem:[%s1066 + $0x150] sm:$0xff]
    %v2669 = vld [vmem:[%s1066 + $0x158] sm:$0xff]
    %v2670 = vld [vmem:[%s1066 + $0x168] sm:$0xff]
    %v2671 = vld [vmem:[%s1066 + $0x170] sm:$0xff]
    %v2672 = vld [vmem:[%s1066 + $0x1b0] sm:$0xff]
    %v2673 = vld [vmem:[%s1066 + $0x1b8] sm:$0xff]
    %v2674 = vld [vmem:[%s1066 + $0x1c8] sm:$0xff]
    %v2675 = vld [vmem:[%s1066 + $0x1d0] sm:$0xff]
    %v2676 = vld [vmem:[%s1066 + $0x1e0] sm:$0xff]
    %v2677 = vld [vmem:[%s1066 + $0x1e8] sm:$0xff]
    %v2678 = vld [vmem:[%s1066 + $0x1f8] sm:$0xff]
    %v2679 = vld [vmem:[%s1066 + $0x200] sm:$0xff]
    %v2680 = vld [vmem:[%s1066 + $0x210] sm:$0xff]
    %v2681 = vld [vmem:[%s1066 + $0x218] sm:$0xff]
    %v2682 = vld [vmem:[%s1066 + $0x228] sm:$0xff]
    %v2683 = vld [vmem:[%s1066 + $0x230] sm:$0xff]
    %v2684 = vld [vmem:[%s1066 + $0x240] sm:$0xff]
    %v2685 = vld [vmem:[%s1066 + $0x248] sm:$0xff]
    %v2686 = vld [vmem:[%s1066 + $0x258] sm:$0xff]
    %v2687 = vld [vmem:[%s1066 + $0x260] sm:$0xff]
    %v2688 = vld [vmem:[%s1066 + $0x270] sm:$0xff]
    %v2689 = vld [vmem:[%s1066 + $0x278] sm:$0xff]
    %v2690 = vld [vmem:[%s1066 + $0x288] sm:$0xff]
    %v2691 = vld [vmem:[%s1066 + $0x290] sm:$0xff]
    %v2692 = vld [vmem:[%s1066 + $0x2a0] sm:$0xff]
    %v2693 = vld [vmem:[%s1066 + $0x2a8] sm:$0xff]
    %v2694 = vld [vmem:[%s1066 + $0x2b8] sm:$0xff]
    %v2695 = vld [vmem:[%s1066 + $0x2c0] sm:$0xff]
    %v2696 = vld [vmem:[%s1066 + $0x2d0] sm:$0xff]
    %v2697 = vld [vmem:[%s1066 + $0x2d8] sm:$0xff]
    %v2698 = vld [vmem:[%s1066 + $0x2e8] sm:$0xff]
    %v2699 = vld [vmem:[%s1066 + $0x2f0] sm:$0xff]
    %v2700 = vld [vmem:[%s1066 + $0x300] sm:$0xff]
    %v2701 = vld [vmem:[%s1066 + $0x308] sm:$0xff]
    %v2702 = vld [vmem:[%s1066 + $0x318] sm:$0xff]
    %v2703 = vld [vmem:[%s1066 + $0x320] sm:$0xff]
    %v2704 = vld [vmem:[#allocation3] sm:$0xff]
    %v2705 = vld [vmem:[#allocation3 + $0x8] sm:$0xff]
    %v2706 = vld [vmem:[#allocation3 + $0x10] sm:$0xff]
    %v2707 = vld [vmem:[#allocation3 + $0x18] sm:$0xff]
    %v2708 = vld [vmem:[#allocation3 + $0x20] sm:$0xff]
    %v2709 = vld [vmem:[#allocation3 + $0x28] sm:$0xff]
    %v2710 = vld [vmem:[#allocation3 + $0x30] sm:$0xff]
    %v2711 = vld [vmem:[#allocation3 + $0x38] sm:$0xff]
    %v2712 = vld [vmem:[#allocation3 + $0x40] sm:$0xff]
    %v2713 = vld [vmem:[#allocation3 + $0x48] sm:$0xff]
    %v2714 = vld [vmem:[#allocation3 + $0x50] sm:$0xff]
    %v2715 = vld [vmem:[#allocation3 + $0x58] sm:$0xff]
    %v2716 = vld [vmem:[#allocation3 + $0x60] sm:$0xff]
    %v2717 = vld [vmem:[#allocation3 + $0x68] sm:$0xff]
    %v2718 = vld [vmem:[#allocation3 + $0x70] sm:$0xff]
    %v2719 = vld [vmem:[#allocation3 + $0x78] sm:$0xff]
    %v2720 = vld [vmem:[#allocation3 + $0x80] sm:$0xff]
    %v2721 = vld [vmem:[#allocation3 + $0x88] sm:$0xff]
    %v2722 = vld [vmem:[#allocation3 + $0x90] sm:$0xff]
    %v2723 = vld [vmem:[#allocation3 + $0x98] sm:$0xff]
    %v2724 = vld [vmem:[#allocation3 + $0xa0] sm:$0xff]
    %v2725 = vld [vmem:[#allocation3 + $0xa8] sm:$0xff]
    %v2726 = vld [vmem:[#allocation3 + $0xb0] sm:$0xff]
    %v2727 = vld [vmem:[#allocation3 + $0xb8] sm:$0xff]
    %v2728 = vld [vmem:[#allocation3 + $0xc0] sm:$0xff]
    %v2729 = vld [vmem:[#allocation3 + $0xc8] sm:$0xff]
    %v2730 = vld [vmem:[#allocation3 + $0xd0] sm:$0xff]
    %v2731 = vld [vmem:[#allocation3 + $0xd8] sm:$0xff]
    %v2732 = vld [vmem:[#allocation3 + $0xe0] sm:$0xff]
    %v2733 = vld [vmem:[#allocation3 + $0xe8] sm:$0xff]
    %v2734 = vld [vmem:[#allocation3 + $0xf0] sm:$0xff]
    %v2735 = vld [vmem:[#allocation3 + $0xf8] sm:$0xff]
    %v2736 = vld [vmem:[#allocation3 + $0x100] sm:$0xff]
    %v2737 = vld [vmem:[#allocation3 + $0x108] sm:$0xff]
    %v2738 = vld [vmem:[#allocation3 + $0x110] sm:$0xff]
    %v2739 = vld [vmem:[#allocation3 + $0x118] sm:$0xff]
    %v2740 = vld [vmem:[#allocation3 + $0x120] sm:$0xff]
    %v2741 = vld [vmem:[#allocation3 + $0x128] sm:$0xff]
    %v2742 = vld [vmem:[#allocation3 + $0x130] sm:$0xff]
    %v2743 = vld [vmem:[#allocation3 + $0x138] sm:$0xff]
    %v2744 = vld [vmem:[#allocation3 + $0x140] sm:$0xff]
    %v2745 = vld [vmem:[#allocation3 + $0x148] sm:$0xff]
    %v2746 = vld [vmem:[#allocation3 + $0x150] sm:$0xff]
    %v2747 = vld [vmem:[#allocation3 + $0x158] sm:$0xff]
    %v2748 = vld [vmem:[#allocation3 + $0x160] sm:$0xff]
    %v2749 = vld [vmem:[#allocation3 + $0x168] sm:$0xff]
    %v2750 = vld [vmem:[#allocation3 + $0x170] sm:$0xff]
    %v2751 = vld [vmem:[#allocation3 + $0x178] sm:$0xff]
    %v2752 = vld [vmem:[#allocation3 + $0x180] sm:$0xff]
    %v2753 = vld [vmem:[#allocation3 + $0x188] sm:$0xff]
    %v2754 = vld [vmem:[#allocation3 + $0x190] sm:$0xff]
    %v2755 = vld [vmem:[#allocation3 + $0x198] sm:$0xff]
    %v2756 = vld [vmem:[#allocation3 + $0x1a0] sm:$0xff]
    %v2757 = vld [vmem:[#allocation3 + $0x1a8] sm:$0xff]
    %v2758 = vld [vmem:[#allocation3 + $0x1b0] sm:$0xff]
    %v2759 = vld [vmem:[#allocation3 + $0x1b8] sm:$0xff]
    %v2760 = vld [vmem:[#allocation3 + $0x1c0] sm:$0xff]
    %v2761 = vld [vmem:[#allocation3 + $0x1c8] sm:$0xff]
    %v2762 = vld [vmem:[#allocation3 + $0x1d0] sm:$0xff]
    %v2763 = vld [vmem:[#allocation3 + $0x1d8] sm:$0xff]
    %v2764 = vld [vmem:[#allocation3 + $0x1e0] sm:$0xff]
    %v2765 = vld [vmem:[#allocation3 + $0x1e8] sm:$0xff]
    %v2766 = vld [vmem:[#allocation3 + $0x1f0] sm:$0xff]
    %v2767 = vld [vmem:[#allocation3 + $0x1f8] sm:$0xff]
    %s2768 = scalar_lea.vmem [#allocation9], 384
    %v2769 = vld [vmem:[%s2768] sm:$0xff]
    %v2770 = vld [vmem:[%s2768 + $0x8] sm:$0xff]
    %v2771 = vld [vmem:[%s2768 + $0x10] sm:$0xff]
    %v2772 = vld [vmem:[%s2768 + $0x18] sm:$0xff]
    %v2773 = vld [vmem:[%s2768 + $0x20] sm:$0xff]
    %v2774 = vld [vmem:[%s2768 + $0x28] sm:$0xff]
    %v2775 = vld [vmem:[%s2768 + $0x30] sm:$0xff]
    %v2776 = vld [vmem:[%s2768 + $0x38] sm:$0xff]
    %v2777 = vld [vmem:[%s2768 + $0x40] sm:$0xff]
    %v2778 = vld [vmem:[%s2768 + $0x48] sm:$0xff]
    %v2779 = vld [vmem:[%s2768 + $0x50] sm:$0xff]
    %v2780 = vld [vmem:[%s2768 + $0x58] sm:$0xff]
    %v2781 = vld [vmem:[%s2768 + $0x60] sm:$0xff]
    %v2782 = vld [vmem:[%s2768 + $0x68] sm:$0xff]
    %v2783 = vld [vmem:[%s2768 + $0x70] sm:$0xff]
    %v2784 = vld [vmem:[%s2768 + $0x78] sm:$0xff]
    %2785 = vmatpush.msra.mxu0 %v2784
    %2786 = vmatpush.msra.mxu0 %v2783
    %2787 = vmatpush.msra.mxu0 %v2782
    %2788 = vmatpush.msra.mxu0 %v2781
    %2789 = vmatpush.msra.mxu0 %v2780
    %2790 = vmatpush.msra.mxu0 %v2779
    %2791 = vmatpush.msra.mxu0 %v2778
    %2792 = vmatpush.msra.mxu0 %v2777
    %2793 = vmatpush.msra.mxu0 %v2776
    %2794 = vmatpush.msra.mxu0 %v2775
    %2795 = vmatpush.msra.mxu0 %v2774
    %2796 = vmatpush.msra.mxu0 %v2773
    %2797 = vmatpush.msra.mxu0 %v2772
    %2798 = vmatpush.msra.mxu0 %v2771
    %2799 = vmatpush.msra.mxu0 %v2770
    %2800 = vmatpush.msra.mxu0 %v2769
    %2801 = vmatmul.f32.gmra.mxu0 %v2640
    %v2802 = vpop.f32.mrf.mxu0
    %v2803 = vadd.f32 0.0, %v2802
    %2804 = vmatmul.f32.gmra.mxu0 %v2641
    %v2805 = vpop.f32.mrf.mxu0
    %v2806 = vadd.f32 0.0, %v2805
    %2807 = vmatmul.f32.gmra.mxu0 %v2642
    %v2808 = vpop.f32.mrf.mxu0
    %v2809 = vadd.f32 0.0, %v2808
    %2810 = vmatmul.f32.gmra.mxu0 %v2643
    %v2811 = vpop.f32.mrf.mxu0
    %v2812 = vadd.f32 0.0, %v2811
    %2813 = vmatmul.f32.gmra.mxu0 %v2644
    %v2814 = vpop.f32.mrf.mxu0
    %v2815 = vadd.f32 0.0, %v2814
    %2816 = vmatmul.f32.gmra.mxu0 %v2645
    %v2817 = vpop.f32.mrf.mxu0
    %v2818 = vadd.f32 0.0, %v2817
    %2819 = vmatmul.f32.gmra.mxu0 %v2646
    %v2820 = vpop.f32.mrf.mxu0
    %v2821 = vadd.f32 0.0, %v2820
    %2822 = vmatmul.f32.gmra.mxu0 %v2647
    %v2823 = vpop.f32.mrf.mxu0
    %v2824 = vadd.f32 0.0, %v2823
    %2825 = vmatmul.f32.gmra.mxu0 %v2648
    %v2826 = vpop.f32.mrf.mxu0
    %v2827 = vadd.f32 0.0, %v2826
    %2828 = vmatmul.f32.gmra.mxu0 %v2649
    %v2829 = vpop.f32.mrf.mxu0
    %v2830 = vadd.f32 0.0, %v2829
    %2831 = vmatmul.f32.gmra.mxu0 %v2650
    %v2832 = vpop.f32.mrf.mxu0
    %v2833 = vadd.f32 0.0, %v2832
    %2834 = vmatmul.f32.gmra.mxu0 %v2651
    %v2835 = vpop.f32.mrf.mxu0
    %v2836 = vadd.f32 0.0, %v2835
    %2837 = vmatmul.f32.gmra.mxu0 %v2652
    %v2838 = vpop.f32.mrf.mxu0
    %v2839 = vadd.f32 0.0, %v2838
    %2840 = vmatmul.f32.gmra.mxu0 %v2653
    %v2841 = vpop.f32.mrf.mxu0
    %v2842 = vadd.f32 0.0, %v2841
    %2843 = vmatmul.f32.gmra.mxu0 %v2654
    %v2844 = vpop.f32.mrf.mxu0
    %v2845 = vadd.f32 0.0, %v2844
    %2846 = vmatmul.f32.gmra.mxu0 %v2655
    %v2847 = vpop.f32.mrf.mxu0
    %v2848 = vadd.f32 0.0, %v2847
    %2849 = vmatmul.f32.gmra.mxu0 %v2656
    %v2850 = vpop.f32.mrf.mxu0
    %v2851 = vadd.f32 0.0, %v2850
    %2852 = vmatmul.f32.gmra.mxu0 %v2657
    %v2853 = vpop.f32.mrf.mxu0
    %v2854 = vadd.f32 0.0, %v2853
    %2855 = vmatmul.f32.gmra.mxu0 %v2658
    %v2856 = vpop.f32.mrf.mxu0
    %v2857 = vadd.f32 0.0, %v2856
    %2858 = vmatmul.f32.gmra.mxu0 %v2659
    %v2859 = vpop.f32.mrf.mxu0
    %v2860 = vadd.f32 0.0, %v2859
    %2861 = vmatmul.f32.gmra.mxu0 %v2660
    %v2862 = vpop.f32.mrf.mxu0
    %v2863 = vadd.f32 0.0, %v2862
    %2864 = vmatmul.f32.gmra.mxu0 %v2661
    %v2865 = vpop.f32.mrf.mxu0
    %v2866 = vadd.f32 0.0, %v2865
    %2867 = vmatmul.f32.gmra.mxu0 %v2662
    %v2868 = vpop.f32.mrf.mxu0
    %v2869 = vadd.f32 0.0, %v2868
    %2870 = vmatmul.f32.gmra.mxu0 %v2663
    %v2871 = vpop.f32.mrf.mxu0
    %v2872 = vadd.f32 0.0, %v2871
    %2873 = vmatmul.f32.gmra.mxu0 %v2664
    %v2874 = vpop.f32.mrf.mxu0
    %v2875 = vadd.f32 0.0, %v2874
    %2876 = vmatmul.f32.gmra.mxu0 %v2665
    %v2877 = vpop.f32.mrf.mxu0
    %v2878 = vadd.f32 0.0, %v2877
    %2879 = vmatmul.f32.gmra.mxu0 %v2666
    %v2880 = vpop.f32.mrf.mxu0
    %v2881 = vadd.f32 0.0, %v2880
    %2882 = vmatmul.f32.gmra.mxu0 %v2667
    %v2883 = vpop.f32.mrf.mxu0
    %v2884 = vadd.f32 0.0, %v2883
    %2885 = vmatmul.f32.gmra.mxu0 %v2668
    %v2886 = vpop.f32.mrf.mxu0
    %v2887 = vadd.f32 0.0, %v2886
    %2888 = vmatmul.f32.gmra.mxu0 %v2669
    %v2889 = vpop.f32.mrf.mxu0
    %v2890 = vadd.f32 0.0, %v2889
    %2891 = vmatmul.f32.gmra.mxu0 %v2670
    %v2892 = vpop.f32.mrf.mxu0
    %v2893 = vadd.f32 0.0, %v2892
    %2894 = vmatmul.f32.gmra.mxu0 %v2671
    %v2895 = vpop.f32.mrf.mxu0
    %v2896 = vadd.f32 0.0, %v2895
    %2897 = vmatmul.f32.gmra.mxu0 %v2672
    %v2898 = vpop.f32.mrf.mxu0
    %v2899 = vadd.f32 0.0, %v2898
    %2900 = vmatmul.f32.gmra.mxu0 %v2673
    %v2901 = vpop.f32.mrf.mxu0
    %v2902 = vadd.f32 0.0, %v2901
    %2903 = vmatmul.f32.gmra.mxu0 %v2674
    %v2904 = vpop.f32.mrf.mxu0
    %v2905 = vadd.f32 0.0, %v2904
    %2906 = vmatmul.f32.gmra.mxu0 %v2675
    %v2907 = vpop.f32.mrf.mxu0
    %v2908 = vadd.f32 0.0, %v2907
    %2909 = vmatmul.f32.gmra.mxu0 %v2676
    %v2910 = vpop.f32.mrf.mxu0
    %v2911 = vadd.f32 0.0, %v2910
    %2912 = vmatmul.f32.gmra.mxu0 %v2677
    %v2913 = vpop.f32.mrf.mxu0
    %v2914 = vadd.f32 0.0, %v2913
    %2915 = vmatmul.f32.gmra.mxu0 %v2678
    %v2916 = vpop.f32.mrf.mxu0
    %v2917 = vadd.f32 0.0, %v2916
    %2918 = vmatmul.f32.gmra.mxu0 %v2679
    %v2919 = vpop.f32.mrf.mxu0
    %v2920 = vadd.f32 0.0, %v2919
    %2921 = vmatmul.f32.gmra.mxu0 %v2680
    %v2922 = vpop.f32.mrf.mxu0
    %v2923 = vadd.f32 0.0, %v2922
    %2924 = vmatmul.f32.gmra.mxu0 %v2681
    %v2925 = vpop.f32.mrf.mxu0
    %v2926 = vadd.f32 0.0, %v2925
    %2927 = vmatmul.f32.gmra.mxu0 %v2682
    %v2928 = vpop.f32.mrf.mxu0
    %v2929 = vadd.f32 0.0, %v2928
    %2930 = vmatmul.f32.gmra.mxu0 %v2683
    %v2931 = vpop.f32.mrf.mxu0
    %v2932 = vadd.f32 0.0, %v2931
    %2933 = vmatmul.f32.gmra.mxu0 %v2684
    %v2934 = vpop.f32.mrf.mxu0
    %v2935 = vadd.f32 0.0, %v2934
    %2936 = vmatmul.f32.gmra.mxu0 %v2685
    %v2937 = vpop.f32.mrf.mxu0
    %v2938 = vadd.f32 0.0, %v2937
    %2939 = vmatmul.f32.gmra.mxu0 %v2686
    %v2940 = vpop.f32.mrf.mxu0
    %v2941 = vadd.f32 0.0, %v2940
    %2942 = vmatmul.f32.gmra.mxu0 %v2687
    %v2943 = vpop.f32.mrf.mxu0
    %v2944 = vadd.f32 0.0, %v2943
    %2945 = vmatmul.f32.gmra.mxu0 %v2688
    %v2946 = vpop.f32.mrf.mxu0
    %v2947 = vadd.f32 0.0, %v2946
    %2948 = vmatmul.f32.gmra.mxu0 %v2689
    %v2949 = vpop.f32.mrf.mxu0
    %v2950 = vadd.f32 0.0, %v2949
    %2951 = vmatmul.f32.gmra.mxu0 %v2690
    %v2952 = vpop.f32.mrf.mxu0
    %v2953 = vadd.f32 0.0, %v2952
    %2954 = vmatmul.f32.gmra.mxu0 %v2691
    %v2955 = vpop.f32.mrf.mxu0
    %v2956 = vadd.f32 0.0, %v2955
    %2957 = vmatmul.f32.gmra.mxu0 %v2692
    %v2958 = vpop.f32.mrf.mxu0
    %v2959 = vadd.f32 0.0, %v2958
    %2960 = vmatmul.f32.gmra.mxu0 %v2693
    %v2961 = vpop.f32.mrf.mxu0
    %v2962 = vadd.f32 0.0, %v2961
    %2963 = vmatmul.f32.gmra.mxu0 %v2694
    %v2964 = vpop.f32.mrf.mxu0
    %v2965 = vadd.f32 0.0, %v2964
    %2966 = vmatmul.f32.gmra.mxu0 %v2695
    %v2967 = vpop.f32.mrf.mxu0
    %v2968 = vadd.f32 0.0, %v2967
    %2969 = vmatmul.f32.gmra.mxu0 %v2696
    %v2970 = vpop.f32.mrf.mxu0
    %v2971 = vadd.f32 0.0, %v2970
    %2972 = vmatmul.f32.gmra.mxu0 %v2697
    %v2973 = vpop.f32.mrf.mxu0
    %v2974 = vadd.f32 0.0, %v2973
    %2975 = vmatmul.f32.gmra.mxu0 %v2698
    %v2976 = vpop.f32.mrf.mxu0
    %v2977 = vadd.f32 0.0, %v2976
    %2978 = vmatmul.f32.gmra.mxu0 %v2699
    %v2979 = vpop.f32.mrf.mxu0
    %v2980 = vadd.f32 0.0, %v2979
    %2981 = vmatmul.f32.gmra.mxu0 %v2700
    %v2982 = vpop.f32.mrf.mxu0
    %v2983 = vadd.f32 0.0, %v2982
    %2984 = vmatmul.f32.gmra.mxu0 %v2701
    %v2985 = vpop.f32.mrf.mxu0
    %v2986 = vadd.f32 0.0, %v2985
    %2987 = vmatmul.f32.gmra.mxu0 %v2702
    %v2988 = vpop.f32.mrf.mxu0
    %v2989 = vadd.f32 0.0, %v2988
    %2990 = vmatmul.f32.gmra.mxu0 %v2703
    %v2991 = vpop.f32.mrf.mxu0
    %v2992 = vadd.f32 0.0, %v2991
    %2993 = vdwg.mxu0
    %v2994 = vadd.f32 %v2704, %v2803
    %v2995 = vadd.f32 %v2705, %v2806
    %v2996 = vadd.f32 %v2706, %v2809
    %v2997 = vadd.f32 %v2707, %v2812
    %v2998 = vadd.f32 %v2708, %v2815
    %v2999 = vadd.f32 %v2709, %v2818
    %v3000 = vadd.f32 %v2710, %v2821
    %v3001 = vadd.f32 %v2711, %v2824
    %v3002 = vadd.f32 %v2712, %v2827
    %v3003 = vadd.f32 %v2713, %v2830
    %v3004 = vadd.f32 %v2714, %v2833
    %v3005 = vadd.f32 %v2715, %v2836
    %v3006 = vadd.f32 %v2716, %v2839
    %v3007 = vadd.f32 %v2717, %v2842
    %v3008 = vadd.f32 %v2718, %v2845
    %v3009 = vadd.f32 %v2719, %v2848
    %v3010 = vadd.f32 %v2720, %v2851
    %v3011 = vadd.f32 %v2721, %v2854
    %v3012 = vadd.f32 %v2722, %v2857
    %v3013 = vadd.f32 %v2723, %v2860
    %v3014 = vadd.f32 %v2724, %v2863
    %v3015 = vadd.f32 %v2725, %v2866
    %v3016 = vadd.f32 %v2726, %v2869
    %v3017 = vadd.f32 %v2727, %v2872
    %v3018 = vadd.f32 %v2728, %v2875
    %v3019 = vadd.f32 %v2729, %v2878
    %v3020 = vadd.f32 %v2730, %v2881
    %v3021 = vadd.f32 %v2731, %v2884
    %v3022 = vadd.f32 %v2732, %v2887
    %v3023 = vadd.f32 %v2733, %v2890
    %v3024 = vadd.f32 %v2734, %v2893
    %v3025 = vadd.f32 %v2735, %v2896
    %v3026 = vadd.f32 %v2736, %v2899
    %v3027 = vadd.f32 %v2737, %v2902
    %v3028 = vadd.f32 %v2738, %v2905
    %v3029 = vadd.f32 %v2739, %v2908
    %v3030 = vadd.f32 %v2740, %v2911
    %v3031 = vadd.f32 %v2741, %v2914
    %v3032 = vadd.f32 %v2742, %v2917
    %v3033 = vadd.f32 %v2743, %v2920
    %v3034 = vadd.f32 %v2744, %v2923
    %v3035 = vadd.f32 %v2745, %v2926
    %v3036 = vadd.f32 %v2746, %v2929
    %v3037 = vadd.f32 %v2747, %v2932
    %v3038 = vadd.f32 %v2748, %v2935
    %v3039 = vadd.f32 %v2749, %v2938
    %v3040 = vadd.f32 %v2750, %v2941
    %v3041 = vadd.f32 %v2751, %v2944
    %v3042 = vadd.f32 %v2752, %v2947
    %v3043 = vadd.f32 %v2753, %v2950
    %v3044 = vadd.f32 %v2754, %v2953
    %v3045 = vadd.f32 %v2755, %v2956
    %v3046 = vadd.f32 %v2756, %v2959
    %v3047 = vadd.f32 %v2757, %v2962
    %v3048 = vadd.f32 %v2758, %v2965
    %v3049 = vadd.f32 %v2759, %v2968
    %v3050 = vadd.f32 %v2760, %v2971
    %v3051 = vadd.f32 %v2761, %v2974
    %v3052 = vadd.f32 %v2762, %v2977
    %v3053 = vadd.f32 %v2763, %v2980
    %v3054 = vadd.f32 %v2764, %v2983
    %v3055 = vadd.f32 %v2765, %v2986
    %v3056 = vadd.f32 %v2766, %v2989
    %v3057 = vadd.f32 %v2767, %v2992
    %3058 = vst [vmem:[#allocation3] sm:$0xff] %v2994
    %3059 = vst [vmem:[#allocation3 + $0x8] sm:$0xff] %v2995
    %3060 = vst [vmem:[#allocation3 + $0x10] sm:$0xff] %v2996
    %3061 = vst [vmem:[#allocation3 + $0x18] sm:$0xff] %v2997
    %3062 = vst [vmem:[#allocation3 + $0x20] sm:$0xff] %v2998
    %3063 = vst [vmem:[#allocation3 + $0x28] sm:$0xff] %v2999
    %3064 = vst [vmem:[#allocation3 + $0x30] sm:$0xff] %v3000
    %3065 = vst [vmem:[#allocation3 + $0x38] sm:$0xff] %v3001
    %3066 = vst [vmem:[#allocation3 + $0x40] sm:$0xff] %v3002
    %3067 = vst [vmem:[#allocation3 + $0x48] sm:$0xff] %v3003
    %3068 = vst [vmem:[#allocation3 + $0x50] sm:$0xff] %v3004
    %3069 = vst [vmem:[#allocation3 + $0x58] sm:$0xff] %v3005
    %3070 = vst [vmem:[#allocation3 + $0x60] sm:$0xff] %v3006
    %3071 = vst [vmem:[#allocation3 + $0x68] sm:$0xff] %v3007
    %3072 = vst [vmem:[#allocation3 + $0x70] sm:$0xff] %v3008
    %3073 = vst [vmem:[#allocation3 + $0x78] sm:$0xff] %v3009
    %3074 = vst [vmem:[#allocation3 + $0x80] sm:$0xff] %v3010
    %3075 = vst [vmem:[#allocation3 + $0x88] sm:$0xff] %v3011
    %3076 = vst [vmem:[#allocation3 + $0x90] sm:$0xff] %v3012
    %3077 = vst [vmem:[#allocation3 + $0x98] sm:$0xff] %v3013
    %3078 = vst [vmem:[#allocation3 + $0xa0] sm:$0xff] %v3014
    %3079 = vst [vmem:[#allocation3 + $0xa8] sm:$0xff] %v3015
    %3080 = vst [vmem:[#allocation3 + $0xb0] sm:$0xff] %v3016
    %3081 = vst [vmem:[#allocation3 + $0xb8] sm:$0xff] %v3017
    %3082 = vst [vmem:[#allocation3 + $0xc0] sm:$0xff] %v3018
    %3083 = vst [vmem:[#allocation3 + $0xc8] sm:$0xff] %v3019
    %3084 = vst [vmem:[#allocation3 + $0xd0] sm:$0xff] %v3020
    %3085 = vst [vmem:[#allocation3 + $0xd8] sm:$0xff] %v3021
    %3086 = vst [vmem:[#allocation3 + $0xe0] sm:$0xff] %v3022
    %3087 = vst [vmem:[#allocation3 + $0xe8] sm:$0xff] %v3023
    %3088 = vst [vmem:[#allocation3 + $0xf0] sm:$0xff] %v3024
    %3089 = vst [vmem:[#allocation3 + $0xf8] sm:$0xff] %v3025
    %3090 = vst [vmem:[#allocation3 + $0x100] sm:$0xff] %v3026
    %3091 = vst [vmem:[#allocation3 + $0x108] sm:$0xff] %v3027
    %3092 = vst [vmem:[#allocation3 + $0x110] sm:$0xff] %v3028
    %3093 = vst [vmem:[#allocation3 + $0x118] sm:$0xff] %v3029
    %3094 = vst [vmem:[#allocation3 + $0x120] sm:$0xff] %v3030
    %3095 = vst [vmem:[#allocation3 + $0x128] sm:$0xff] %v3031
    %3096 = vst [vmem:[#allocation3 + $0x130] sm:$0xff] %v3032
    %3097 = vst [vmem:[#allocation3 + $0x138] sm:$0xff] %v3033
    %3098 = vst [vmem:[#allocation3 + $0x140] sm:$0xff] %v3034
    %3099 = vst [vmem:[#allocation3 + $0x148] sm:$0xff] %v3035
    %3100 = vst [vmem:[#allocation3 + $0x150] sm:$0xff] %v3036
    %3101 = vst [vmem:[#allocation3 + $0x158] sm:$0xff] %v3037
    %3102 = vst [vmem:[#allocation3 + $0x160] sm:$0xff] %v3038
    %3103 = vst [vmem:[#allocation3 + $0x168] sm:$0xff] %v3039
    %3104 = vst [vmem:[#allocation3 + $0x170] sm:$0xff] %v3040
    %3105 = vst [vmem:[#allocation3 + $0x178] sm:$0xff] %v3041
    %3106 = vst [vmem:[#allocation3 + $0x180] sm:$0xff] %v3042
    %3107 = vst [vmem:[#allocation3 + $0x188] sm:$0xff] %v3043
    %3108 = vst [vmem:[#allocation3 + $0x190] sm:$0xff] %v3044
    %3109 = vst [vmem:[#allocation3 + $0x198] sm:$0xff] %v3045
    %3110 = vst [vmem:[#allocation3 + $0x1a0] sm:$0xff] %v3046
    %3111 = vst [vmem:[#allocation3 + $0x1a8] sm:$0xff] %v3047
    %3112 = vst [vmem:[#allocation3 + $0x1b0] sm:$0xff] %v3048
    %3113 = vst [vmem:[#allocation3 + $0x1b8] sm:$0xff] %v3049
    %3114 = vst [vmem:[#allocation3 + $0x1c0] sm:$0xff] %v3050
    %3115 = vst [vmem:[#allocation3 + $0x1c8] sm:$0xff] %v3051
    %3116 = vst [vmem:[#allocation3 + $0x1d0] sm:$0xff] %v3052
    %3117 = vst [vmem:[#allocation3 + $0x1d8] sm:$0xff] %v3053
    %3118 = vst [vmem:[#allocation3 + $0x1e0] sm:$0xff] %v3054
    %3119 = vst [vmem:[#allocation3 + $0x1e8] sm:$0xff] %v3055
    %3120 = vst [vmem:[#allocation3 + $0x1f0] sm:$0xff] %v3056
    %3121 = vst [vmem:[#allocation3 + $0x1f8] sm:$0xff] %v3057
    %v3122 = vld [vmem:[%s1066 + $0x1] sm:$0xff]
    %v3123 = vld [vmem:[%s1066 + $0x9] sm:$0xff]
    %v3124 = vld [vmem:[%s1066 + $0x19] sm:$0xff]
    %v3125 = vld [vmem:[%s1066 + $0x21] sm:$0xff]
    %v3126 = vld [vmem:[%s1066 + $0x31] sm:$0xff]
    %v3127 = vld [vmem:[%s1066 + $0x39] sm:$0xff]
    %v3128 = vld [vmem:[%s1066 + $0x49] sm:$0xff]
    %v3129 = vld [vmem:[%s1066 + $0x51] sm:$0xff]
    %v3130 = vld [vmem:[%s1066 + $0x61] sm:$0xff]
    %v3131 = vld [vmem:[%s1066 + $0x69] sm:$0xff]
    %v3132 = vld [vmem:[%s1066 + $0x79] sm:$0xff]
    %v3133 = vld [vmem:[%s1066 + $0x81] sm:$0xff]
    %v3134 = vld [vmem:[%s1066 + $0x91] sm:$0xff]
    %v3135 = vld [vmem:[%s1066 + $0x99] sm:$0xff]
    %v3136 = vld [vmem:[%s1066 + $0xa9] sm:$0xff]
    %v3137 = vld [vmem:[%s1066 + $0xb1] sm:$0xff]
    %v3138 = vld [vmem:[%s1066 + $0xc1] sm:$0xff]
    %v3139 = vld [vmem:[%s1066 + $0xc9] sm:$0xff]
    %v3140 = vld [vmem:[%s1066 + $0xd9] sm:$0xff]
    %v3141 = vld [vmem:[%s1066 + $0xe1] sm:$0xff]
    %v3142 = vld [vmem:[%s1066 + $0xf1] sm:$0xff]
    %v3143 = vld [vmem:[%s1066 + $0xf9] sm:$0xff]
    %v3144 = vld [vmem:[%s1066 + $0x109] sm:$0xff]
    %v3145 = vld [vmem:[%s1066 + $0x111] sm:$0xff]
    %v3146 = vld [vmem:[%s1066 + $0x121] sm:$0xff]
    %v3147 = vld [vmem:[%s1066 + $0x129] sm:$0xff]
    %v3148 = vld [vmem:[%s1066 + $0x139] sm:$0xff]
    %v3149 = vld [vmem:[%s1066 + $0x141] sm:$0xff]
    %v3150 = vld [vmem:[%s1066 + $0x151] sm:$0xff]
    %v3151 = vld [vmem:[%s1066 + $0x159] sm:$0xff]
    %v3152 = vld [vmem:[%s1066 + $0x169] sm:$0xff]
    %v3153 = vld [vmem:[%s1066 + $0x171] sm:$0xff]
    %v3154 = vld [vmem:[%s1066 + $0x1b1] sm:$0xff]
    %v3155 = vld [vmem:[%s1066 + $0x1b9] sm:$0xff]
    %v3156 = vld [vmem:[%s1066 + $0x1c9] sm:$0xff]
    %v3157 = vld [vmem:[%s1066 + $0x1d1] sm:$0xff]
    %v3158 = vld [vmem:[%s1066 + $0x1e1] sm:$0xff]
    %v3159 = vld [vmem:[%s1066 + $0x1e9] sm:$0xff]
    %v3160 = vld [vmem:[%s1066 + $0x1f9] sm:$0xff]
    %v3161 = vld [vmem:[%s1066 + $0x201] sm:$0xff]
    %v3162 = vld [vmem:[%s1066 + $0x211] sm:$0xff]
    %v3163 = vld [vmem:[%s1066 + $0x219] sm:$0xff]
    %v3164 = vld [vmem:[%s1066 + $0x229] sm:$0xff]
    %v3165 = vld [vmem:[%s1066 + $0x231] sm:$0xff]
    %v3166 = vld [vmem:[%s1066 + $0x241] sm:$0xff]
    %v3167 = vld [vmem:[%s1066 + $0x249] sm:$0xff]
    %v3168 = vld [vmem:[%s1066 + $0x259] sm:$0xff]
    %v3169 = vld [vmem:[%s1066 + $0x261] sm:$0xff]
    %v3170 = vld [vmem:[%s1066 + $0x271] sm:$0xff]
    %v3171 = vld [vmem:[%s1066 + $0x279] sm:$0xff]
    %v3172 = vld [vmem:[%s1066 + $0x289] sm:$0xff]
    %v3173 = vld [vmem:[%s1066 + $0x291] sm:$0xff]
    %v3174 = vld [vmem:[%s1066 + $0x2a1] sm:$0xff]
    %v3175 = vld [vmem:[%s1066 + $0x2a9] sm:$0xff]
    %v3176 = vld [vmem:[%s1066 + $0x2b9] sm:$0xff]
    %v3177 = vld [vmem:[%s1066 + $0x2c1] sm:$0xff]
    %v3178 = vld [vmem:[%s1066 + $0x2d1] sm:$0xff]
    %v3179 = vld [vmem:[%s1066 + $0x2d9] sm:$0xff]
    %v3180 = vld [vmem:[%s1066 + $0x2e9] sm:$0xff]
    %v3181 = vld [vmem:[%s1066 + $0x2f1] sm:$0xff]
    %v3182 = vld [vmem:[%s1066 + $0x301] sm:$0xff]
    %v3183 = vld [vmem:[%s1066 + $0x309] sm:$0xff]
    %v3184 = vld [vmem:[%s1066 + $0x319] sm:$0xff]
    %v3185 = vld [vmem:[%s1066 + $0x321] sm:$0xff]
    %v3186 = vld [vmem:[#allocation3] sm:$0xff]
    %v3187 = vld [vmem:[#allocation3 + $0x8] sm:$0xff]
    %v3188 = vld [vmem:[#allocation3 + $0x10] sm:$0xff]
    %v3189 = vld [vmem:[#allocation3 + $0x18] sm:$0xff]
    %v3190 = vld [vmem:[#allocation3 + $0x20] sm:$0xff]
    %v3191 = vld [vmem:[#allocation3 + $0x28] sm:$0xff]
    %v3192 = vld [vmem:[#allocation3 + $0x30] sm:$0xff]
    %v3193 = vld [vmem:[#allocation3 + $0x38] sm:$0xff]
    %v3194 = vld [vmem:[#allocation3 + $0x40] sm:$0xff]
    %v3195 = vld [vmem:[#allocation3 + $0x48] sm:$0xff]
    %v3196 = vld [vmem:[#allocation3 + $0x50] sm:$0xff]
    %v3197 = vld [vmem:[#allocation3 + $0x58] sm:$0xff]
    %v3198 = vld [vmem:[#allocation3 + $0x60] sm:$0xff]
    %v3199 = vld [vmem:[#allocation3 + $0x68] sm:$0xff]
    %v3200 = vld [vmem:[#allocation3 + $0x70] sm:$0xff]
    %v3201 = vld [vmem:[#allocation3 + $0x78] sm:$0xff]
    %v3202 = vld [vmem:[#allocation3 + $0x80] sm:$0xff]
    %v3203 = vld [vmem:[#allocation3 + $0x88] sm:$0xff]
    %v3204 = vld [vmem:[#allocation3 + $0x90] sm:$0xff]
    %v3205 = vld [vmem:[#allocation3 + $0x98] sm:$0xff]
    %v3206 = vld [vmem:[#allocation3 + $0xa0] sm:$0xff]
    %v3207 = vld [vmem:[#allocation3 + $0xa8] sm:$0xff]
    %v3208 = vld [vmem:[#allocation3 + $0xb0] sm:$0xff]
    %v3209 = vld [vmem:[#allocation3 + $0xb8] sm:$0xff]
    %v3210 = vld [vmem:[#allocation3 + $0xc0] sm:$0xff]
    %v3211 = vld [vmem:[#allocation3 + $0xc8] sm:$0xff]
    %v3212 = vld [vmem:[#allocation3 + $0xd0] sm:$0xff]
    %v3213 = vld [vmem:[#allocation3 + $0xd8] sm:$0xff]
    %v3214 = vld [vmem:[#allocation3 + $0xe0] sm:$0xff]
    %v3215 = vld [vmem:[#allocation3 + $0xe8] sm:$0xff]
    %v3216 = vld [vmem:[#allocation3 + $0xf0] sm:$0xff]
    %v3217 = vld [vmem:[#allocation3 + $0xf8] sm:$0xff]
    %v3218 = vld [vmem:[#allocation3 + $0x100] sm:$0xff]
    %v3219 = vld [vmem:[#allocation3 + $0x108] sm:$0xff]
    %v3220 = vld [vmem:[#allocation3 + $0x110] sm:$0xff]
    %v3221 = vld [vmem:[#allocation3 + $0x118] sm:$0xff]
    %v3222 = vld [vmem:[#allocation3 + $0x120] sm:$0xff]
    %v3223 = vld [vmem:[#allocation3 + $0x128] sm:$0xff]
    %v3224 = vld [vmem:[#allocation3 + $0x130] sm:$0xff]
    %v3225 = vld [vmem:[#allocation3 + $0x138] sm:$0xff]
    %v3226 = vld [vmem:[#allocation3 + $0x140] sm:$0xff]
    %v3227 = vld [vmem:[#allocation3 + $0x148] sm:$0xff]
    %v3228 = vld [vmem:[#allocation3 + $0x150] sm:$0xff]
    %v3229 = vld [vmem:[#allocation3 + $0x158] sm:$0xff]
    %v3230 = vld [vmem:[#allocation3 + $0x160] sm:$0xff]
    %v3231 = vld [vmem:[#allocation3 + $0x168] sm:$0xff]
    %v3232 = vld [vmem:[#allocation3 + $0x170] sm:$0xff]
    %v3233 = vld [vmem:[#allocation3 + $0x178] sm:$0xff]
    %v3234 = vld [vmem:[#allocation3 + $0x180] sm:$0xff]
    %v3235 = vld [vmem:[#allocation3 + $0x188] sm:$0xff]
    %v3236 = vld [vmem:[#allocation3 + $0x190] sm:$0xff]
    %v3237 = vld [vmem:[#allocation3 + $0x198] sm:$0xff]
    %v3238 = vld [vmem:[#allocation3 + $0x1a0] sm:$0xff]
    %v3239 = vld [vmem:[#allocation3 + $0x1a8] sm:$0xff]
    %v3240 = vld [vmem:[#allocation3 + $0x1b0] sm:$0xff]
    %v3241 = vld [vmem:[#allocation3 + $0x1b8] sm:$0xff]
    %v3242 = vld [vmem:[#allocation3 + $0x1c0] sm:$0xff]
    %v3243 = vld [vmem:[#allocation3 + $0x1c8] sm:$0xff]
    %v3244 = vld [vmem:[#allocation3 + $0x1d0] sm:$0xff]
    %v3245 = vld [vmem:[#allocation3 + $0x1d8] sm:$0xff]
    %v3246 = vld [vmem:[#allocation3 + $0x1e0] sm:$0xff]
    %v3247 = vld [vmem:[#allocation3 + $0x1e8] sm:$0xff]
    %v3248 = vld [vmem:[#allocation3 + $0x1f0] sm:$0xff]
    %v3249 = vld [vmem:[#allocation3 + $0x1f8] sm:$0xff]
    %s3250 = scalar_lea.vmem [#allocation9], 512
    %v3251 = vld [vmem:[%s3250] sm:$0xff]
    %v3252 = vld [vmem:[%s3250 + $0x8] sm:$0xff]
    %v3253 = vld [vmem:[%s3250 + $0x10] sm:$0xff]
    %v3254 = vld [vmem:[%s3250 + $0x18] sm:$0xff]
    %v3255 = vld [vmem:[%s3250 + $0x20] sm:$0xff]
    %v3256 = vld [vmem:[%s3250 + $0x28] sm:$0xff]
    %v3257 = vld [vmem:[%s3250 + $0x30] sm:$0xff]
    %v3258 = vld [vmem:[%s3250 + $0x38] sm:$0xff]
    %v3259 = vld [vmem:[%s3250 + $0x40] sm:$0xff]
    %v3260 = vld [vmem:[%s3250 + $0x48] sm:$0xff]
    %v3261 = vld [vmem:[%s3250 + $0x50] sm:$0xff]
    %v3262 = vld [vmem:[%s3250 + $0x58] sm:$0xff]
    %v3263 = vld [vmem:[%s3250 + $0x60] sm:$0xff]
    %v3264 = vld [vmem:[%s3250 + $0x68] sm:$0xff]
    %v3265 = vld [vmem:[%s3250 + $0x70] sm:$0xff]
    %v3266 = vld [vmem:[%s3250 + $0x78] sm:$0xff]
    %3267 = vmatpush.msra.mxu0 %v3266
    %3268 = vmatpush.msra.mxu0 %v3265
    %3269 = vmatpush.msra.mxu0 %v3264
    %3270 = vmatpush.msra.mxu0 %v3263
    %3271 = vmatpush.msra.mxu0 %v3262
    %3272 = vmatpush.msra.mxu0 %v3261
    %3273 = vmatpush.msra.mxu0 %v3260
    %3274 = vmatpush.msra.mxu0 %v3259
    %3275 = vmatpush.msra.mxu0 %v3258
    %3276 = vmatpush.msra.mxu0 %v3257
    %3277 = vmatpush.msra.mxu0 %v3256
    %3278 = vmatpush.msra.mxu0 %v3255
    %3279 = vmatpush.msra.mxu0 %v3254
    %3280 = vmatpush.msra.mxu0 %v3253
    %3281 = vmatpush.msra.mxu0 %v3252
    %3282 = vmatpush.msra.mxu0 %v3251
    %3283 = vmatmul.f32.gmra.mxu0 %v3122
    %v3284 = vpop.f32.mrf.mxu0
    %v3285 = vadd.f32 0.0, %v3284
    %3286 = vmatmul.f32.gmra.mxu0 %v3123
    %v3287 = vpop.f32.mrf.mxu0
    %v3288 = vadd.f32 0.0, %v3287
    %3289 = vmatmul.f32.gmra.mxu0 %v3124
    %v3290 = vpop.f32.mrf.mxu0
    %v3291 = vadd.f32 0.0, %v3290
    %3292 = vmatmul.f32.gmra.mxu0 %v3125
    %v3293 = vpop.f32.mrf.mxu0
    %v3294 = vadd.f32 0.0, %v3293
    %3295 = vmatmul.f32.gmra.mxu0 %v3126
    %v3296 = vpop.f32.mrf.mxu0
    %v3297 = vadd.f32 0.0, %v3296
    %3298 = vmatmul.f32.gmra.mxu0 %v3127
    %v3299 = vpop.f32.mrf.mxu0
    %v3300 = vadd.f32 0.0, %v3299
    %3301 = vmatmul.f32.gmra.mxu0 %v3128
    %v3302 = vpop.f32.mrf.mxu0
    %v3303 = vadd.f32 0.0, %v3302
    %3304 = vmatmul.f32.gmra.mxu0 %v3129
    %v3305 = vpop.f32.mrf.mxu0
    %v3306 = vadd.f32 0.0, %v3305
    %3307 = vmatmul.f32.gmra.mxu0 %v3130
    %v3308 = vpop.f32.mrf.mxu0
    %v3309 = vadd.f32 0.0, %v3308
    %3310 = vmatmul.f32.gmra.mxu0 %v3131
    %v3311 = vpop.f32.mrf.mxu0
    %v3312 = vadd.f32 0.0, %v3311
    %3313 = vmatmul.f32.gmra.mxu0 %v3132
    %v3314 = vpop.f32.mrf.mxu0
    %v3315 = vadd.f32 0.0, %v3314
    %3316 = vmatmul.f32.gmra.mxu0 %v3133
    %v3317 = vpop.f32.mrf.mxu0
    %v3318 = vadd.f32 0.0, %v3317
    %3319 = vmatmul.f32.gmra.mxu0 %v3134
    %v3320 = vpop.f32.mrf.mxu0
    %v3321 = vadd.f32 0.0, %v3320
    %3322 = vmatmul.f32.gmra.mxu0 %v3135
    %v3323 = vpop.f32.mrf.mxu0
    %v3324 = vadd.f32 0.0, %v3323
    %3325 = vmatmul.f32.gmra.mxu0 %v3136
    %v3326 = vpop.f32.mrf.mxu0
    %v3327 = vadd.f32 0.0, %v3326
    %3328 = vmatmul.f32.gmra.mxu0 %v3137
    %v3329 = vpop.f32.mrf.mxu0
    %v3330 = vadd.f32 0.0, %v3329
    %3331 = vmatmul.f32.gmra.mxu0 %v3138
    %v3332 = vpop.f32.mrf.mxu0
    %v3333 = vadd.f32 0.0, %v3332
    %3334 = vmatmul.f32.gmra.mxu0 %v3139
    %v3335 = vpop.f32.mrf.mxu0
    %v3336 = vadd.f32 0.0, %v3335
    %3337 = vmatmul.f32.gmra.mxu0 %v3140
    %v3338 = vpop.f32.mrf.mxu0
    %v3339 = vadd.f32 0.0, %v3338
    %3340 = vmatmul.f32.gmra.mxu0 %v3141
    %v3341 = vpop.f32.mrf.mxu0
    %v3342 = vadd.f32 0.0, %v3341
    %3343 = vmatmul.f32.gmra.mxu0 %v3142
    %v3344 = vpop.f32.mrf.mxu0
    %v3345 = vadd.f32 0.0, %v3344
    %3346 = vmatmul.f32.gmra.mxu0 %v3143
    %v3347 = vpop.f32.mrf.mxu0
    %v3348 = vadd.f32 0.0, %v3347
    %3349 = vmatmul.f32.gmra.mxu0 %v3144
    %v3350 = vpop.f32.mrf.mxu0
    %v3351 = vadd.f32 0.0, %v3350
    %3352 = vmatmul.f32.gmra.mxu0 %v3145
    %v3353 = vpop.f32.mrf.mxu0
    %v3354 = vadd.f32 0.0, %v3353
    %3355 = vmatmul.f32.gmra.mxu0 %v3146
    %v3356 = vpop.f32.mrf.mxu0
    %v3357 = vadd.f32 0.0, %v3356
    %3358 = vmatmul.f32.gmra.mxu0 %v3147
    %v3359 = vpop.f32.mrf.mxu0
    %v3360 = vadd.f32 0.0, %v3359
    %3361 = vmatmul.f32.gmra.mxu0 %v3148
    %v3362 = vpop.f32.mrf.mxu0
    %v3363 = vadd.f32 0.0, %v3362
    %3364 = vmatmul.f32.gmra.mxu0 %v3149
    %v3365 = vpop.f32.mrf.mxu0
    %v3366 = vadd.f32 0.0, %v3365
    %3367 = vmatmul.f32.gmra.mxu0 %v3150
    %v3368 = vpop.f32.mrf.mxu0
    %v3369 = vadd.f32 0.0, %v3368
    %3370 = vmatmul.f32.gmra.mxu0 %v3151
    %v3371 = vpop.f32.mrf.mxu0
    %v3372 = vadd.f32 0.0, %v3371
    %3373 = vmatmul.f32.gmra.mxu0 %v3152
    %v3374 = vpop.f32.mrf.mxu0
    %v3375 = vadd.f32 0.0, %v3374
    %3376 = vmatmul.f32.gmra.mxu0 %v3153
    %v3377 = vpop.f32.mrf.mxu0
    %v3378 = vadd.f32 0.0, %v3377
    %3379 = vmatmul.f32.gmra.mxu0 %v3154
    %v3380 = vpop.f32.mrf.mxu0
    %v3381 = vadd.f32 0.0, %v3380
    %3382 = vmatmul.f32.gmra.mxu0 %v3155
    %v3383 = vpop.f32.mrf.mxu0
    %v3384 = vadd.f32 0.0, %v3383
    %3385 = vmatmul.f32.gmra.mxu0 %v3156
    %v3386 = vpop.f32.mrf.mxu0
    %v3387 = vadd.f32 0.0, %v3386
    %3388 = vmatmul.f32.gmra.mxu0 %v3157
    %v3389 = vpop.f32.mrf.mxu0
    %v3390 = vadd.f32 0.0, %v3389
    %3391 = vmatmul.f32.gmra.mxu0 %v3158
    %v3392 = vpop.f32.mrf.mxu0
    %v3393 = vadd.f32 0.0, %v3392
    %3394 = vmatmul.f32.gmra.mxu0 %v3159
    %v3395 = vpop.f32.mrf.mxu0
    %v3396 = vadd.f32 0.0, %v3395
    %3397 = vmatmul.f32.gmra.mxu0 %v3160
    %v3398 = vpop.f32.mrf.mxu0
    %v3399 = vadd.f32 0.0, %v3398
    %3400 = vmatmul.f32.gmra.mxu0 %v3161
    %v3401 = vpop.f32.mrf.mxu0
    %v3402 = vadd.f32 0.0, %v3401
    %3403 = vmatmul.f32.gmra.mxu0 %v3162
    %v3404 = vpop.f32.mrf.mxu0
    %v3405 = vadd.f32 0.0, %v3404
    %3406 = vmatmul.f32.gmra.mxu0 %v3163
    %v3407 = vpop.f32.mrf.mxu0
    %v3408 = vadd.f32 0.0, %v3407
    %3409 = vmatmul.f32.gmra.mxu0 %v3164
    %v3410 = vpop.f32.mrf.mxu0
    %v3411 = vadd.f32 0.0, %v3410
    %3412 = vmatmul.f32.gmra.mxu0 %v3165
    %v3413 = vpop.f32.mrf.mxu0
    %v3414 = vadd.f32 0.0, %v3413
    %3415 = vmatmul.f32.gmra.mxu0 %v3166
    %v3416 = vpop.f32.mrf.mxu0
    %v3417 = vadd.f32 0.0, %v3416
    %3418 = vmatmul.f32.gmra.mxu0 %v3167
    %v3419 = vpop.f32.mrf.mxu0
    %v3420 = vadd.f32 0.0, %v3419
    %3421 = vmatmul.f32.gmra.mxu0 %v3168
    %v3422 = vpop.f32.mrf.mxu0
    %v3423 = vadd.f32 0.0, %v3422
    %3424 = vmatmul.f32.gmra.mxu0 %v3169
    %v3425 = vpop.f32.mrf.mxu0
    %v3426 = vadd.f32 0.0, %v3425
    %3427 = vmatmul.f32.gmra.mxu0 %v3170
    %v3428 = vpop.f32.mrf.mxu0
    %v3429 = vadd.f32 0.0, %v3428
    %3430 = vmatmul.f32.gmra.mxu0 %v3171
    %v3431 = vpop.f32.mrf.mxu0
    %v3432 = vadd.f32 0.0, %v3431
    %3433 = vmatmul.f32.gmra.mxu0 %v3172
    %v3434 = vpop.f32.mrf.mxu0
    %v3435 = vadd.f32 0.0, %v3434
    %3436 = vmatmul.f32.gmra.mxu0 %v3173
    %v3437 = vpop.f32.mrf.mxu0
    %v3438 = vadd.f32 0.0, %v3437
    %3439 = vmatmul.f32.gmra.mxu0 %v3174
    %v3440 = vpop.f32.mrf.mxu0
    %v3441 = vadd.f32 0.0, %v3440
    %3442 = vmatmul.f32.gmra.mxu0 %v3175
    %v3443 = vpop.f32.mrf.mxu0
    %v3444 = vadd.f32 0.0, %v3443
    %3445 = vmatmul.f32.gmra.mxu0 %v3176
    %v3446 = vpop.f32.mrf.mxu0
    %v3447 = vadd.f32 0.0, %v3446
    %3448 = vmatmul.f32.gmra.mxu0 %v3177
    %v3449 = vpop.f32.mrf.mxu0
    %v3450 = vadd.f32 0.0, %v3449
    %3451 = vmatmul.f32.gmra.mxu0 %v3178
    %v3452 = vpop.f32.mrf.mxu0
    %v3453 = vadd.f32 0.0, %v3452
    %3454 = vmatmul.f32.gmra.mxu0 %v3179
    %v3455 = vpop.f32.mrf.mxu0
    %v3456 = vadd.f32 0.0, %v3455
    %3457 = vmatmul.f32.gmra.mxu0 %v3180
    %v3458 = vpop.f32.mrf.mxu0
    %v3459 = vadd.f32 0.0, %v3458
    %3460 = vmatmul.f32.gmra.mxu0 %v3181
    %v3461 = vpop.f32.mrf.mxu0
    %v3462 = vadd.f32 0.0, %v3461
    %3463 = vmatmul.f32.gmra.mxu0 %v3182
    %v3464 = vpop.f32.mrf.mxu0
    %v3465 = vadd.f32 0.0, %v3464
    %3466 = vmatmul.f32.gmra.mxu0 %v3183
    %v3467 = vpop.f32.mrf.mxu0
    %v3468 = vadd.f32 0.0, %v3467
    %3469 = vmatmul.f32.gmra.mxu0 %v3184
    %v3470 = vpop.f32.mrf.mxu0
    %v3471 = vadd.f32 0.0, %v3470
    %3472 = vmatmul.f32.gmra.mxu0 %v3185
    %v3473 = vpop.f32.mrf.mxu0
    %v3474 = vadd.f32 0.0, %v3473
    %3475 = vdwg.mxu0
    %v3476 = vadd.f32 %v3186, %v3285
    %v3477 = vadd.f32 %v3187, %v3288
    %v3478 = vadd.f32 %v3188, %v3291
    %v3479 = vadd.f32 %v3189, %v3294
    %v3480 = vadd.f32 %v3190, %v3297
    %v3481 = vadd.f32 %v3191, %v3300
    %v3482 = vadd.f32 %v3192, %v3303
    %v3483 = vadd.f32 %v3193, %v3306
    %v3484 = vadd.f32 %v3194, %v3309
    %v3485 = vadd.f32 %v3195, %v3312
    %v3486 = vadd.f32 %v3196, %v3315
    %v3487 = vadd.f32 %v3197, %v3318
    %v3488 = vadd.f32 %v3198, %v3321
    %v3489 = vadd.f32 %v3199, %v3324
    %v3490 = vadd.f32 %v3200, %v3327
    %v3491 = vadd.f32 %v3201, %v3330
    %v3492 = vadd.f32 %v3202, %v3333
    %v3493 = vadd.f32 %v3203, %v3336
    %v3494 = vadd.f32 %v3204, %v3339
    %v3495 = vadd.f32 %v3205, %v3342
    %v3496 = vadd.f32 %v3206, %v3345
    %v3497 = vadd.f32 %v3207, %v3348
    %v3498 = vadd.f32 %v3208, %v3351
    %v3499 = vadd.f32 %v3209, %v3354
    %v3500 = vadd.f32 %v3210, %v3357
    %v3501 = vadd.f32 %v3211, %v3360
    %v3502 = vadd.f32 %v3212, %v3363
    %v3503 = vadd.f32 %v3213, %v3366
    %v3504 = vadd.f32 %v3214, %v3369
    %v3505 = vadd.f32 %v3215, %v3372
    %v3506 = vadd.f32 %v3216, %v3375
    %v3507 = vadd.f32 %v3217, %v3378
    %v3508 = vadd.f32 %v3218, %v3381
    %v3509 = vadd.f32 %v3219, %v3384
    %v3510 = vadd.f32 %v3220, %v3387
    %v3511 = vadd.f32 %v3221, %v3390
    %v3512 = vadd.f32 %v3222, %v3393
    %v3513 = vadd.f32 %v3223, %v3396
    %v3514 = vadd.f32 %v3224, %v3399
    %v3515 = vadd.f32 %v3225, %v3402
    %v3516 = vadd.f32 %v3226, %v3405
    %v3517 = vadd.f32 %v3227, %v3408
    %v3518 = vadd.f32 %v3228, %v3411
    %v3519 = vadd.f32 %v3229, %v3414
    %v3520 = vadd.f32 %v3230, %v3417
    %v3521 = vadd.f32 %v3231, %v3420
    %v3522 = vadd.f32 %v3232, %v3423
    %v3523 = vadd.f32 %v3233, %v3426
    %v3524 = vadd.f32 %v3234, %v3429
    %v3525 = vadd.f32 %v3235, %v3432
    %v3526 = vadd.f32 %v3236, %v3435
    %v3527 = vadd.f32 %v3237, %v3438
    %v3528 = vadd.f32 %v3238, %v3441
    %v3529 = vadd.f32 %v3239, %v3444
    %v3530 = vadd.f32 %v3240, %v3447
    %v3531 = vadd.f32 %v3241, %v3450
    %v3532 = vadd.f32 %v3242, %v3453
    %v3533 = vadd.f32 %v3243, %v3456
    %v3534 = vadd.f32 %v3244, %v3459
    %v3535 = vadd.f32 %v3245, %v3462
    %v3536 = vadd.f32 %v3246, %v3465
    %v3537 = vadd.f32 %v3247, %v3468
    %v3538 = vadd.f32 %v3248, %v3471
    %v3539 = vadd.f32 %v3249, %v3474
    %3540 = vst [vmem:[#allocation3] sm:$0xff] %v3476
    %3541 = vst [vmem:[#allocation3 + $0x8] sm:$0xff] %v3477
    %3542 = vst [vmem:[#allocation3 + $0x10] sm:$0xff] %v3478
    %3543 = vst [vmem:[#allocation3 + $0x18] sm:$0xff] %v3479
    %3544 = vst [vmem:[#allocation3 + $0x20] sm:$0xff] %v3480
    %3545 = vst [vmem:[#allocation3 + $0x28] sm:$0xff] %v3481
    %3546 = vst [vmem:[#allocation3 + $0x30] sm:$0xff] %v3482
    %3547 = vst [vmem:[#allocation3 + $0x38] sm:$0xff] %v3483
    %3548 = vst [vmem:[#allocation3 + $0x40] sm:$0xff] %v3484
    %3549 = vst [vmem:[#allocation3 + $0x48] sm:$0xff] %v3485
    %3550 = vst [vmem:[#allocation3 + $0x50] sm:$0xff] %v3486
    %3551 = vst [vmem:[#allocation3 + $0x58] sm:$0xff] %v3487
    %3552 = vst [vmem:[#allocation3 + $0x60] sm:$0xff] %v3488
    %3553 = vst [vmem:[#allocation3 + $0x68] sm:$0xff] %v3489
    %3554 = vst [vmem:[#allocation3 + $0x70] sm:$0xff] %v3490
    %3555 = vst [vmem:[#allocation3 + $0x78] sm:$0xff] %v3491
    %3556 = vst [vmem:[#allocation3 + $0x80] sm:$0xff] %v3492
    %3557 = vst [vmem:[#allocation3 + $0x88] sm:$0xff] %v3493
    %3558 = vst [vmem:[#allocation3 + $0x90] sm:$0xff] %v3494
    %3559 = vst [vmem:[#allocation3 + $0x98] sm:$0xff] %v3495
    %3560 = vst [vmem:[#allocation3 + $0xa0] sm:$0xff] %v3496
    %3561 = vst [vmem:[#allocation3 + $0xa8] sm:$0xff] %v3497
    %3562 = vst [vmem:[#allocation3 + $0xb0] sm:$0xff] %v3498
    %3563 = vst [vmem:[#allocation3 + $0xb8] sm:$0xff] %v3499
    %3564 = vst [vmem:[#allocation3 + $0xc0] sm:$0xff] %v3500
    %3565 = vst [vmem:[#allocation3 + $0xc8] sm:$0xff] %v3501
    %3566 = vst [vmem:[#allocation3 + $0xd0] sm:$0xff] %v3502
    %3567 = vst [vmem:[#allocation3 + $0xd8] sm:$0xff] %v3503
    %3568 = vst [vmem:[#allocation3 + $0xe0] sm:$0xff] %v3504
    %3569 = vst [vmem:[#allocation3 + $0xe8] sm:$0xff] %v3505
    %3570 = vst [vmem:[#allocation3 + $0xf0] sm:$0xff] %v3506
    %3571 = vst [vmem:[#allocation3 + $0xf8] sm:$0xff] %v3507
    %3572 = vst [vmem:[#allocation3 + $0x100] sm:$0xff] %v3508
    %3573 = vst [vmem:[#allocation3 + $0x108] sm:$0xff] %v3509
    %3574 = vst [vmem:[#allocation3 + $0x110] sm:$0xff] %v3510
    %3575 = vst [vmem:[#allocation3 + $0x118] sm:$0xff] %v3511
    %3576 = vst [vmem:[#allocation3 + $0x120] sm:$0xff] %v3512
    %3577 = vst [vmem:[#allocation3 + $0x128] sm:$0xff] %v3513
    %3578 = vst [vmem:[#allocation3 + $0x130] sm:$0xff] %v3514
    %3579 = vst [vmem:[#allocation3 + $0x138] sm:$0xff] %v3515
    %3580 = vst [vmem:[#allocation3 + $0x140] sm:$0xff] %v3516
    %3581 = vst [vmem:[#allocation3 + $0x148] sm:$0xff] %v3517
    %3582 = vst [vmem:[#allocation3 + $0x150] sm:$0xff] %v3518
    %3583 = vst [vmem:[#allocation3 + $0x158] sm:$0xff] %v3519
    %3584 = vst [vmem:[#allocation3 + $0x160] sm:$0xff] %v3520
    %3585 = vst [vmem:[#allocation3 + $0x168] sm:$0xff] %v3521
    %3586 = vst [vmem:[#allocation3 + $0x170] sm:$0xff] %v3522
    %3587 = vst [vmem:[#allocation3 + $0x178] sm:$0xff] %v3523
    %3588 = vst [vmem:[#allocation3 + $0x180] sm:$0xff] %v3524
    %3589 = vst [vmem:[#allocation3 + $0x188] sm:$0xff] %v3525
    %3590 = vst [vmem:[#allocation3 + $0x190] sm:$0xff] %v3526
    %3591 = vst [vmem:[#allocation3 + $0x198] sm:$0xff] %v3527
    %3592 = vst [vmem:[#allocation3 + $0x1a0] sm:$0xff] %v3528
    %3593 = vst [vmem:[#allocation3 + $0x1a8] sm:$0xff] %v3529
    %3594 = vst [vmem:[#allocation3 + $0x1b0] sm:$0xff] %v3530
    %3595 = vst [vmem:[#allocation3 + $0x1b8] sm:$0xff] %v3531
    %3596 = vst [vmem:[#allocation3 + $0x1c0] sm:$0xff] %v3532
    %3597 = vst [vmem:[#allocation3 + $0x1c8] sm:$0xff] %v3533
    %3598 = vst [vmem:[#allocation3 + $0x1d0] sm:$0xff] %v3534
    %3599 = vst [vmem:[#allocation3 + $0x1d8] sm:$0xff] %v3535
    %3600 = vst [vmem:[#allocation3 + $0x1e0] sm:$0xff] %v3536
    %3601 = vst [vmem:[#allocation3 + $0x1e8] sm:$0xff] %v3537
    %3602 = vst [vmem:[#allocation3 + $0x1f0] sm:$0xff] %v3538
    %3603 = vst [vmem:[#allocation3 + $0x1f8] sm:$0xff] %v3539
    %v3604 = vld [vmem:[%s1066 + $0x2] sm:$0xff]
    %v3605 = vld [vmem:[%s1066 + $0xa] sm:$0xff]
    %v3606 = vld [vmem:[%s1066 + $0x1a] sm:$0xff]
    %v3607 = vld [vmem:[%s1066 + $0x22] sm:$0xff]
    %v3608 = vld [vmem:[%s1066 + $0x32] sm:$0xff]
    %v3609 = vld [vmem:[%s1066 + $0x3a] sm:$0xff]
    %v3610 = vld [vmem:[%s1066 + $0x4a] sm:$0xff]
    %v3611 = vld [vmem:[%s1066 + $0x52] sm:$0xff]
    %v3612 = vld [vmem:[%s1066 + $0x62] sm:$0xff]
    %v3613 = vld [vmem:[%s1066 + $0x6a] sm:$0xff]
    %v3614 = vld [vmem:[%s1066 + $0x7a] sm:$0xff]
    %v3615 = vld [vmem:[%s1066 + $0x82] sm:$0xff]
    %v3616 = vld [vmem:[%s1066 + $0x92] sm:$0xff]
    %v3617 = vld [vmem:[%s1066 + $0x9a] sm:$0xff]
    %v3618 = vld [vmem:[%s1066 + $0xaa] sm:$0xff]
    %v3619 = vld [vmem:[%s1066 + $0xb2] sm:$0xff]
    %v3620 = vld [vmem:[%s1066 + $0xc2] sm:$0xff]
    %v3621 = vld [vmem:[%s1066 + $0xca] sm:$0xff]
    %v3622 = vld [vmem:[%s1066 + $0xda] sm:$0xff]
    %v3623 = vld [vmem:[%s1066 + $0xe2] sm:$0xff]
    %v3624 = vld [vmem:[%s1066 + $0xf2] sm:$0xff]
    %v3625 = vld [vmem:[%s1066 + $0xfa] sm:$0xff]
    %v3626 = vld [vmem:[%s1066 + $0x10a] sm:$0xff]
    %v3627 = vld [vmem:[%s1066 + $0x112] sm:$0xff]
    %v3628 = vld [vmem:[%s1066 + $0x122] sm:$0xff]
    %v3629 = vld [vmem:[%s1066 + $0x12a] sm:$0xff]
    %v3630 = vld [vmem:[%s1066 + $0x13a] sm:$0xff]
    %v3631 = vld [vmem:[%s1066 + $0x142] sm:$0xff]
    %v3632 = vld [vmem:[%s1066 + $0x152] sm:$0xff]
    %v3633 = vld [vmem:[%s1066 + $0x15a] sm:$0xff]
    %v3634 = vld [vmem:[%s1066 + $0x16a] sm:$0xff]
    %v3635 = vld [vmem:[%s1066 + $0x172] sm:$0xff]
    %v3636 = vld [vmem:[%s1066 + $0x1b2] sm:$0xff]
    %v3637 = vld [vmem:[%s1066 + $0x1ba] sm:$0xff]
    %v3638 = vld [vmem:[%s1066 + $0x1ca] sm:$0xff]
    %v3639 = vld [vmem:[%s1066 + $0x1d2] sm:$0xff]
    %v3640 = vld [vmem:[%s1066 + $0x1e2] sm:$0xff]
    %v3641 = vld [vmem:[%s1066 + $0x1ea] sm:$0xff]
    %v3642 = vld [vmem:[%s1066 + $0x1fa] sm:$0xff]
    %v3643 = vld [vmem:[%s1066 + $0x202] sm:$0xff]
    %v3644 = vld [vmem:[%s1066 + $0x212] sm:$0xff]
    %v3645 = vld [vmem:[%s1066 + $0x21a] sm:$0xff]
    %v3646 = vld [vmem:[%s1066 + $0x22a] sm:$0xff]
    %v3647 = vld [vmem:[%s1066 + $0x232] sm:$0xff]
    %v3648 = vld [vmem:[%s1066 + $0x242] sm:$0xff]
    %v3649 = vld [vmem:[%s1066 + $0x24a] sm:$0xff]
    %v3650 = vld [vmem:[%s1066 + $0x25a] sm:$0xff]
    %v3651 = vld [vmem:[%s1066 + $0x262] sm:$0xff]
    %v3652 = vld [vmem:[%s1066 + $0x272] sm:$0xff]
    %v3653 = vld [vmem:[%s1066 + $0x27a] sm:$0xff]
    %v3654 = vld [vmem:[%s1066 + $0x28a] sm:$0xff]
    %v3655 = vld [vmem:[%s1066 + $0x292] sm:$0xff]
    %v3656 = vld [vmem:[%s1066 + $0x2a2] sm:$0xff]
    %v3657 = vld [vmem:[%s1066 + $0x2aa] sm:$0xff]
    %v3658 = vld [vmem:[%s1066 + $0x2ba] sm:$0xff]
    %v3659 = vld [vmem:[%s1066 + $0x2c2] sm:$0xff]
    %v3660 = vld [vmem:[%s1066 + $0x2d2] sm:$0xff]
    %v3661 = vld [vmem:[%s1066 + $0x2da] sm:$0xff]
    %v3662 = vld [vmem:[%s1066 + $0x2ea] sm:$0xff]
    %v3663 = vld [vmem:[%s1066 + $0x2f2] sm:$0xff]
    %v3664 = vld [vmem:[%s1066 + $0x302] sm:$0xff]
    %v3665 = vld [vmem:[%s1066 + $0x30a] sm:$0xff]
    %v3666 = vld [vmem:[%s1066 + $0x31a] sm:$0xff]
    %v3667 = vld [vmem:[%s1066 + $0x322] sm:$0xff]
    %v3668 = vld [vmem:[#allocation3] sm:$0xff]
    %v3669 = vld [vmem:[#allocation3 + $0x8] sm:$0xff]
    %v3670 = vld [vmem:[#allocation3 + $0x10] sm:$0xff]
    %v3671 = vld [vmem:[#allocation3 + $0x18] sm:$0xff]
    %v3672 = vld [vmem:[#allocation3 + $0x20] sm:$0xff]
    %v3673 = vld [vmem:[#allocation3 + $0x28] sm:$0xff]
    %v3674 = vld [vmem:[#allocation3 + $0x30] sm:$0xff]
    %v3675 = vld [vmem:[#allocation3 + $0x38] sm:$0xff]
    %v3676 = vld [vmem:[#allocation3 + $0x40] sm:$0xff]
    %v3677 = vld [vmem:[#allocation3 + $0x48] sm:$0xff]
    %v3678 = vld [vmem:[#allocation3 + $0x50] sm:$0xff]
    %v3679 = vld [vmem:[#allocation3 + $0x58] sm:$0xff]
    %v3680 = vld [vmem:[#allocation3 + $0x60] sm:$0xff]
    %v3681 = vld [vmem:[#allocation3 + $0x68] sm:$0xff]
    %v3682 = vld [vmem:[#allocation3 + $0x70] sm:$0xff]
    %v3683 = vld [vmem:[#allocation3 + $0x78] sm:$0xff]
    %v3684 = vld [vmem:[#allocation3 + $0x80] sm:$0xff]
    %v3685 = vld [vmem:[#allocation3 + $0x88] sm:$0xff]
    %v3686 = vld [vmem:[#allocation3 + $0x90] sm:$0xff]
    %v3687 = vld [vmem:[#allocation3 + $0x98] sm:$0xff]
    %v3688 = vld [vmem:[#allocation3 + $0xa0] sm:$0xff]
    %v3689 = vld [vmem:[#allocation3 + $0xa8] sm:$0xff]
    %v3690 = vld [vmem:[#allocation3 + $0xb0] sm:$0xff]
    %v3691 = vld [vmem:[#allocation3 + $0xb8] sm:$0xff]
    %v3692 = vld [vmem:[#allocation3 + $0xc0] sm:$0xff]
    %v3693 = vld [vmem:[#allocation3 + $0xc8] sm:$0xff]
    %v3694 = vld [vmem:[#allocation3 + $0xd0] sm:$0xff]
    %v3695 = vld [vmem:[#allocation3 + $0xd8] sm:$0xff]
    %v3696 = vld [vmem:[#allocation3 + $0xe0] sm:$0xff]
    %v3697 = vld [vmem:[#allocation3 + $0xe8] sm:$0xff]
    %v3698 = vld [vmem:[#allocation3 + $0xf0] sm:$0xff]
    %v3699 = vld [vmem:[#allocation3 + $0xf8] sm:$0xff]
    %v3700 = vld [vmem:[#allocation3 + $0x100] sm:$0xff]
    %v3701 = vld [vmem:[#allocation3 + $0x108] sm:$0xff]
    %v3702 = vld [vmem:[#allocation3 + $0x110] sm:$0xff]
    %v3703 = vld [vmem:[#allocation3 + $0x118] sm:$0xff]
    %v3704 = vld [vmem:[#allocation3 + $0x120] sm:$0xff]
    %v3705 = vld [vmem:[#allocation3 + $0x128] sm:$0xff]
    %v3706 = vld [vmem:[#allocation3 + $0x130] sm:$0xff]
    %v3707 = vld [vmem:[#allocation3 + $0x138] sm:$0xff]
    %v3708 = vld [vmem:[#allocation3 + $0x140] sm:$0xff]
    %v3709 = vld [vmem:[#allocation3 + $0x148] sm:$0xff]
    %v3710 = vld [vmem:[#allocation3 + $0x150] sm:$0xff]
    %v3711 = vld [vmem:[#allocation3 + $0x158] sm:$0xff]
    %v3712 = vld [vmem:[#allocation3 + $0x160] sm:$0xff]
    %v3713 = vld [vmem:[#allocation3 + $0x168] sm:$0xff]
    %v3714 = vld [vmem:[#allocation3 + $0x170] sm:$0xff]
    %v3715 = vld [vmem:[#allocation3 + $0x178] sm:$0xff]
    %v3716 = vld [vmem:[#allocation3 + $0x180] sm:$0xff]
    %v3717 = vld [vmem:[#allocation3 + $0x188] sm:$0xff]
    %v3718 = vld [vmem:[#allocation3 + $0x190] sm:$0xff]
    %v3719 = vld [vmem:[#allocation3 + $0x198] sm:$0xff]
    %v3720 = vld [vmem:[#allocation3 + $0x1a0] sm:$0xff]
    %v3721 = vld [vmem:[#allocation3 + $0x1a8] sm:$0xff]
    %v3722 = vld [vmem:[#allocation3 + $0x1b0] sm:$0xff]
    %v3723 = vld [vmem:[#allocation3 + $0x1b8] sm:$0xff]
    %v3724 = vld [vmem:[#allocation3 + $0x1c0] sm:$0xff]
    %v3725 = vld [vmem:[#allocation3 + $0x1c8] sm:$0xff]
    %v3726 = vld [vmem:[#allocation3 + $0x1d0] sm:$0xff]
    %v3727 = vld [vmem:[#allocation3 + $0x1d8] sm:$0xff]
    %v3728 = vld [vmem:[#allocation3 + $0x1e0] sm:$0xff]
    %v3729 = vld [vmem:[#allocation3 + $0x1e8] sm:$0xff]
    %v3730 = vld [vmem:[#allocation3 + $0x1f0] sm:$0xff]
    %v3731 = vld [vmem:[#allocation3 + $0x1f8] sm:$0xff]
    %s3732 = scalar_lea.vmem [#allocation9], 640
    %v3733 = vld [vmem:[%s3732] sm:$0xff]
    %v3734 = vld [vmem:[%s3732 + $0x8] sm:$0xff]
    %v3735 = vld [vmem:[%s3732 + $0x10] sm:$0xff]
    %v3736 = vld [vmem:[%s3732 + $0x18] sm:$0xff]
    %v3737 = vld [vmem:[%s3732 + $0x20] sm:$0xff]
    %v3738 = vld [vmem:[%s3732 + $0x28] sm:$0xff]
    %v3739 = vld [vmem:[%s3732 + $0x30] sm:$0xff]
    %v3740 = vld [vmem:[%s3732 + $0x38] sm:$0xff]
    %v3741 = vld [vmem:[%s3732 + $0x40] sm:$0xff]
    %v3742 = vld [vmem:[%s3732 + $0x48] sm:$0xff]
    %v3743 = vld [vmem:[%s3732 + $0x50] sm:$0xff]
    %v3744 = vld [vmem:[%s3732 + $0x58] sm:$0xff]
    %v3745 = vld [vmem:[%s3732 + $0x60] sm:$0xff]
    %v3746 = vld [vmem:[%s3732 + $0x68] sm:$0xff]
    %v3747 = vld [vmem:[%s3732 + $0x70] sm:$0xff]
    %v3748 = vld [vmem:[%s3732 + $0x78] sm:$0xff]
    %3749 = vmatpush.msra.mxu0 %v3748
    %3750 = vmatpush.msra.mxu0 %v3747
    %3751 = vmatpush.msra.mxu0 %v3746
    %3752 = vmatpush.msra.mxu0 %v3745
    %3753 = vmatpush.msra.mxu0 %v3744
    %3754 = vmatpush.msra.mxu0 %v3743
    %3755 = vmatpush.msra.mxu0 %v3742
    %3756 = vmatpush.msra.mxu0 %v3741
    %3757 = vmatpush.msra.mxu0 %v3740
    %3758 = vmatpush.msra.mxu0 %v3739
    %3759 = vmatpush.msra.mxu0 %v3738
    %3760 = vmatpush.msra.mxu0 %v3737
    %3761 = vmatpush.msra.mxu0 %v3736
    %3762 = vmatpush.msra.mxu0 %v3735
    %3763 = vmatpush.msra.mxu0 %v3734
    %3764 = vmatpush.msra.mxu0 %v3733
    %3765 = vmatmul.f32.gmra.mxu0 %v3604
    %v3766 = vpop.f32.mrf.mxu0
    %v3767 = vadd.f32 0.0, %v3766
    %3768 = vmatmul.f32.gmra.mxu0 %v3605
    %v3769 = vpop.f32.mrf.mxu0
    %v3770 = vadd.f32 0.0, %v3769
    %3771 = vmatmul.f32.gmra.mxu0 %v3606
    %v3772 = vpop.f32.mrf.mxu0
    %v3773 = vadd.f32 0.0, %v3772
    %3774 = vmatmul.f32.gmra.mxu0 %v3607
    %v3775 = vpop.f32.mrf.mxu0
    %v3776 = vadd.f32 0.0, %v3775
    %3777 = vmatmul.f32.gmra.mxu0 %v3608
    %v3778 = vpop.f32.mrf.mxu0
    %v3779 = vadd.f32 0.0, %v3778
    %3780 = vmatmul.f32.gmra.mxu0 %v3609
    %v3781 = vpop.f32.mrf.mxu0
    %v3782 = vadd.f32 0.0, %v3781
    %3783 = vmatmul.f32.gmra.mxu0 %v3610
    %v3784 = vpop.f32.mrf.mxu0
    %v3785 = vadd.f32 0.0, %v3784
    %3786 = vmatmul.f32.gmra.mxu0 %v3611
    %v3787 = vpop.f32.mrf.mxu0
    %v3788 = vadd.f32 0.0, %v3787
    %3789 = vmatmul.f32.gmra.mxu0 %v3612
    %v3790 = vpop.f32.mrf.mxu0
    %v3791 = vadd.f32 0.0, %v3790
    %3792 = vmatmul.f32.gmra.mxu0 %v3613
    %v3793 = vpop.f32.mrf.mxu0
    %v3794 = vadd.f32 0.0, %v3793
    %3795 = vmatmul.f32.gmra.mxu0 %v3614
    %v3796 = vpop.f32.mrf.mxu0
    %v3797 = vadd.f32 0.0, %v3796
    %3798 = vmatmul.f32.gmra.mxu0 %v3615
    %v3799 = vpop.f32.mrf.mxu0
    %v3800 = vadd.f32 0.0, %v3799
    %3801 = vmatmul.f32.gmra.mxu0 %v3616
    %v3802 = vpop.f32.mrf.mxu0
    %v3803 = vadd.f32 0.0, %v3802
    %3804 = vmatmul.f32.gmra.mxu0 %v3617
    %v3805 = vpop.f32.mrf.mxu0
    %v3806 = vadd.f32 0.0, %v3805
    %3807 = vmatmul.f32.gmra.mxu0 %v3618
    %v3808 = vpop.f32.mrf.mxu0
    %v3809 = vadd.f32 0.0, %v3808
    %3810 = vmatmul.f32.gmra.mxu0 %v3619
    %v3811 = vpop.f32.mrf.mxu0
    %v3812 = vadd.f32 0.0, %v3811
    %3813 = vmatmul.f32.gmra.mxu0 %v3620
    %v3814 = vpop.f32.mrf.mxu0
    %v3815 = vadd.f32 0.0, %v3814
    %3816 = vmatmul.f32.gmra.mxu0 %v3621
    %v3817 = vpop.f32.mrf.mxu0
    %v3818 = vadd.f32 0.0, %v3817
    %3819 = vmatmul.f32.gmra.mxu0 %v3622
    %v3820 = vpop.f32.mrf.mxu0
    %v3821 = vadd.f32 0.0, %v3820
    %3822 = vmatmul.f32.gmra.mxu0 %v3623
    %v3823 = vpop.f32.mrf.mxu0
    %v3824 = vadd.f32 0.0, %v3823
    %3825 = vmatmul.f32.gmra.mxu0 %v3624
    %v3826 = vpop.f32.mrf.mxu0
    %v3827 = vadd.f32 0.0, %v3826
    %3828 = vmatmul.f32.gmra.mxu0 %v3625
    %v3829 = vpop.f32.mrf.mxu0
    %v3830 = vadd.f32 0.0, %v3829
    %3831 = vmatmul.f32.gmra.mxu0 %v3626
    %v3832 = vpop.f32.mrf.mxu0
    %v3833 = vadd.f32 0.0, %v3832
    %3834 = vmatmul.f32.gmra.mxu0 %v3627
    %v3835 = vpop.f32.mrf.mxu0
    %v3836 = vadd.f32 0.0, %v3835
    %3837 = vmatmul.f32.gmra.mxu0 %v3628
    %v3838 = vpop.f32.mrf.mxu0
    %v3839 = vadd.f32 0.0, %v3838
    %3840 = vmatmul.f32.gmra.mxu0 %v3629
    %v3841 = vpop.f32.mrf.mxu0
    %v3842 = vadd.f32 0.0, %v3841
    %3843 = vmatmul.f32.gmra.mxu0 %v3630
    %v3844 = vpop.f32.mrf.mxu0
    %v3845 = vadd.f32 0.0, %v3844
    %3846 = vmatmul.f32.gmra.mxu0 %v3631
    %v3847 = vpop.f32.mrf.mxu0
    %v3848 = vadd.f32 0.0, %v3847
    %3849 = vmatmul.f32.gmra.mxu0 %v3632
    %v3850 = vpop.f32.mrf.mxu0
    %v3851 = vadd.f32 0.0, %v3850
    %3852 = vmatmul.f32.gmra.mxu0 %v3633
    %v3853 = vpop.f32.mrf.mxu0
    %v3854 = vadd.f32 0.0, %v3853
    %3855 = vmatmul.f32.gmra.mxu0 %v3634
    %v3856 = vpop.f32.mrf.mxu0
    %v3857 = vadd.f32 0.0, %v3856
    %3858 = vmatmul.f32.gmra.mxu0 %v3635
    %v3859 = vpop.f32.mrf.mxu0
    %v3860 = vadd.f32 0.0, %v3859
    %3861 = vmatmul.f32.gmra.mxu0 %v3636
    %v3862 = vpop.f32.mrf.mxu0
    %v3863 = vadd.f32 0.0, %v3862
    %3864 = vmatmul.f32.gmra.mxu0 %v3637
    %v3865 = vpop.f32.mrf.mxu0
    %v3866 = vadd.f32 0.0, %v3865
    %3867 = vmatmul.f32.gmra.mxu0 %v3638
    %v3868 = vpop.f32.mrf.mxu0
    %v3869 = vadd.f32 0.0, %v3868
    %3870 = vmatmul.f32.gmra.mxu0 %v3639
    %v3871 = vpop.f32.mrf.mxu0
    %v3872 = vadd.f32 0.0, %v3871
    %3873 = vmatmul.f32.gmra.mxu0 %v3640
    %v3874 = vpop.f32.mrf.mxu0
    %v3875 = vadd.f32 0.0, %v3874
    %3876 = vmatmul.f32.gmra.mxu0 %v3641
    %v3877 = vpop.f32.mrf.mxu0
    %v3878 = vadd.f32 0.0, %v3877
    %3879 = vmatmul.f32.gmra.mxu0 %v3642
    %v3880 = vpop.f32.mrf.mxu0
    %v3881 = vadd.f32 0.0, %v3880
    %3882 = vmatmul.f32.gmra.mxu0 %v3643
    %v3883 = vpop.f32.mrf.mxu0
    %v3884 = vadd.f32 0.0, %v3883
    %3885 = vmatmul.f32.gmra.mxu0 %v3644
    %v3886 = vpop.f32.mrf.mxu0
    %v3887 = vadd.f32 0.0, %v3886
    %3888 = vmatmul.f32.gmra.mxu0 %v3645
    %v3889 = vpop.f32.mrf.mxu0
    %v3890 = vadd.f32 0.0, %v3889
    %3891 = vmatmul.f32.gmra.mxu0 %v3646
    %v3892 = vpop.f32.mrf.mxu0
    %v3893 = vadd.f32 0.0, %v3892
    %3894 = vmatmul.f32.gmra.mxu0 %v3647
    %v3895 = vpop.f32.mrf.mxu0
    %v3896 = vadd.f32 0.0, %v3895
    %3897 = vmatmul.f32.gmra.mxu0 %v3648
    %v3898 = vpop.f32.mrf.mxu0
    %v3899 = vadd.f32 0.0, %v3898
    %3900 = vmatmul.f32.gmra.mxu0 %v3649
    %v3901 = vpop.f32.mrf.mxu0
    %v3902 = vadd.f32 0.0, %v3901
    %3903 = vmatmul.f32.gmra.mxu0 %v3650
    %v3904 = vpop.f32.mrf.mxu0
    %v3905 = vadd.f32 0.0, %v3904
    %3906 = vmatmul.f32.gmra.mxu0 %v3651
    %v3907 = vpop.f32.mrf.mxu0
    %v3908 = vadd.f32 0.0, %v3907
    %3909 = vmatmul.f32.gmra.mxu0 %v3652
    %v3910 = vpop.f32.mrf.mxu0
    %v3911 = vadd.f32 0.0, %v3910
    %3912 = vmatmul.f32.gmra.mxu0 %v3653
    %v3913 = vpop.f32.mrf.mxu0
    %v3914 = vadd.f32 0.0, %v3913
    %3915 = vmatmul.f32.gmra.mxu0 %v3654
    %v3916 = vpop.f32.mrf.mxu0
    %v3917 = vadd.f32 0.0, %v3916
    %3918 = vmatmul.f32.gmra.mxu0 %v3655
    %v3919 = vpop.f32.mrf.mxu0
    %v3920 = vadd.f32 0.0, %v3919
    %3921 = vmatmul.f32.gmra.mxu0 %v3656
    %v3922 = vpop.f32.mrf.mxu0
    %v3923 = vadd.f32 0.0, %v3922
    %3924 = vmatmul.f32.gmra.mxu0 %v3657
    %v3925 = vpop.f32.mrf.mxu0
    %v3926 = vadd.f32 0.0, %v3925
    %3927 = vmatmul.f32.gmra.mxu0 %v3658
    %v3928 = vpop.f32.mrf.mxu0
    %v3929 = vadd.f32 0.0, %v3928
    %3930 = vmatmul.f32.gmra.mxu0 %v3659
    %v3931 = vpop.f32.mrf.mxu0
    %v3932 = vadd.f32 0.0, %v3931
    %3933 = vmatmul.f32.gmra.mxu0 %v3660
    %v3934 = vpop.f32.mrf.mxu0
    %v3935 = vadd.f32 0.0, %v3934
    %3936 = vmatmul.f32.gmra.mxu0 %v3661
    %v3937 = vpop.f32.mrf.mxu0
    %v3938 = vadd.f32 0.0, %v3937
    %3939 = vmatmul.f32.gmra.mxu0 %v3662
    %v3940 = vpop.f32.mrf.mxu0
    %v3941 = vadd.f32 0.0, %v3940
    %3942 = vmatmul.f32.gmra.mxu0 %v3663
    %v3943 = vpop.f32.mrf.mxu0
    %v3944 = vadd.f32 0.0, %v3943
    %3945 = vmatmul.f32.gmra.mxu0 %v3664
    %v3946 = vpop.f32.mrf.mxu0
    %v3947 = vadd.f32 0.0, %v3946
    %3948 = vmatmul.f32.gmra.mxu0 %v3665
    %v3949 = vpop.f32.mrf.mxu0
    %v3950 = vadd.f32 0.0, %v3949
    %3951 = vmatmul.f32.gmra.mxu0 %v3666
    %v3952 = vpop.f32.mrf.mxu0
    %v3953 = vadd.f32 0.0, %v3952
    %3954 = vmatmul.f32.gmra.mxu0 %v3667
    %v3955 = vpop.f32.mrf.mxu0
    %v3956 = vadd.f32 0.0, %v3955
    %3957 = vdwg.mxu0
    %v3958 = vadd.f32 %v3668, %v3767
    %v3959 = vadd.f32 %v3669, %v3770
    %v3960 = vadd.f32 %v3670, %v3773
    %v3961 = vadd.f32 %v3671, %v3776
    %v3962 = vadd.f32 %v3672, %v3779
    %v3963 = vadd.f32 %v3673, %v3782
    %v3964 = vadd.f32 %v3674, %v3785
    %v3965 = vadd.f32 %v3675, %v3788
    %v3966 = vadd.f32 %v3676, %v3791
    %v3967 = vadd.f32 %v3677, %v3794
    %v3968 = vadd.f32 %v3678, %v3797
    %v3969 = vadd.f32 %v3679, %v3800
    %v3970 = vadd.f32 %v3680, %v3803
    %v3971 = vadd.f32 %v3681, %v3806
    %v3972 = vadd.f32 %v3682, %v3809
    %v3973 = vadd.f32 %v3683, %v3812
    %v3974 = vadd.f32 %v3684, %v3815
    %v3975 = vadd.f32 %v3685, %v3818
    %v3976 = vadd.f32 %v3686, %v3821
    %v3977 = vadd.f32 %v3687, %v3824
    %v3978 = vadd.f32 %v3688, %v3827
    %v3979 = vadd.f32 %v3689, %v3830
    %v3980 = vadd.f32 %v3690, %v3833
    %v3981 = vadd.f32 %v3691, %v3836
    %v3982 = vadd.f32 %v3692, %v3839
    %v3983 = vadd.f32 %v3693, %v3842
    %v3984 = vadd.f32 %v3694, %v3845
    %v3985 = vadd.f32 %v3695, %v3848
    %v3986 = vadd.f32 %v3696, %v3851
    %v3987 = vadd.f32 %v3697, %v3854
    %v3988 = vadd.f32 %v3698, %v3857
    %v3989 = vadd.f32 %v3699, %v3860
    %v3990 = vadd.f32 %v3700, %v3863
    %v3991 = vadd.f32 %v3701, %v3866
    %v3992 = vadd.f32 %v3702, %v3869
    %v3993 = vadd.f32 %v3703, %v3872
    %v3994 = vadd.f32 %v3704, %v3875
    %v3995 = vadd.f32 %v3705, %v3878
    %v3996 = vadd.f32 %v3706, %v3881
    %v3997 = vadd.f32 %v3707, %v3884
    %v3998 = vadd.f32 %v3708, %v3887
    %v3999 = vadd.f32 %v3709, %v3890
    %v4000 = vadd.f32 %v3710, %v3893
    %v4001 = vadd.f32 %v3711, %v3896
    %v4002 = vadd.f32 %v3712, %v3899
    %v4003 = vadd.f32 %v3713, %v3902
    %v4004 = vadd.f32 %v3714, %v3905
    %v4005 = vadd.f32 %v3715, %v3908
    %v4006 = vadd.f32 %v3716, %v3911
    %v4007 = vadd.f32 %v3717, %v3914
    %v4008 = vadd.f32 %v3718, %v3917
    %v4009 = vadd.f32 %v3719, %v3920
    %v4010 = vadd.f32 %v3720, %v3923
    %v4011 = vadd.f32 %v3721, %v3926
    %v4012 = vadd.f32 %v3722, %v3929
    %v4013 = vadd.f32 %v3723, %v3932
    %v4014 = vadd.f32 %v3724, %v3935
    %v4015 = vadd.f32 %v3725, %v3938
    %v4016 = vadd.f32 %v3726, %v3941
    %v4017 = vadd.f32 %v3727, %v3944
    %v4018 = vadd.f32 %v3728, %v3947
    %v4019 = vadd.f32 %v3729, %v3950
    %v4020 = vadd.f32 %v3730, %v3953
    %v4021 = vadd.f32 %v3731, %v3956
    %4022 = vst [vmem:[#allocation3] sm:$0xff] %v3958
    %4023 = vst [vmem:[#allocation3 + $0x8] sm:$0xff] %v3959
    %4024 = vst [vmem:[#allocation3 + $0x10] sm:$0xff] %v3960
    %4025 = vst [vmem:[#allocation3 + $0x18] sm:$0xff] %v3961
    %4026 = vst [vmem:[#allocation3 + $0x20] sm:$0xff] %v3962
    %4027 = vst [vmem:[#allocation3 + $0x28] sm:$0xff] %v3963
    %4028 = vst [vmem:[#allocation3 + $0x30] sm:$0xff] %v3964
    %4029 = vst [vmem:[#allocation3 + $0x38] sm:$0xff] %v3965
    %4030 = vst [vmem:[#allocation3 + $0x40] sm:$0xff] %v3966
    %4031 = vst [vmem:[#allocation3 + $0x48] sm:$0xff] %v3967
    %4032 = vst [vmem:[#allocation3 + $0x50] sm:$0xff] %v3968
    %4033 = vst [vmem:[#allocation3 + $0x58] sm:$0xff] %v3969
    %4034 = vst [vmem:[#allocation3 + $0x60] sm:$0xff] %v3970
    %4035 = vst [vmem:[#allocation3 + $0x68] sm:$0xff] %v3971
    %4036 = vst [vmem:[#allocation3 + $0x70] sm:$0xff] %v3972
    %4037 = vst [vmem:[#allocation3 + $0x78] sm:$0xff] %v3973
    %4038 = vst [vmem:[#allocation3 + $0x80] sm:$0xff] %v3974
    %4039 = vst [vmem:[#allocation3 + $0x88] sm:$0xff] %v3975
    %4040 = vst [vmem:[#allocation3 + $0x90] sm:$0xff] %v3976
    %4041 = vst [vmem:[#allocation3 + $0x98] sm:$0xff] %v3977
    %4042 = vst [vmem:[#allocation3 + $0xa0] sm:$0xff] %v3978
    %4043 = vst [vmem:[#allocation3 + $0xa8] sm:$0xff] %v3979
    %4044 = vst [vmem:[#allocation3 + $0xb0] sm:$0xff] %v3980
    %4045 = vst [vmem:[#allocation3 + $0xb8] sm:$0xff] %v3981
    %4046 = vst [vmem:[#allocation3 + $0xc0] sm:$0xff] %v3982
    %4047 = vst [vmem:[#allocation3 + $0xc8] sm:$0xff] %v3983
    %4048 = vst [vmem:[#allocation3 + $0xd0] sm:$0xff] %v3984
    %4049 = vst [vmem:[#allocation3 + $0xd8] sm:$0xff] %v3985
    %4050 = vst [vmem:[#allocation3 + $0xe0] sm:$0xff] %v3986
    %4051 = vst [vmem:[#allocation3 + $0xe8] sm:$0xff] %v3987
    %4052 = vst [vmem:[#allocation3 + $0xf0] sm:$0xff] %v3988
    %4053 = vst [vmem:[#allocation3 + $0xf8] sm:$0xff] %v3989
    %4054 = vst [vmem:[#allocation3 + $0x100] sm:$0xff] %v3990
    %4055 = vst [vmem:[#allocation3 + $0x108] sm:$0xff] %v3991
    %4056 = vst [vmem:[#allocation3 + $0x110] sm:$0xff] %v3992
    %4057 = vst [vmem:[#allocation3 + $0x118] sm:$0xff] %v3993
    %4058 = vst [vmem:[#allocation3 + $0x120] sm:$0xff] %v3994
    %4059 = vst [vmem:[#allocation3 + $0x128] sm:$0xff] %v3995
    %4060 = vst [vmem:[#allocation3 + $0x130] sm:$0xff] %v3996
    %4061 = vst [vmem:[#allocation3 + $0x138] sm:$0xff] %v3997
    %4062 = vst [vmem:[#allocation3 + $0x140] sm:$0xff] %v3998
    %4063 = vst [vmem:[#allocation3 + $0x148] sm:$0xff] %v3999
    %4064 = vst [vmem:[#allocation3 + $0x150] sm:$0xff] %v4000
    %4065 = vst [vmem:[#allocation3 + $0x158] sm:$0xff] %v4001
    %4066 = vst [vmem:[#allocation3 + $0x160] sm:$0xff] %v4002
    %4067 = vst [vmem:[#allocation3 + $0x168] sm:$0xff] %v4003
    %4068 = vst [vmem:[#allocation3 + $0x170] sm:$0xff] %v4004
    %4069 = vst [vmem:[#allocation3 + $0x178] sm:$0xff] %v4005
    %4070 = vst [vmem:[#allocation3 + $0x180] sm:$0xff] %v4006
    %4071 = vst [vmem:[#allocation3 + $0x188] sm:$0xff] %v4007
    %4072 = vst [vmem:[#allocation3 + $0x190] sm:$0xff] %v4008
    %4073 = vst [vmem:[#allocation3 + $0x198] sm:$0xff] %v4009
    %4074 = vst [vmem:[#allocation3 + $0x1a0] sm:$0xff] %v4010
    %4075 = vst [vmem:[#allocation3 + $0x1a8] sm:$0xff] %v4011
    %4076 = vst [vmem:[#allocation3 + $0x1b0] sm:$0xff] %v4012
    %4077 = vst [vmem:[#allocation3 + $0x1b8] sm:$0xff] %v4013
    %4078 = vst [vmem:[#allocation3 + $0x1c0] sm:$0xff] %v4014
    %4079 = vst [vmem:[#allocation3 + $0x1c8] sm:$0xff] %v4015
    %4080 = vst [vmem:[#allocation3 + $0x1d0] sm:$0xff] %v4016
    %4081 = vst [vmem:[#allocation3 + $0x1d8] sm:$0xff] %v4017
    %4082 = vst [vmem:[#allocation3 + $0x1e0] sm:$0xff] %v4018
    %4083 = vst [vmem:[#allocation3 + $0x1e8] sm:$0xff] %v4019
    %4084 = vst [vmem:[#allocation3 + $0x1f0] sm:$0xff] %v4020
    %4085 = vst [vmem:[#allocation3 + $0x1f8] sm:$0xff] %v4021
    %s4086 = scalar_lea.vmem [#allocation2], 48
    %v4087 = vld [vmem:[%s4086] sm:$0xff]
    %v4088 = vld [vmem:[%s4086 + $0x8] sm:$0xff]
    %v4089 = vld [vmem:[%s4086 + $0x18] sm:$0xff]
    %v4090 = vld [vmem:[%s4086 + $0x20] sm:$0xff]
    %v4091 = vld [vmem:[%s4086 + $0x30] sm:$0xff]
    %v4092 = vld [vmem:[%s4086 + $0x38] sm:$0xff]
    %v4093 = vld [vmem:[%s4086 + $0x48] sm:$0xff]
    %v4094 = vld [vmem:[%s4086 + $0x50] sm:$0xff]
    %v4095 = vld [vmem:[%s4086 + $0x60] sm:$0xff]
    %v4096 = vld [vmem:[%s4086 + $0x68] sm:$0xff]
    %v4097 = vld [vmem:[%s4086 + $0x78] sm:$0xff]
    %v4098 = vld [vmem:[%s4086 + $0x80] sm:$0xff]
    %v4099 = vld [vmem:[%s4086 + $0x90] sm:$0xff]
    %v4100 = vld [vmem:[%s4086 + $0x98] sm:$0xff]
    %v4101 = vld [vmem:[%s4086 + $0xa8] sm:$0xff]
    %v4102 = vld [vmem:[%s4086 + $0xb0] sm:$0xff]
    %v4103 = vld [vmem:[%s4086 + $0xc0] sm:$0xff]
    %v4104 = vld [vmem:[%s4086 + $0xc8] sm:$0xff]
    %v4105 = vld [vmem:[%s4086 + $0xd8] sm:$0xff]
    %v4106 = vld [vmem:[%s4086 + $0xe0] sm:$0xff]
    %v4107 = vld [vmem:[%s4086 + $0xf0] sm:$0xff]
    %v4108 = vld [vmem:[%s4086 + $0xf8] sm:$0xff]
    %v4109 = vld [vmem:[%s4086 + $0x108] sm:$0xff]
    %v4110 = vld [vmem:[%s4086 + $0x110] sm:$0xff]
    %v4111 = vld [vmem:[%s4086 + $0x120] sm:$0xff]
    %v4112 = vld [vmem:[%s4086 + $0x128] sm:$0xff]
    %v4113 = vld [vmem:[%s4086 + $0x138] sm:$0xff]
    %v4114 = vld [vmem:[%s4086 + $0x140] sm:$0xff]
    %v4115 = vld [vmem:[%s4086 + $0x150] sm:$0xff]
    %v4116 = vld [vmem:[%s4086 + $0x158] sm:$0xff]
    %v4117 = vld [vmem:[%s4086 + $0x168] sm:$0xff]
    %v4118 = vld [vmem:[%s4086 + $0x170] sm:$0xff]
    %v4119 = vld [vmem:[%s4086 + $0x1b0] sm:$0xff]
    %v4120 = vld [vmem:[%s4086 + $0x1b8] sm:$0xff]
    %v4121 = vld [vmem:[%s4086 + $0x1c8] sm:$0xff]
    %v4122 = vld [vmem:[%s4086 + $0x1d0] sm:$0xff]
    %v4123 = vld [vmem:[%s4086 + $0x1e0] sm:$0xff]
    %v4124 = vld [vmem:[%s4086 + $0x1e8] sm:$0xff]
    %v4125 = vld [vmem:[%s4086 + $0x1f8] sm:$0xff]
    %v4126 = vld [vmem:[%s4086 + $0x200] sm:$0xff]
    %v4127 = vld [vmem:[%s4086 + $0x210] sm:$0xff]
    %v4128 = vld [vmem:[%s4086 + $0x218] sm:$0xff]
    %v4129 = vld [vmem:[%s4086 + $0x228] sm:$0xff]
    %v4130 = vld [vmem:[%s4086 + $0x230] sm:$0xff]
    %v4131 = vld [vmem:[%s4086 + $0x240] sm:$0xff]
    %v4132 = vld [vmem:[%s4086 + $0x248] sm:$0xff]
    %v4133 = vld [vmem:[%s4086 + $0x258] sm:$0xff]
    %v4134 = vld [vmem:[%s4086 + $0x260] sm:$0xff]
    %v4135 = vld [vmem:[%s4086 + $0x270] sm:$0xff]
    %v4136 = vld [vmem:[%s4086 + $0x278] sm:$0xff]
    %v4137 = vld [vmem:[%s4086 + $0x288] sm:$0xff]
    %v4138 = vld [vmem:[%s4086 + $0x290] sm:$0xff]
    %v4139 = vld [vmem:[%s4086 + $0x2a0] sm:$0xff]
    %v4140 = vld [vmem:[%s4086 + $0x2a8] sm:$0xff]
    %v4141 = vld [vmem:[%s4086 + $0x2b8] sm:$0xff]
    %v4142 = vld [vmem:[%s4086 + $0x2c0] sm:$0xff]
    %v4143 = vld [vmem:[%s4086 + $0x2d0] sm:$0xff]
    %v4144 = vld [vmem:[%s4086 + $0x2d8] sm:$0xff]
    %v4145 = vld [vmem:[%s4086 + $0x2e8] sm:$0xff]
    %v4146 = vld [vmem:[%s4086 + $0x2f0] sm:$0xff]
    %v4147 = vld [vmem:[%s4086 + $0x300] sm:$0xff]
    %v4148 = vld [vmem:[%s4086 + $0x308] sm:$0xff]
    %v4149 = vld [vmem:[%s4086 + $0x318] sm:$0xff]
    %v4150 = vld [vmem:[%s4086 + $0x320] sm:$0xff]
    %v4151 = vld [vmem:[#allocation3] sm:$0xff]
    %v4152 = vld [vmem:[#allocation3 + $0x8] sm:$0xff]
    %v4153 = vld [vmem:[#allocation3 + $0x10] sm:$0xff]
    %v4154 = vld [vmem:[#allocation3 + $0x18] sm:$0xff]
    %v4155 = vld [vmem:[#allocation3 + $0x20] sm:$0xff]
    %v4156 = vld [vmem:[#allocation3 + $0x28] sm:$0xff]
    %v4157 = vld [vmem:[#allocation3 + $0x30] sm:$0xff]
    %v4158 = vld [vmem:[#allocation3 + $0x38] sm:$0xff]
    %v4159 = vld [vmem:[#allocation3 + $0x40] sm:$0xff]
    %v4160 = vld [vmem:[#allocation3 + $0x48] sm:$0xff]
    %v4161 = vld [vmem:[#allocation3 + $0x50] sm:$0xff]
    %v4162 = vld [vmem:[#allocation3 + $0x58] sm:$0xff]
    %v4163 = vld [vmem:[#allocation3 + $0x60] sm:$0xff]
    %v4164 = vld [vmem:[#allocation3 + $0x68] sm:$0xff]
    %v4165 = vld [vmem:[#allocation3 + $0x70] sm:$0xff]
    %v4166 = vld [vmem:[#allocation3 + $0x78] sm:$0xff]
    %v4167 = vld [vmem:[#allocation3 + $0x80] sm:$0xff]
    %v4168 = vld [vmem:[#allocation3 + $0x88] sm:$0xff]
    %v4169 = vld [vmem:[#allocation3 + $0x90] sm:$0xff]
    %v4170 = vld [vmem:[#allocation3 + $0x98] sm:$0xff]
    %v4171 = vld [vmem:[#allocation3 + $0xa0] sm:$0xff]
    %v4172 = vld [vmem:[#allocation3 + $0xa8] sm:$0xff]
    %v4173 = vld [vmem:[#allocation3 + $0xb0] sm:$0xff]
    %v4174 = vld [vmem:[#allocation3 + $0xb8] sm:$0xff]
    %v4175 = vld [vmem:[#allocation3 + $0xc0] sm:$0xff]
    %v4176 = vld [vmem:[#allocation3 + $0xc8] sm:$0xff]
    %v4177 = vld [vmem:[#allocation3 + $0xd0] sm:$0xff]
    %v4178 = vld [vmem:[#allocation3 + $0xd8] sm:$0xff]
    %v4179 = vld [vmem:[#allocation3 + $0xe0] sm:$0xff]
    %v4180 = vld [vmem:[#allocation3 + $0xe8] sm:$0xff]
    %v4181 = vld [vmem:[#allocation3 + $0xf0] sm:$0xff]
    %v4182 = vld [vmem:[#allocation3 + $0xf8] sm:$0xff]
    %v4183 = vld [vmem:[#allocation3 + $0x100] sm:$0xff]
    %v4184 = vld [vmem:[#allocation3 + $0x108] sm:$0xff]
    %v4185 = vld [vmem:[#allocation3 + $0x110] sm:$0xff]
    %v4186 = vld [vmem:[#allocation3 + $0x118] sm:$0xff]
    %v4187 = vld [vmem:[#allocation3 + $0x120] sm:$0xff]
    %v4188 = vld [vmem:[#allocation3 + $0x128] sm:$0xff]
    %v4189 = vld [vmem:[#allocation3 + $0x130] sm:$0xff]
    %v4190 = vld [vmem:[#allocation3 + $0x138] sm:$0xff]
    %v4191 = vld [vmem:[#allocation3 + $0x140] sm:$0xff]
    %v4192 = vld [vmem:[#allocation3 + $0x148] sm:$0xff]
    %v4193 = vld [vmem:[#allocation3 + $0x150] sm:$0xff]
    %v4194 = vld [vmem:[#allocation3 + $0x158] sm:$0xff]
    %v4195 = vld [vmem:[#allocation3 + $0x160] sm:$0xff]
    %v4196 = vld [vmem:[#allocation3 + $0x168] sm:$0xff]
    %v4197 = vld [vmem:[#allocation3 + $0x170] sm:$0xff]
    %v4198 = vld [vmem:[#allocation3 + $0x178] sm:$0xff]
    %v4199 = vld [vmem:[#allocation3 + $0x180] sm:$0xff]
    %v4200 = vld [vmem:[#allocation3 + $0x188] sm:$0xff]
    %v4201 = vld [vmem:[#allocation3 + $0x190] sm:$0xff]
    %v4202 = vld [vmem:[#allocation3 + $0x198] sm:$0xff]
    %v4203 = vld [vmem:[#allocation3 + $0x1a0] sm:$0xff]
    %v4204 = vld [vmem:[#allocation3 + $0x1a8] sm:$0xff]
    %v4205 = vld [vmem:[#allocation3 + $0x1b0] sm:$0xff]
    %v4206 = vld [vmem:[#allocation3 + $0x1b8] sm:$0xff]
    %v4207 = vld [vmem:[#allocation3 + $0x1c0] sm:$0xff]
    %v4208 = vld [vmem:[#allocation3 + $0x1c8] sm:$0xff]
    %v4209 = vld [vmem:[#allocation3 + $0x1d0] sm:$0xff]
    %v4210 = vld [vmem:[#allocation3 + $0x1d8] sm:$0xff]
    %v4211 = vld [vmem:[#allocation3 + $0x1e0] sm:$0xff]
    %v4212 = vld [vmem:[#allocation3 + $0x1e8] sm:$0xff]
    %v4213 = vld [vmem:[#allocation3 + $0x1f0] sm:$0xff]
    %v4214 = vld [vmem:[#allocation3 + $0x1f8] sm:$0xff]
    %s4215 = scalar_lea.vmem [#allocation9], 768
    %v4216 = vld [vmem:[%s4215] sm:$0xff]
    %v4217 = vld [vmem:[%s4215 + $0x8] sm:$0xff]
    %v4218 = vld [vmem:[%s4215 + $0x10] sm:$0xff]
    %v4219 = vld [vmem:[%s4215 + $0x18] sm:$0xff]
    %v4220 = vld [vmem:[%s4215 + $0x20] sm:$0xff]
    %v4221 = vld [vmem:[%s4215 + $0x28] sm:$0xff]
    %v4222 = vld [vmem:[%s4215 + $0x30] sm:$0xff]
    %v4223 = vld [vmem:[%s4215 + $0x38] sm:$0xff]
    %v4224 = vld [vmem:[%s4215 + $0x40] sm:$0xff]
    %v4225 = vld [vmem:[%s4215 + $0x48] sm:$0xff]
    %v4226 = vld [vmem:[%s4215 + $0x50] sm:$0xff]
    %v4227 = vld [vmem:[%s4215 + $0x58] sm:$0xff]
    %v4228 = vld [vmem:[%s4215 + $0x60] sm:$0xff]
    %v4229 = vld [vmem:[%s4215 + $0x68] sm:$0xff]
    %v4230 = vld [vmem:[%s4215 + $0x70] sm:$0xff]
    %v4231 = vld [vmem:[%s4215 + $0x78] sm:$0xff]
    %4232 = vmatpush.msra.mxu0 %v4231
    %4233 = vmatpush.msra.mxu0 %v4230
    %4234 = vmatpush.msra.mxu0 %v4229
    %4235 = vmatpush.msra.mxu0 %v4228
    %4236 = vmatpush.msra.mxu0 %v4227
    %4237 = vmatpush.msra.mxu0 %v4226
    %4238 = vmatpush.msra.mxu0 %v4225
    %4239 = vmatpush.msra.mxu0 %v4224
    %4240 = vmatpush.msra.mxu0 %v4223
    %4241 = vmatpush.msra.mxu0 %v4222
    %4242 = vmatpush.msra.mxu0 %v4221
    %4243 = vmatpush.msra.mxu0 %v4220
    %4244 = vmatpush.msra.mxu0 %v4219
    %4245 = vmatpush.msra.mxu0 %v4218
    %4246 = vmatpush.msra.mxu0 %v4217
    %4247 = vmatpush.msra.mxu0 %v4216
    %4248 = vmatmul.f32.gmra.mxu0 %v4087
    %v4249 = vpop.f32.mrf.mxu0
    %v4250 = vadd.f32 0.0, %v4249
    %4251 = vmatmul.f32.gmra.mxu0 %v4088
    %v4252 = vpop.f32.mrf.mxu0
    %v4253 = vadd.f32 0.0, %v4252
    %4254 = vmatmul.f32.gmra.mxu0 %v4089
    %v4255 = vpop.f32.mrf.mxu0
    %v4256 = vadd.f32 0.0, %v4255
    %4257 = vmatmul.f32.gmra.mxu0 %v4090
    %v4258 = vpop.f32.mrf.mxu0
    %v4259 = vadd.f32 0.0, %v4258
    %4260 = vmatmul.f32.gmra.mxu0 %v4091
    %v4261 = vpop.f32.mrf.mxu0
    %v4262 = vadd.f32 0.0, %v4261
    %4263 = vmatmul.f32.gmra.mxu0 %v4092
    %v4264 = vpop.f32.mrf.mxu0
    %v4265 = vadd.f32 0.0, %v4264
    %4266 = vmatmul.f32.gmra.mxu0 %v4093
    %v4267 = vpop.f32.mrf.mxu0
    %v4268 = vadd.f32 0.0, %v4267
    %4269 = vmatmul.f32.gmra.mxu0 %v4094
    %v4270 = vpop.f32.mrf.mxu0
    %v4271 = vadd.f32 0.0, %v4270
    %4272 = vmatmul.f32.gmra.mxu0 %v4095
    %v4273 = vpop.f32.mrf.mxu0
    %v4274 = vadd.f32 0.0, %v4273
    %4275 = vmatmul.f32.gmra.mxu0 %v4096
    %v4276 = vpop.f32.mrf.mxu0
    %v4277 = vadd.f32 0.0, %v4276
    %4278 = vmatmul.f32.gmra.mxu0 %v4097
    %v4279 = vpop.f32.mrf.mxu0
    %v4280 = vadd.f32 0.0, %v4279
    %4281 = vmatmul.f32.gmra.mxu0 %v4098
    %v4282 = vpop.f32.mrf.mxu0
    %v4283 = vadd.f32 0.0, %v4282
    %4284 = vmatmul.f32.gmra.mxu0 %v4099
    %v4285 = vpop.f32.mrf.mxu0
    %v4286 = vadd.f32 0.0, %v4285
    %4287 = vmatmul.f32.gmra.mxu0 %v4100
    %v4288 = vpop.f32.mrf.mxu0
    %v4289 = vadd.f32 0.0, %v4288
    %4290 = vmatmul.f32.gmra.mxu0 %v4101
    %v4291 = vpop.f32.mrf.mxu0
    %v4292 = vadd.f32 0.0, %v4291
    %4293 = vmatmul.f32.gmra.mxu0 %v4102
    %v4294 = vpop.f32.mrf.mxu0
    %v4295 = vadd.f32 0.0, %v4294
    %4296 = vmatmul.f32.gmra.mxu0 %v4103
    %v4297 = vpop.f32.mrf.mxu0
    %v4298 = vadd.f32 0.0, %v4297
    %4299 = vmatmul.f32.gmra.mxu0 %v4104
    %v4300 = vpop.f32.mrf.mxu0
    %v4301 = vadd.f32 0.0, %v4300
    %4302 = vmatmul.f32.gmra.mxu0 %v4105
    %v4303 = vpop.f32.mrf.mxu0
    %v4304 = vadd.f32 0.0, %v4303
    %4305 = vmatmul.f32.gmra.mxu0 %v4106
    %v4306 = vpop.f32.mrf.mxu0
    %v4307 = vadd.f32 0.0, %v4306
    %4308 = vmatmul.f32.gmra.mxu0 %v4107
    %v4309 = vpop.f32.mrf.mxu0
    %v4310 = vadd.f32 0.0, %v4309
    %4311 = vmatmul.f32.gmra.mxu0 %v4108
    %v4312 = vpop.f32.mrf.mxu0
    %v4313 = vadd.f32 0.0, %v4312
    %4314 = vmatmul.f32.gmra.mxu0 %v4109
    %v4315 = vpop.f32.mrf.mxu0
    %v4316 = vadd.f32 0.0, %v4315
    %4317 = vmatmul.f32.gmra.mxu0 %v4110
    %v4318 = vpop.f32.mrf.mxu0
    %v4319 = vadd.f32 0.0, %v4318
    %4320 = vmatmul.f32.gmra.mxu0 %v4111
    %v4321 = vpop.f32.mrf.mxu0
    %v4322 = vadd.f32 0.0, %v4321
    %4323 = vmatmul.f32.gmra.mxu0 %v4112
    %v4324 = vpop.f32.mrf.mxu0
    %v4325 = vadd.f32 0.0, %v4324
    %4326 = vmatmul.f32.gmra.mxu0 %v4113
    %v4327 = vpop.f32.mrf.mxu0
    %v4328 = vadd.f32 0.0, %v4327
    %4329 = vmatmul.f32.gmra.mxu0 %v4114
    %v4330 = vpop.f32.mrf.mxu0
    %v4331 = vadd.f32 0.0, %v4330
    %4332 = vmatmul.f32.gmra.mxu0 %v4115
    %v4333 = vpop.f32.mrf.mxu0
    %v4334 = vadd.f32 0.0, %v4333
    %4335 = vmatmul.f32.gmra.mxu0 %v4116
    %v4336 = vpop.f32.mrf.mxu0
    %v4337 = vadd.f32 0.0, %v4336
    %4338 = vmatmul.f32.gmra.mxu0 %v4117
    %v4339 = vpop.f32.mrf.mxu0
    %v4340 = vadd.f32 0.0, %v4339
    %4341 = vmatmul.f32.gmra.mxu0 %v4118
    %v4342 = vpop.f32.mrf.mxu0
    %v4343 = vadd.f32 0.0, %v4342
    %4344 = vmatmul.f32.gmra.mxu0 %v4119
    %v4345 = vpop.f32.mrf.mxu0
    %v4346 = vadd.f32 0.0, %v4345
    %4347 = vmatmul.f32.gmra.mxu0 %v4120
    %v4348 = vpop.f32.mrf.mxu0
    %v4349 = vadd.f32 0.0, %v4348
    %4350 = vmatmul.f32.gmra.mxu0 %v4121
    %v4351 = vpop.f32.mrf.mxu0
    %v4352 = vadd.f32 0.0, %v4351
    %4353 = vmatmul.f32.gmra.mxu0 %v4122
    %v4354 = vpop.f32.mrf.mxu0
    %v4355 = vadd.f32 0.0, %v4354
    %4356 = vmatmul.f32.gmra.mxu0 %v4123
    %v4357 = vpop.f32.mrf.mxu0
    %v4358 = vadd.f32 0.0, %v4357
    %4359 = vmatmul.f32.gmra.mxu0 %v4124
    %v4360 = vpop.f32.mrf.mxu0
    %v4361 = vadd.f32 0.0, %v4360
    %4362 = vmatmul.f32.gmra.mxu0 %v4125
    %v4363 = vpop.f32.mrf.mxu0
    %v4364 = vadd.f32 0.0, %v4363
    %4365 = vmatmul.f32.gmra.mxu0 %v4126
    %v4366 = vpop.f32.mrf.mxu0
    %v4367 = vadd.f32 0.0, %v4366
    %4368 = vmatmul.f32.gmra.mxu0 %v4127
    %v4369 = vpop.f32.mrf.mxu0
    %v4370 = vadd.f32 0.0, %v4369
    %4371 = vmatmul.f32.gmra.mxu0 %v4128
    %v4372 = vpop.f32.mrf.mxu0
    %v4373 = vadd.f32 0.0, %v4372
    %4374 = vmatmul.f32.gmra.mxu0 %v4129
    %v4375 = vpop.f32.mrf.mxu0
    %v4376 = vadd.f32 0.0, %v4375
    %4377 = vmatmul.f32.gmra.mxu0 %v4130
    %v4378 = vpop.f32.mrf.mxu0
    %v4379 = vadd.f32 0.0, %v4378
    %4380 = vmatmul.f32.gmra.mxu0 %v4131
    %v4381 = vpop.f32.mrf.mxu0
    %v4382 = vadd.f32 0.0, %v4381
    %4383 = vmatmul.f32.gmra.mxu0 %v4132
    %v4384 = vpop.f32.mrf.mxu0
    %v4385 = vadd.f32 0.0, %v4384
    %4386 = vmatmul.f32.gmra.mxu0 %v4133
    %v4387 = vpop.f32.mrf.mxu0
    %v4388 = vadd.f32 0.0, %v4387
    %4389 = vmatmul.f32.gmra.mxu0 %v4134
    %v4390 = vpop.f32.mrf.mxu0
    %v4391 = vadd.f32 0.0, %v4390
    %4392 = vmatmul.f32.gmra.mxu0 %v4135
    %v4393 = vpop.f32.mrf.mxu0
    %v4394 = vadd.f32 0.0, %v4393
    %4395 = vmatmul.f32.gmra.mxu0 %v4136
    %v4396 = vpop.f32.mrf.mxu0
    %v4397 = vadd.f32 0.0, %v4396
    %4398 = vmatmul.f32.gmra.mxu0 %v4137
    %v4399 = vpop.f32.mrf.mxu0
    %v4400 = vadd.f32 0.0, %v4399
    %4401 = vmatmul.f32.gmra.mxu0 %v4138
    %v4402 = vpop.f32.mrf.mxu0
    %v4403 = vadd.f32 0.0, %v4402
    %4404 = vmatmul.f32.gmra.mxu0 %v4139
    %v4405 = vpop.f32.mrf.mxu0
    %v4406 = vadd.f32 0.0, %v4405
    %4407 = vmatmul.f32.gmra.mxu0 %v4140
    %v4408 = vpop.f32.mrf.mxu0
    %v4409 = vadd.f32 0.0, %v4408
    %4410 = vmatmul.f32.gmra.mxu0 %v4141
    %v4411 = vpop.f32.mrf.mxu0
    %v4412 = vadd.f32 0.0, %v4411
    %4413 = vmatmul.f32.gmra.mxu0 %v4142
    %v4414 = vpop.f32.mrf.mxu0
    %v4415 = vadd.f32 0.0, %v4414
    %4416 = vmatmul.f32.gmra.mxu0 %v4143
    %v4417 = vpop.f32.mrf.mxu0
    %v4418 = vadd.f32 0.0, %v4417
    %4419 = vmatmul.f32.gmra.mxu0 %v4144
    %v4420 = vpop.f32.mrf.mxu0
    %v4421 = vadd.f32 0.0, %v4420
    %4422 = vmatmul.f32.gmra.mxu0 %v4145
    %v4423 = vpop.f32.mrf.mxu0
    %v4424 = vadd.f32 0.0, %v4423
    %4425 = vmatmul.f32.gmra.mxu0 %v4146
    %v4426 = vpop.f32.mrf.mxu0
    %v4427 = vadd.f32 0.0, %v4426
    %4428 = vmatmul.f32.gmra.mxu0 %v4147
    %v4429 = vpop.f32.mrf.mxu0
    %v4430 = vadd.f32 0.0, %v4429
    %4431 = vmatmul.f32.gmra.mxu0 %v4148
    %v4432 = vpop.f32.mrf.mxu0
    %v4433 = vadd.f32 0.0, %v4432
    %4434 = vmatmul.f32.gmra.mxu0 %v4149
    %v4435 = vpop.f32.mrf.mxu0
    %v4436 = vadd.f32 0.0, %v4435
    %4437 = vmatmul.f32.gmra.mxu0 %v4150
    %v4438 = vpop.f32.mrf.mxu0
    %v4439 = vadd.f32 0.0, %v4438
    %4440 = vdwg.mxu0
    %v4441 = vadd.f32 %v4151, %v4250
    %v4442 = vadd.f32 %v4152, %v4253
    %v4443 = vadd.f32 %v4153, %v4256
    %v4444 = vadd.f32 %v4154, %v4259
    %v4445 = vadd.f32 %v4155, %v4262
    %v4446 = vadd.f32 %v4156, %v4265
    %v4447 = vadd.f32 %v4157, %v4268
    %v4448 = vadd.f32 %v4158, %v4271
    %v4449 = vadd.f32 %v4159, %v4274
    %v4450 = vadd.f32 %v4160, %v4277
    %v4451 = vadd.f32 %v4161, %v4280
    %v4452 = vadd.f32 %v4162, %v4283
    %v4453 = vadd.f32 %v4163, %v4286
    %v4454 = vadd.f32 %v4164, %v4289
    %v4455 = vadd.f32 %v4165, %v4292
    %v4456 = vadd.f32 %v4166, %v4295
    %v4457 = vadd.f32 %v4167, %v4298
    %v4458 = vadd.f32 %v4168, %v4301
    %v4459 = vadd.f32 %v4169, %v4304
    %v4460 = vadd.f32 %v4170, %v4307
    %v4461 = vadd.f32 %v4171, %v4310
    %v4462 = vadd.f32 %v4172, %v4313
    %v4463 = vadd.f32 %v4173, %v4316
    %v4464 = vadd.f32 %v4174, %v4319
    %v4465 = vadd.f32 %v4175, %v4322
    %v4466 = vadd.f32 %v4176, %v4325
    %v4467 = vadd.f32 %v4177, %v4328
    %v4468 = vadd.f32 %v4178, %v4331
    %v4469 = vadd.f32 %v4179, %v4334
    %v4470 = vadd.f32 %v4180, %v4337
    %v4471 = vadd.f32 %v4181, %v4340
    %v4472 = vadd.f32 %v4182, %v4343
    %v4473 = vadd.f32 %v4183, %v4346
    %v4474 = vadd.f32 %v4184, %v4349
    %v4475 = vadd.f32 %v4185, %v4352
    %v4476 = vadd.f32 %v4186, %v4355
    %v4477 = vadd.f32 %v4187, %v4358
    %v4478 = vadd.f32 %v4188, %v4361
    %v4479 = vadd.f32 %v4189, %v4364
    %v4480 = vadd.f32 %v4190, %v4367
    %v4481 = vadd.f32 %v4191, %v4370
    %v4482 = vadd.f32 %v4192, %v4373
    %v4483 = vadd.f32 %v4193, %v4376
    %v4484 = vadd.f32 %v4194, %v4379
    %v4485 = vadd.f32 %v4195, %v4382
    %v4486 = vadd.f32 %v4196, %v4385
    %v4487 = vadd.f32 %v4197, %v4388
    %v4488 = vadd.f32 %v4198, %v4391
    %v4489 = vadd.f32 %v4199, %v4394
    %v4490 = vadd.f32 %v4200, %v4397
    %v4491 = vadd.f32 %v4201, %v4400
    %v4492 = vadd.f32 %v4202, %v4403
    %v4493 = vadd.f32 %v4203, %v4406
    %v4494 = vadd.f32 %v4204, %v4409
    %v4495 = vadd.f32 %v4205, %v4412
    %v4496 = vadd.f32 %v4206, %v4415
    %v4497 = vadd.f32 %v4207, %v4418
    %v4498 = vadd.f32 %v4208, %v4421
    %v4499 = vadd.f32 %v4209, %v4424
    %v4500 = vadd.f32 %v4210, %v4427
    %v4501 = vadd.f32 %v4211, %v4430
    %v4502 = vadd.f32 %v4212, %v4433
    %v4503 = vadd.f32 %v4213, %v4436
    %v4504 = vadd.f32 %v4214, %v4439
    %4505 = vst [vmem:[#allocation3] sm:$0xff] %v4441
    %4506 = vst [vmem:[#allocation3 + $0x8] sm:$0xff] %v4442
    %4507 = vst [vmem:[#allocation3 + $0x10] sm:$0xff] %v4443
    %4508 = vst [vmem:[#allocation3 + $0x18] sm:$0xff] %v4444
    %4509 = vst [vmem:[#allocation3 + $0x20] sm:$0xff] %v4445
    %4510 = vst [vmem:[#allocation3 + $0x28] sm:$0xff] %v4446
    %4511 = vst [vmem:[#allocation3 + $0x30] sm:$0xff] %v4447
    %4512 = vst [vmem:[#allocation3 + $0x38] sm:$0xff] %v4448
    %4513 = vst [vmem:[#allocation3 + $0x40] sm:$0xff] %v4449
    %4514 = vst [vmem:[#allocation3 + $0x48] sm:$0xff] %v4450
    %4515 = vst [vmem:[#allocation3 + $0x50] sm:$0xff] %v4451
    %4516 = vst [vmem:[#allocation3 + $0x58] sm:$0xff] %v4452
    %4517 = vst [vmem:[#allocation3 + $0x60] sm:$0xff] %v4453
    %4518 = vst [vmem:[#allocation3 + $0x68] sm:$0xff] %v4454
    %4519 = vst [vmem:[#allocation3 + $0x70] sm:$0xff] %v4455
    %4520 = vst [vmem:[#allocation3 + $0x78] sm:$0xff] %v4456
    %4521 = vst [vmem:[#allocation3 + $0x80] sm:$0xff] %v4457
    %4522 = vst [vmem:[#allocation3 + $0x88] sm:$0xff] %v4458
    %4523 = vst [vmem:[#allocation3 + $0x90] sm:$0xff] %v4459
    %4524 = vst [vmem:[#allocation3 + $0x98] sm:$0xff] %v4460
    %4525 = vst [vmem:[#allocation3 + $0xa0] sm:$0xff] %v4461
    %4526 = vst [vmem:[#allocation3 + $0xa8] sm:$0xff] %v4462
    %4527 = vst [vmem:[#allocation3 + $0xb0] sm:$0xff] %v4463
    %4528 = vst [vmem:[#allocation3 + $0xb8] sm:$0xff] %v4464
    %4529 = vst [vmem:[#allocation3 + $0xc0] sm:$0xff] %v4465
    %4530 = vst [vmem:[#allocation3 + $0xc8] sm:$0xff] %v4466
    %4531 = vst [vmem:[#allocation3 + $0xd0] sm:$0xff] %v4467
    %4532 = vst [vmem:[#allocation3 + $0xd8] sm:$0xff] %v4468
    %4533 = vst [vmem:[#allocation3 + $0xe0] sm:$0xff] %v4469
    %4534 = vst [vmem:[#allocation3 + $0xe8] sm:$0xff] %v4470
    %4535 = vst [vmem:[#allocation3 + $0xf0] sm:$0xff] %v4471
    %4536 = vst [vmem:[#allocation3 + $0xf8] sm:$0xff] %v4472
    %4537 = vst [vmem:[#allocation3 + $0x100] sm:$0xff] %v4473
    %4538 = vst [vmem:[#allocation3 + $0x108] sm:$0xff] %v4474
    %4539 = vst [vmem:[#allocation3 + $0x110] sm:$0xff] %v4475
    %4540 = vst [vmem:[#allocation3 + $0x118] sm:$0xff] %v4476
    %4541 = vst [vmem:[#allocation3 + $0x120] sm:$0xff] %v4477
    %4542 = vst [vmem:[#allocation3 + $0x128] sm:$0xff] %v4478
    %4543 = vst [vmem:[#allocation3 + $0x130] sm:$0xff] %v4479
    %4544 = vst [vmem:[#allocation3 + $0x138] sm:$0xff] %v4480
    %4545 = vst [vmem:[#allocation3 + $0x140] sm:$0xff] %v4481
    %4546 = vst [vmem:[#allocation3 + $0x148] sm:$0xff] %v4482
    %4547 = vst [vmem:[#allocation3 + $0x150] sm:$0xff] %v4483
    %4548 = vst [vmem:[#allocation3 + $0x158] sm:$0xff] %v4484
    %4549 = vst [vmem:[#allocation3 + $0x160] sm:$0xff] %v4485
    %4550 = vst [vmem:[#allocation3 + $0x168] sm:$0xff] %v4486
    %4551 = vst [vmem:[#allocation3 + $0x170] sm:$0xff] %v4487
    %4552 = vst [vmem:[#allocation3 + $0x178] sm:$0xff] %v4488
    %4553 = vst [vmem:[#allocation3 + $0x180] sm:$0xff] %v4489
    %4554 = vst [vmem:[#allocation3 + $0x188] sm:$0xff] %v4490
    %4555 = vst [vmem:[#allocation3 + $0x190] sm:$0xff] %v4491
    %4556 = vst [vmem:[#allocation3 + $0x198] sm:$0xff] %v4492
    %4557 = vst [vmem:[#allocation3 + $0x1a0] sm:$0xff] %v4493
    %4558 = vst [vmem:[#allocation3 + $0x1a8] sm:$0xff] %v4494
    %4559 = vst [vmem:[#allocation3 + $0x1b0] sm:$0xff] %v4495
    %4560 = vst [vmem:[#allocation3 + $0x1b8] sm:$0xff] %v4496
    %4561 = vst [vmem:[#allocation3 + $0x1c0] sm:$0xff] %v4497
    %4562 = vst [vmem:[#allocation3 + $0x1c8] sm:$0xff] %v4498
    %4563 = vst [vmem:[#allocation3 + $0x1d0] sm:$0xff] %v4499
    %4564 = vst [vmem:[#allocation3 + $0x1d8] sm:$0xff] %v4500
    %4565 = vst [vmem:[#allocation3 + $0x1e0] sm:$0xff] %v4501
    %4566 = vst [vmem:[#allocation3 + $0x1e8] sm:$0xff] %v4502
    %4567 = vst [vmem:[#allocation3 + $0x1f0] sm:$0xff] %v4503
    %4568 = vst [vmem:[#allocation3 + $0x1f8] sm:$0xff] %v4504
    %v4569 = vld [vmem:[%s4086 + $0x1] sm:$0xff]
    %v4570 = vld [vmem:[%s4086 + $0x9] sm:$0xff]
    %v4571 = vld [vmem:[%s4086 + $0x19] sm:$0xff]
    %v4572 = vld [vmem:[%s4086 + $0x21] sm:$0xff]
    %v4573 = vld [vmem:[%s4086 + $0x31] sm:$0xff]
    %v4574 = vld [vmem:[%s4086 + $0x39] sm:$0xff]
    %v4575 = vld [vmem:[%s4086 + $0x49] sm:$0xff]
    %v4576 = vld [vmem:[%s4086 + $0x51] sm:$0xff]
    %v4577 = vld [vmem:[%s4086 + $0x61] sm:$0xff]
    %v4578 = vld [vmem:[%s4086 + $0x69] sm:$0xff]
    %v4579 = vld [vmem:[%s4086 + $0x79] sm:$0xff]
    %v4580 = vld [vmem:[%s4086 + $0x81] sm:$0xff]
    %v4581 = vld [vmem:[%s4086 + $0x91] sm:$0xff]
    %v4582 = vld [vmem:[%s4086 + $0x99] sm:$0xff]
    %v4583 = vld [vmem:[%s4086 + $0xa9] sm:$0xff]
    %v4584 = vld [vmem:[%s4086 + $0xb1] sm:$0xff]
    %v4585 = vld [vmem:[%s4086 + $0xc1] sm:$0xff]
    %v4586 = vld [vmem:[%s4086 + $0xc9] sm:$0xff]
    %v4587 = vld [vmem:[%s4086 + $0xd9] sm:$0xff]
    %v4588 = vld [vmem:[%s4086 + $0xe1] sm:$0xff]
    %v4589 = vld [vmem:[%s4086 + $0xf1] sm:$0xff]
    %v4590 = vld [vmem:[%s4086 + $0xf9] sm:$0xff]
    %v4591 = vld [vmem:[%s4086 + $0x109] sm:$0xff]
    %v4592 = vld [vmem:[%s4086 + $0x111] sm:$0xff]
    %v4593 = vld [vmem:[%s4086 + $0x121] sm:$0xff]
    %v4594 = vld [vmem:[%s4086 + $0x129] sm:$0xff]
    %v4595 = vld [vmem:[%s4086 + $0x139] sm:$0xff]
    %v4596 = vld [vmem:[%s4086 + $0x141] sm:$0xff]
    %v4597 = vld [vmem:[%s4086 + $0x151] sm:$0xff]
    %v4598 = vld [vmem:[%s4086 + $0x159] sm:$0xff]
    %v4599 = vld [vmem:[%s4086 + $0x169] sm:$0xff]
    %v4600 = vld [vmem:[%s4086 + $0x171] sm:$0xff]
    %v4601 = vld [vmem:[%s4086 + $0x1b1] sm:$0xff]
    %v4602 = vld [vmem:[%s4086 + $0x1b9] sm:$0xff]
    %v4603 = vld [vmem:[%s4086 + $0x1c9] sm:$0xff]
    %v4604 = vld [vmem:[%s4086 + $0x1d1] sm:$0xff]
    %v4605 = vld [vmem:[%s4086 + $0x1e1] sm:$0xff]
    %v4606 = vld [vmem:[%s4086 + $0x1e9] sm:$0xff]
    %v4607 = vld [vmem:[%s4086 + $0x1f9] sm:$0xff]
    %v4608 = vld [vmem:[%s4086 + $0x201] sm:$0xff]
    %v4609 = vld [vmem:[%s4086 + $0x211] sm:$0xff]
    %v4610 = vld [vmem:[%s4086 + $0x219] sm:$0xff]
    %v4611 = vld [vmem:[%s4086 + $0x229] sm:$0xff]
    %v4612 = vld [vmem:[%s4086 + $0x231] sm:$0xff]
    %v4613 = vld [vmem:[%s4086 + $0x241] sm:$0xff]
    %v4614 = vld [vmem:[%s4086 + $0x249] sm:$0xff]
    %v4615 = vld [vmem:[%s4086 + $0x259] sm:$0xff]
    %v4616 = vld [vmem:[%s4086 + $0x261] sm:$0xff]
    %v4617 = vld [vmem:[%s4086 + $0x271] sm:$0xff]
    %v4618 = vld [vmem:[%s4086 + $0x279] sm:$0xff]
    %v4619 = vld [vmem:[%s4086 + $0x289] sm:$0xff]
    %v4620 = vld [vmem:[%s4086 + $0x291] sm:$0xff]
    %v4621 = vld [vmem:[%s4086 + $0x2a1] sm:$0xff]
    %v4622 = vld [vmem:[%s4086 + $0x2a9] sm:$0xff]
    %v4623 = vld [vmem:[%s4086 + $0x2b9] sm:$0xff]
    %v4624 = vld [vmem:[%s4086 + $0x2c1] sm:$0xff]
    %v4625 = vld [vmem:[%s4086 + $0x2d1] sm:$0xff]
    %v4626 = vld [vmem:[%s4086 + $0x2d9] sm:$0xff]
    %v4627 = vld [vmem:[%s4086 + $0x2e9] sm:$0xff]
    %v4628 = vld [vmem:[%s4086 + $0x2f1] sm:$0xff]
    %v4629 = vld [vmem:[%s4086 + $0x301] sm:$0xff]
    %v4630 = vld [vmem:[%s4086 + $0x309] sm:$0xff]
    %v4631 = vld [vmem:[%s4086 + $0x319] sm:$0xff]
    %v4632 = vld [vmem:[%s4086 + $0x321] sm:$0xff]
    %v4633 = vld [vmem:[#allocation3] sm:$0xff]
    %v4634 = vld [vmem:[#allocation3 + $0x8] sm:$0xff]
    %v4635 = vld [vmem:[#allocation3 + $0x10] sm:$0xff]
    %v4636 = vld [vmem:[#allocation3 + $0x18] sm:$0xff]
    %v4637 = vld [vmem:[#allocation3 + $0x20] sm:$0xff]
    %v4638 = vld [vmem:[#allocation3 + $0x28] sm:$0xff]
    %v4639 = vld [vmem:[#allocation3 + $0x30] sm:$0xff]
    %v4640 = vld [vmem:[#allocation3 + $0x38] sm:$0xff]
    %v4641 = vld [vmem:[#allocation3 + $0x40] sm:$0xff]
    %v4642 = vld [vmem:[#allocation3 + $0x48] sm:$0xff]
    %v4643 = vld [vmem:[#allocation3 + $0x50] sm:$0xff]
    %v4644 = vld [vmem:[#allocation3 + $0x58] sm:$0xff]
    %v4645 = vld [vmem:[#allocation3 + $0x60] sm:$0xff]
    %v4646 = vld [vmem:[#allocation3 + $0x68] sm:$0xff]
    %v4647 = vld [vmem:[#allocation3 + $0x70] sm:$0xff]
    %v4648 = vld [vmem:[#allocation3 + $0x78] sm:$0xff]
    %v4649 = vld [vmem:[#allocation3 + $0x80] sm:$0xff]
    %v4650 = vld [vmem:[#allocation3 + $0x88] sm:$0xff]
    %v4651 = vld [vmem:[#allocation3 + $0x90] sm:$0xff]
    %v4652 = vld [vmem:[#allocation3 + $0x98] sm:$0xff]
    %v4653 = vld [vmem:[#allocation3 + $0xa0] sm:$0xff]
    %v4654 = vld [vmem:[#allocation3 + $0xa8] sm:$0xff]
    %v4655 = vld [vmem:[#allocation3 + $0xb0] sm:$0xff]
    %v4656 = vld [vmem:[#allocation3 + $0xb8] sm:$0xff]
    %v4657 = vld [vmem:[#allocation3 + $0xc0] sm:$0xff]
    %v4658 = vld [vmem:[#allocation3 + $0xc8] sm:$0xff]
    %v4659 = vld [vmem:[#allocation3 + $0xd0] sm:$0xff]
    %v4660 = vld [vmem:[#allocation3 + $0xd8] sm:$0xff]
    %v4661 = vld [vmem:[#allocation3 + $0xe0] sm:$0xff]
    %v4662 = vld [vmem:[#allocation3 + $0xe8] sm:$0xff]
    %v4663 = vld [vmem:[#allocation3 + $0xf0] sm:$0xff]
    %v4664 = vld [vmem:[#allocation3 + $0xf8] sm:$0xff]
    %v4665 = vld [vmem:[#allocation3 + $0x100] sm:$0xff]
    %v4666 = vld [vmem:[#allocation3 + $0x108] sm:$0xff]
    %v4667 = vld [vmem:[#allocation3 + $0x110] sm:$0xff]
    %v4668 = vld [vmem:[#allocation3 + $0x118] sm:$0xff]
    %v4669 = vld [vmem:[#allocation3 + $0x120] sm:$0xff]
    %v4670 = vld [vmem:[#allocation3 + $0x128] sm:$0xff]
    %v4671 = vld [vmem:[#allocation3 + $0x130] sm:$0xff]
    %v4672 = vld [vmem:[#allocation3 + $0x138] sm:$0xff]
    %v4673 = vld [vmem:[#allocation3 + $0x140] sm:$0xff]
    %v4674 = vld [vmem:[#allocation3 + $0x148] sm:$0xff]
    %v4675 = vld [vmem:[#allocation3 + $0x150] sm:$0xff]
    %v4676 = vld [vmem:[#allocation3 + $0x158] sm:$0xff]
    %v4677 = vld [vmem:[#allocation3 + $0x160] sm:$0xff]
    %v4678 = vld [vmem:[#allocation3 + $0x168] sm:$0xff]
    %v4679 = vld [vmem:[#allocation3 + $0x170] sm:$0xff]
    %v4680 = vld [vmem:[#allocation3 + $0x178] sm:$0xff]
    %v4681 = vld [vmem:[#allocation3 + $0x180] sm:$0xff]
    %v4682 = vld [vmem:[#allocation3 + $0x188] sm:$0xff]
    %v4683 = vld [vmem:[#allocation3 + $0x190] sm:$0xff]
    %v4684 = vld [vmem:[#allocation3 + $0x198] sm:$0xff]
    %v4685 = vld [vmem:[#allocation3 + $0x1a0] sm:$0xff]
    %v4686 = vld [vmem:[#allocation3 + $0x1a8] sm:$0xff]
    %v4687 = vld [vmem:[#allocation3 + $0x1b0] sm:$0xff]
    %v4688 = vld [vmem:[#allocation3 + $0x1b8] sm:$0xff]
    %v4689 = vld [vmem:[#allocation3 + $0x1c0] sm:$0xff]
    %v4690 = vld [vmem:[#allocation3 + $0x1c8] sm:$0xff]
    %v4691 = vld [vmem:[#allocation3 + $0x1d0] sm:$0xff]
    %v4692 = vld [vmem:[#allocation3 + $0x1d8] sm:$0xff]
    %v4693 = vld [vmem:[#allocation3 + $0x1e0] sm:$0xff]
    %v4694 = vld [vmem:[#allocation3 + $0x1e8] sm:$0xff]
    %v4695 = vld [vmem:[#allocation3 + $0x1f0] sm:$0xff]
    %v4696 = vld [vmem:[#allocation3 + $0x1f8] sm:$0xff]
    %s4697 = scalar_lea.vmem [#allocation9], 896
    %v4698 = vld [vmem:[%s4697] sm:$0xff]
    %v4699 = vld [vmem:[%s4697 + $0x8] sm:$0xff]
    %v4700 = vld [vmem:[%s4697 + $0x10] sm:$0xff]
    %v4701 = vld [vmem:[%s4697 + $0x18] sm:$0xff]
    %v4702 = vld [vmem:[%s4697 + $0x20] sm:$0xff]
    %v4703 = vld [vmem:[%s4697 + $0x28] sm:$0xff]
    %v4704 = vld [vmem:[%s4697 + $0x30] sm:$0xff]
    %v4705 = vld [vmem:[%s4697 + $0x38] sm:$0xff]
    %v4706 = vld [vmem:[%s4697 + $0x40] sm:$0xff]
    %v4707 = vld [vmem:[%s4697 + $0x48] sm:$0xff]
    %v4708 = vld [vmem:[%s4697 + $0x50] sm:$0xff]
    %v4709 = vld [vmem:[%s4697 + $0x58] sm:$0xff]
    %v4710 = vld [vmem:[%s4697 + $0x60] sm:$0xff]
    %v4711 = vld [vmem:[%s4697 + $0x68] sm:$0xff]
    %v4712 = vld [vmem:[%s4697 + $0x70] sm:$0xff]
    %v4713 = vld [vmem:[%s4697 + $0x78] sm:$0xff]
    %4714 = vmatpush.msra.mxu0 %v4713
    %4715 = vmatpush.msra.mxu0 %v4712
    %4716 = vmatpush.msra.mxu0 %v4711
    %4717 = vmatpush.msra.mxu0 %v4710
    %4718 = vmatpush.msra.mxu0 %v4709
    %4719 = vmatpush.msra.mxu0 %v4708
    %4720 = vmatpush.msra.mxu0 %v4707
    %4721 = vmatpush.msra.mxu0 %v4706
    %4722 = vmatpush.msra.mxu0 %v4705
    %4723 = vmatpush.msra.mxu0 %v4704
    %4724 = vmatpush.msra.mxu0 %v4703
    %4725 = vmatpush.msra.mxu0 %v4702
    %4726 = vmatpush.msra.mxu0 %v4701
    %4727 = vmatpush.msra.mxu0 %v4700
    %4728 = vmatpush.msra.mxu0 %v4699
    %4729 = vmatpush.msra.mxu0 %v4698
    %4730 = vmatmul.f32.gmra.mxu0 %v4569
    %v4731 = vpop.f32.mrf.mxu0
    %v4732 = vadd.f32 0.0, %v4731
    %4733 = vmatmul.f32.gmra.mxu0 %v4570
    %v4734 = vpop.f32.mrf.mxu0
    %v4735 = vadd.f32 0.0, %v4734
    %4736 = vmatmul.f32.gmra.mxu0 %v4571
    %v4737 = vpop.f32.mrf.mxu0
    %v4738 = vadd.f32 0.0, %v4737
    %4739 = vmatmul.f32.gmra.mxu0 %v4572
    %v4740 = vpop.f32.mrf.mxu0
    %v4741 = vadd.f32 0.0, %v4740
    %4742 = vmatmul.f32.gmra.mxu0 %v4573
    %v4743 = vpop.f32.mrf.mxu0
    %v4744 = vadd.f32 0.0, %v4743
    %4745 = vmatmul.f32.gmra.mxu0 %v4574
    %v4746 = vpop.f32.mrf.mxu0
    %v4747 = vadd.f32 0.0, %v4746
    %4748 = vmatmul.f32.gmra.mxu0 %v4575
    %v4749 = vpop.f32.mrf.mxu0
    %v4750 = vadd.f32 0.0, %v4749
    %4751 = vmatmul.f32.gmra.mxu0 %v4576
    %v4752 = vpop.f32.mrf.mxu0
    %v4753 = vadd.f32 0.0, %v4752
    %4754 = vmatmul.f32.gmra.mxu0 %v4577
    %v4755 = vpop.f32.mrf.mxu0
    %v4756 = vadd.f32 0.0, %v4755
    %4757 = vmatmul.f32.gmra.mxu0 %v4578
    %v4758 = vpop.f32.mrf.mxu0
    %v4759 = vadd.f32 0.0, %v4758
    %4760 = vmatmul.f32.gmra.mxu0 %v4579
    %v4761 = vpop.f32.mrf.mxu0
    %v4762 = vadd.f32 0.0, %v4761
    %4763 = vmatmul.f32.gmra.mxu0 %v4580
    %v4764 = vpop.f32.mrf.mxu0
    %v4765 = vadd.f32 0.0, %v4764
    %4766 = vmatmul.f32.gmra.mxu0 %v4581
    %v4767 = vpop.f32.mrf.mxu0
    %v4768 = vadd.f32 0.0, %v4767
    %4769 = vmatmul.f32.gmra.mxu0 %v4582
    %v4770 = vpop.f32.mrf.mxu0
    %v4771 = vadd.f32 0.0, %v4770
    %4772 = vmatmul.f32.gmra.mxu0 %v4583
    %v4773 = vpop.f32.mrf.mxu0
    %v4774 = vadd.f32 0.0, %v4773
    %4775 = vmatmul.f32.gmra.mxu0 %v4584
    %v4776 = vpop.f32.mrf.mxu0
    %v4777 = vadd.f32 0.0, %v4776
    %4778 = vmatmul.f32.gmra.mxu0 %v4585
    %v4779 = vpop.f32.mrf.mxu0
    %v4780 = vadd.f32 0.0, %v4779
    %4781 = vmatmul.f32.gmra.mxu0 %v4586
    %v4782 = vpop.f32.mrf.mxu0
    %v4783 = vadd.f32 0.0, %v4782
    %4784 = vmatmul.f32.gmra.mxu0 %v4587
    %v4785 = vpop.f32.mrf.mxu0
    %v4786 = vadd.f32 0.0, %v4785
    %4787 = vmatmul.f32.gmra.mxu0 %v4588
    %v4788 = vpop.f32.mrf.mxu0
    %v4789 = vadd.f32 0.0, %v4788
    %4790 = vmatmul.f32.gmra.mxu0 %v4589
    %v4791 = vpop.f32.mrf.mxu0
    %v4792 = vadd.f32 0.0, %v4791
    %4793 = vmatmul.f32.gmra.mxu0 %v4590
    %v4794 = vpop.f32.mrf.mxu0
    %v4795 = vadd.f32 0.0, %v4794
    %4796 = vmatmul.f32.gmra.mxu0 %v4591
    %v4797 = vpop.f32.mrf.mxu0
    %v4798 = vadd.f32 0.0, %v4797
    %4799 = vmatmul.f32.gmra.mxu0 %v4592
    %v4800 = vpop.f32.mrf.mxu0
    %v4801 = vadd.f32 0.0, %v4800
    %4802 = vmatmul.f32.gmra.mxu0 %v4593
    %v4803 = vpop.f32.mrf.mxu0
    %v4804 = vadd.f32 0.0, %v4803
    %4805 = vmatmul.f32.gmra.mxu0 %v4594
    %v4806 = vpop.f32.mrf.mxu0
    %v4807 = vadd.f32 0.0, %v4806
    %4808 = vmatmul.f32.gmra.mxu0 %v4595
    %v4809 = vpop.f32.mrf.mxu0
    %v4810 = vadd.f32 0.0, %v4809
    %4811 = vmatmul.f32.gmra.mxu0 %v4596
    %v4812 = vpop.f32.mrf.mxu0
    %v4813 = vadd.f32 0.0, %v4812
    %4814 = vmatmul.f32.gmra.mxu0 %v4597
    %v4815 = vpop.f32.mrf.mxu0
    %v4816 = vadd.f32 0.0, %v4815
    %4817 = vmatmul.f32.gmra.mxu0 %v4598
    %v4818 = vpop.f32.mrf.mxu0
    %v4819 = vadd.f32 0.0, %v4818
    %4820 = vmatmul.f32.gmra.mxu0 %v4599
    %v4821 = vpop.f32.mrf.mxu0
    %v4822 = vadd.f32 0.0, %v4821
    %4823 = vmatmul.f32.gmra.mxu0 %v4600
    %v4824 = vpop.f32.mrf.mxu0
    %v4825 = vadd.f32 0.0, %v4824
    %4826 = vmatmul.f32.gmra.mxu0 %v4601
    %v4827 = vpop.f32.mrf.mxu0
    %v4828 = vadd.f32 0.0, %v4827
    %4829 = vmatmul.f32.gmra.mxu0 %v4602
    %v4830 = vpop.f32.mrf.mxu0
    %v4831 = vadd.f32 0.0, %v4830
    %4832 = vmatmul.f32.gmra.mxu0 %v4603
    %v4833 = vpop.f32.mrf.mxu0
    %v4834 = vadd.f32 0.0, %v4833
    %4835 = vmatmul.f32.gmra.mxu0 %v4604
    %v4836 = vpop.f32.mrf.mxu0
    %v4837 = vadd.f32 0.0, %v4836
    %4838 = vmatmul.f32.gmra.mxu0 %v4605
    %v4839 = vpop.f32.mrf.mxu0
    %v4840 = vadd.f32 0.0, %v4839
    %4841 = vmatmul.f32.gmra.mxu0 %v4606
    %v4842 = vpop.f32.mrf.mxu0
    %v4843 = vadd.f32 0.0, %v4842
    %4844 = vmatmul.f32.gmra.mxu0 %v4607
    %v4845 = vpop.f32.mrf.mxu0
    %v4846 = vadd.f32 0.0, %v4845
    %4847 = vmatmul.f32.gmra.mxu0 %v4608
    %v4848 = vpop.f32.mrf.mxu0
    %v4849 = vadd.f32 0.0, %v4848
    %4850 = vmatmul.f32.gmra.mxu0 %v4609
    %v4851 = vpop.f32.mrf.mxu0
    %v4852 = vadd.f32 0.0, %v4851
    %4853 = vmatmul.f32.gmra.mxu0 %v4610
    %v4854 = vpop.f32.mrf.mxu0
    %v4855 = vadd.f32 0.0, %v4854
    %4856 = vmatmul.f32.gmra.mxu0 %v4611
    %v4857 = vpop.f32.mrf.mxu0
    %v4858 = vadd.f32 0.0, %v4857
    %4859 = vmatmul.f32.gmra.mxu0 %v4612
    %v4860 = vpop.f32.mrf.mxu0
    %v4861 = vadd.f32 0.0, %v4860
    %4862 = vmatmul.f32.gmra.mxu0 %v4613
    %v4863 = vpop.f32.mrf.mxu0
    %v4864 = vadd.f32 0.0, %v4863
    %4865 = vmatmul.f32.gmra.mxu0 %v4614
    %v4866 = vpop.f32.mrf.mxu0
    %v4867 = vadd.f32 0.0, %v4866
    %4868 = vmatmul.f32.gmra.mxu0 %v4615
    %v4869 = vpop.f32.mrf.mxu0
    %v4870 = vadd.f32 0.0, %v4869
    %4871 = vmatmul.f32.gmra.mxu0 %v4616
    %v4872 = vpop.f32.mrf.mxu0
    %v4873 = vadd.f32 0.0, %v4872
    %4874 = vmatmul.f32.gmra.mxu0 %v4617
    %v4875 = vpop.f32.mrf.mxu0
    %v4876 = vadd.f32 0.0, %v4875
    %4877 = vmatmul.f32.gmra.mxu0 %v4618
    %v4878 = vpop.f32.mrf.mxu0
    %v4879 = vadd.f32 0.0, %v4878
    %4880 = vmatmul.f32.gmra.mxu0 %v4619
    %v4881 = vpop.f32.mrf.mxu0
    %v4882 = vadd.f32 0.0, %v4881
    %4883 = vmatmul.f32.gmra.mxu0 %v4620
    %v4884 = vpop.f32.mrf.mxu0
    %v4885 = vadd.f32 0.0, %v4884
    %4886 = vmatmul.f32.gmra.mxu0 %v4621
    %v4887 = vpop.f32.mrf.mxu0
    %v4888 = vadd.f32 0.0, %v4887
    %4889 = vmatmul.f32.gmra.mxu0 %v4622
    %v4890 = vpop.f32.mrf.mxu0
    %v4891 = vadd.f32 0.0, %v4890
    %4892 = vmatmul.f32.gmra.mxu0 %v4623
    %v4893 = vpop.f32.mrf.mxu0
    %v4894 = vadd.f32 0.0, %v4893
    %4895 = vmatmul.f32.gmra.mxu0 %v4624
    %v4896 = vpop.f32.mrf.mxu0
    %v4897 = vadd.f32 0.0, %v4896
    %4898 = vmatmul.f32.gmra.mxu0 %v4625
    %v4899 = vpop.f32.mrf.mxu0
    %v4900 = vadd.f32 0.0, %v4899
    %4901 = vmatmul.f32.gmra.mxu0 %v4626
    %v4902 = vpop.f32.mrf.mxu0
    %v4903 = vadd.f32 0.0, %v4902
    %4904 = vmatmul.f32.gmra.mxu0 %v4627
    %v4905 = vpop.f32.mrf.mxu0
    %v4906 = vadd.f32 0.0, %v4905
    %4907 = vmatmul.f32.gmra.mxu0 %v4628
    %v4908 = vpop.f32.mrf.mxu0
    %v4909 = vadd.f32 0.0, %v4908
    %4910 = vmatmul.f32.gmra.mxu0 %v4629
    %v4911 = vpop.f32.mrf.mxu0
    %v4912 = vadd.f32 0.0, %v4911
    %4913 = vmatmul.f32.gmra.mxu0 %v4630
    %v4914 = vpop.f32.mrf.mxu0
    %v4915 = vadd.f32 0.0, %v4914
    %4916 = vmatmul.f32.gmra.mxu0 %v4631
    %v4917 = vpop.f32.mrf.mxu0
    %v4918 = vadd.f32 0.0, %v4917
    %4919 = vmatmul.f32.gmra.mxu0 %v4632
    %v4920 = vpop.f32.mrf.mxu0
    %v4921 = vadd.f32 0.0, %v4920
    %4922 = vdwg.mxu0
    %v4923 = vadd.f32 %v4633, %v4732
    %v4924 = vadd.f32 %v4634, %v4735
    %v4925 = vadd.f32 %v4635, %v4738
    %v4926 = vadd.f32 %v4636, %v4741
    %v4927 = vadd.f32 %v4637, %v4744
    %v4928 = vadd.f32 %v4638, %v4747
    %v4929 = vadd.f32 %v4639, %v4750
    %v4930 = vadd.f32 %v4640, %v4753
    %v4931 = vadd.f32 %v4641, %v4756
    %v4932 = vadd.f32 %v4642, %v4759
    %v4933 = vadd.f32 %v4643, %v4762
    %v4934 = vadd.f32 %v4644, %v4765
    %v4935 = vadd.f32 %v4645, %v4768
    %v4936 = vadd.f32 %v4646, %v4771
    %v4937 = vadd.f32 %v4647, %v4774
    %v4938 = vadd.f32 %v4648, %v4777
    %v4939 = vadd.f32 %v4649, %v4780
    %v4940 = vadd.f32 %v4650, %v4783
    %v4941 = vadd.f32 %v4651, %v4786
    %v4942 = vadd.f32 %v4652, %v4789
    %v4943 = vadd.f32 %v4653, %v4792
    %v4944 = vadd.f32 %v4654, %v4795
    %v4945 = vadd.f32 %v4655, %v4798
    %v4946 = vadd.f32 %v4656, %v4801
    %v4947 = vadd.f32 %v4657, %v4804
    %v4948 = vadd.f32 %v4658, %v4807
    %v4949 = vadd.f32 %v4659, %v4810
    %v4950 = vadd.f32 %v4660, %v4813
    %v4951 = vadd.f32 %v4661, %v4816
    %v4952 = vadd.f32 %v4662, %v4819
    %v4953 = vadd.f32 %v4663, %v4822
    %v4954 = vadd.f32 %v4664, %v4825
    %v4955 = vadd.f32 %v4665, %v4828
    %v4956 = vadd.f32 %v4666, %v4831
    %v4957 = vadd.f32 %v4667, %v4834
    %v4958 = vadd.f32 %v4668, %v4837
    %v4959 = vadd.f32 %v4669, %v4840
    %v4960 = vadd.f32 %v4670, %v4843
    %v4961 = vadd.f32 %v4671, %v4846
    %v4962 = vadd.f32 %v4672, %v4849
    %v4963 = vadd.f32 %v4673, %v4852
    %v4964 = vadd.f32 %v4674, %v4855
    %v4965 = vadd.f32 %v4675, %v4858
    %v4966 = vadd.f32 %v4676, %v4861
    %v4967 = vadd.f32 %v4677, %v4864
    %v4968 = vadd.f32 %v4678, %v4867
    %v4969 = vadd.f32 %v4679, %v4870
    %v4970 = vadd.f32 %v4680, %v4873
    %v4971 = vadd.f32 %v4681, %v4876
    %v4972 = vadd.f32 %v4682, %v4879
    %v4973 = vadd.f32 %v4683, %v4882
    %v4974 = vadd.f32 %v4684, %v4885
    %v4975 = vadd.f32 %v4685, %v4888
    %v4976 = vadd.f32 %v4686, %v4891
    %v4977 = vadd.f32 %v4687, %v4894
    %v4978 = vadd.f32 %v4688, %v4897
    %v4979 = vadd.f32 %v4689, %v4900
    %v4980 = vadd.f32 %v4690, %v4903
    %v4981 = vadd.f32 %v4691, %v4906
    %v4982 = vadd.f32 %v4692, %v4909
    %v4983 = vadd.f32 %v4693, %v4912
    %v4984 = vadd.f32 %v4694, %v4915
    %v4985 = vadd.f32 %v4695, %v4918
    %v4986 = vadd.f32 %v4696, %v4921
    %4987 = vst [vmem:[#allocation3] sm:$0xff] %v4923
    %4988 = vst [vmem:[#allocation3 + $0x8] sm:$0xff] %v4924
    %4989 = vst [vmem:[#allocation3 + $0x10] sm:$0xff] %v4925
    %4990 = vst [vmem:[#allocation3 + $0x18] sm:$0xff] %v4926
    %4991 = vst [vmem:[#allocation3 + $0x20] sm:$0xff] %v4927
    %4992 = vst [vmem:[#allocation3 + $0x28] sm:$0xff] %v4928
    %4993 = vst [vmem:[#allocation3 + $0x30] sm:$0xff] %v4929
    %4994 = vst [vmem:[#allocation3 + $0x38] sm:$0xff] %v4930
    %4995 = vst [vmem:[#allocation3 + $0x40] sm:$0xff] %v4931
    %4996 = vst [vmem:[#allocation3 + $0x48] sm:$0xff] %v4932
    %4997 = vst [vmem:[#allocation3 + $0x50] sm:$0xff] %v4933
    %4998 = vst [vmem:[#allocation3 + $0x58] sm:$0xff] %v4934
    %4999 = vst [vmem:[#allocation3 + $0x60] sm:$0xff] %v4935
    %5000 = vst [vmem:[#allocation3 + $0x68] sm:$0xff] %v4936
    %5001 = vst [vmem:[#allocation3 + $0x70] sm:$0xff] %v4937
    %5002 = vst [vmem:[#allocation3 + $0x78] sm:$0xff] %v4938
    %5003 = vst [vmem:[#allocation3 + $0x80] sm:$0xff] %v4939
    %5004 = vst [vmem:[#allocation3 + $0x88] sm:$0xff] %v4940
    %5005 = vst [vmem:[#allocation3 + $0x90] sm:$0xff] %v4941
    %5006 = vst [vmem:[#allocation3 + $0x98] sm:$0xff] %v4942
    %5007 = vst [vmem:[#allocation3 + $0xa0] sm:$0xff] %v4943
    %5008 = vst [vmem:[#allocation3 + $0xa8] sm:$0xff] %v4944
    %5009 = vst [vmem:[#allocation3 + $0xb0] sm:$0xff] %v4945
    %5010 = vst [vmem:[#allocation3 + $0xb8] sm:$0xff] %v4946
    %5011 = vst [vmem:[#allocation3 + $0xc0] sm:$0xff] %v4947
    %5012 = vst [vmem:[#allocation3 + $0xc8] sm:$0xff] %v4948
    %5013 = vst [vmem:[#allocation3 + $0xd0] sm:$0xff] %v4949
    %5014 = vst [vmem:[#allocation3 + $0xd8] sm:$0xff] %v4950
    %5015 = vst [vmem:[#allocation3 + $0xe0] sm:$0xff] %v4951
    %5016 = vst [vmem:[#allocation3 + $0xe8] sm:$0xff] %v4952
    %5017 = vst [vmem:[#allocation3 + $0xf0] sm:$0xff] %v4953
    %5018 = vst [vmem:[#allocation3 + $0xf8] sm:$0xff] %v4954
    %5019 = vst [vmem:[#allocation3 + $0x100] sm:$0xff] %v4955
    %5020 = vst [vmem:[#allocation3 + $0x108] sm:$0xff] %v4956
    %5021 = vst [vmem:[#allocation3 + $0x110] sm:$0xff] %v4957
    %5022 = vst [vmem:[#allocation3 + $0x118] sm:$0xff] %v4958
    %5023 = vst [vmem:[#allocation3 + $0x120] sm:$0xff] %v4959
    %5024 = vst [vmem:[#allocation3 + $0x128] sm:$0xff] %v4960
    %5025 = vst [vmem:[#allocation3 + $0x130] sm:$0xff] %v4961
    %5026 = vst [vmem:[#allocation3 + $0x138] sm:$0xff] %v4962
    %5027 = vst [vmem:[#allocation3 + $0x140] sm:$0xff] %v4963
    %5028 = vst [vmem:[#allocation3 + $0x148] sm:$0xff] %v4964
    %5029 = vst [vmem:[#allocation3 + $0x150] sm:$0xff] %v4965
    %5030 = vst [vmem:[#allocation3 + $0x158] sm:$0xff] %v4966
    %5031 = vst [vmem:[#allocation3 + $0x160] sm:$0xff] %v4967
    %5032 = vst [vmem:[#allocation3 + $0x168] sm:$0xff] %v4968
    %5033 = vst [vmem:[#allocation3 + $0x170] sm:$0xff] %v4969
    %5034 = vst [vmem:[#allocation3 + $0x178] sm:$0xff] %v4970
    %5035 = vst [vmem:[#allocation3 + $0x180] sm:$0xff] %v4971
    %5036 = vst [vmem:[#allocation3 + $0x188] sm:$0xff] %v4972
    %5037 = vst [vmem:[#allocation3 + $0x190] sm:$0xff] %v4973
    %5038 = vst [vmem:[#allocation3 + $0x198] sm:$0xff] %v4974
    %5039 = vst [vmem:[#allocation3 + $0x1a0] sm:$0xff] %v4975
    %5040 = vst [vmem:[#allocation3 + $0x1a8] sm:$0xff] %v4976
    %5041 = vst [vmem:[#allocation3 + $0x1b0] sm:$0xff] %v4977
    %5042 = vst [vmem:[#allocation3 + $0x1b8] sm:$0xff] %v4978
    %5043 = vst [vmem:[#allocation3 + $0x1c0] sm:$0xff] %v4979
    %5044 = vst [vmem:[#allocation3 + $0x1c8] sm:$0xff] %v4980
    %5045 = vst [vmem:[#allocation3 + $0x1d0] sm:$0xff] %v4981
    %5046 = vst [vmem:[#allocation3 + $0x1d8] sm:$0xff] %v4982
    %5047 = vst [vmem:[#allocation3 + $0x1e0] sm:$0xff] %v4983
    %5048 = vst [vmem:[#allocation3 + $0x1e8] sm:$0xff] %v4984
    %5049 = vst [vmem:[#allocation3 + $0x1f0] sm:$0xff] %v4985
    %5050 = vst [vmem:[#allocation3 + $0x1f8] sm:$0xff] %v4986
    %v5051 = vld [vmem:[%s4086 + $0x2] sm:$0xff]
    %v5052 = vld [vmem:[%s4086 + $0xa] sm:$0xff]
    %v5053 = vld [vmem:[%s4086 + $0x1a] sm:$0xff]
    %v5054 = vld [vmem:[%s4086 + $0x22] sm:$0xff]
    %v5055 = vld [vmem:[%s4086 + $0x32] sm:$0xff]
    %v5056 = vld [vmem:[%s4086 + $0x3a] sm:$0xff]
    %v5057 = vld [vmem:[%s4086 + $0x4a] sm:$0xff]
    %v5058 = vld [vmem:[%s4086 + $0x52] sm:$0xff]
    %v5059 = vld [vmem:[%s4086 + $0x62] sm:$0xff]
    %v5060 = vld [vmem:[%s4086 + $0x6a] sm:$0xff]
    %v5061 = vld [vmem:[%s4086 + $0x7a] sm:$0xff]
    %v5062 = vld [vmem:[%s4086 + $0x82] sm:$0xff]
    %v5063 = vld [vmem:[%s4086 + $0x92] sm:$0xff]
    %v5064 = vld [vmem:[%s4086 + $0x9a] sm:$0xff]
    %v5065 = vld [vmem:[%s4086 + $0xaa] sm:$0xff]
    %v5066 = vld [vmem:[%s4086 + $0xb2] sm:$0xff]
    %v5067 = vld [vmem:[%s4086 + $0xc2] sm:$0xff]
    %v5068 = vld [vmem:[%s4086 + $0xca] sm:$0xff]
    %v5069 = vld [vmem:[%s4086 + $0xda] sm:$0xff]
    %v5070 = vld [vmem:[%s4086 + $0xe2] sm:$0xff]
    %v5071 = vld [vmem:[%s4086 + $0xf2] sm:$0xff]
    %v5072 = vld [vmem:[%s4086 + $0xfa] sm:$0xff]
    %v5073 = vld [vmem:[%s4086 + $0x10a] sm:$0xff]
    %v5074 = vld [vmem:[%s4086 + $0x112] sm:$0xff]
    %v5075 = vld [vmem:[%s4086 + $0x122] sm:$0xff]
    %v5076 = vld [vmem:[%s4086 + $0x12a] sm:$0xff]
    %v5077 = vld [vmem:[%s4086 + $0x13a] sm:$0xff]
    %v5078 = vld [vmem:[%s4086 + $0x142] sm:$0xff]
    %v5079 = vld [vmem:[%s4086 + $0x152] sm:$0xff]
    %v5080 = vld [vmem:[%s4086 + $0x15a] sm:$0xff]
    %v5081 = vld [vmem:[%s4086 + $0x16a] sm:$0xff]
    %v5082 = vld [vmem:[%s4086 + $0x172] sm:$0xff]
    %v5083 = vld [vmem:[%s4086 + $0x1b2] sm:$0xff]
    %v5084 = vld [vmem:[%s4086 + $0x1ba] sm:$0xff]
    %v5085 = vld [vmem:[%s4086 + $0x1ca] sm:$0xff]
    %v5086 = vld [vmem:[%s4086 + $0x1d2] sm:$0xff]
    %v5087 = vld [vmem:[%s4086 + $0x1e2] sm:$0xff]
    %v5088 = vld [vmem:[%s4086 + $0x1ea] sm:$0xff]
    %v5089 = vld [vmem:[%s4086 + $0x1fa] sm:$0xff]
    %v5090 = vld [vmem:[%s4086 + $0x202] sm:$0xff]
    %v5091 = vld [vmem:[%s4086 + $0x212] sm:$0xff]
    %v5092 = vld [vmem:[%s4086 + $0x21a] sm:$0xff]
    %v5093 = vld [vmem:[%s4086 + $0x22a] sm:$0xff]
    %v5094 = vld [vmem:[%s4086 + $0x232] sm:$0xff]
    %v5095 = vld [vmem:[%s4086 + $0x242] sm:$0xff]
    %v5096 = vld [vmem:[%s4086 + $0x24a] sm:$0xff]
    %v5097 = vld [vmem:[%s4086 + $0x25a] sm:$0xff]
    %v5098 = vld [vmem:[%s4086 + $0x262] sm:$0xff]
    %v5099 = vld [vmem:[%s4086 + $0x272] sm:$0xff]
    %v5100 = vld [vmem:[%s4086 + $0x27a] sm:$0xff]
    %v5101 = vld [vmem:[%s4086 + $0x28a] sm:$0xff]
    %v5102 = vld [vmem:[%s4086 + $0x292] sm:$0xff]
    %v5103 = vld [vmem:[%s4086 + $0x2a2] sm:$0xff]
    %v5104 = vld [vmem:[%s4086 + $0x2aa] sm:$0xff]
    %v5105 = vld [vmem:[%s4086 + $0x2ba] sm:$0xff]
    %v5106 = vld [vmem:[%s4086 + $0x2c2] sm:$0xff]
    %v5107 = vld [vmem:[%s4086 + $0x2d2] sm:$0xff]
    %v5108 = vld [vmem:[%s4086 + $0x2da] sm:$0xff]
    %v5109 = vld [vmem:[%s4086 + $0x2ea] sm:$0xff]
    %v5110 = vld [vmem:[%s4086 + $0x2f2] sm:$0xff]
    %v5111 = vld [vmem:[%s4086 + $0x302] sm:$0xff]
    %v5112 = vld [vmem:[%s4086 + $0x30a] sm:$0xff]
    %v5113 = vld [vmem:[%s4086 + $0x31a] sm:$0xff]
    %v5114 = vld [vmem:[%s4086 + $0x322] sm:$0xff]
    %v5115 = vld [vmem:[#allocation3] sm:$0xff]
    %v5116 = vld [vmem:[#allocation3 + $0x8] sm:$0xff]
    %v5117 = vld [vmem:[#allocation3 + $0x10] sm:$0xff]
    %v5118 = vld [vmem:[#allocation3 + $0x18] sm:$0xff]
    %v5119 = vld [vmem:[#allocation3 + $0x20] sm:$0xff]
    %v5120 = vld [vmem:[#allocation3 + $0x28] sm:$0xff]
    %v5121 = vld [vmem:[#allocation3 + $0x30] sm:$0xff]
    %v5122 = vld [vmem:[#allocation3 + $0x38] sm:$0xff]
    %v5123 = vld [vmem:[#allocation3 + $0x40] sm:$0xff]
    %v5124 = vld [vmem:[#allocation3 + $0x48] sm:$0xff]
    %v5125 = vld [vmem:[#allocation3 + $0x50] sm:$0xff]
    %v5126 = vld [vmem:[#allocation3 + $0x58] sm:$0xff]
    %v5127 = vld [vmem:[#allocation3 + $0x60] sm:$0xff]
    %v5128 = vld [vmem:[#allocation3 + $0x68] sm:$0xff]
    %v5129 = vld [vmem:[#allocation3 + $0x70] sm:$0xff]
    %v5130 = vld [vmem:[#allocation3 + $0x78] sm:$0xff]
    %v5131 = vld [vmem:[#allocation3 + $0x80] sm:$0xff]
    %v5132 = vld [vmem:[#allocation3 + $0x88] sm:$0xff]
    %v5133 = vld [vmem:[#allocation3 + $0x90] sm:$0xff]
    %v5134 = vld [vmem:[#allocation3 + $0x98] sm:$0xff]
    %v5135 = vld [vmem:[#allocation3 + $0xa0] sm:$0xff]
    %v5136 = vld [vmem:[#allocation3 + $0xa8] sm:$0xff]
    %v5137 = vld [vmem:[#allocation3 + $0xb0] sm:$0xff]
    %v5138 = vld [vmem:[#allocation3 + $0xb8] sm:$0xff]
    %v5139 = vld [vmem:[#allocation3 + $0xc0] sm:$0xff]
    %v5140 = vld [vmem:[#allocation3 + $0xc8] sm:$0xff]
    %v5141 = vld [vmem:[#allocation3 + $0xd0] sm:$0xff]
    %v5142 = vld [vmem:[#allocation3 + $0xd8] sm:$0xff]
    %v5143 = vld [vmem:[#allocation3 + $0xe0] sm:$0xff]
    %v5144 = vld [vmem:[#allocation3 + $0xe8] sm:$0xff]
    %v5145 = vld [vmem:[#allocation3 + $0xf0] sm:$0xff]
    %v5146 = vld [vmem:[#allocation3 + $0xf8] sm:$0xff]
    %v5147 = vld [vmem:[#allocation3 + $0x100] sm:$0xff]
    %v5148 = vld [vmem:[#allocation3 + $0x108] sm:$0xff]
    %v5149 = vld [vmem:[#allocation3 + $0x110] sm:$0xff]
    %v5150 = vld [vmem:[#allocation3 + $0x118] sm:$0xff]
    %v5151 = vld [vmem:[#allocation3 + $0x120] sm:$0xff]
    %v5152 = vld [vmem:[#allocation3 + $0x128] sm:$0xff]
    %v5153 = vld [vmem:[#allocation3 + $0x130] sm:$0xff]
    %v5154 = vld [vmem:[#allocation3 + $0x138] sm:$0xff]
    %v5155 = vld [vmem:[#allocation3 + $0x140] sm:$0xff]
    %v5156 = vld [vmem:[#allocation3 + $0x148] sm:$0xff]
    %v5157 = vld [vmem:[#allocation3 + $0x150] sm:$0xff]
    %v5158 = vld [vmem:[#allocation3 + $0x158] sm:$0xff]
    %v5159 = vld [vmem:[#allocation3 + $0x160] sm:$0xff]
    %v5160 = vld [vmem:[#allocation3 + $0x168] sm:$0xff]
    %v5161 = vld [vmem:[#allocation3 + $0x170] sm:$0xff]
    %v5162 = vld [vmem:[#allocation3 + $0x178] sm:$0xff]
    %v5163 = vld [vmem:[#allocation3 + $0x180] sm:$0xff]
    %v5164 = vld [vmem:[#allocation3 + $0x188] sm:$0xff]
    %v5165 = vld [vmem:[#allocation3 + $0x190] sm:$0xff]
    %v5166 = vld [vmem:[#allocation3 + $0x198] sm:$0xff]
    %v5167 = vld [vmem:[#allocation3 + $0x1a0] sm:$0xff]
    %v5168 = vld [vmem:[#allocation3 + $0x1a8] sm:$0xff]
    %v5169 = vld [vmem:[#allocation3 + $0x1b0] sm:$0xff]
    %v5170 = vld [vmem:[#allocation3 + $0x1b8] sm:$0xff]
    %v5171 = vld [vmem:[#allocation3 + $0x1c0] sm:$0xff]
    %v5172 = vld [vmem:[#allocation3 + $0x1c8] sm:$0xff]
    %v5173 = vld [vmem:[#allocation3 + $0x1d0] sm:$0xff]
    %v5174 = vld [vmem:[#allocation3 + $0x1d8] sm:$0xff]
    %v5175 = vld [vmem:[#allocation3 + $0x1e0] sm:$0xff]
    %v5176 = vld [vmem:[#allocation3 + $0x1e8] sm:$0xff]
    %v5177 = vld [vmem:[#allocation3 + $0x1f0] sm:$0xff]
    %v5178 = vld [vmem:[#allocation3 + $0x1f8] sm:$0xff]
    %s5179 = scalar_lea.vmem [#allocation9], 1024
    %v5180 = vld [vmem:[%s5179] sm:$0xff]
    %v5181 = vld [vmem:[%s5179 + $0x8] sm:$0xff]
    %v5182 = vld [vmem:[%s5179 + $0x10] sm:$0xff]
    %v5183 = vld [vmem:[%s5179 + $0x18] sm:$0xff]
    %v5184 = vld [vmem:[%s5179 + $0x20] sm:$0xff]
    %v5185 = vld [vmem:[%s5179 + $0x28] sm:$0xff]
    %v5186 = vld [vmem:[%s5179 + $0x30] sm:$0xff]
    %v5187 = vld [vmem:[%s5179 + $0x38] sm:$0xff]
    %v5188 = vld [vmem:[%s5179 + $0x40] sm:$0xff]
    %v5189 = vld [vmem:[%s5179 + $0x48] sm:$0xff]
    %v5190 = vld [vmem:[%s5179 + $0x50] sm:$0xff]
    %v5191 = vld [vmem:[%s5179 + $0x58] sm:$0xff]
    %v5192 = vld [vmem:[%s5179 + $0x60] sm:$0xff]
    %v5193 = vld [vmem:[%s5179 + $0x68] sm:$0xff]
    %v5194 = vld [vmem:[%s5179 + $0x70] sm:$0xff]
    %v5195 = vld [vmem:[%s5179 + $0x78] sm:$0xff]
    %5196 = vmatpush.msra.mxu0 %v5195
    %5197 = vmatpush.msra.mxu0 %v5194
    %5198 = vmatpush.msra.mxu0 %v5193
    %5199 = vmatpush.msra.mxu0 %v5192
    %5200 = vmatpush.msra.mxu0 %v5191
    %5201 = vmatpush.msra.mxu0 %v5190
    %5202 = vmatpush.msra.mxu0 %v5189
    %5203 = vmatpush.msra.mxu0 %v5188
    %5204 = vmatpush.msra.mxu0 %v5187
    %5205 = vmatpush.msra.mxu0 %v5186
    %5206 = vmatpush.msra.mxu0 %v5185
    %5207 = vmatpush.msra.mxu0 %v5184
    %5208 = vmatpush.msra.mxu0 %v5183
    %5209 = vmatpush.msra.mxu0 %v5182
    %5210 = vmatpush.msra.mxu0 %v5181
    %5211 = vmatpush.msra.mxu0 %v5180
    %5212 = vmatmul.f32.gmra.mxu0 %v5051
    %v5213 = vpop.f32.mrf.mxu0
    %v5214 = vadd.f32 0.0, %v5213
    %5215 = vmatmul.f32.gmra.mxu0 %v5052
    %v5216 = vpop.f32.mrf.mxu0
    %v5217 = vadd.f32 0.0, %v5216
    %5218 = vmatmul.f32.gmra.mxu0 %v5053
    %v5219 = vpop.f32.mrf.mxu0
    %v5220 = vadd.f32 0.0, %v5219
    %5221 = vmatmul.f32.gmra.mxu0 %v5054
    %v5222 = vpop.f32.mrf.mxu0
    %v5223 = vadd.f32 0.0, %v5222
    %5224 = vmatmul.f32.gmra.mxu0 %v5055
    %v5225 = vpop.f32.mrf.mxu0
    %v5226 = vadd.f32 0.0, %v5225
    %5227 = vmatmul.f32.gmra.mxu0 %v5056
    %v5228 = vpop.f32.mrf.mxu0
    %v5229 = vadd.f32 0.0, %v5228
    %5230 = vmatmul.f32.gmra.mxu0 %v5057
    %v5231 = vpop.f32.mrf.mxu0
    %v5232 = vadd.f32 0.0, %v5231
    %5233 = vmatmul.f32.gmra.mxu0 %v5058
    %v5234 = vpop.f32.mrf.mxu0
    %v5235 = vadd.f32 0.0, %v5234
    %5236 = vmatmul.f32.gmra.mxu0 %v5059
    %v5237 = vpop.f32.mrf.mxu0
    %v5238 = vadd.f32 0.0, %v5237
    %5239 = vmatmul.f32.gmra.mxu0 %v5060
    %v5240 = vpop.f32.mrf.mxu0
    %v5241 = vadd.f32 0.0, %v5240
    %5242 = vmatmul.f32.gmra.mxu0 %v5061
    %v5243 = vpop.f32.mrf.mxu0
    %v5244 = vadd.f32 0.0, %v5243
    %5245 = vmatmul.f32.gmra.mxu0 %v5062
    %v5246 = vpop.f32.mrf.mxu0
    %v5247 = vadd.f32 0.0, %v5246
    %5248 = vmatmul.f32.gmra.mxu0 %v5063
    %v5249 = vpop.f32.mrf.mxu0
    %v5250 = vadd.f32 0.0, %v5249
    %5251 = vmatmul.f32.gmra.mxu0 %v5064
    %v5252 = vpop.f32.mrf.mxu0
    %v5253 = vadd.f32 0.0, %v5252
    %5254 = vmatmul.f32.gmra.mxu0 %v5065
    %v5255 = vpop.f32.mrf.mxu0
    %v5256 = vadd.f32 0.0, %v5255
    %5257 = vmatmul.f32.gmra.mxu0 %v5066
    %v5258 = vpop.f32.mrf.mxu0
    %v5259 = vadd.f32 0.0, %v5258
    %5260 = vmatmul.f32.gmra.mxu0 %v5067
    %v5261 = vpop.f32.mrf.mxu0
    %v5262 = vadd.f32 0.0, %v5261
    %5263 = vmatmul.f32.gmra.mxu0 %v5068
    %v5264 = vpop.f32.mrf.mxu0
    %v5265 = vadd.f32 0.0, %v5264
    %5266 = vmatmul.f32.gmra.mxu0 %v5069
    %v5267 = vpop.f32.mrf.mxu0
    %v5268 = vadd.f32 0.0, %v5267
    %5269 = vmatmul.f32.gmra.mxu0 %v5070
    %v5270 = vpop.f32.mrf.mxu0
    %v5271 = vadd.f32 0.0, %v5270
    %5272 = vmatmul.f32.gmra.mxu0 %v5071
    %v5273 = vpop.f32.mrf.mxu0
    %v5274 = vadd.f32 0.0, %v5273
    %5275 = vmatmul.f32.gmra.mxu0 %v5072
    %v5276 = vpop.f32.mrf.mxu0
    %v5277 = vadd.f32 0.0, %v5276
    %5278 = vmatmul.f32.gmra.mxu0 %v5073
    %v5279 = vpop.f32.mrf.mxu0
    %v5280 = vadd.f32 0.0, %v5279
    %5281 = vmatmul.f32.gmra.mxu0 %v5074
    %v5282 = vpop.f32.mrf.mxu0
    %v5283 = vadd.f32 0.0, %v5282
    %5284 = vmatmul.f32.gmra.mxu0 %v5075
    %v5285 = vpop.f32.mrf.mxu0
    %v5286 = vadd.f32 0.0, %v5285
    %5287 = vmatmul.f32.gmra.mxu0 %v5076
    %v5288 = vpop.f32.mrf.mxu0
    %v5289 = vadd.f32 0.0, %v5288
    %5290 = vmatmul.f32.gmra.mxu0 %v5077
    %v5291 = vpop.f32.mrf.mxu0
    %v5292 = vadd.f32 0.0, %v5291
    %5293 = vmatmul.f32.gmra.mxu0 %v5078
    %v5294 = vpop.f32.mrf.mxu0
    %v5295 = vadd.f32 0.0, %v5294
    %5296 = vmatmul.f32.gmra.mxu0 %v5079
    %v5297 = vpop.f32.mrf.mxu0
    %v5298 = vadd.f32 0.0, %v5297
    %5299 = vmatmul.f32.gmra.mxu0 %v5080
    %v5300 = vpop.f32.mrf.mxu0
    %v5301 = vadd.f32 0.0, %v5300
    %5302 = vmatmul.f32.gmra.mxu0 %v5081
    %v5303 = vpop.f32.mrf.mxu0
    %v5304 = vadd.f32 0.0, %v5303
    %5305 = vmatmul.f32.gmra.mxu0 %v5082
    %v5306 = vpop.f32.mrf.mxu0
    %v5307 = vadd.f32 0.0, %v5306
    %5308 = vmatmul.f32.gmra.mxu0 %v5083
    %v5309 = vpop.f32.mrf.mxu0
    %v5310 = vadd.f32 0.0, %v5309
    %5311 = vmatmul.f32.gmra.mxu0 %v5084
    %v5312 = vpop.f32.mrf.mxu0
    %v5313 = vadd.f32 0.0, %v5312
    %5314 = vmatmul.f32.gmra.mxu0 %v5085
    %v5315 = vpop.f32.mrf.mxu0
    %v5316 = vadd.f32 0.0, %v5315
    %5317 = vmatmul.f32.gmra.mxu0 %v5086
    %v5318 = vpop.f32.mrf.mxu0
    %v5319 = vadd.f32 0.0, %v5318
    %5320 = vmatmul.f32.gmra.mxu0 %v5087
    %v5321 = vpop.f32.mrf.mxu0
    %v5322 = vadd.f32 0.0, %v5321
    %5323 = vmatmul.f32.gmra.mxu0 %v5088
    %v5324 = vpop.f32.mrf.mxu0
    %v5325 = vadd.f32 0.0, %v5324
    %5326 = vmatmul.f32.gmra.mxu0 %v5089
    %v5327 = vpop.f32.mrf.mxu0
    %v5328 = vadd.f32 0.0, %v5327
    %5329 = vmatmul.f32.gmra.mxu0 %v5090
    %v5330 = vpop.f32.mrf.mxu0
    %v5331 = vadd.f32 0.0, %v5330
    %5332 = vmatmul.f32.gmra.mxu0 %v5091
    %v5333 = vpop.f32.mrf.mxu0
    %v5334 = vadd.f32 0.0, %v5333
    %5335 = vmatmul.f32.gmra.mxu0 %v5092
    %v5336 = vpop.f32.mrf.mxu0
    %v5337 = vadd.f32 0.0, %v5336
    %5338 = vmatmul.f32.gmra.mxu0 %v5093
    %v5339 = vpop.f32.mrf.mxu0
    %v5340 = vadd.f32 0.0, %v5339
    %5341 = vmatmul.f32.gmra.mxu0 %v5094
    %v5342 = vpop.f32.mrf.mxu0
    %v5343 = vadd.f32 0.0, %v5342
    %5344 = vmatmul.f32.gmra.mxu0 %v5095
    %v5345 = vpop.f32.mrf.mxu0
    %v5346 = vadd.f32 0.0, %v5345
    %5347 = vmatmul.f32.gmra.mxu0 %v5096
    %v5348 = vpop.f32.mrf.mxu0
    %v5349 = vadd.f32 0.0, %v5348
    %5350 = vmatmul.f32.gmra.mxu0 %v5097
    %v5351 = vpop.f32.mrf.mxu0
    %v5352 = vadd.f32 0.0, %v5351
    %5353 = vmatmul.f32.gmra.mxu0 %v5098
    %v5354 = vpop.f32.mrf.mxu0
    %v5355 = vadd.f32 0.0, %v5354
    %5356 = vmatmul.f32.gmra.mxu0 %v5099
    %v5357 = vpop.f32.mrf.mxu0
    %v5358 = vadd.f32 0.0, %v5357
    %5359 = vmatmul.f32.gmra.mxu0 %v5100
    %v5360 = vpop.f32.mrf.mxu0
    %v5361 = vadd.f32 0.0, %v5360
    %5362 = vmatmul.f32.gmra.mxu0 %v5101
    %v5363 = vpop.f32.mrf.mxu0
    %v5364 = vadd.f32 0.0, %v5363
    %5365 = vmatmul.f32.gmra.mxu0 %v5102
    %v5366 = vpop.f32.mrf.mxu0
    %v5367 = vadd.f32 0.0, %v5366
    %5368 = vmatmul.f32.gmra.mxu0 %v5103
    %v5369 = vpop.f32.mrf.mxu0
    %v5370 = vadd.f32 0.0, %v5369
    %5371 = vmatmul.f32.gmra.mxu0 %v5104
    %v5372 = vpop.f32.mrf.mxu0
    %v5373 = vadd.f32 0.0, %v5372
    %5374 = vmatmul.f32.gmra.mxu0 %v5105
    %v5375 = vpop.f32.mrf.mxu0
    %v5376 = vadd.f32 0.0, %v5375
    %5377 = vmatmul.f32.gmra.mxu0 %v5106
    %v5378 = vpop.f32.mrf.mxu0
    %v5379 = vadd.f32 0.0, %v5378
    %5380 = vmatmul.f32.gmra.mxu0 %v5107
    %v5381 = vpop.f32.mrf.mxu0
    %v5382 = vadd.f32 0.0, %v5381
    %5383 = vmatmul.f32.gmra.mxu0 %v5108
    %v5384 = vpop.f32.mrf.mxu0
    %v5385 = vadd.f32 0.0, %v5384
    %5386 = vmatmul.f32.gmra.mxu0 %v5109
    %v5387 = vpop.f32.mrf.mxu0
    %v5388 = vadd.f32 0.0, %v5387
    %5389 = vmatmul.f32.gmra.mxu0 %v5110
    %v5390 = vpop.f32.mrf.mxu0
    %v5391 = vadd.f32 0.0, %v5390
    %5392 = vmatmul.f32.gmra.mxu0 %v5111
    %v5393 = vpop.f32.mrf.mxu0
    %v5394 = vadd.f32 0.0, %v5393
    %5395 = vmatmul.f32.gmra.mxu0 %v5112
    %v5396 = vpop.f32.mrf.mxu0
    %v5397 = vadd.f32 0.0, %v5396
    %5398 = vmatmul.f32.gmra.mxu0 %v5113
    %v5399 = vpop.f32.mrf.mxu0
    %v5400 = vadd.f32 0.0, %v5399
    %5401 = vmatmul.f32.gmra.mxu0 %v5114
    %v5402 = vpop.f32.mrf.mxu0
    %v5403 = vadd.f32 0.0, %v5402
    %5404 = vdwg.mxu0
    %v5405 = vadd.f32 %v5115, %v5214
    %v5406 = vadd.f32 %v5116, %v5217
    %v5407 = vadd.f32 %v5117, %v5220
    %v5408 = vadd.f32 %v5118, %v5223
    %v5409 = vadd.f32 %v5119, %v5226
    %v5410 = vadd.f32 %v5120, %v5229
    %v5411 = vadd.f32 %v5121, %v5232
    %v5412 = vadd.f32 %v5122, %v5235
    %v5413 = vadd.f32 %v5123, %v5238
    %v5414 = vadd.f32 %v5124, %v5241
    %v5415 = vadd.f32 %v5125, %v5244
    %v5416 = vadd.f32 %v5126, %v5247
    %v5417 = vadd.f32 %v5127, %v5250
    %v5418 = vadd.f32 %v5128, %v5253
    %v5419 = vadd.f32 %v5129, %v5256
    %v5420 = vadd.f32 %v5130, %v5259
    %v5421 = vadd.f32 %v5131, %v5262
    %v5422 = vadd.f32 %v5132, %v5265
    %v5423 = vadd.f32 %v5133, %v5268
    %v5424 = vadd.f32 %v5134, %v5271
    %v5425 = vadd.f32 %v5135, %v5274
    %v5426 = vadd.f32 %v5136, %v5277
    %v5427 = vadd.f32 %v5137, %v5280
    %v5428 = vadd.f32 %v5138, %v5283
    %v5429 = vadd.f32 %v5139, %v5286
    %v5430 = vadd.f32 %v5140, %v5289
    %v5431 = vadd.f32 %v5141, %v5292
    %v5432 = vadd.f32 %v5142, %v5295
    %v5433 = vadd.f32 %v5143, %v5298
    %v5434 = vadd.f32 %v5144, %v5301
    %v5435 = vadd.f32 %v5145, %v5304
    %v5436 = vadd.f32 %v5146, %v5307
    %v5437 = vadd.f32 %v5147, %v5310
    %v5438 = vadd.f32 %v5148, %v5313
    %v5439 = vadd.f32 %v5149, %v5316
    %v5440 = vadd.f32 %v5150, %v5319
    %v5441 = vadd.f32 %v5151, %v5322
    %v5442 = vadd.f32 %v5152, %v5325
    %v5443 = vadd.f32 %v5153, %v5328
    %v5444 = vadd.f32 %v5154, %v5331
    %v5445 = vadd.f32 %v5155, %v5334
    %v5446 = vadd.f32 %v5156, %v5337
    %v5447 = vadd.f32 %v5157, %v5340
    %v5448 = vadd.f32 %v5158, %v5343
    %v5449 = vadd.f32 %v5159, %v5346
    %v5450 = vadd.f32 %v5160, %v5349
    %v5451 = vadd.f32 %v5161, %v5352
    %v5452 = vadd.f32 %v5162, %v5355
    %v5453 = vadd.f32 %v5163, %v5358
    %v5454 = vadd.f32 %v5164, %v5361
    %v5455 = vadd.f32 %v5165, %v5364
    %v5456 = vadd.f32 %v5166, %v5367
    %v5457 = vadd.f32 %v5167, %v5370
    %v5458 = vadd.f32 %v5168, %v5373
    %v5459 = vadd.f32 %v5169, %v5376
    %v5460 = vadd.f32 %v5170, %v5379
    %v5461 = vadd.f32 %v5171, %v5382
    %v5462 = vadd.f32 %v5172, %v5385
    %v5463 = vadd.f32 %v5173, %v5388
    %v5464 = vadd.f32 %v5174, %v5391
    %v5465 = vadd.f32 %v5175, %v5394
    %v5466 = vadd.f32 %v5176, %v5397
    %v5467 = vadd.f32 %v5177, %v5400
    %v5468 = vadd.f32 %v5178, %v5403
    %5469 = vst [vmem:[#allocation3] sm:$0xff] %v5405
    %5470 = vst [vmem:[#allocation3 + $0x8] sm:$0xff] %v5406
    %5471 = vst [vmem:[#allocation3 + $0x10] sm:$0xff] %v5407
    %5472 = vst [vmem:[#allocation3 + $0x18] sm:$0xff] %v5408
    %5473 = vst [vmem:[#allocation3 + $0x20] sm:$0xff] %v5409
    %5474 = vst [vmem:[#allocation3 + $0x28] sm:$0xff] %v5410
    %5475 = vst [vmem:[#allocation3 + $0x30] sm:$0xff] %v5411
    %5476 = vst [vmem:[#allocation3 + $0x38] sm:$0xff] %v5412
    %5477 = vst [vmem:[#allocation3 + $0x40] sm:$0xff] %v5413
    %5478 = vst [vmem:[#allocation3 + $0x48] sm:$0xff] %v5414
    %5479 = vst [vmem:[#allocation3 + $0x50] sm:$0xff] %v5415
    %5480 = vst [vmem:[#allocation3 + $0x58] sm:$0xff] %v5416
    %5481 = vst [vmem:[#allocation3 + $0x60] sm:$0xff] %v5417
    %5482 = vst [vmem:[#allocation3 + $0x68] sm:$0xff] %v5418
    %5483 = vst [vmem:[#allocation3 + $0x70] sm:$0xff] %v5419
    %5484 = vst [vmem:[#allocation3 + $0x78] sm:$0xff] %v5420
    %5485 = vst [vmem:[#allocation3 + $0x80] sm:$0xff] %v5421
    %5486 = vst [vmem:[#allocation3 + $0x88] sm:$0xff] %v5422
    %5487 = vst [vmem:[#allocation3 + $0x90] sm:$0xff] %v5423
    %5488 = vst [vmem:[#allocation3 + $0x98] sm:$0xff] %v5424
    %5489 = vst [vmem:[#allocation3 + $0xa0] sm:$0xff] %v5425
    %5490 = vst [vmem:[#allocation3 + $0xa8] sm:$0xff] %v5426
    %5491 = vst [vmem:[#allocation3 + $0xb0] sm:$0xff] %v5427
    %5492 = vst [vmem:[#allocation3 + $0xb8] sm:$0xff] %v5428
    %5493 = vst [vmem:[#allocation3 + $0xc0] sm:$0xff] %v5429
    %5494 = vst [vmem:[#allocation3 + $0xc8] sm:$0xff] %v5430
    %5495 = vst [vmem:[#allocation3 + $0xd0] sm:$0xff] %v5431
    %5496 = vst [vmem:[#allocation3 + $0xd8] sm:$0xff] %v5432
    %5497 = vst [vmem:[#allocation3 + $0xe0] sm:$0xff] %v5433
    %5498 = vst [vmem:[#allocation3 + $0xe8] sm:$0xff] %v5434
    %5499 = vst [vmem:[#allocation3 + $0xf0] sm:$0xff] %v5435
    %5500 = vst [vmem:[#allocation3 + $0xf8] sm:$0xff] %v5436
    %5501 = vst [vmem:[#allocation3 + $0x100] sm:$0xff] %v5437
    %5502 = vst [vmem:[#allocation3 + $0x108] sm:$0xff] %v5438
    %5503 = vst [vmem:[#allocation3 + $0x110] sm:$0xff] %v5439
    %5504 = vst [vmem:[#allocation3 + $0x118] sm:$0xff] %v5440
    %5505 = vst [vmem:[#allocation3 + $0x120] sm:$0xff] %v5441
    %5506 = vst [vmem:[#allocation3 + $0x128] sm:$0xff] %v5442
    %5507 = vst [vmem:[#allocation3 + $0x130] sm:$0xff] %v5443
    %5508 = vst [vmem:[#allocation3 + $0x138] sm:$0xff] %v5444
    %5509 = vst [vmem:[#allocation3 + $0x140] sm:$0xff] %v5445
    %5510 = vst [vmem:[#allocation3 + $0x148] sm:$0xff] %v5446
    %5511 = vst [vmem:[#allocation3 + $0x150] sm:$0xff] %v5447
    %5512 = vst [vmem:[#allocation3 + $0x158] sm:$0xff] %v5448
    %5513 = vst [vmem:[#allocation3 + $0x160] sm:$0xff] %v5449
    %5514 = vst [vmem:[#allocation3 + $0x168] sm:$0xff] %v5450
    %5515 = vst [vmem:[#allocation3 + $0x170] sm:$0xff] %v5451
    %5516 = vst [vmem:[#allocation3 + $0x178] sm:$0xff] %v5452
    %5517 = vst [vmem:[#allocation3 + $0x180] sm:$0xff] %v5453
    %5518 = vst [vmem:[#allocation3 + $0x188] sm:$0xff] %v5454
    %5519 = vst [vmem:[#allocation3 + $0x190] sm:$0xff] %v5455
    %5520 = vst [vmem:[#allocation3 + $0x198] sm:$0xff] %v5456
    %5521 = vst [vmem:[#allocation3 + $0x1a0] sm:$0xff] %v5457
    %5522 = vst [vmem:[#allocation3 + $0x1a8] sm:$0xff] %v5458
    %5523 = vst [vmem:[#allocation3 + $0x1b0] sm:$0xff] %v5459
    %5524 = vst [vmem:[#allocation3 + $0x1b8] sm:$0xff] %v5460
    %5525 = vst [vmem:[#allocation3 + $0x1c0] sm:$0xff] %v5461
    %5526 = vst [vmem:[#allocation3 + $0x1c8] sm:$0xff] %v5462
    %5527 = vst [vmem:[#allocation3 + $0x1d0] sm:$0xff] %v5463
    %5528 = vst [vmem:[#allocation3 + $0x1d8] sm:$0xff] %v5464
    %5529 = vst [vmem:[#allocation3 + $0x1e0] sm:$0xff] %v5465
    %5530 = vst [vmem:[#allocation3 + $0x1e8] sm:$0xff] %v5466
    %5531 = vst [vmem:[#allocation3 + $0x1f0] sm:$0xff] %v5467
    %5532 = vst [vmem:[#allocation3 + $0x1f8] sm:$0xff] %v5468
    %v5533 = vld [vmem:[#allocation3] sm:$0xff]
    %v5534 = vld [vmem:[#allocation3 + $0x8] sm:$0xff]
    %v5535 = vld [vmem:[#allocation3 + $0x10] sm:$0xff]
    %v5536 = vld [vmem:[#allocation3 + $0x18] sm:$0xff]
    %v5537 = vld [vmem:[#allocation3 + $0x20] sm:$0xff]
    %v5538 = vld [vmem:[#allocation3 + $0x28] sm:$0xff]
    %v5539 = vld [vmem:[#allocation3 + $0x30] sm:$0xff]
    %v5540 = vld [vmem:[#allocation3 + $0x38] sm:$0xff]
    %v5541 = vld [vmem:[#allocation3 + $0x40] sm:$0xff]
    %v5542 = vld [vmem:[#allocation3 + $0x48] sm:$0xff]
    %v5543 = vld [vmem:[#allocation3 + $0x50] sm:$0xff]
    %v5544 = vld [vmem:[#allocation3 + $0x58] sm:$0xff]
    %v5545 = vld [vmem:[#allocation3 + $0x60] sm:$0xff]
    %v5546 = vld [vmem:[#allocation3 + $0x68] sm:$0xff]
    %v5547 = vld [vmem:[#allocation3 + $0x70] sm:$0xff]
    %v5548 = vld [vmem:[#allocation3 + $0x78] sm:$0xff]
    %v5549 = vld [vmem:[#allocation3 + $0x80] sm:$0xff]
    %v5550 = vld [vmem:[#allocation3 + $0x88] sm:$0xff]
    %v5551 = vld [vmem:[#allocation3 + $0x90] sm:$0xff]
    %v5552 = vld [vmem:[#allocation3 + $0x98] sm:$0xff]
    %v5553 = vld [vmem:[#allocation3 + $0xa0] sm:$0xff]
    %v5554 = vld [vmem:[#allocation3 + $0xa8] sm:$0xff]
    %v5555 = vld [vmem:[#allocation3 + $0xb0] sm:$0xff]
    %v5556 = vld [vmem:[#allocation3 + $0xb8] sm:$0xff]
    %v5557 = vld [vmem:[#allocation3 + $0xc0] sm:$0xff]
    %v5558 = vld [vmem:[#allocation3 + $0xc8] sm:$0xff]
    %v5559 = vld [vmem:[#allocation3 + $0xd0] sm:$0xff]
    %v5560 = vld [vmem:[#allocation3 + $0xd8] sm:$0xff]
    %v5561 = vld [vmem:[#allocation3 + $0xe0] sm:$0xff]
    %v5562 = vld [vmem:[#allocation3 + $0xe8] sm:$0xff]
    %v5563 = vld [vmem:[#allocation3 + $0xf0] sm:$0xff]
    %v5564 = vld [vmem:[#allocation3 + $0xf8] sm:$0xff]
    %v5565 = vld [vmem:[#allocation3 + $0x100] sm:$0xff]
    %v5566 = vld [vmem:[#allocation3 + $0x108] sm:$0xff]
    %v5567 = vld [vmem:[#allocation3 + $0x110] sm:$0xff]
    %v5568 = vld [vmem:[#allocation3 + $0x118] sm:$0xff]
    %v5569 = vld [vmem:[#allocation3 + $0x120] sm:$0xff]
    %v5570 = vld [vmem:[#allocation3 + $0x128] sm:$0xff]
    %v5571 = vld [vmem:[#allocation3 + $0x130] sm:$0xff]
    %v5572 = vld [vmem:[#allocation3 + $0x138] sm:$0xff]
    %v5573 = vld [vmem:[#allocation3 + $0x140] sm:$0xff]
    %v5574 = vld [vmem:[#allocation3 + $0x148] sm:$0xff]
    %v5575 = vld [vmem:[#allocation3 + $0x150] sm:$0xff]
    %v5576 = vld [vmem:[#allocation3 + $0x158] sm:$0xff]
    %v5577 = vld [vmem:[#allocation3 + $0x160] sm:$0xff]
    %v5578 = vld [vmem:[#allocation3 + $0x168] sm:$0xff]
    %v5579 = vld [vmem:[#allocation3 + $0x170] sm:$0xff]
    %v5580 = vld [vmem:[#allocation3 + $0x178] sm:$0xff]
    %v5581 = vld [vmem:[#allocation3 + $0x180] sm:$0xff]
    %v5582 = vld [vmem:[#allocation3 + $0x188] sm:$0xff]
    %v5583 = vld [vmem:[#allocation3 + $0x190] sm:$0xff]
    %v5584 = vld [vmem:[#allocation3 + $0x198] sm:$0xff]
    %v5585 = vld [vmem:[#allocation3 + $0x1a0] sm:$0xff]
    %v5586 = vld [vmem:[#allocation3 + $0x1a8] sm:$0xff]
    %v5587 = vld [vmem:[#allocation3 + $0x1b0] sm:$0xff]
    %v5588 = vld [vmem:[#allocation3 + $0x1b8] sm:$0xff]
    %v5589 = vld [vmem:[#allocation3 + $0x1c0] sm:$0xff]
    %v5590 = vld [vmem:[#allocation3 + $0x1c8] sm:$0xff]
    %v5591 = vld [vmem:[#allocation3 + $0x1d0] sm:$0xff]
    %v5592 = vld [vmem:[#allocation3 + $0x1d8] sm:$0xff]
    %v5593 = vld [vmem:[#allocation3 + $0x1e0] sm:$0xff]
    %v5594 = vld [vmem:[#allocation3 + $0x1e8] sm:$0xff]
    %v5595 = vld [vmem:[#allocation3 + $0x1f0] sm:$0xff]
    %v5596 = vld [vmem:[#allocation3 + $0x1f8] sm:$0xff]
    %v5597 = vld [vmem:[%s5] sm:$0x1]
    %v5598 = vld [vmem:[%s6] sm:$0x1]
    %v5599 = vadd.f32 %v5533, %v5534
    %v5600 = vadd.f32 %v5599, %v5535
    %v5601 = vadd.f32 %v5600, %v5536
    %v5602 = vadd.f32 %v5601, %v5537
    %v5603 = vadd.f32 %v5602, %v5538
    %v5604 = vadd.f32 %v5603, %v5539
    %v5605 = vadd.f32 %v5604, %v5540
    %v5606 = vadd.f32 %v5605, %v5541
    %v5607 = vadd.f32 %v5606, %v5542
    %v5608 = vadd.f32 %v5607, %v5543
    %v5609 = vadd.f32 %v5608, %v5544
    %v5610 = vadd.f32 %v5609, %v5545
    %v5611 = vadd.f32 %v5610, %v5546
    %v5612 = vadd.f32 %v5611, %v5547
    %v5613 = vadd.f32 %v5612, %v5548
    %v5614 = vadd.f32 %v5613, %v5549
    %v5615 = vadd.f32 %v5614, %v5550
    %v5616 = vadd.f32 %v5615, %v5551
    %v5617 = vadd.f32 %v5616, %v5552
    %v5618 = vadd.f32 %v5617, %v5553
    %v5619 = vadd.f32 %v5618, %v5554
    %v5620 = vadd.f32 %v5619, %v5555
    %v5621 = vadd.f32 %v5620, %v5556
    %v5622 = vadd.f32 %v5621, %v5557
    %v5623 = vadd.f32 %v5622, %v5558
    %v5624 = vadd.f32 %v5623, %v5559
    %v5625 = vadd.f32 %v5624, %v5560
    %v5626 = vadd.f32 %v5625, %v5561
    %v5627 = vadd.f32 %v5626, %v5562
    %v5628 = vadd.f32 %v5627, %v5563
    %v5629 = vadd.f32 %v5628, %v5564
    %v5630 = vadd.f32 %v5629, %v5565
    %v5631 = vadd.f32 %v5630, %v5566
    %v5632 = vadd.f32 %v5631, %v5567
    %v5633 = vadd.f32 %v5632, %v5568
    %v5634 = vadd.f32 %v5633, %v5569
    %v5635 = vadd.f32 %v5634, %v5570
    %v5636 = vadd.f32 %v5635, %v5571
    %v5637 = vadd.f32 %v5636, %v5572
    %v5638 = vadd.f32 %v5637, %v5573
    %v5639 = vadd.f32 %v5638, %v5574
    %v5640 = vadd.f32 %v5639, %v5575
    %v5641 = vadd.f32 %v5640, %v5576
    %v5642 = vadd.f32 %v5641, %v5577
    %v5643 = vadd.f32 %v5642, %v5578
    %v5644 = vadd.f32 %v5643, %v5579
    %v5645 = vadd.f32 %v5644, %v5580
    %v5646 = vadd.f32 %v5645, %v5581
    %v5647 = vadd.f32 %v5646, %v5582
    %v5648 = vadd.f32 %v5647, %v5583
    %v5649 = vadd.f32 %v5648, %v5584
    %v5650 = vadd.f32 %v5649, %v5585
    %v5651 = vadd.f32 %v5650, %v5586
    %v5652 = vadd.f32 %v5651, %v5587
    %v5653 = vadd.f32 %v5652, %v5588
    %v5654 = vadd.f32 %v5653, %v5589
    %v5655 = vadd.f32 %v5654, %v5590
    %v5656 = vadd.f32 %v5655, %v5591
    %v5657 = vadd.f32 %v5656, %v5592
    %v5658 = vadd.f32 %v5657, %v5593
    %v5659 = vadd.f32 %v5658, %v5594
    %v5660 = vadd.f32 %v5659, %v5595
    %v5661 = vadd.f32 %v5660, %v5596
    %v5662 = vrot.slane %v5661, 4
    %v5663 = vadd.f32 %v5661, %v5662
    %v5664 = vrot.slane %v5663, 2
    %v5665 = vadd.f32 %v5663, %v5664
    %v5666 = vrot.slane %v5665, 1
    %v5667 = vadd.f32 %v5665, %v5666
    %v5668 = vmul.f32 %v5533, %v5533
    %v5669 = vmul.f32 %v5534, %v5534
    %v5670 = vmul.f32 %v5535, %v5535
    %v5671 = vmul.f32 %v5536, %v5536
    %v5672 = vmul.f32 %v5537, %v5537
    %v5673 = vmul.f32 %v5538, %v5538
    %v5674 = vmul.f32 %v5539, %v5539
    %v5675 = vmul.f32 %v5540, %v5540
    %v5676 = vmul.f32 %v5541, %v5541
    %v5677 = vmul.f32 %v5542, %v5542
    %v5678 = vmul.f32 %v5543, %v5543
    %v5679 = vmul.f32 %v5544, %v5544
    %v5680 = vmul.f32 %v5545, %v5545
    %v5681 = vmul.f32 %v5546, %v5546
    %v5682 = vmul.f32 %v5547, %v5547
    %v5683 = vmul.f32 %v5548, %v5548
    %v5684 = vmul.f32 %v5549, %v5549
    %v5685 = vmul.f32 %v5550, %v5550
    %v5686 = vmul.f32 %v5551, %v5551
    %v5687 = vmul.f32 %v5552, %v5552
    %v5688 = vmul.f32 %v5553, %v5553
    %v5689 = vmul.f32 %v5554, %v5554
    %v5690 = vmul.f32 %v5555, %v5555
    %v5691 = vmul.f32 %v5556, %v5556
    %v5692 = vmul.f32 %v5557, %v5557
    %v5693 = vmul.f32 %v5558, %v5558
    %v5694 = vmul.f32 %v5559, %v5559
    %v5695 = vmul.f32 %v5560, %v5560
    %v5696 = vmul.f32 %v5561, %v5561
    %v5697 = vmul.f32 %v5562, %v5562
    %v5698 = vmul.f32 %v5563, %v5563
    %v5699 = vmul.f32 %v5564, %v5564
    %v5700 = vmul.f32 %v5565, %v5565
    %v5701 = vmul.f32 %v5566, %v5566
    %v5702 = vmul.f32 %v5567, %v5567
    %v5703 = vmul.f32 %v5568, %v5568
    %v5704 = vmul.f32 %v5569, %v5569
    %v5705 = vmul.f32 %v5570, %v5570
    %v5706 = vmul.f32 %v5571, %v5571
    %v5707 = vmul.f32 %v5572, %v5572
    %v5708 = vmul.f32 %v5573, %v5573
    %v5709 = vmul.f32 %v5574, %v5574
    %v5710 = vmul.f32 %v5575, %v5575
    %v5711 = vmul.f32 %v5576, %v5576
    %v5712 = vmul.f32 %v5577, %v5577
    %v5713 = vmul.f32 %v5578, %v5578
    %v5714 = vmul.f32 %v5579, %v5579
    %v5715 = vmul.f32 %v5580, %v5580
    %v5716 = vmul.f32 %v5581, %v5581
    %v5717 = vmul.f32 %v5582, %v5582
    %v5718 = vmul.f32 %v5583, %v5583
    %v5719 = vmul.f32 %v5584, %v5584
    %v5720 = vmul.f32 %v5585, %v5585
    %v5721 = vmul.f32 %v5586, %v5586
    %v5722 = vmul.f32 %v5587, %v5587
    %v5723 = vmul.f32 %v5588, %v5588
    %v5724 = vmul.f32 %v5589, %v5589
    %v5725 = vmul.f32 %v5590, %v5590
    %v5726 = vmul.f32 %v5591, %v5591
    %v5727 = vmul.f32 %v5592, %v5592
    %v5728 = vmul.f32 %v5593, %v5593
    %v5729 = vmul.f32 %v5594, %v5594
    %v5730 = vmul.f32 %v5595, %v5595
    %v5731 = vmul.f32 %v5596, %v5596
    %v5732 = vadd.f32 %v5668, %v5669
    %v5733 = vadd.f32 %v5732, %v5670
    %v5734 = vadd.f32 %v5733, %v5671
    %v5735 = vadd.f32 %v5734, %v5672
    %v5736 = vadd.f32 %v5735, %v5673
    %v5737 = vadd.f32 %v5736, %v5674
    %v5738 = vadd.f32 %v5737, %v5675
    %v5739 = vadd.f32 %v5738, %v5676
    %v5740 = vadd.f32 %v5739, %v5677
    %v5741 = vadd.f32 %v5740, %v5678
    %v5742 = vadd.f32 %v5741, %v5679
    %v5743 = vadd.f32 %v5742, %v5680
    %v5744 = vadd.f32 %v5743, %v5681
    %v5745 = vadd.f32 %v5744, %v5682
    %v5746 = vadd.f32 %v5745, %v5683
    %v5747 = vadd.f32 %v5746, %v5684
    %v5748 = vadd.f32 %v5747, %v5685
    %v5749 = vadd.f32 %v5748, %v5686
    %v5750 = vadd.f32 %v5749, %v5687
    %v5751 = vadd.f32 %v5750, %v5688
    %v5752 = vadd.f32 %v5751, %v5689
    %v5753 = vadd.f32 %v5752, %v5690
    %v5754 = vadd.f32 %v5753, %v5691
    %v5755 = vadd.f32 %v5754, %v5692
    %v5756 = vadd.f32 %v5755, %v5693
    %v5757 = vadd.f32 %v5756, %v5694
    %v5758 = vadd.f32 %v5757, %v5695
    %v5759 = vadd.f32 %v5758, %v5696
    %v5760 = vadd.f32 %v5759, %v5697
    %v5761 = vadd.f32 %v5760, %v5698
    %v5762 = vadd.f32 %v5761, %v5699
    %v5763 = vadd.f32 %v5762, %v5700
    %v5764 = vadd.f32 %v5763, %v5701
    %v5765 = vadd.f32 %v5764, %v5702
    %v5766 = vadd.f32 %v5765, %v5703
    %v5767 = vadd.f32 %v5766, %v5704
    %v5768 = vadd.f32 %v5767, %v5705
    %v5769 = vadd.f32 %v5768, %v5706
    %v5770 = vadd.f32 %v5769, %v5707
    %v5771 = vadd.f32 %v5770, %v5708
    %v5772 = vadd.f32 %v5771, %v5709
    %v5773 = vadd.f32 %v5772, %v5710
    %v5774 = vadd.f32 %v5773, %v5711
    %v5775 = vadd.f32 %v5774, %v5712
    %v5776 = vadd.f32 %v5775, %v5713
    %v5777 = vadd.f32 %v5776, %v5714
    %v5778 = vadd.f32 %v5777, %v5715
    %v5779 = vadd.f32 %v5778, %v5716
    %v5780 = vadd.f32 %v5779, %v5717
    %v5781 = vadd.f32 %v5780, %v5718
    %v5782 = vadd.f32 %v5781, %v5719
    %v5783 = vadd.f32 %v5782, %v5720
    %v5784 = vadd.f32 %v5783, %v5721
    %v5785 = vadd.f32 %v5784, %v5722
    %v5786 = vadd.f32 %v5785, %v5723
    %v5787 = vadd.f32 %v5786, %v5724
    %v5788 = vadd.f32 %v5787, %v5725
    %v5789 = vadd.f32 %v5788, %v5726
    %v5790 = vadd.f32 %v5789, %v5727
    %v5791 = vadd.f32 %v5790, %v5728
    %v5792 = vadd.f32 %v5791, %v5729
    %v5793 = vadd.f32 %v5792, %v5730
    %v5794 = vadd.f32 %v5793, %v5731
    %v5795 = vrot.slane %v5794, 4
    %v5796 = vadd.f32 %v5794, %v5795
    %v5797 = vrot.slane %v5796, 2
    %v5798 = vadd.f32 %v5796, %v5797
    %v5799 = vrot.slane %v5798, 1
    %v5800 = vadd.f32 %v5798, %v5799
    %v5801 = vmul.f32 %v5667, 0.001953125
    %v5802 = vmul.f32 %v5800, 0.001953125
    %v5803 = vmul.f32 %v5801, %v5801
    %v5804 = vsub.f32 %v5802, %v5803
    %v5805 = vmax.f32 %v5804, 0.0
    %v5806 = vsub.f32 %v5533, %v5801
    %v5807 = vsub.f32 %v5534, %v5801
    %v5808 = vsub.f32 %v5535, %v5801
    %v5809 = vsub.f32 %v5536, %v5801
    %v5810 = vsub.f32 %v5537, %v5801
    %v5811 = vsub.f32 %v5538, %v5801
    %v5812 = vsub.f32 %v5539, %v5801
    %v5813 = vsub.f32 %v5540, %v5801
    %v5814 = vsub.f32 %v5541, %v5801
    %v5815 = vsub.f32 %v5542, %v5801
    %v5816 = vsub.f32 %v5543, %v5801
    %v5817 = vsub.f32 %v5544, %v5801
    %v5818 = vsub.f32 %v5545, %v5801
    %v5819 = vsub.f32 %v5546, %v5801
    %v5820 = vsub.f32 %v5547, %v5801
    %v5821 = vsub.f32 %v5548, %v5801
    %v5822 = vsub.f32 %v5549, %v5801
    %v5823 = vsub.f32 %v5550, %v5801
    %v5824 = vsub.f32 %v5551, %v5801
    %v5825 = vsub.f32 %v5552, %v5801
    %v5826 = vsub.f32 %v5553, %v5801
    %v5827 = vsub.f32 %v5554, %v5801
    %v5828 = vsub.f32 %v5555, %v5801
    %v5829 = vsub.f32 %v5556, %v5801
    %v5830 = vsub.f32 %v5557, %v5801
    %v5831 = vsub.f32 %v5558, %v5801
    %v5832 = vsub.f32 %v5559, %v5801
    %v5833 = vsub.f32 %v5560, %v5801
    %v5834 = vsub.f32 %v5561, %v5801
    %v5835 = vsub.f32 %v5562, %v5801
    %v5836 = vsub.f32 %v5563, %v5801
    %v5837 = vsub.f32 %v5564, %v5801
    %v5838 = vsub.f32 %v5565, %v5801
    %v5839 = vsub.f32 %v5566, %v5801
    %v5840 = vsub.f32 %v5567, %v5801
    %v5841 = vsub.f32 %v5568, %v5801
    %v5842 = vsub.f32 %v5569, %v5801
    %v5843 = vsub.f32 %v5570, %v5801
    %v5844 = vsub.f32 %v5571, %v5801
    %v5845 = vsub.f32 %v5572, %v5801
    %v5846 = vsub.f32 %v5573, %v5801
    %v5847 = vsub.f32 %v5574, %v5801
    %v5848 = vsub.f32 %v5575, %v5801
    %v5849 = vsub.f32 %v5576, %v5801
    %v5850 = vsub.f32 %v5577, %v5801
    %v5851 = vsub.f32 %v5578, %v5801
    %v5852 = vsub.f32 %v5579, %v5801
    %v5853 = vsub.f32 %v5580, %v5801
    %v5854 = vsub.f32 %v5581, %v5801
    %v5855 = vsub.f32 %v5582, %v5801
    %v5856 = vsub.f32 %v5583, %v5801
    %v5857 = vsub.f32 %v5584, %v5801
    %v5858 = vsub.f32 %v5585, %v5801
    %v5859 = vsub.f32 %v5586, %v5801
    %v5860 = vsub.f32 %v5587, %v5801
    %v5861 = vsub.f32 %v5588, %v5801
    %v5862 = vsub.f32 %v5589, %v5801
    %v5863 = vsub.f32 %v5590, %v5801
    %v5864 = vsub.f32 %v5591, %v5801
    %v5865 = vsub.f32 %v5592, %v5801
    %v5866 = vsub.f32 %v5593, %v5801
    %v5867 = vsub.f32 %v5594, %v5801
    %v5868 = vsub.f32 %v5595, %v5801
    %v5869 = vsub.f32 %v5596, %v5801
    %v5870 = vadd.f32 %v5805, 1e-05
    %v5871 = vrsqrt.pop %v5870
    %v5872 = vmul.f32 %v5871, %v5870
    %v5873 = vmul.f32 %v5872, %v5871
    %v5874 = vmul.f32 0.5, %v5873
    %v5875 = vsub.f32 1.5, %v5874
    %v5876 = vmul.f32 %v5871, %v5875
    %vm5877 = vweird.f32 %v5870
    %vm5878 = vweird.f32 %v5871
    %vm5879 = vmor %vm5877, %vm5878
    %v5880 = vsel %vm5879, %v5871, %v5876
    %v5881 = vmul.f32 %v5806, %v5880
    %v5882 = vmul.f32 %v5807, %v5880
    %v5883 = vmul.f32 %v5808, %v5880
    %v5884 = vmul.f32 %v5809, %v5880
    %v5885 = vmul.f32 %v5810, %v5880
    %v5886 = vmul.f32 %v5811, %v5880
    %v5887 = vmul.f32 %v5812, %v5880
    %v5888 = vmul.f32 %v5813, %v5880
    %v5889 = vmul.f32 %v5814, %v5880
    %v5890 = vmul.f32 %v5815, %v5880
    %v5891 = vmul.f32 %v5816, %v5880
    %v5892 = vmul.f32 %v5817, %v5880
    %v5893 = vmul.f32 %v5818, %v5880
    %v5894 = vmul.f32 %v5819, %v5880
    %v5895 = vmul.f32 %v5820, %v5880
    %v5896 = vmul.f32 %v5821, %v5880
    %v5897 = vmul.f32 %v5822, %v5880
    %v5898 = vmul.f32 %v5823, %v5880
    %v5899 = vmul.f32 %v5824, %v5880
    %v5900 = vmul.f32 %v5825, %v5880
    %v5901 = vmul.f32 %v5826, %v5880
    %v5902 = vmul.f32 %v5827, %v5880
    %v5903 = vmul.f32 %v5828, %v5880
    %v5904 = vmul.f32 %v5829, %v5880
    %v5905 = vmul.f32 %v5830, %v5880
    %v5906 = vmul.f32 %v5831, %v5880
    %v5907 = vmul.f32 %v5832, %v5880
    %v5908 = vmul.f32 %v5833, %v5880
    %v5909 = vmul.f32 %v5834, %v5880
    %v5910 = vmul.f32 %v5835, %v5880
    %v5911 = vmul.f32 %v5836, %v5880
    %v5912 = vmul.f32 %v5837, %v5880
    %v5913 = vmul.f32 %v5838, %v5880
    %v5914 = vmul.f32 %v5839, %v5880
    %v5915 = vmul.f32 %v5840, %v5880
    %v5916 = vmul.f32 %v5841, %v5880
    %v5917 = vmul.f32 %v5842, %v5880
    %v5918 = vmul.f32 %v5843, %v5880
    %v5919 = vmul.f32 %v5844, %v5880
    %v5920 = vmul.f32 %v5845, %v5880
    %v5921 = vmul.f32 %v5846, %v5880
    %v5922 = vmul.f32 %v5847, %v5880
    %v5923 = vmul.f32 %v5848, %v5880
    %v5924 = vmul.f32 %v5849, %v5880
    %v5925 = vmul.f32 %v5850, %v5880
    %v5926 = vmul.f32 %v5851, %v5880
    %v5927 = vmul.f32 %v5852, %v5880
    %v5928 = vmul.f32 %v5853, %v5880
    %v5929 = vmul.f32 %v5854, %v5880
    %v5930 = vmul.f32 %v5855, %v5880
    %v5931 = vmul.f32 %v5856, %v5880
    %v5932 = vmul.f32 %v5857, %v5880
    %v5933 = vmul.f32 %v5858, %v5880
    %v5934 = vmul.f32 %v5859, %v5880
    %v5935 = vmul.f32 %v5860, %v5880
    %v5936 = vmul.f32 %v5861, %v5880
    %v5937 = vmul.f32 %v5862, %v5880
    %v5938 = vmul.f32 %v5863, %v5880
    %v5939 = vmul.f32 %v5864, %v5880
    %v5940 = vmul.f32 %v5865, %v5880
    %v5941 = vmul.f32 %v5866, %v5880
    %v5942 = vmul.f32 %v5867, %v5880
    %v5943 = vmul.f32 %v5868, %v5880
    %v5944 = vmul.f32 %v5869, %v5880
    %v5946 = vperm.slane %v5597, 0
    %v5948 = vmul.f32 %v5881, %v5946
    %v5949 = vmul.f32 %v5882, %v5946
    %v5950 = vmul.f32 %v5883, %v5946
    %v5951 = vmul.f32 %v5884, %v5946
    %v5952 = vmul.f32 %v5885, %v5946
    %v5953 = vmul.f32 %v5886, %v5946
    %v5954 = vmul.f32 %v5887, %v5946
    %v5955 = vmul.f32 %v5888, %v5946
    %v5956 = vmul.f32 %v5889, %v5946
    %v5957 = vmul.f32 %v5890, %v5946
    %v5958 = vmul.f32 %v5891, %v5946
    %v5959 = vmul.f32 %v5892, %v5946
    %v5960 = vmul.f32 %v5893, %v5946
    %v5961 = vmul.f32 %v5894, %v5946
    %v5962 = vmul.f32 %v5895, %v5946
    %v5963 = vmul.f32 %v5896, %v5946
    %v5964 = vmul.f32 %v5897, %v5946
    %v5965 = vmul.f32 %v5898, %v5946
    %v5966 = vmul.f32 %v5899, %v5946
    %v5967 = vmul.f32 %v5900, %v5946
    %v5968 = vmul.f32 %v5901, %v5946
    %v5969 = vmul.f32 %v5902, %v5946
    %v5970 = vmul.f32 %v5903, %v5946
    %v5971 = vmul.f32 %v5904, %v5946
    %v5972 = vmul.f32 %v5905, %v5946
    %v5973 = vmul.f32 %v5906, %v5946
    %v5974 = vmul.f32 %v5907, %v5946
    %v5975 = vmul.f32 %v5908, %v5946
    %v5976 = vmul.f32 %v5909, %v5946
    %v5977 = vmul.f32 %v5910, %v5946
    %v5978 = vmul.f32 %v5911, %v5946
    %v5979 = vmul.f32 %v5912, %v5946
    %v5980 = vmul.f32 %v5913, %v5946
    %v5981 = vmul.f32 %v5914, %v5946
    %v5982 = vmul.f32 %v5915, %v5946
    %v5983 = vmul.f32 %v5916, %v5946
    %v5984 = vmul.f32 %v5917, %v5946
    %v5985 = vmul.f32 %v5918, %v5946
    %v5986 = vmul.f32 %v5919, %v5946
    %v5987 = vmul.f32 %v5920, %v5946
    %v5988 = vmul.f32 %v5921, %v5946
    %v5989 = vmul.f32 %v5922, %v5946
    %v5990 = vmul.f32 %v5923, %v5946
    %v5991 = vmul.f32 %v5924, %v5946
    %v5992 = vmul.f32 %v5925, %v5946
    %v5993 = vmul.f32 %v5926, %v5946
    %v5994 = vmul.f32 %v5927, %v5946
    %v5995 = vmul.f32 %v5928, %v5946
    %v5996 = vmul.f32 %v5929, %v5946
    %v5997 = vmul.f32 %v5930, %v5946
    %v5998 = vmul.f32 %v5931, %v5946
    %v5999 = vmul.f32 %v5932, %v5946
    %v6000 = vmul.f32 %v5933, %v5946
    %v6001 = vmul.f32 %v5934, %v5946
    %v6002 = vmul.f32 %v5935, %v5946
    %v6003 = vmul.f32 %v5936, %v5946
    %v6004 = vmul.f32 %v5937, %v5946
    %v6005 = vmul.f32 %v5938, %v5946
    %v6006 = vmul.f32 %v5939, %v5946
    %v6007 = vmul.f32 %v5940, %v5946
    %v6008 = vmul.f32 %v5941, %v5946
    %v6009 = vmul.f32 %v5942, %v5946
    %v6010 = vmul.f32 %v5943, %v5946
    %v6011 = vmul.f32 %v5944, %v5946
    %v6013 = vperm.slane %v5598, 0
    %v6015 = vadd.f32 %v5948, %v6013
    %v6016 = vadd.f32 %v5949, %v6013
    %v6017 = vadd.f32 %v5950, %v6013
    %v6018 = vadd.f32 %v5951, %v6013
    %v6019 = vadd.f32 %v5952, %v6013
    %v6020 = vadd.f32 %v5953, %v6013
    %v6021 = vadd.f32 %v5954, %v6013
    %v6022 = vadd.f32 %v5955, %v6013
    %v6023 = vadd.f32 %v5956, %v6013
    %v6024 = vadd.f32 %v5957, %v6013
    %v6025 = vadd.f32 %v5958, %v6013
    %v6026 = vadd.f32 %v5959, %v6013
    %v6027 = vadd.f32 %v5960, %v6013
    %v6028 = vadd.f32 %v5961, %v6013
    %v6029 = vadd.f32 %v5962, %v6013
    %v6030 = vadd.f32 %v5963, %v6013
    %v6031 = vadd.f32 %v5964, %v6013
    %v6032 = vadd.f32 %v5965, %v6013
    %v6033 = vadd.f32 %v5966, %v6013
    %v6034 = vadd.f32 %v5967, %v6013
    %v6035 = vadd.f32 %v5968, %v6013
    %v6036 = vadd.f32 %v5969, %v6013
    %v6037 = vadd.f32 %v5970, %v6013
    %v6038 = vadd.f32 %v5971, %v6013
    %v6039 = vadd.f32 %v5972, %v6013
    %v6040 = vadd.f32 %v5973, %v6013
    %v6041 = vadd.f32 %v5974, %v6013
    %v6042 = vadd.f32 %v5975, %v6013
    %v6043 = vadd.f32 %v5976, %v6013
    %v6044 = vadd.f32 %v5977, %v6013
    %v6045 = vadd.f32 %v5978, %v6013
    %v6046 = vadd.f32 %v5979, %v6013
    %v6047 = vadd.f32 %v5980, %v6013
    %v6048 = vadd.f32 %v5981, %v6013
    %v6049 = vadd.f32 %v5982, %v6013
    %v6050 = vadd.f32 %v5983, %v6013
    %v6051 = vadd.f32 %v5984, %v6013
    %v6052 = vadd.f32 %v5985, %v6013
    %v6053 = vadd.f32 %v5986, %v6013
    %v6054 = vadd.f32 %v5987, %v6013
    %v6055 = vadd.f32 %v5988, %v6013
    %v6056 = vadd.f32 %v5989, %v6013
    %v6057 = vadd.f32 %v5990, %v6013
    %v6058 = vadd.f32 %v5991, %v6013
    %v6059 = vadd.f32 %v5992, %v6013
    %v6060 = vadd.f32 %v5993, %v6013
    %v6061 = vadd.f32 %v5994, %v6013
    %v6062 = vadd.f32 %v5995, %v6013
    %v6063 = vadd.f32 %v5996, %v6013
    %v6064 = vadd.f32 %v5997, %v6013
    %v6065 = vadd.f32 %v5998, %v6013
    %v6066 = vadd.f32 %v5999, %v6013
    %v6067 = vadd.f32 %v6000, %v6013
    %v6068 = vadd.f32 %v6001, %v6013
    %v6069 = vadd.f32 %v6002, %v6013
    %v6070 = vadd.f32 %v6003, %v6013
    %v6071 = vadd.f32 %v6004, %v6013
    %v6072 = vadd.f32 %v6005, %v6013
    %v6073 = vadd.f32 %v6006, %v6013
    %v6074 = vadd.f32 %v6007, %v6013
    %v6075 = vadd.f32 %v6008, %v6013
    %v6076 = vadd.f32 %v6009, %v6013
    %v6077 = vadd.f32 %v6010, %v6013
    %v6078 = vadd.f32 %v6011, %v6013
    %v6079 = vmax.f32 %v6015, 0.0
    %v6080 = vmax.f32 %v6016, 0.0
    %v6081 = vmax.f32 %v6017, 0.0
    %v6082 = vmax.f32 %v6018, 0.0
    %v6083 = vmax.f32 %v6019, 0.0
    %v6084 = vmax.f32 %v6020, 0.0
    %v6085 = vmax.f32 %v6021, 0.0
    %v6086 = vmax.f32 %v6022, 0.0
    %v6087 = vmax.f32 %v6023, 0.0
    %v6088 = vmax.f32 %v6024, 0.0
    %v6089 = vmax.f32 %v6025, 0.0
    %v6090 = vmax.f32 %v6026, 0.0
    %v6091 = vmax.f32 %v6027, 0.0
    %v6092 = vmax.f32 %v6028, 0.0
    %v6093 = vmax.f32 %v6029, 0.0
    %v6094 = vmax.f32 %v6030, 0.0
    %v6095 = vmax.f32 %v6031, 0.0
    %v6096 = vmax.f32 %v6032, 0.0
    %v6097 = vmax.f32 %v6033, 0.0
    %v6098 = vmax.f32 %v6034, 0.0
    %v6099 = vmax.f32 %v6035, 0.0
    %v6100 = vmax.f32 %v6036, 0.0
    %v6101 = vmax.f32 %v6037, 0.0
    %v6102 = vmax.f32 %v6038, 0.0
    %v6103 = vmax.f32 %v6039, 0.0
    %v6104 = vmax.f32 %v6040, 0.0
    %v6105 = vmax.f32 %v6041, 0.0
    %v6106 = vmax.f32 %v6042, 0.0
    %v6107 = vmax.f32 %v6043, 0.0
    %v6108 = vmax.f32 %v6044, 0.0
    %v6109 = vmax.f32 %v6045, 0.0
    %v6110 = vmax.f32 %v6046, 0.0
    %v6111 = vmax.f32 %v6047, 0.0
    %v6112 = vmax.f32 %v6048, 0.0
    %v6113 = vmax.f32 %v6049, 0.0
    %v6114 = vmax.f32 %v6050, 0.0
    %v6115 = vmax.f32 %v6051, 0.0
    %v6116 = vmax.f32 %v6052, 0.0
    %v6117 = vmax.f32 %v6053, 0.0
    %v6118 = vmax.f32 %v6054, 0.0
    %v6119 = vmax.f32 %v6055, 0.0
    %v6120 = vmax.f32 %v6056, 0.0
    %v6121 = vmax.f32 %v6057, 0.0
    %v6122 = vmax.f32 %v6058, 0.0
    %v6123 = vmax.f32 %v6059, 0.0
    %v6124 = vmax.f32 %v6060, 0.0
    %v6125 = vmax.f32 %v6061, 0.0
    %v6126 = vmax.f32 %v6062, 0.0
    %v6127 = vmax.f32 %v6063, 0.0
    %v6128 = vmax.f32 %v6064, 0.0
    %v6129 = vmax.f32 %v6065, 0.0
    %v6130 = vmax.f32 %v6066, 0.0
    %v6131 = vmax.f32 %v6067, 0.0
    %v6132 = vmax.f32 %v6068, 0.0
    %v6133 = vmax.f32 %v6069, 0.0
    %v6134 = vmax.f32 %v6070, 0.0
    %v6135 = vmax.f32 %v6071, 0.0
    %v6136 = vmax.f32 %v6072, 0.0
    %v6137 = vmax.f32 %v6073, 0.0
    %v6138 = vmax.f32 %v6074, 0.0
    %v6139 = vmax.f32 %v6075, 0.0
    %v6140 = vmax.f32 %v6076, 0.0
    %v6141 = vmax.f32 %v6077, 0.0
    %v6142 = vmax.f32 %v6078, 0.0
    %v6143 = vld [vmem:[#allocation10] sm:$0xff]
    %v6144 = vld [vmem:[#allocation10 + $0x8] sm:$0xff]
    %v6145 = vld [vmem:[#allocation10 + $0x10] sm:$0xff]
    %v6146 = vld [vmem:[#allocation10 + $0x18] sm:$0xff]
    %v6147 = vld [vmem:[#allocation10 + $0x20] sm:$0xff]
    %v6148 = vld [vmem:[#allocation10 + $0x28] sm:$0xff]
    %v6149 = vld [vmem:[#allocation10 + $0x30] sm:$0xff]
    %v6150 = vld [vmem:[#allocation10 + $0x38] sm:$0xff]
    %v6151 = vld [vmem:[#allocation10 + $0x40] sm:$0xff]
    %v6152 = vld [vmem:[#allocation10 + $0x48] sm:$0xff]
    %v6153 = vld [vmem:[#allocation10 + $0x50] sm:$0xff]
    %v6154 = vld [vmem:[#allocation10 + $0x58] sm:$0xff]
    %v6155 = vld [vmem:[#allocation10 + $0x60] sm:$0xff]
    %v6156 = vld [vmem:[#allocation10 + $0x68] sm:$0xff]
    %v6157 = vld [vmem:[#allocation10 + $0x70] sm:$0xff]
    %v6158 = vld [vmem:[#allocation10 + $0x78] sm:$0xff]
    %6159 = vmatpush.msra.mxu0 %v6158
    %6160 = vmatpush.msra.mxu0 %v6157
    %6161 = vmatpush.msra.mxu0 %v6156
    %6162 = vmatpush.msra.mxu0 %v6155
    %6163 = vmatpush.msra.mxu0 %v6154
    %6164 = vmatpush.msra.mxu0 %v6153
    %6165 = vmatpush.msra.mxu0 %v6152
    %6166 = vmatpush.msra.mxu0 %v6151
    %6167 = vmatpush.msra.mxu0 %v6150
    %6168 = vmatpush.msra.mxu0 %v6149
    %6169 = vmatpush.msra.mxu0 %v6148
    %6170 = vmatpush.msra.mxu0 %v6147
    %6171 = vmatpush.msra.mxu0 %v6146
    %6172 = vmatpush.msra.mxu0 %v6145
    %6173 = vmatpush.msra.mxu0 %v6144
    %6174 = vmatpush.msra.mxu0 %v6143
    %6175 = vmatmul.f32.gmra.mxu0 %v6079
    %v6176 = vpop.f32.mrf.mxu0
    %v6177 = vadd.f32 0.0, %v6176
    %6178 = vmatmul.f32.gmra.mxu0 %v6080
    %v6179 = vpop.f32.mrf.mxu0
    %v6180 = vadd.f32 0.0, %v6179
    %6181 = vmatmul.f32.gmra.mxu0 %v6081
    %v6182 = vpop.f32.mrf.mxu0
    %v6183 = vadd.f32 0.0, %v6182
    %6184 = vmatmul.f32.gmra.mxu0 %v6082
    %v6185 = vpop.f32.mrf.mxu0
    %v6186 = vadd.f32 0.0, %v6185
    %6187 = vmatmul.f32.gmra.mxu0 %v6083
    %v6188 = vpop.f32.mrf.mxu0
    %v6189 = vadd.f32 0.0, %v6188
    %6190 = vmatmul.f32.gmra.mxu0 %v6084
    %v6191 = vpop.f32.mrf.mxu0
    %v6192 = vadd.f32 0.0, %v6191
    %6193 = vmatmul.f32.gmra.mxu0 %v6085
    %v6194 = vpop.f32.mrf.mxu0
    %v6195 = vadd.f32 0.0, %v6194
    %6196 = vmatmul.f32.gmra.mxu0 %v6086
    %v6197 = vpop.f32.mrf.mxu0
    %v6198 = vadd.f32 0.0, %v6197
    %6199 = vmatmul.f32.gmra.mxu0 %v6087
    %v6200 = vpop.f32.mrf.mxu0
    %v6201 = vadd.f32 0.0, %v6200
    %6202 = vmatmul.f32.gmra.mxu0 %v6088
    %v6203 = vpop.f32.mrf.mxu0
    %v6204 = vadd.f32 0.0, %v6203
    %6205 = vmatmul.f32.gmra.mxu0 %v6089
    %v6206 = vpop.f32.mrf.mxu0
    %v6207 = vadd.f32 0.0, %v6206
    %6208 = vmatmul.f32.gmra.mxu0 %v6090
    %v6209 = vpop.f32.mrf.mxu0
    %v6210 = vadd.f32 0.0, %v6209
    %6211 = vmatmul.f32.gmra.mxu0 %v6091
    %v6212 = vpop.f32.mrf.mxu0
    %v6213 = vadd.f32 0.0, %v6212
    %6214 = vmatmul.f32.gmra.mxu0 %v6092
    %v6215 = vpop.f32.mrf.mxu0
    %v6216 = vadd.f32 0.0, %v6215
    %6217 = vmatmul.f32.gmra.mxu0 %v6093
    %v6218 = vpop.f32.mrf.mxu0
    %v6219 = vadd.f32 0.0, %v6218
    %6220 = vmatmul.f32.gmra.mxu0 %v6094
    %v6221 = vpop.f32.mrf.mxu0
    %v6222 = vadd.f32 0.0, %v6221
    %6223 = vmatmul.f32.gmra.mxu0 %v6095
    %v6224 = vpop.f32.mrf.mxu0
    %v6225 = vadd.f32 0.0, %v6224
    %6226 = vmatmul.f32.gmra.mxu0 %v6096
    %v6227 = vpop.f32.mrf.mxu0
    %v6228 = vadd.f32 0.0, %v6227
    %6229 = vmatmul.f32.gmra.mxu0 %v6097
    %v6230 = vpop.f32.mrf.mxu0
    %v6231 = vadd.f32 0.0, %v6230
    %6232 = vmatmul.f32.gmra.mxu0 %v6098
    %v6233 = vpop.f32.mrf.mxu0
    %v6234 = vadd.f32 0.0, %v6233
    %6235 = vmatmul.f32.gmra.mxu0 %v6099
    %v6236 = vpop.f32.mrf.mxu0
    %v6237 = vadd.f32 0.0, %v6236
    %6238 = vmatmul.f32.gmra.mxu0 %v6100
    %v6239 = vpop.f32.mrf.mxu0
    %v6240 = vadd.f32 0.0, %v6239
    %6241 = vmatmul.f32.gmra.mxu0 %v6101
    %v6242 = vpop.f32.mrf.mxu0
    %v6243 = vadd.f32 0.0, %v6242
    %6244 = vmatmul.f32.gmra.mxu0 %v6102
    %v6245 = vpop.f32.mrf.mxu0
    %v6246 = vadd.f32 0.0, %v6245
    %6247 = vmatmul.f32.gmra.mxu0 %v6103
    %v6248 = vpop.f32.mrf.mxu0
    %v6249 = vadd.f32 0.0, %v6248
    %6250 = vmatmul.f32.gmra.mxu0 %v6104
    %v6251 = vpop.f32.mrf.mxu0
    %v6252 = vadd.f32 0.0, %v6251
    %6253 = vmatmul.f32.gmra.mxu0 %v6105
    %v6254 = vpop.f32.mrf.mxu0
    %v6255 = vadd.f32 0.0, %v6254
    %6256 = vmatmul.f32.gmra.mxu0 %v6106
    %v6257 = vpop.f32.mrf.mxu0
    %v6258 = vadd.f32 0.0, %v6257
    %6259 = vmatmul.f32.gmra.mxu0 %v6107
    %v6260 = vpop.f32.mrf.mxu0
    %v6261 = vadd.f32 0.0, %v6260
    %6262 = vmatmul.f32.gmra.mxu0 %v6108
    %v6263 = vpop.f32.mrf.mxu0
    %v6264 = vadd.f32 0.0, %v6263
    %6265 = vmatmul.f32.gmra.mxu0 %v6109
    %v6266 = vpop.f32.mrf.mxu0
    %v6267 = vadd.f32 0.0, %v6266
    %6268 = vmatmul.f32.gmra.mxu0 %v6110
    %v6269 = vpop.f32.mrf.mxu0
    %v6270 = vadd.f32 0.0, %v6269
    %6271 = vmatmul.f32.gmra.mxu0 %v6111
    %v6272 = vpop.f32.mrf.mxu0
    %v6273 = vadd.f32 0.0, %v6272
    %6274 = vmatmul.f32.gmra.mxu0 %v6112
    %v6275 = vpop.f32.mrf.mxu0
    %v6276 = vadd.f32 0.0, %v6275
    %6277 = vmatmul.f32.gmra.mxu0 %v6113
    %v6278 = vpop.f32.mrf.mxu0
    %v6279 = vadd.f32 0.0, %v6278
    %6280 = vmatmul.f32.gmra.mxu0 %v6114
    %v6281 = vpop.f32.mrf.mxu0
    %v6282 = vadd.f32 0.0, %v6281
    %6283 = vmatmul.f32.gmra.mxu0 %v6115
    %v6284 = vpop.f32.mrf.mxu0
    %v6285 = vadd.f32 0.0, %v6284
    %6286 = vmatmul.f32.gmra.mxu0 %v6116
    %v6287 = vpop.f32.mrf.mxu0
    %v6288 = vadd.f32 0.0, %v6287
    %6289 = vmatmul.f32.gmra.mxu0 %v6117
    %v6290 = vpop.f32.mrf.mxu0
    %v6291 = vadd.f32 0.0, %v6290
    %6292 = vmatmul.f32.gmra.mxu0 %v6118
    %v6293 = vpop.f32.mrf.mxu0
    %v6294 = vadd.f32 0.0, %v6293
    %6295 = vmatmul.f32.gmra.mxu0 %v6119
    %v6296 = vpop.f32.mrf.mxu0
    %v6297 = vadd.f32 0.0, %v6296
    %6298 = vmatmul.f32.gmra.mxu0 %v6120
    %v6299 = vpop.f32.mrf.mxu0
    %v6300 = vadd.f32 0.0, %v6299
    %6301 = vmatmul.f32.gmra.mxu0 %v6121
    %v6302 = vpop.f32.mrf.mxu0
    %v6303 = vadd.f32 0.0, %v6302
    %6304 = vmatmul.f32.gmra.mxu0 %v6122
    %v6305 = vpop.f32.mrf.mxu0
    %v6306 = vadd.f32 0.0, %v6305
    %6307 = vmatmul.f32.gmra.mxu0 %v6123
    %v6308 = vpop.f32.mrf.mxu0
    %v6309 = vadd.f32 0.0, %v6308
    %6310 = vmatmul.f32.gmra.mxu0 %v6124
    %v6311 = vpop.f32.mrf.mxu0
    %v6312 = vadd.f32 0.0, %v6311
    %6313 = vmatmul.f32.gmra.mxu0 %v6125
    %v6314 = vpop.f32.mrf.mxu0
    %v6315 = vadd.f32 0.0, %v6314
    %6316 = vmatmul.f32.gmra.mxu0 %v6126
    %v6317 = vpop.f32.mrf.mxu0
    %v6318 = vadd.f32 0.0, %v6317
    %6319 = vmatmul.f32.gmra.mxu0 %v6127
    %v6320 = vpop.f32.mrf.mxu0
    %v6321 = vadd.f32 0.0, %v6320
    %6322 = vmatmul.f32.gmra.mxu0 %v6128
    %v6323 = vpop.f32.mrf.mxu0
    %v6324 = vadd.f32 0.0, %v6323
    %6325 = vmatmul.f32.gmra.mxu0 %v6129
    %v6326 = vpop.f32.mrf.mxu0
    %v6327 = vadd.f32 0.0, %v6326
    %6328 = vmatmul.f32.gmra.mxu0 %v6130
    %v6329 = vpop.f32.mrf.mxu0
    %v6330 = vadd.f32 0.0, %v6329
    %6331 = vmatmul.f32.gmra.mxu0 %v6131
    %v6332 = vpop.f32.mrf.mxu0
    %v6333 = vadd.f32 0.0, %v6332
    %6334 = vmatmul.f32.gmra.mxu0 %v6132
    %v6335 = vpop.f32.mrf.mxu0
    %v6336 = vadd.f32 0.0, %v6335
    %6337 = vmatmul.f32.gmra.mxu0 %v6133
    %v6338 = vpop.f32.mrf.mxu0
    %v6339 = vadd.f32 0.0, %v6338
    %6340 = vmatmul.f32.gmra.mxu0 %v6134
    %v6341 = vpop.f32.mrf.mxu0
    %v6342 = vadd.f32 0.0, %v6341
    %6343 = vmatmul.f32.gmra.mxu0 %v6135
    %v6344 = vpop.f32.mrf.mxu0
    %v6345 = vadd.f32 0.0, %v6344
    %6346 = vmatmul.f32.gmra.mxu0 %v6136
    %v6347 = vpop.f32.mrf.mxu0
    %v6348 = vadd.f32 0.0, %v6347
    %6349 = vmatmul.f32.gmra.mxu0 %v6137
    %v6350 = vpop.f32.mrf.mxu0
    %v6351 = vadd.f32 0.0, %v6350
    %6352 = vmatmul.f32.gmra.mxu0 %v6138
    %v6353 = vpop.f32.mrf.mxu0
    %v6354 = vadd.f32 0.0, %v6353
    %6355 = vmatmul.f32.gmra.mxu0 %v6139
    %v6356 = vpop.f32.mrf.mxu0
    %v6357 = vadd.f32 0.0, %v6356
    %6358 = vmatmul.f32.gmra.mxu0 %v6140
    %v6359 = vpop.f32.mrf.mxu0
    %v6360 = vadd.f32 0.0, %v6359
    %6361 = vmatmul.f32.gmra.mxu0 %v6141
    %v6362 = vpop.f32.mrf.mxu0
    %v6363 = vadd.f32 0.0, %v6362
    %6364 = vmatmul.f32.gmra.mxu0 %v6142
    %v6365 = vpop.f32.mrf.mxu0
    %v6366 = vadd.f32 0.0, %v6365
    %6367 = vdwg.mxu0
    %v6368 = vld [vmem:[%s8] sm:$0x1]
    %v6369 = vld [vmem:[%s9] sm:$0x1]
    %v6370 = vadd.f32 %v6177, %v6180
    %v6371 = vadd.f32 %v6370, %v6183
    %v6372 = vadd.f32 %v6371, %v6186
    %v6373 = vadd.f32 %v6372, %v6189
    %v6374 = vadd.f32 %v6373, %v6192
    %v6375 = vadd.f32 %v6374, %v6195
    %v6376 = vadd.f32 %v6375, %v6198
    %v6377 = vadd.f32 %v6376, %v6201
    %v6378 = vadd.f32 %v6377, %v6204
    %v6379 = vadd.f32 %v6378, %v6207
    %v6380 = vadd.f32 %v6379, %v6210
    %v6381 = vadd.f32 %v6380, %v6213
    %v6382 = vadd.f32 %v6381, %v6216
    %v6383 = vadd.f32 %v6382, %v6219
    %v6384 = vadd.f32 %v6383, %v6222
    %v6385 = vadd.f32 %v6384, %v6225
    %v6386 = vadd.f32 %v6385, %v6228
    %v6387 = vadd.f32 %v6386, %v6231
    %v6388 = vadd.f32 %v6387, %v6234
    %v6389 = vadd.f32 %v6388, %v6237
    %v6390 = vadd.f32 %v6389, %v6240
    %v6391 = vadd.f32 %v6390, %v6243
    %v6392 = vadd.f32 %v6391, %v6246
    %v6393 = vadd.f32 %v6392, %v6249
    %v6394 = vadd.f32 %v6393, %v6252
    %v6395 = vadd.f32 %v6394, %v6255
    %v6396 = vadd.f32 %v6395, %v6258
    %v6397 = vadd.f32 %v6396, %v6261
    %v6398 = vadd.f32 %v6397, %v6264
    %v6399 = vadd.f32 %v6398, %v6267
    %v6400 = vadd.f32 %v6399, %v6270
    %v6401 = vadd.f32 %v6400, %v6273
    %v6402 = vadd.f32 %v6401, %v6276
    %v6403 = vadd.f32 %v6402, %v6279
    %v6404 = vadd.f32 %v6403, %v6282
    %v6405 = vadd.f32 %v6404, %v6285
    %v6406 = vadd.f32 %v6405, %v6288
    %v6407 = vadd.f32 %v6406, %v6291
    %v6408 = vadd.f32 %v6407, %v6294
    %v6409 = vadd.f32 %v6408, %v6297
    %v6410 = vadd.f32 %v6409, %v6300
    %v6411 = vadd.f32 %v6410, %v6303
    %v6412 = vadd.f32 %v6411, %v6306
    %v6413 = vadd.f32 %v6412, %v6309
    %v6414 = vadd.f32 %v6413, %v6312
    %v6415 = vadd.f32 %v6414, %v6315
    %v6416 = vadd.f32 %v6415, %v6318
    %v6417 = vadd.f32 %v6416, %v6321
    %v6418 = vadd.f32 %v6417, %v6324
    %v6419 = vadd.f32 %v6418, %v6327
    %v6420 = vadd.f32 %v6419, %v6330
    %v6421 = vadd.f32 %v6420, %v6333
    %v6422 = vadd.f32 %v6421, %v6336
    %v6423 = vadd.f32 %v6422, %v6339
    %v6424 = vadd.f32 %v6423, %v6342
    %v6425 = vadd.f32 %v6424, %v6345
    %v6426 = vadd.f32 %v6425, %v6348
    %v6427 = vadd.f32 %v6426, %v6351
    %v6428 = vadd.f32 %v6427, %v6354
    %v6429 = vadd.f32 %v6428, %v6357
    %v6430 = vadd.f32 %v6429, %v6360
    %v6431 = vadd.f32 %v6430, %v6363
    %v6432 = vadd.f32 %v6431, %v6366
    %v6433 = vrot.slane %v6432, 4
    %v6434 = vadd.f32 %v6432, %v6433
    %v6435 = vrot.slane %v6434, 2
    %v6436 = vadd.f32 %v6434, %v6435
    %v6437 = vrot.slane %v6436, 1
    %v6438 = vadd.f32 %v6436, %v6437
    %v6439 = vmul.f32 %v6177, %v6177
    %v6440 = vmul.f32 %v6180, %v6180
    %v6441 = vmul.f32 %v6183, %v6183
    %v6442 = vmul.f32 %v6186, %v6186
    %v6443 = vmul.f32 %v6189, %v6189
    %v6444 = vmul.f32 %v6192, %v6192
    %v6445 = vmul.f32 %v6195, %v6195
    %v6446 = vmul.f32 %v6198, %v6198
    %v6447 = vmul.f32 %v6201, %v6201
    %v6448 = vmul.f32 %v6204, %v6204
    %v6449 = vmul.f32 %v6207, %v6207
    %v6450 = vmul.f32 %v6210, %v6210
    %v6451 = vmul.f32 %v6213, %v6213
    %v6452 = vmul.f32 %v6216, %v6216
    %v6453 = vmul.f32 %v6219, %v6219
    %v6454 = vmul.f32 %v6222, %v6222
    %v6455 = vmul.f32 %v6225, %v6225
    %v6456 = vmul.f32 %v6228, %v6228
    %v6457 = vmul.f32 %v6231, %v6231
    %v6458 = vmul.f32 %v6234, %v6234
    %v6459 = vmul.f32 %v6237, %v6237
    %v6460 = vmul.f32 %v6240, %v6240
    %v6461 = vmul.f32 %v6243, %v6243
    %v6462 = vmul.f32 %v6246, %v6246
    %v6463 = vmul.f32 %v6249, %v6249
    %v6464 = vmul.f32 %v6252, %v6252
    %v6465 = vmul.f32 %v6255, %v6255
    %v6466 = vmul.f32 %v6258, %v6258
    %v6467 = vmul.f32 %v6261, %v6261
    %v6468 = vmul.f32 %v6264, %v6264
    %v6469 = vmul.f32 %v6267, %v6267
    %v6470 = vmul.f32 %v6270, %v6270
    %v6471 = vmul.f32 %v6273, %v6273
    %v6472 = vmul.f32 %v6276, %v6276
    %v6473 = vmul.f32 %v6279, %v6279
    %v6474 = vmul.f32 %v6282, %v6282
    %v6475 = vmul.f32 %v6285, %v6285
    %v6476 = vmul.f32 %v6288, %v6288
    %v6477 = vmul.f32 %v6291, %v6291
    %v6478 = vmul.f32 %v6294, %v6294
    %v6479 = vmul.f32 %v6297, %v6297
    %v6480 = vmul.f32 %v6300, %v6300
    %v6481 = vmul.f32 %v6303, %v6303
    %v6482 = vmul.f32 %v6306, %v6306
    %v6483 = vmul.f32 %v6309, %v6309
    %v6484 = vmul.f32 %v6312, %v6312
    %v6485 = vmul.f32 %v6315, %v6315
    %v6486 = vmul.f32 %v6318, %v6318
    %v6487 = vmul.f32 %v6321, %v6321
    %v6488 = vmul.f32 %v6324, %v6324
    %v6489 = vmul.f32 %v6327, %v6327
    %v6490 = vmul.f32 %v6330, %v6330
    %v6491 = vmul.f32 %v6333, %v6333
    %v6492 = vmul.f32 %v6336, %v6336
    %v6493 = vmul.f32 %v6339, %v6339
    %v6494 = vmul.f32 %v6342, %v6342
    %v6495 = vmul.f32 %v6345, %v6345
    %v6496 = vmul.f32 %v6348, %v6348
    %v6497 = vmul.f32 %v6351, %v6351
    %v6498 = vmul.f32 %v6354, %v6354
    %v6499 = vmul.f32 %v6357, %v6357
    %v6500 = vmul.f32 %v6360, %v6360
    %v6501 = vmul.f32 %v6363, %v6363
    %v6502 = vmul.f32 %v6366, %v6366
    %v6503 = vadd.f32 %v6439, %v6440
    %v6504 = vadd.f32 %v6503, %v6441
    %v6505 = vadd.f32 %v6504, %v6442
    %v6506 = vadd.f32 %v6505, %v6443
    %v6507 = vadd.f32 %v6506, %v6444
    %v6508 = vadd.f32 %v6507, %v6445
    %v6509 = vadd.f32 %v6508, %v6446
    %v6510 = vadd.f32 %v6509, %v6447
    %v6511 = vadd.f32 %v6510, %v6448
    %v6512 = vadd.f32 %v6511, %v6449
    %v6513 = vadd.f32 %v6512, %v6450
    %v6514 = vadd.f32 %v6513, %v6451
    %v6515 = vadd.f32 %v6514, %v6452
    %v6516 = vadd.f32 %v6515, %v6453
    %v6517 = vadd.f32 %v6516, %v6454
    %v6518 = vadd.f32 %v6517, %v6455
    %v6519 = vadd.f32 %v6518, %v6456
    %v6520 = vadd.f32 %v6519, %v6457
    %v6521 = vadd.f32 %v6520, %v6458
    %v6522 = vadd.f32 %v6521, %v6459
    %v6523 = vadd.f32 %v6522, %v6460
    %v6524 = vadd.f32 %v6523, %v6461
    %v6525 = vadd.f32 %v6524, %v6462
    %v6526 = vadd.f32 %v6525, %v6463
    %v6527 = vadd.f32 %v6526, %v6464
    %v6528 = vadd.f32 %v6527, %v6465
    %v6529 = vadd.f32 %v6528, %v6466
    %v6530 = vadd.f32 %v6529, %v6467
    %v6531 = vadd.f32 %v6530, %v6468
    %v6532 = vadd.f32 %v6531, %v6469
    %v6533 = vadd.f32 %v6532, %v6470
    %v6534 = vadd.f32 %v6533, %v6471
    %v6535 = vadd.f32 %v6534, %v6472
    %v6536 = vadd.f32 %v6535, %v6473
    %v6537 = vadd.f32 %v6536, %v6474
    %v6538 = vadd.f32 %v6537, %v6475
    %v6539 = vadd.f32 %v6538, %v6476
    %v6540 = vadd.f32 %v6539, %v6477
    %v6541 = vadd.f32 %v6540, %v6478
    %v6542 = vadd.f32 %v6541, %v6479
    %v6543 = vadd.f32 %v6542, %v6480
    %v6544 = vadd.f32 %v6543, %v6481
    %v6545 = vadd.f32 %v6544, %v6482
    %v6546 = vadd.f32 %v6545, %v6483
    %v6547 = vadd.f32 %v6546, %v6484
    %v6548 = vadd.f32 %v6547, %v6485
    %v6549 = vadd.f32 %v6548, %v6486
    %v6550 = vadd.f32 %v6549, %v6487
    %v6551 = vadd.f32 %v6550, %v6488
    %v6552 = vadd.f32 %v6551, %v6489
    %v6553 = vadd.f32 %v6552, %v6490
    %v6554 = vadd.f32 %v6553, %v6491
    %v6555 = vadd.f32 %v6554, %v6492
    %v6556 = vadd.f32 %v6555, %v6493
    %v6557 = vadd.f32 %v6556, %v6494
    %v6558 = vadd.f32 %v6557, %v6495
    %v6559 = vadd.f32 %v6558, %v6496
    %v6560 = vadd.f32 %v6559, %v6497
    %v6561 = vadd.f32 %v6560, %v6498
    %v6562 = vadd.f32 %v6561, %v6499
    %v6563 = vadd.f32 %v6562, %v6500
    %v6564 = vadd.f32 %v6563, %v6501
    %v6565 = vadd.f32 %v6564, %v6502
    %v6566 = vrot.slane %v6565, 4
    %v6567 = vadd.f32 %v6565, %v6566
    %v6568 = vrot.slane %v6567, 2
    %v6569 = vadd.f32 %v6567, %v6568
    %v6570 = vrot.slane %v6569, 1
    %v6571 = vadd.f32 %v6569, %v6570
    %v6572 = vmul.f32 %v6438, 0.001953125
    %v6573 = vmul.f32 %v6571, 0.001953125
    %v6574 = vmul.f32 %v6572, %v6572
    %v6575 = vsub.f32 %v6573, %v6574
    %v6576 = vmax.f32 %v6575, 0.0
    %v6577 = vsub.f32 %v6177, %v6572
    %v6578 = vsub.f32 %v6180, %v6572
    %v6579 = vsub.f32 %v6183, %v6572
    %v6580 = vsub.f32 %v6186, %v6572
    %v6581 = vsub.f32 %v6189, %v6572
    %v6582 = vsub.f32 %v6192, %v6572
    %v6583 = vsub.f32 %v6195, %v6572
    %v6584 = vsub.f32 %v6198, %v6572
    %v6585 = vsub.f32 %v6201, %v6572
    %v6586 = vsub.f32 %v6204, %v6572
    %v6587 = vsub.f32 %v6207, %v6572
    %v6588 = vsub.f32 %v6210, %v6572
    %v6589 = vsub.f32 %v6213, %v6572
    %v6590 = vsub.f32 %v6216, %v6572
    %v6591 = vsub.f32 %v6219, %v6572
    %v6592 = vsub.f32 %v6222, %v6572
    %v6593 = vsub.f32 %v6225, %v6572
    %v6594 = vsub.f32 %v6228, %v6572
    %v6595 = vsub.f32 %v6231, %v6572
    %v6596 = vsub.f32 %v6234, %v6572
    %v6597 = vsub.f32 %v6237, %v6572
    %v6598 = vsub.f32 %v6240, %v6572
    %v6599 = vsub.f32 %v6243, %v6572
    %v6600 = vsub.f32 %v6246, %v6572
    %v6601 = vsub.f32 %v6249, %v6572
    %v6602 = vsub.f32 %v6252, %v6572
    %v6603 = vsub.f32 %v6255, %v6572
    %v6604 = vsub.f32 %v6258, %v6572
    %v6605 = vsub.f32 %v6261, %v6572
    %v6606 = vsub.f32 %v6264, %v6572
    %v6607 = vsub.f32 %v6267, %v6572
    %v6608 = vsub.f32 %v6270, %v6572
    %v6609 = vsub.f32 %v6273, %v6572
    %v6610 = vsub.f32 %v6276, %v6572
    %v6611 = vsub.f32 %v6279, %v6572
    %v6612 = vsub.f32 %v6282, %v6572
    %v6613 = vsub.f32 %v6285, %v6572
    %v6614 = vsub.f32 %v6288, %v6572
    %v6615 = vsub.f32 %v6291, %v6572
    %v6616 = vsub.f32 %v6294, %v6572
    %v6617 = vsub.f32 %v6297, %v6572
    %v6618 = vsub.f32 %v6300, %v6572
    %v6619 = vsub.f32 %v6303, %v6572
    %v6620 = vsub.f32 %v6306, %v6572
    %v6621 = vsub.f32 %v6309, %v6572
    %v6622 = vsub.f32 %v6312, %v6572
    %v6623 = vsub.f32 %v6315, %v6572
    %v6624 = vsub.f32 %v6318, %v6572
    %v6625 = vsub.f32 %v6321, %v6572
    %v6626 = vsub.f32 %v6324, %v6572
    %v6627 = vsub.f32 %v6327, %v6572
    %v6628 = vsub.f32 %v6330, %v6572
    %v6629 = vsub.f32 %v6333, %v6572
    %v6630 = vsub.f32 %v6336, %v6572
    %v6631 = vsub.f32 %v6339, %v6572
    %v6632 = vsub.f32 %v6342, %v6572
    %v6633 = vsub.f32 %v6345, %v6572
    %v6634 = vsub.f32 %v6348, %v6572
    %v6635 = vsub.f32 %v6351, %v6572
    %v6636 = vsub.f32 %v6354, %v6572
    %v6637 = vsub.f32 %v6357, %v6572
    %v6638 = vsub.f32 %v6360, %v6572
    %v6639 = vsub.f32 %v6363, %v6572
    %v6640 = vsub.f32 %v6366, %v6572
    %v6641 = vadd.f32 %v6576, 1e-05
    %v6642 = vrsqrt.pop %v6641
    %v6643 = vmul.f32 %v6642, %v6641
    %v6644 = vmul.f32 %v6643, %v6642
    %v6645 = vmul.f32 0.5, %v6644
    %v6646 = vsub.f32 1.5, %v6645
    %v6647 = vmul.f32 %v6642, %v6646
    %vm6648 = vweird.f32 %v6641
    %vm6649 = vweird.f32 %v6642
    %vm6650 = vmor %vm6648, %vm6649
    %v6651 = vsel %vm6650, %v6642, %v6647
    %v6652 = vmul.f32 %v6577, %v6651
    %v6653 = vmul.f32 %v6578, %v6651
    %v6654 = vmul.f32 %v6579, %v6651
    %v6655 = vmul.f32 %v6580, %v6651
    %v6656 = vmul.f32 %v6581, %v6651
    %v6657 = vmul.f32 %v6582, %v6651
    %v6658 = vmul.f32 %v6583, %v6651
    %v6659 = vmul.f32 %v6584, %v6651
    %v6660 = vmul.f32 %v6585, %v6651
    %v6661 = vmul.f32 %v6586, %v6651
    %v6662 = vmul.f32 %v6587, %v6651
    %v6663 = vmul.f32 %v6588, %v6651
    %v6664 = vmul.f32 %v6589, %v6651
    %v6665 = vmul.f32 %v6590, %v6651
    %v6666 = vmul.f32 %v6591, %v6651
    %v6667 = vmul.f32 %v6592, %v6651
    %v6668 = vmul.f32 %v6593, %v6651
    %v6669 = vmul.f32 %v6594, %v6651
    %v6670 = vmul.f32 %v6595, %v6651
    %v6671 = vmul.f32 %v6596, %v6651
    %v6672 = vmul.f32 %v6597, %v6651
    %v6673 = vmul.f32 %v6598, %v6651
    %v6674 = vmul.f32 %v6599, %v6651
    %v6675 = vmul.f32 %v6600, %v6651
    %v6676 = vmul.f32 %v6601, %v6651
    %v6677 = vmul.f32 %v6602, %v6651
    %v6678 = vmul.f32 %v6603, %v6651
    %v6679 = vmul.f32 %v6604, %v6651
    %v6680 = vmul.f32 %v6605, %v6651
    %v6681 = vmul.f32 %v6606, %v6651
    %v6682 = vmul.f32 %v6607, %v6651
    %v6683 = vmul.f32 %v6608, %v6651
    %v6684 = vmul.f32 %v6609, %v6651
    %v6685 = vmul.f32 %v6610, %v6651
    %v6686 = vmul.f32 %v6611, %v6651
    %v6687 = vmul.f32 %v6612, %v6651
    %v6688 = vmul.f32 %v6613, %v6651
    %v6689 = vmul.f32 %v6614, %v6651
    %v6690 = vmul.f32 %v6615, %v6651
    %v6691 = vmul.f32 %v6616, %v6651
    %v6692 = vmul.f32 %v6617, %v6651
    %v6693 = vmul.f32 %v6618, %v6651
    %v6694 = vmul.f32 %v6619, %v6651
    %v6695 = vmul.f32 %v6620, %v6651
    %v6696 = vmul.f32 %v6621, %v6651
    %v6697 = vmul.f32 %v6622, %v6651
    %v6698 = vmul.f32 %v6623, %v6651
    %v6699 = vmul.f32 %v6624, %v6651
    %v6700 = vmul.f32 %v6625, %v6651
    %v6701 = vmul.f32 %v6626, %v6651
    %v6702 = vmul.f32 %v6627, %v6651
    %v6703 = vmul.f32 %v6628, %v6651
    %v6704 = vmul.f32 %v6629, %v6651
    %v6705 = vmul.f32 %v6630, %v6651
    %v6706 = vmul.f32 %v6631, %v6651
    %v6707 = vmul.f32 %v6632, %v6651
    %v6708 = vmul.f32 %v6633, %v6651
    %v6709 = vmul.f32 %v6634, %v6651
    %v6710 = vmul.f32 %v6635, %v6651
    %v6711 = vmul.f32 %v6636, %v6651
    %v6712 = vmul.f32 %v6637, %v6651
    %v6713 = vmul.f32 %v6638, %v6651
    %v6714 = vmul.f32 %v6639, %v6651
    %v6715 = vmul.f32 %v6640, %v6651
    %v6717 = vperm.slane %v6368, 0
    %v6719 = vmul.f32 %v6652, %v6717
    %v6720 = vmul.f32 %v6653, %v6717
    %v6721 = vmul.f32 %v6654, %v6717
    %v6722 = vmul.f32 %v6655, %v6717
    %v6723 = vmul.f32 %v6656, %v6717
    %v6724 = vmul.f32 %v6657, %v6717
    %v6725 = vmul.f32 %v6658, %v6717
    %v6726 = vmul.f32 %v6659, %v6717
    %v6727 = vmul.f32 %v6660, %v6717
    %v6728 = vmul.f32 %v6661, %v6717
    %v6729 = vmul.f32 %v6662, %v6717
    %v6730 = vmul.f32 %v6663, %v6717
    %v6731 = vmul.f32 %v6664, %v6717
    %v6732 = vmul.f32 %v6665, %v6717
    %v6733 = vmul.f32 %v6666, %v6717
    %v6734 = vmul.f32 %v6667, %v6717
    %v6735 = vmul.f32 %v6668, %v6717
    %v6736 = vmul.f32 %v6669, %v6717
    %v6737 = vmul.f32 %v6670, %v6717
    %v6738 = vmul.f32 %v6671, %v6717
    %v6739 = vmul.f32 %v6672, %v6717
    %v6740 = vmul.f32 %v6673, %v6717
    %v6741 = vmul.f32 %v6674, %v6717
    %v6742 = vmul.f32 %v6675, %v6717
    %v6743 = vmul.f32 %v6676, %v6717
    %v6744 = vmul.f32 %v6677, %v6717
    %v6745 = vmul.f32 %v6678, %v6717
    %v6746 = vmul.f32 %v6679, %v6717
    %v6747 = vmul.f32 %v6680, %v6717
    %v6748 = vmul.f32 %v6681, %v6717
    %v6749 = vmul.f32 %v6682, %v6717
    %v6750 = vmul.f32 %v6683, %v6717
    %v6751 = vmul.f32 %v6684, %v6717
    %v6752 = vmul.f32 %v6685, %v6717
    %v6753 = vmul.f32 %v6686, %v6717
    %v6754 = vmul.f32 %v6687, %v6717
    %v6755 = vmul.f32 %v6688, %v6717
    %v6756 = vmul.f32 %v6689, %v6717
    %v6757 = vmul.f32 %v6690, %v6717
    %v6758 = vmul.f32 %v6691, %v6717
    %v6759 = vmul.f32 %v6692, %v6717
    %v6760 = vmul.f32 %v6693, %v6717
    %v6761 = vmul.f32 %v6694, %v6717
    %v6762 = vmul.f32 %v6695, %v6717
    %v6763 = vmul.f32 %v6696, %v6717
    %v6764 = vmul.f32 %v6697, %v6717
    %v6765 = vmul.f32 %v6698, %v6717
    %v6766 = vmul.f32 %v6699, %v6717
    %v6767 = vmul.f32 %v6700, %v6717
    %v6768 = vmul.f32 %v6701, %v6717
    %v6769 = vmul.f32 %v6702, %v6717
    %v6770 = vmul.f32 %v6703, %v6717
    %v6771 = vmul.f32 %v6704, %v6717
    %v6772 = vmul.f32 %v6705, %v6717
    %v6773 = vmul.f32 %v6706, %v6717
    %v6774 = vmul.f32 %v6707, %v6717
    %v6775 = vmul.f32 %v6708, %v6717
    %v6776 = vmul.f32 %v6709, %v6717
    %v6777 = vmul.f32 %v6710, %v6717
    %v6778 = vmul.f32 %v6711, %v6717
    %v6779 = vmul.f32 %v6712, %v6717
    %v6780 = vmul.f32 %v6713, %v6717
    %v6781 = vmul.f32 %v6714, %v6717
    %v6782 = vmul.f32 %v6715, %v6717
    %v6784 = vperm.slane %v6369, 0
    %v6786 = vadd.f32 %v6719, %v6784
    %v6787 = vadd.f32 %v6720, %v6784
    %v6788 = vadd.f32 %v6721, %v6784
    %v6789 = vadd.f32 %v6722, %v6784
    %v6790 = vadd.f32 %v6723, %v6784
    %v6791 = vadd.f32 %v6724, %v6784
    %v6792 = vadd.f32 %v6725, %v6784
    %v6793 = vadd.f32 %v6726, %v6784
    %v6794 = vadd.f32 %v6727, %v6784
    %v6795 = vadd.f32 %v6728, %v6784
    %v6796 = vadd.f32 %v6729, %v6784
    %v6797 = vadd.f32 %v6730, %v6784
    %v6798 = vadd.f32 %v6731, %v6784
    %v6799 = vadd.f32 %v6732, %v6784
    %v6800 = vadd.f32 %v6733, %v6784
    %v6801 = vadd.f32 %v6734, %v6784
    %v6802 = vadd.f32 %v6735, %v6784
    %v6803 = vadd.f32 %v6736, %v6784
    %v6804 = vadd.f32 %v6737, %v6784
    %v6805 = vadd.f32 %v6738, %v6784
    %v6806 = vadd.f32 %v6739, %v6784
    %v6807 = vadd.f32 %v6740, %v6784
    %v6808 = vadd.f32 %v6741, %v6784
    %v6809 = vadd.f32 %v6742, %v6784
    %v6810 = vadd.f32 %v6743, %v6784
    %v6811 = vadd.f32 %v6744, %v6784
    %v6812 = vadd.f32 %v6745, %v6784
    %v6813 = vadd.f32 %v6746, %v6784
    %v6814 = vadd.f32 %v6747, %v6784
    %v6815 = vadd.f32 %v6748, %v6784
    %v6816 = vadd.f32 %v6749, %v6784
    %v6817 = vadd.f32 %v6750, %v6784
    %v6818 = vadd.f32 %v6751, %v6784
    %v6819 = vadd.f32 %v6752, %v6784
    %v6820 = vadd.f32 %v6753, %v6784
    %v6821 = vadd.f32 %v6754, %v6784
    %v6822 = vadd.f32 %v6755, %v6784
    %v6823 = vadd.f32 %v6756, %v6784
    %v6824 = vadd.f32 %v6757, %v6784
    %v6825 = vadd.f32 %v6758, %v6784
    %v6826 = vadd.f32 %v6759, %v6784
    %v6827 = vadd.f32 %v6760, %v6784
    %v6828 = vadd.f32 %v6761, %v6784
    %v6829 = vadd.f32 %v6762, %v6784
    %v6830 = vadd.f32 %v6763, %v6784
    %v6831 = vadd.f32 %v6764, %v6784
    %v6832 = vadd.f32 %v6765, %v6784
    %v6833 = vadd.f32 %v6766, %v6784
    %v6834 = vadd.f32 %v6767, %v6784
    %v6835 = vadd.f32 %v6768, %v6784
    %v6836 = vadd.f32 %v6769, %v6784
    %v6837 = vadd.f32 %v6770, %v6784
    %v6838 = vadd.f32 %v6771, %v6784
    %v6839 = vadd.f32 %v6772, %v6784
    %v6840 = vadd.f32 %v6773, %v6784
    %v6841 = vadd.f32 %v6774, %v6784
    %v6842 = vadd.f32 %v6775, %v6784
    %v6843 = vadd.f32 %v6776, %v6784
    %v6844 = vadd.f32 %v6777, %v6784
    %v6845 = vadd.f32 %v6778, %v6784
    %v6846 = vadd.f32 %v6779, %v6784
    %v6847 = vadd.f32 %v6780, %v6784
    %v6848 = vadd.f32 %v6781, %v6784
    %v6849 = vadd.f32 %v6782, %v6784
    %v6850 = vld [vmem:[#allocation12] sm:$0xff]
    %v6851 = vld [vmem:[#allocation12 + $0x8] sm:$0xff]
    %v6852 = vld [vmem:[#allocation12 + $0x10] sm:$0xff]
    %v6853 = vld [vmem:[#allocation12 + $0x18] sm:$0xff]
    %v6854 = vld [vmem:[#allocation12 + $0x20] sm:$0xff]
    %v6855 = vld [vmem:[#allocation12 + $0x28] sm:$0xff]
    %v6856 = vld [vmem:[#allocation12 + $0x30] sm:$0xff]
    %v6857 = vld [vmem:[#allocation12 + $0x38] sm:$0xff]
    %v6858 = vld [vmem:[#allocation12 + $0x40] sm:$0xff]
    %v6859 = vld [vmem:[#allocation12 + $0x48] sm:$0xff]
    %v6860 = vld [vmem:[#allocation12 + $0x50] sm:$0xff]
    %v6861 = vld [vmem:[#allocation12 + $0x58] sm:$0xff]
    %v6862 = vld [vmem:[#allocation12 + $0x60] sm:$0xff]
    %v6863 = vld [vmem:[#allocation12 + $0x68] sm:$0xff]
    %v6864 = vld [vmem:[#allocation12 + $0x70] sm:$0xff]
    %v6865 = vld [vmem:[#allocation12 + $0x78] sm:$0xff]
    %6866 = vmatpush.msra.mxu0 %v6865
    %6867 = vmatpush.msra.mxu0 %v6864
    %6868 = vmatpush.msra.mxu0 %v6863
    %6869 = vmatpush.msra.mxu0 %v6862
    %6870 = vmatpush.msra.mxu0 %v6861
    %6871 = vmatpush.msra.mxu0 %v6860
    %6872 = vmatpush.msra.mxu0 %v6859
    %6873 = vmatpush.msra.mxu0 %v6858
    %6874 = vmatpush.msra.mxu0 %v6857
    %6875 = vmatpush.msra.mxu0 %v6856
    %6876 = vmatpush.msra.mxu0 %v6855
    %6877 = vmatpush.msra.mxu0 %v6854
    %6878 = vmatpush.msra.mxu0 %v6853
    %6879 = vmatpush.msra.mxu0 %v6852
    %6880 = vmatpush.msra.mxu0 %v6851
    %6881 = vmatpush.msra.mxu0 %v6850
    %6882 = vmatmul.f32.gmra.mxu0 %v123
    %v6883 = vpop.f32.mrf.mxu0
    %v6884 = vadd.f32 0.0, %v6883
    %6885 = vmatmul.f32.gmra.mxu0 %v124
    %v6886 = vpop.f32.mrf.mxu0
    %v6887 = vadd.f32 0.0, %v6886
    %6888 = vmatmul.f32.gmra.mxu0 %v125
    %v6889 = vpop.f32.mrf.mxu0
    %v6890 = vadd.f32 0.0, %v6889
    %6891 = vmatmul.f32.gmra.mxu0 %v126
    %v6892 = vpop.f32.mrf.mxu0
    %v6893 = vadd.f32 0.0, %v6892
    %6894 = vmatmul.f32.gmra.mxu0 %v127
    %v6895 = vpop.f32.mrf.mxu0
    %v6896 = vadd.f32 0.0, %v6895
    %6897 = vmatmul.f32.gmra.mxu0 %v128
    %v6898 = vpop.f32.mrf.mxu0
    %v6899 = vadd.f32 0.0, %v6898
    %6900 = vmatmul.f32.gmra.mxu0 %v129
    %v6901 = vpop.f32.mrf.mxu0
    %v6902 = vadd.f32 0.0, %v6901
    %6903 = vmatmul.f32.gmra.mxu0 %v130
    %v6904 = vpop.f32.mrf.mxu0
    %v6905 = vadd.f32 0.0, %v6904
    %6906 = vmatmul.f32.gmra.mxu0 %v131
    %v6907 = vpop.f32.mrf.mxu0
    %v6908 = vadd.f32 0.0, %v6907
    %6909 = vmatmul.f32.gmra.mxu0 %v132
    %v6910 = vpop.f32.mrf.mxu0
    %v6911 = vadd.f32 0.0, %v6910
    %6912 = vmatmul.f32.gmra.mxu0 %v133
    %v6913 = vpop.f32.mrf.mxu0
    %v6914 = vadd.f32 0.0, %v6913
    %6915 = vmatmul.f32.gmra.mxu0 %v134
    %v6916 = vpop.f32.mrf.mxu0
    %v6917 = vadd.f32 0.0, %v6916
    %6918 = vmatmul.f32.gmra.mxu0 %v135
    %v6919 = vpop.f32.mrf.mxu0
    %v6920 = vadd.f32 0.0, %v6919
    %6921 = vmatmul.f32.gmra.mxu0 %v136
    %v6922 = vpop.f32.mrf.mxu0
    %v6923 = vadd.f32 0.0, %v6922
    %6924 = vmatmul.f32.gmra.mxu0 %v137
    %v6925 = vpop.f32.mrf.mxu0
    %v6926 = vadd.f32 0.0, %v6925
    %6927 = vmatmul.f32.gmra.mxu0 %v138
    %v6928 = vpop.f32.mrf.mxu0
    %v6929 = vadd.f32 0.0, %v6928
    %6930 = vmatmul.f32.gmra.mxu0 %v139
    %v6931 = vpop.f32.mrf.mxu0
    %v6932 = vadd.f32 0.0, %v6931
    %6933 = vmatmul.f32.gmra.mxu0 %v140
    %v6934 = vpop.f32.mrf.mxu0
    %v6935 = vadd.f32 0.0, %v6934
    %6936 = vmatmul.f32.gmra.mxu0 %v141
    %v6937 = vpop.f32.mrf.mxu0
    %v6938 = vadd.f32 0.0, %v6937
    %6939 = vmatmul.f32.gmra.mxu0 %v142
    %v6940 = vpop.f32.mrf.mxu0
    %v6941 = vadd.f32 0.0, %v6940
    %6942 = vmatmul.f32.gmra.mxu0 %v143
    %v6943 = vpop.f32.mrf.mxu0
    %v6944 = vadd.f32 0.0, %v6943
    %6945 = vmatmul.f32.gmra.mxu0 %v144
    %v6946 = vpop.f32.mrf.mxu0
    %v6947 = vadd.f32 0.0, %v6946
    %6948 = vmatmul.f32.gmra.mxu0 %v145
    %v6949 = vpop.f32.mrf.mxu0
    %v6950 = vadd.f32 0.0, %v6949
    %6951 = vmatmul.f32.gmra.mxu0 %v146
    %v6952 = vpop.f32.mrf.mxu0
    %v6953 = vadd.f32 0.0, %v6952
    %6954 = vmatmul.f32.gmra.mxu0 %v147
    %v6955 = vpop.f32.mrf.mxu0
    %v6956 = vadd.f32 0.0, %v6955
    %6957 = vmatmul.f32.gmra.mxu0 %v148
    %v6958 = vpop.f32.mrf.mxu0
    %v6959 = vadd.f32 0.0, %v6958
    %6960 = vmatmul.f32.gmra.mxu0 %v149
    %v6961 = vpop.f32.mrf.mxu0
    %v6962 = vadd.f32 0.0, %v6961
    %6963 = vmatmul.f32.gmra.mxu0 %v150
    %v6964 = vpop.f32.mrf.mxu0
    %v6965 = vadd.f32 0.0, %v6964
    %6966 = vmatmul.f32.gmra.mxu0 %v151
    %v6967 = vpop.f32.mrf.mxu0
    %v6968 = vadd.f32 0.0, %v6967
    %6969 = vmatmul.f32.gmra.mxu0 %v152
    %v6970 = vpop.f32.mrf.mxu0
    %v6971 = vadd.f32 0.0, %v6970
    %6972 = vmatmul.f32.gmra.mxu0 %v153
    %v6973 = vpop.f32.mrf.mxu0
    %v6974 = vadd.f32 0.0, %v6973
    %6975 = vmatmul.f32.gmra.mxu0 %v154
    %v6976 = vpop.f32.mrf.mxu0
    %v6977 = vadd.f32 0.0, %v6976
    %6978 = vmatmul.f32.gmra.mxu0 %v155
    %v6979 = vpop.f32.mrf.mxu0
    %v6980 = vadd.f32 0.0, %v6979
    %6981 = vmatmul.f32.gmra.mxu0 %v156
    %v6982 = vpop.f32.mrf.mxu0
    %v6983 = vadd.f32 0.0, %v6982
    %6984 = vmatmul.f32.gmra.mxu0 %v157
    %v6985 = vpop.f32.mrf.mxu0
    %v6986 = vadd.f32 0.0, %v6985
    %6987 = vmatmul.f32.gmra.mxu0 %v158
    %v6988 = vpop.f32.mrf.mxu0
    %v6989 = vadd.f32 0.0, %v6988
    %6990 = vmatmul.f32.gmra.mxu0 %v159
    %v6991 = vpop.f32.mrf.mxu0
    %v6992 = vadd.f32 0.0, %v6991
    %6993 = vmatmul.f32.gmra.mxu0 %v160
    %v6994 = vpop.f32.mrf.mxu0
    %v6995 = vadd.f32 0.0, %v6994
    %6996 = vmatmul.f32.gmra.mxu0 %v161
    %v6997 = vpop.f32.mrf.mxu0
    %v6998 = vadd.f32 0.0, %v6997
    %6999 = vmatmul.f32.gmra.mxu0 %v162
    %v7000 = vpop.f32.mrf.mxu0
    %v7001 = vadd.f32 0.0, %v7000
    %7002 = vmatmul.f32.gmra.mxu0 %v163
    %v7003 = vpop.f32.mrf.mxu0
    %v7004 = vadd.f32 0.0, %v7003
    %7005 = vmatmul.f32.gmra.mxu0 %v164
    %v7006 = vpop.f32.mrf.mxu0
    %v7007 = vadd.f32 0.0, %v7006
    %7008 = vmatmul.f32.gmra.mxu0 %v165
    %v7009 = vpop.f32.mrf.mxu0
    %v7010 = vadd.f32 0.0, %v7009
    %7011 = vmatmul.f32.gmra.mxu0 %v166
    %v7012 = vpop.f32.mrf.mxu0
    %v7013 = vadd.f32 0.0, %v7012
    %7014 = vmatmul.f32.gmra.mxu0 %v167
    %v7015 = vpop.f32.mrf.mxu0
    %v7016 = vadd.f32 0.0, %v7015
    %7017 = vmatmul.f32.gmra.mxu0 %v168
    %v7018 = vpop.f32.mrf.mxu0
    %v7019 = vadd.f32 0.0, %v7018
    %7020 = vmatmul.f32.gmra.mxu0 %v169
    %v7021 = vpop.f32.mrf.mxu0
    %v7022 = vadd.f32 0.0, %v7021
    %7023 = vmatmul.f32.gmra.mxu0 %v170
    %v7024 = vpop.f32.mrf.mxu0
    %v7025 = vadd.f32 0.0, %v7024
    %7026 = vmatmul.f32.gmra.mxu0 %v171
    %v7027 = vpop.f32.mrf.mxu0
    %v7028 = vadd.f32 0.0, %v7027
    %7029 = vmatmul.f32.gmra.mxu0 %v172
    %v7030 = vpop.f32.mrf.mxu0
    %v7031 = vadd.f32 0.0, %v7030
    %7032 = vmatmul.f32.gmra.mxu0 %v173
    %v7033 = vpop.f32.mrf.mxu0
    %v7034 = vadd.f32 0.0, %v7033
    %7035 = vmatmul.f32.gmra.mxu0 %v174
    %v7036 = vpop.f32.mrf.mxu0
    %v7037 = vadd.f32 0.0, %v7036
    %7038 = vmatmul.f32.gmra.mxu0 %v175
    %v7039 = vpop.f32.mrf.mxu0
    %v7040 = vadd.f32 0.0, %v7039
    %7041 = vmatmul.f32.gmra.mxu0 %v176
    %v7042 = vpop.f32.mrf.mxu0
    %v7043 = vadd.f32 0.0, %v7042
    %7044 = vmatmul.f32.gmra.mxu0 %v177
    %v7045 = vpop.f32.mrf.mxu0
    %v7046 = vadd.f32 0.0, %v7045
    %7047 = vmatmul.f32.gmra.mxu0 %v178
    %v7048 = vpop.f32.mrf.mxu0
    %v7049 = vadd.f32 0.0, %v7048
    %7050 = vmatmul.f32.gmra.mxu0 %v179
    %v7051 = vpop.f32.mrf.mxu0
    %v7052 = vadd.f32 0.0, %v7051
    %7053 = vmatmul.f32.gmra.mxu0 %v180
    %v7054 = vpop.f32.mrf.mxu0
    %v7055 = vadd.f32 0.0, %v7054
    %7056 = vmatmul.f32.gmra.mxu0 %v181
    %v7057 = vpop.f32.mrf.mxu0
    %v7058 = vadd.f32 0.0, %v7057
    %7059 = vmatmul.f32.gmra.mxu0 %v182
    %v7060 = vpop.f32.mrf.mxu0
    %v7061 = vadd.f32 0.0, %v7060
    %7062 = vmatmul.f32.gmra.mxu0 %v183
    %v7063 = vpop.f32.mrf.mxu0
    %v7064 = vadd.f32 0.0, %v7063
    %7065 = vmatmul.f32.gmra.mxu0 %v184
    %v7066 = vpop.f32.mrf.mxu0
    %v7067 = vadd.f32 0.0, %v7066
    %7068 = vmatmul.f32.gmra.mxu0 %v185
    %v7069 = vpop.f32.mrf.mxu0
    %v7070 = vadd.f32 0.0, %v7069
    %7071 = vmatmul.f32.gmra.mxu0 %v186
    %v7072 = vpop.f32.mrf.mxu0
    %v7073 = vadd.f32 0.0, %v7072
    %7074 = vdwg.mxu0
    %v7075 = vld [vmem:[%s11] sm:$0x1]
    %v7076 = vld [vmem:[%s12] sm:$0x1]
    %v7077 = vadd.f32 %v6884, %v6887
    %v7078 = vadd.f32 %v7077, %v6890
    %v7079 = vadd.f32 %v7078, %v6893
    %v7080 = vadd.f32 %v7079, %v6896
    %v7081 = vadd.f32 %v7080, %v6899
    %v7082 = vadd.f32 %v7081, %v6902
    %v7083 = vadd.f32 %v7082, %v6905
    %v7084 = vadd.f32 %v7083, %v6908
    %v7085 = vadd.f32 %v7084, %v6911
    %v7086 = vadd.f32 %v7085, %v6914
    %v7087 = vadd.f32 %v7086, %v6917
    %v7088 = vadd.f32 %v7087, %v6920
    %v7089 = vadd.f32 %v7088, %v6923
    %v7090 = vadd.f32 %v7089, %v6926
    %v7091 = vadd.f32 %v7090, %v6929
    %v7092 = vadd.f32 %v7091, %v6932
    %v7093 = vadd.f32 %v7092, %v6935
    %v7094 = vadd.f32 %v7093, %v6938
    %v7095 = vadd.f32 %v7094, %v6941
    %v7096 = vadd.f32 %v7095, %v6944
    %v7097 = vadd.f32 %v7096, %v6947
    %v7098 = vadd.f32 %v7097, %v6950
    %v7099 = vadd.f32 %v7098, %v6953
    %v7100 = vadd.f32 %v7099, %v6956
    %v7101 = vadd.f32 %v7100, %v6959
    %v7102 = vadd.f32 %v7101, %v6962
    %v7103 = vadd.f32 %v7102, %v6965
    %v7104 = vadd.f32 %v7103, %v6968
    %v7105 = vadd.f32 %v7104, %v6971
    %v7106 = vadd.f32 %v7105, %v6974
    %v7107 = vadd.f32 %v7106, %v6977
    %v7108 = vadd.f32 %v7107, %v6980
    %v7109 = vadd.f32 %v7108, %v6983
    %v7110 = vadd.f32 %v7109, %v6986
    %v7111 = vadd.f32 %v7110, %v6989
    %v7112 = vadd.f32 %v7111, %v6992
    %v7113 = vadd.f32 %v7112, %v6995
    %v7114 = vadd.f32 %v7113, %v6998
    %v7115 = vadd.f32 %v7114, %v7001
    %v7116 = vadd.f32 %v7115, %v7004
    %v7117 = vadd.f32 %v7116, %v7007
    %v7118 = vadd.f32 %v7117, %v7010
    %v7119 = vadd.f32 %v7118, %v7013
    %v7120 = vadd.f32 %v7119, %v7016
    %v7121 = vadd.f32 %v7120, %v7019
    %v7122 = vadd.f32 %v7121, %v7022
    %v7123 = vadd.f32 %v7122, %v7025
    %v7124 = vadd.f32 %v7123, %v7028
    %v7125 = vadd.f32 %v7124, %v7031
    %v7126 = vadd.f32 %v7125, %v7034
    %v7127 = vadd.f32 %v7126, %v7037
    %v7128 = vadd.f32 %v7127, %v7040
    %v7129 = vadd.f32 %v7128, %v7043
    %v7130 = vadd.f32 %v7129, %v7046
    %v7131 = vadd.f32 %v7130, %v7049
    %v7132 = vadd.f32 %v7131, %v7052
    %v7133 = vadd.f32 %v7132, %v7055
    %v7134 = vadd.f32 %v7133, %v7058
    %v7135 = vadd.f32 %v7134, %v7061
    %v7136 = vadd.f32 %v7135, %v7064
    %v7137 = vadd.f32 %v7136, %v7067
    %v7138 = vadd.f32 %v7137, %v7070
    %v7139 = vadd.f32 %v7138, %v7073
    %v7140 = vrot.slane %v7139, 4
    %v7141 = vadd.f32 %v7139, %v7140
    %v7142 = vrot.slane %v7141, 2
    %v7143 = vadd.f32 %v7141, %v7142
    %v7144 = vrot.slane %v7143, 1
    %v7145 = vadd.f32 %v7143, %v7144
    %v7146 = vmul.f32 %v6884, %v6884
    %v7147 = vmul.f32 %v6887, %v6887
    %v7148 = vmul.f32 %v6890, %v6890
    %v7149 = vmul.f32 %v6893, %v6893
    %v7150 = vmul.f32 %v6896, %v6896
    %v7151 = vmul.f32 %v6899, %v6899
    %v7152 = vmul.f32 %v6902, %v6902
    %v7153 = vmul.f32 %v6905, %v6905
    %v7154 = vmul.f32 %v6908, %v6908
    %v7155 = vmul.f32 %v6911, %v6911
    %v7156 = vmul.f32 %v6914, %v6914
    %v7157 = vmul.f32 %v6917, %v6917
    %v7158 = vmul.f32 %v6920, %v6920
    %v7159 = vmul.f32 %v6923, %v6923
    %v7160 = vmul.f32 %v6926, %v6926
    %v7161 = vmul.f32 %v6929, %v6929
    %v7162 = vmul.f32 %v6932, %v6932
    %v7163 = vmul.f32 %v6935, %v6935
    %v7164 = vmul.f32 %v6938, %v6938
    %v7165 = vmul.f32 %v6941, %v6941
    %v7166 = vmul.f32 %v6944, %v6944
    %v7167 = vmul.f32 %v6947, %v6947
    %v7168 = vmul.f32 %v6950, %v6950
    %v7169 = vmul.f32 %v6953, %v6953
    %v7170 = vmul.f32 %v6956, %v6956
    %v7171 = vmul.f32 %v6959, %v6959
    %v7172 = vmul.f32 %v6962, %v6962
    %v7173 = vmul.f32 %v6965, %v6965
    %v7174 = vmul.f32 %v6968, %v6968
    %v7175 = vmul.f32 %v6971, %v6971
    %v7176 = vmul.f32 %v6974, %v6974
    %v7177 = vmul.f32 %v6977, %v6977
    %v7178 = vmul.f32 %v6980, %v6980
    %v7179 = vmul.f32 %v6983, %v6983
    %v7180 = vmul.f32 %v6986, %v6986
    %v7181 = vmul.f32 %v6989, %v6989
    %v7182 = vmul.f32 %v6992, %v6992
    %v7183 = vmul.f32 %v6995, %v6995
    %v7184 = vmul.f32 %v6998, %v6998
    %v7185 = vmul.f32 %v7001, %v7001
    %v7186 = vmul.f32 %v7004, %v7004
    %v7187 = vmul.f32 %v7007, %v7007
    %v7188 = vmul.f32 %v7010, %v7010
    %v7189 = vmul.f32 %v7013, %v7013
    %v7190 = vmul.f32 %v7016, %v7016
    %v7191 = vmul.f32 %v7019, %v7019
    %v7192 = vmul.f32 %v7022, %v7022
    %v7193 = vmul.f32 %v7025, %v7025
    %v7194 = vmul.f32 %v7028, %v7028
    %v7195 = vmul.f32 %v7031, %v7031
    %v7196 = vmul.f32 %v7034, %v7034
    %v7197 = vmul.f32 %v7037, %v7037
    %v7198 = vmul.f32 %v7040, %v7040
    %v7199 = vmul.f32 %v7043, %v7043
    %v7200 = vmul.f32 %v7046, %v7046
    %v7201 = vmul.f32 %v7049, %v7049
    %v7202 = vmul.f32 %v7052, %v7052
    %v7203 = vmul.f32 %v7055, %v7055
    %v7204 = vmul.f32 %v7058, %v7058
    %v7205 = vmul.f32 %v7061, %v7061
    %v7206 = vmul.f32 %v7064, %v7064
    %v7207 = vmul.f32 %v7067, %v7067
    %v7208 = vmul.f32 %v7070, %v7070
    %v7209 = vmul.f32 %v7073, %v7073
    %v7210 = vadd.f32 %v7146, %v7147
    %v7211 = vadd.f32 %v7210, %v7148
    %v7212 = vadd.f32 %v7211, %v7149
    %v7213 = vadd.f32 %v7212, %v7150
    %v7214 = vadd.f32 %v7213, %v7151
    %v7215 = vadd.f32 %v7214, %v7152
    %v7216 = vadd.f32 %v7215, %v7153
    %v7217 = vadd.f32 %v7216, %v7154
    %v7218 = vadd.f32 %v7217, %v7155
    %v7219 = vadd.f32 %v7218, %v7156
    %v7220 = vadd.f32 %v7219, %v7157
    %v7221 = vadd.f32 %v7220, %v7158
    %v7222 = vadd.f32 %v7221, %v7159
    %v7223 = vadd.f32 %v7222, %v7160
    %v7224 = vadd.f32 %v7223, %v7161
    %v7225 = vadd.f32 %v7224, %v7162
    %v7226 = vadd.f32 %v7225, %v7163
    %v7227 = vadd.f32 %v7226, %v7164
    %v7228 = vadd.f32 %v7227, %v7165
    %v7229 = vadd.f32 %v7228, %v7166
    %v7230 = vadd.f32 %v7229, %v7167
    %v7231 = vadd.f32 %v7230, %v7168
    %v7232 = vadd.f32 %v7231, %v7169
    %v7233 = vadd.f32 %v7232, %v7170
    %v7234 = vadd.f32 %v7233, %v7171
    %v7235 = vadd.f32 %v7234, %v7172
    %v7236 = vadd.f32 %v7235, %v7173
    %v7237 = vadd.f32 %v7236, %v7174
    %v7238 = vadd.f32 %v7237, %v7175
    %v7239 = vadd.f32 %v7238, %v7176
    %v7240 = vadd.f32 %v7239, %v7177
    %v7241 = vadd.f32 %v7240, %v7178
    %v7242 = vadd.f32 %v7241, %v7179
    %v7243 = vadd.f32 %v7242, %v7180
    %v7244 = vadd.f32 %v7243, %v7181
    %v7245 = vadd.f32 %v7244, %v7182
    %v7246 = vadd.f32 %v7245, %v7183
    %v7247 = vadd.f32 %v7246, %v7184
    %v7248 = vadd.f32 %v7247, %v7185
    %v7249 = vadd.f32 %v7248, %v7186
    %v7250 = vadd.f32 %v7249, %v7187
    %v7251 = vadd.f32 %v7250, %v7188
    %v7252 = vadd.f32 %v7251, %v7189
    %v7253 = vadd.f32 %v7252, %v7190
    %v7254 = vadd.f32 %v7253, %v7191
    %v7255 = vadd.f32 %v7254, %v7192
    %v7256 = vadd.f32 %v7255, %v7193
    %v7257 = vadd.f32 %v7256, %v7194
    %v7258 = vadd.f32 %v7257, %v7195
    %v7259 = vadd.f32 %v7258, %v7196
    %v7260 = vadd.f32 %v7259, %v7197
    %v7261 = vadd.f32 %v7260, %v7198
    %v7262 = vadd.f32 %v7261, %v7199
    %v7263 = vadd.f32 %v7262, %v7200
    %v7264 = vadd.f32 %v7263, %v7201
    %v7265 = vadd.f32 %v7264, %v7202
    %v7266 = vadd.f32 %v7265, %v7203
    %v7267 = vadd.f32 %v7266, %v7204
    %v7268 = vadd.f32 %v7267, %v7205
    %v7269 = vadd.f32 %v7268, %v7206
    %v7270 = vadd.f32 %v7269, %v7207
    %v7271 = vadd.f32 %v7270, %v7208
    %v7272 = vadd.f32 %v7271, %v7209
    %v7273 = vrot.slane %v7272, 4
    %v7274 = vadd.f32 %v7272, %v7273
    %v7275 = vrot.slane %v7274, 2
    %v7276 = vadd.f32 %v7274, %v7275
    %v7277 = vrot.slane %v7276, 1
    %v7278 = vadd.f32 %v7276, %v7277
    %v7279 = vmul.f32 %v7145, 0.001953125
    %v7280 = vmul.f32 %v7278, 0.001953125
    %v7281 = vmul.f32 %v7279, %v7279
    %v7282 = vsub.f32 %v7280, %v7281
    %v7283 = vmax.f32 %v7282, 0.0
    %v7284 = vsub.f32 %v6884, %v7279
    %v7285 = vsub.f32 %v6887, %v7279
    %v7286 = vsub.f32 %v6890, %v7279
    %v7287 = vsub.f32 %v6893, %v7279
    %v7288 = vsub.f32 %v6896, %v7279
    %v7289 = vsub.f32 %v6899, %v7279
    %v7290 = vsub.f32 %v6902, %v7279
    %v7291 = vsub.f32 %v6905, %v7279
    %v7292 = vsub.f32 %v6908, %v7279
    %v7293 = vsub.f32 %v6911, %v7279
    %v7294 = vsub.f32 %v6914, %v7279
    %v7295 = vsub.f32 %v6917, %v7279
    %v7296 = vsub.f32 %v6920, %v7279
    %v7297 = vsub.f32 %v6923, %v7279
    %v7298 = vsub.f32 %v6926, %v7279
    %v7299 = vsub.f32 %v6929, %v7279
    %v7300 = vsub.f32 %v6932, %v7279
    %v7301 = vsub.f32 %v6935, %v7279
    %v7302 = vsub.f32 %v6938, %v7279
    %v7303 = vsub.f32 %v6941, %v7279
    %v7304 = vsub.f32 %v6944, %v7279
    %v7305 = vsub.f32 %v6947, %v7279
    %v7306 = vsub.f32 %v6950, %v7279
    %v7307 = vsub.f32 %v6953, %v7279
    %v7308 = vsub.f32 %v6956, %v7279
    %v7309 = vsub.f32 %v6959, %v7279
    %v7310 = vsub.f32 %v6962, %v7279
    %v7311 = vsub.f32 %v6965, %v7279
    %v7312 = vsub.f32 %v6968, %v7279
    %v7313 = vsub.f32 %v6971, %v7279
    %v7314 = vsub.f32 %v6974, %v7279
    %v7315 = vsub.f32 %v6977, %v7279
    %v7316 = vsub.f32 %v6980, %v7279
    %v7317 = vsub.f32 %v6983, %v7279
    %v7318 = vsub.f32 %v6986, %v7279
    %v7319 = vsub.f32 %v6989, %v7279
    %v7320 = vsub.f32 %v6992, %v7279
    %v7321 = vsub.f32 %v6995, %v7279
    %v7322 = vsub.f32 %v6998, %v7279
    %v7323 = vsub.f32 %v7001, %v7279
    %v7324 = vsub.f32 %v7004, %v7279
    %v7325 = vsub.f32 %v7007, %v7279
    %v7326 = vsub.f32 %v7010, %v7279
    %v7327 = vsub.f32 %v7013, %v7279
    %v7328 = vsub.f32 %v7016, %v7279
    %v7329 = vsub.f32 %v7019, %v7279
    %v7330 = vsub.f32 %v7022, %v7279
    %v7331 = vsub.f32 %v7025, %v7279
    %v7332 = vsub.f32 %v7028, %v7279
    %v7333 = vsub.f32 %v7031, %v7279
    %v7334 = vsub.f32 %v7034, %v7279
    %v7335 = vsub.f32 %v7037, %v7279
    %v7336 = vsub.f32 %v7040, %v7279
    %v7337 = vsub.f32 %v7043, %v7279
    %v7338 = vsub.f32 %v7046, %v7279
    %v7339 = vsub.f32 %v7049, %v7279
    %v7340 = vsub.f32 %v7052, %v7279
    %v7341 = vsub.f32 %v7055, %v7279
    %v7342 = vsub.f32 %v7058, %v7279
    %v7343 = vsub.f32 %v7061, %v7279
    %v7344 = vsub.f32 %v7064, %v7279
    %v7345 = vsub.f32 %v7067, %v7279
    %v7346 = vsub.f32 %v7070, %v7279
    %v7347 = vsub.f32 %v7073, %v7279
    %v7348 = vadd.f32 %v7283, 1e-05
    %v7349 = vrsqrt.pop %v7348
    %v7350 = vmul.f32 %v7349, %v7348
    %v7351 = vmul.f32 %v7350, %v7349
    %v7352 = vmul.f32 0.5, %v7351
    %v7353 = vsub.f32 1.5, %v7352
    %v7354 = vmul.f32 %v7349, %v7353
    %vm7355 = vweird.f32 %v7348
    %vm7356 = vweird.f32 %v7349
    %vm7357 = vmor %vm7355, %vm7356
    %v7358 = vsel %vm7357, %v7349, %v7354
    %v7359 = vmul.f32 %v7284, %v7358
    %v7360 = vmul.f32 %v7285, %v7358
    %v7361 = vmul.f32 %v7286, %v7358
    %v7362 = vmul.f32 %v7287, %v7358
    %v7363 = vmul.f32 %v7288, %v7358
    %v7364 = vmul.f32 %v7289, %v7358
    %v7365 = vmul.f32 %v7290, %v7358
    %v7366 = vmul.f32 %v7291, %v7358
    %v7367 = vmul.f32 %v7292, %v7358
    %v7368 = vmul.f32 %v7293, %v7358
    %v7369 = vmul.f32 %v7294, %v7358
    %v7370 = vmul.f32 %v7295, %v7358
    %v7371 = vmul.f32 %v7296, %v7358
    %v7372 = vmul.f32 %v7297, %v7358
    %v7373 = vmul.f32 %v7298, %v7358
    %v7374 = vmul.f32 %v7299, %v7358
    %v7375 = vmul.f32 %v7300, %v7358
    %v7376 = vmul.f32 %v7301, %v7358
    %v7377 = vmul.f32 %v7302, %v7358
    %v7378 = vmul.f32 %v7303, %v7358
    %v7379 = vmul.f32 %v7304, %v7358
    %v7380 = vmul.f32 %v7305, %v7358
    %v7381 = vmul.f32 %v7306, %v7358
    %v7382 = vmul.f32 %v7307, %v7358
    %v7383 = vmul.f32 %v7308, %v7358
    %v7384 = vmul.f32 %v7309, %v7358
    %v7385 = vmul.f32 %v7310, %v7358
    %v7386 = vmul.f32 %v7311, %v7358
    %v7387 = vmul.f32 %v7312, %v7358
    %v7388 = vmul.f32 %v7313, %v7358
    %v7389 = vmul.f32 %v7314, %v7358
    %v7390 = vmul.f32 %v7315, %v7358
    %v7391 = vmul.f32 %v7316, %v7358
    %v7392 = vmul.f32 %v7317, %v7358
    %v7393 = vmul.f32 %v7318, %v7358
    %v7394 = vmul.f32 %v7319, %v7358
    %v7395 = vmul.f32 %v7320, %v7358
    %v7396 = vmul.f32 %v7321, %v7358
    %v7397 = vmul.f32 %v7322, %v7358
    %v7398 = vmul.f32 %v7323, %v7358
    %v7399 = vmul.f32 %v7324, %v7358
    %v7400 = vmul.f32 %v7325, %v7358
    %v7401 = vmul.f32 %v7326, %v7358
    %v7402 = vmul.f32 %v7327, %v7358
    %v7403 = vmul.f32 %v7328, %v7358
    %v7404 = vmul.f32 %v7329, %v7358
    %v7405 = vmul.f32 %v7330, %v7358
    %v7406 = vmul.f32 %v7331, %v7358
    %v7407 = vmul.f32 %v7332, %v7358
    %v7408 = vmul.f32 %v7333, %v7358
    %v7409 = vmul.f32 %v7334, %v7358
    %v7410 = vmul.f32 %v7335, %v7358
    %v7411 = vmul.f32 %v7336, %v7358
    %v7412 = vmul.f32 %v7337, %v7358
    %v7413 = vmul.f32 %v7338, %v7358
    %v7414 = vmul.f32 %v7339, %v7358
    %v7415 = vmul.f32 %v7340, %v7358
    %v7416 = vmul.f32 %v7341, %v7358
    %v7417 = vmul.f32 %v7342, %v7358
    %v7418 = vmul.f32 %v7343, %v7358
    %v7419 = vmul.f32 %v7344, %v7358
    %v7420 = vmul.f32 %v7345, %v7358
    %v7421 = vmul.f32 %v7346, %v7358
    %v7422 = vmul.f32 %v7347, %v7358
    %v7424 = vperm.slane %v7075, 0
    %v7426 = vmul.f32 %v7359, %v7424
    %v7427 = vmul.f32 %v7360, %v7424
    %v7428 = vmul.f32 %v7361, %v7424
    %v7429 = vmul.f32 %v7362, %v7424
    %v7430 = vmul.f32 %v7363, %v7424
    %v7431 = vmul.f32 %v7364, %v7424
    %v7432 = vmul.f32 %v7365, %v7424
    %v7433 = vmul.f32 %v7366, %v7424
    %v7434 = vmul.f32 %v7367, %v7424
    %v7435 = vmul.f32 %v7368, %v7424
    %v7436 = vmul.f32 %v7369, %v7424
    %v7437 = vmul.f32 %v7370, %v7424
    %v7438 = vmul.f32 %v7371, %v7424
    %v7439 = vmul.f32 %v7372, %v7424
    %v7440 = vmul.f32 %v7373, %v7424
    %v7441 = vmul.f32 %v7374, %v7424
    %v7442 = vmul.f32 %v7375, %v7424
    %v7443 = vmul.f32 %v7376, %v7424
    %v7444 = vmul.f32 %v7377, %v7424
    %v7445 = vmul.f32 %v7378, %v7424
    %v7446 = vmul.f32 %v7379, %v7424
    %v7447 = vmul.f32 %v7380, %v7424
    %v7448 = vmul.f32 %v7381, %v7424
    %v7449 = vmul.f32 %v7382, %v7424
    %v7450 = vmul.f32 %v7383, %v7424
    %v7451 = vmul.f32 %v7384, %v7424
    %v7452 = vmul.f32 %v7385, %v7424
    %v7453 = vmul.f32 %v7386, %v7424
    %v7454 = vmul.f32 %v7387, %v7424
    %v7455 = vmul.f32 %v7388, %v7424
    %v7456 = vmul.f32 %v7389, %v7424
    %v7457 = vmul.f32 %v7390, %v7424
    %v7458 = vmul.f32 %v7391, %v7424
    %v7459 = vmul.f32 %v7392, %v7424
    %v7460 = vmul.f32 %v7393, %v7424
    %v7461 = vmul.f32 %v7394, %v7424
    %v7462 = vmul.f32 %v7395, %v7424
    %v7463 = vmul.f32 %v7396, %v7424
    %v7464 = vmul.f32 %v7397, %v7424
    %v7465 = vmul.f32 %v7398, %v7424
    %v7466 = vmul.f32 %v7399, %v7424
    %v7467 = vmul.f32 %v7400, %v7424
    %v7468 = vmul.f32 %v7401, %v7424
    %v7469 = vmul.f32 %v7402, %v7424
    %v7470 = vmul.f32 %v7403, %v7424
    %v7471 = vmul.f32 %v7404, %v7424
    %v7472 = vmul.f32 %v7405, %v7424
    %v7473 = vmul.f32 %v7406, %v7424
    %v7474 = vmul.f32 %v7407, %v7424
    %v7475 = vmul.f32 %v7408, %v7424
    %v7476 = vmul.f32 %v7409, %v7424
    %v7477 = vmul.f32 %v7410, %v7424
    %v7478 = vmul.f32 %v7411, %v7424
    %v7479 = vmul.f32 %v7412, %v7424
    %v7480 = vmul.f32 %v7413, %v7424
    %v7481 = vmul.f32 %v7414, %v7424
    %v7482 = vmul.f32 %v7415, %v7424
    %v7483 = vmul.f32 %v7416, %v7424
    %v7484 = vmul.f32 %v7417, %v7424
    %v7485 = vmul.f32 %v7418, %v7424
    %v7486 = vmul.f32 %v7419, %v7424
    %v7487 = vmul.f32 %v7420, %v7424
    %v7488 = vmul.f32 %v7421, %v7424
    %v7489 = vmul.f32 %v7422, %v7424
    %v7491 = vperm.slane %v7076, 0
    %v7493 = vadd.f32 %v7426, %v7491
    %v7494 = vadd.f32 %v7427, %v7491
    %v7495 = vadd.f32 %v7428, %v7491
    %v7496 = vadd.f32 %v7429, %v7491
    %v7497 = vadd.f32 %v7430, %v7491
    %v7498 = vadd.f32 %v7431, %v7491
    %v7499 = vadd.f32 %v7432, %v7491
    %v7500 = vadd.f32 %v7433, %v7491
    %v7501 = vadd.f32 %v7434, %v7491
    %v7502 = vadd.f32 %v7435, %v7491
    %v7503 = vadd.f32 %v7436, %v7491
    %v7504 = vadd.f32 %v7437, %v7491
    %v7505 = vadd.f32 %v7438, %v7491
    %v7506 = vadd.f32 %v7439, %v7491
    %v7507 = vadd.f32 %v7440, %v7491
    %v7508 = vadd.f32 %v7441, %v7491
    %v7509 = vadd.f32 %v7442, %v7491
    %v7510 = vadd.f32 %v7443, %v7491
    %v7511 = vadd.f32 %v7444, %v7491
    %v7512 = vadd.f32 %v7445, %v7491
    %v7513 = vadd.f32 %v7446, %v7491
    %v7514 = vadd.f32 %v7447, %v7491
    %v7515 = vadd.f32 %v7448, %v7491
    %v7516 = vadd.f32 %v7449, %v7491
    %v7517 = vadd.f32 %v7450, %v7491
    %v7518 = vadd.f32 %v7451, %v7491
    %v7519 = vadd.f32 %v7452, %v7491
    %v7520 = vadd.f32 %v7453, %v7491
    %v7521 = vadd.f32 %v7454, %v7491
    %v7522 = vadd.f32 %v7455, %v7491
    %v7523 = vadd.f32 %v7456, %v7491
    %v7524 = vadd.f32 %v7457, %v7491
    %v7525 = vadd.f32 %v7458, %v7491
    %v7526 = vadd.f32 %v7459, %v7491
    %v7527 = vadd.f32 %v7460, %v7491
    %v7528 = vadd.f32 %v7461, %v7491
    %v7529 = vadd.f32 %v7462, %v7491
    %v7530 = vadd.f32 %v7463, %v7491
    %v7531 = vadd.f32 %v7464, %v7491
    %v7532 = vadd.f32 %v7465, %v7491
    %v7533 = vadd.f32 %v7466, %v7491
    %v7534 = vadd.f32 %v7467, %v7491
    %v7535 = vadd.f32 %v7468, %v7491
    %v7536 = vadd.f32 %v7469, %v7491
    %v7537 = vadd.f32 %v7470, %v7491
    %v7538 = vadd.f32 %v7471, %v7491
    %v7539 = vadd.f32 %v7472, %v7491
    %v7540 = vadd.f32 %v7473, %v7491
    %v7541 = vadd.f32 %v7474, %v7491
    %v7542 = vadd.f32 %v7475, %v7491
    %v7543 = vadd.f32 %v7476, %v7491
    %v7544 = vadd.f32 %v7477, %v7491
    %v7545 = vadd.f32 %v7478, %v7491
    %v7546 = vadd.f32 %v7479, %v7491
    %v7547 = vadd.f32 %v7480, %v7491
    %v7548 = vadd.f32 %v7481, %v7491
    %v7549 = vadd.f32 %v7482, %v7491
    %v7550 = vadd.f32 %v7483, %v7491
    %v7551 = vadd.f32 %v7484, %v7491
    %v7552 = vadd.f32 %v7485, %v7491
    %v7553 = vadd.f32 %v7486, %v7491
    %v7554 = vadd.f32 %v7487, %v7491
    %v7555 = vadd.f32 %v7488, %v7491
    %v7556 = vadd.f32 %v7489, %v7491
    %v7557 = vadd.f32 %v6786, %v7493
    %v7558 = vadd.f32 %v6787, %v7494
    %v7559 = vadd.f32 %v6788, %v7495
    %v7560 = vadd.f32 %v6789, %v7496
    %v7561 = vadd.f32 %v6790, %v7497
    %v7562 = vadd.f32 %v6791, %v7498
    %v7563 = vadd.f32 %v6792, %v7499
    %v7564 = vadd.f32 %v6793, %v7500
    %v7565 = vadd.f32 %v6794, %v7501
    %v7566 = vadd.f32 %v6795, %v7502
    %v7567 = vadd.f32 %v6796, %v7503
    %v7568 = vadd.f32 %v6797, %v7504
    %v7569 = vadd.f32 %v6798, %v7505
    %v7570 = vadd.f32 %v6799, %v7506
    %v7571 = vadd.f32 %v6800, %v7507
    %v7572 = vadd.f32 %v6801, %v7508
    %v7573 = vadd.f32 %v6802, %v7509
    %v7574 = vadd.f32 %v6803, %v7510
    %v7575 = vadd.f32 %v6804, %v7511
    %v7576 = vadd.f32 %v6805, %v7512
    %v7577 = vadd.f32 %v6806, %v7513
    %v7578 = vadd.f32 %v6807, %v7514
    %v7579 = vadd.f32 %v6808, %v7515
    %v7580 = vadd.f32 %v6809, %v7516
    %v7581 = vadd.f32 %v6810, %v7517
    %v7582 = vadd.f32 %v6811, %v7518
    %v7583 = vadd.f32 %v6812, %v7519
    %v7584 = vadd.f32 %v6813, %v7520
    %v7585 = vadd.f32 %v6814, %v7521
    %v7586 = vadd.f32 %v6815, %v7522
    %v7587 = vadd.f32 %v6816, %v7523
    %v7588 = vadd.f32 %v6817, %v7524
    %v7589 = vadd.f32 %v6818, %v7525
    %v7590 = vadd.f32 %v6819, %v7526
    %v7591 = vadd.f32 %v6820, %v7527
    %v7592 = vadd.f32 %v6821, %v7528
    %v7593 = vadd.f32 %v6822, %v7529
    %v7594 = vadd.f32 %v6823, %v7530
    %v7595 = vadd.f32 %v6824, %v7531
    %v7596 = vadd.f32 %v6825, %v7532
    %v7597 = vadd.f32 %v6826, %v7533
    %v7598 = vadd.f32 %v6827, %v7534
    %v7599 = vadd.f32 %v6828, %v7535
    %v7600 = vadd.f32 %v6829, %v7536
    %v7601 = vadd.f32 %v6830, %v7537
    %v7602 = vadd.f32 %v6831, %v7538
    %v7603 = vadd.f32 %v6832, %v7539
    %v7604 = vadd.f32 %v6833, %v7540
    %v7605 = vadd.f32 %v6834, %v7541
    %v7606 = vadd.f32 %v6835, %v7542
    %v7607 = vadd.f32 %v6836, %v7543
    %v7608 = vadd.f32 %v6837, %v7544
    %v7609 = vadd.f32 %v6838, %v7545
    %v7610 = vadd.f32 %v6839, %v7546
    %v7611 = vadd.f32 %v6840, %v7547
    %v7612 = vadd.f32 %v6841, %v7548
    %v7613 = vadd.f32 %v6842, %v7549
    %v7614 = vadd.f32 %v6843, %v7550
    %v7615 = vadd.f32 %v6844, %v7551
    %v7616 = vadd.f32 %v6845, %v7552
    %v7617 = vadd.f32 %v6846, %v7553
    %v7618 = vadd.f32 %v6847, %v7554
    %v7619 = vadd.f32 %v6848, %v7555
    %v7620 = vadd.f32 %v6849, %v7556
    %v7621 = vmax.f32 %v7557, 0.0
    %v7622 = vmax.f32 %v7558, 0.0
    %v7623 = vmax.f32 %v7559, 0.0
    %v7624 = vmax.f32 %v7560, 0.0
    %v7625 = vmax.f32 %v7561, 0.0
    %v7626 = vmax.f32 %v7562, 0.0
    %v7627 = vmax.f32 %v7563, 0.0
    %v7628 = vmax.f32 %v7564, 0.0
    %v7629 = vmax.f32 %v7565, 0.0
    %v7630 = vmax.f32 %v7566, 0.0
    %v7631 = vmax.f32 %v7567, 0.0
    %v7632 = vmax.f32 %v7568, 0.0
    %v7633 = vmax.f32 %v7569, 0.0
    %v7634 = vmax.f32 %v7570, 0.0
    %v7635 = vmax.f32 %v7571, 0.0
    %v7636 = vmax.f32 %v7572, 0.0
    %v7637 = vmax.f32 %v7573, 0.0
    %v7638 = vmax.f32 %v7574, 0.0
    %v7639 = vmax.f32 %v7575, 0.0
    %v7640 = vmax.f32 %v7576, 0.0
    %v7641 = vmax.f32 %v7577, 0.0
    %v7642 = vmax.f32 %v7578, 0.0
    %v7643 = vmax.f32 %v7579, 0.0
    %v7644 = vmax.f32 %v7580, 0.0
    %v7645 = vmax.f32 %v7581, 0.0
    %v7646 = vmax.f32 %v7582, 0.0
    %v7647 = vmax.f32 %v7583, 0.0
    %v7648 = vmax.f32 %v7584, 0.0
    %v7649 = vmax.f32 %v7585, 0.0
    %v7650 = vmax.f32 %v7586, 0.0
    %v7651 = vmax.f32 %v7587, 0.0
    %v7652 = vmax.f32 %v7588, 0.0
    %v7653 = vmax.f32 %v7589, 0.0
    %v7654 = vmax.f32 %v7590, 0.0
    %v7655 = vmax.f32 %v7591, 0.0
    %v7656 = vmax.f32 %v7592, 0.0
    %v7657 = vmax.f32 %v7593, 0.0
    %v7658 = vmax.f32 %v7594, 0.0
    %v7659 = vmax.f32 %v7595, 0.0
    %v7660 = vmax.f32 %v7596, 0.0
    %v7661 = vmax.f32 %v7597, 0.0
    %v7662 = vmax.f32 %v7598, 0.0
    %v7663 = vmax.f32 %v7599, 0.0
    %v7664 = vmax.f32 %v7600, 0.0
    %v7665 = vmax.f32 %v7601, 0.0
    %v7666 = vmax.f32 %v7602, 0.0
    %v7667 = vmax.f32 %v7603, 0.0
    %v7668 = vmax.f32 %v7604, 0.0
    %v7669 = vmax.f32 %v7605, 0.0
    %v7670 = vmax.f32 %v7606, 0.0
    %v7671 = vmax.f32 %v7607, 0.0
    %v7672 = vmax.f32 %v7608, 0.0
    %v7673 = vmax.f32 %v7609, 0.0
    %v7674 = vmax.f32 %v7610, 0.0
    %v7675 = vmax.f32 %v7611, 0.0
    %v7676 = vmax.f32 %v7612, 0.0
    %v7677 = vmax.f32 %v7613, 0.0
    %v7678 = vmax.f32 %v7614, 0.0
    %v7679 = vmax.f32 %v7615, 0.0
    %v7680 = vmax.f32 %v7616, 0.0
    %v7681 = vmax.f32 %v7617, 0.0
    %v7682 = vmax.f32 %v7618, 0.0
    %v7683 = vmax.f32 %v7619, 0.0
    %v7684 = vmax.f32 %v7620, 0.0
    %7685 = vst [vmem:[#allocation13] sm:$0xff] %v7621
    %7686 = vst [vmem:[#allocation13 + $0x8] sm:$0xff] %v7622
    %7687 = vst [vmem:[#allocation13 + $0x10] sm:$0xff] %v7623
    %7688 = vst [vmem:[#allocation13 + $0x18] sm:$0xff] %v7624
    %7689 = vst [vmem:[#allocation13 + $0x20] sm:$0xff] %v7625
    %7690 = vst [vmem:[#allocation13 + $0x28] sm:$0xff] %v7626
    %7691 = vst [vmem:[#allocation13 + $0x30] sm:$0xff] %v7627
    %7692 = vst [vmem:[#allocation13 + $0x38] sm:$0xff] %v7628
    %7693 = vst [vmem:[#allocation13 + $0x40] sm:$0xff] %v7629
    %7694 = vst [vmem:[#allocation13 + $0x48] sm:$0xff] %v7630
    %7695 = vst [vmem:[#allocation13 + $0x50] sm:$0xff] %v7631
    %7696 = vst [vmem:[#allocation13 + $0x58] sm:$0xff] %v7632
    %7697 = vst [vmem:[#allocation13 + $0x60] sm:$0xff] %v7633
    %7698 = vst [vmem:[#allocation13 + $0x68] sm:$0xff] %v7634
    %7699 = vst [vmem:[#allocation13 + $0x70] sm:$0xff] %v7635
    %7700 = vst [vmem:[#allocation13 + $0x78] sm:$0xff] %v7636
    %7701 = vst [vmem:[#allocation13 + $0x80] sm:$0xff] %v7637
    %7702 = vst [vmem:[#allocation13 + $0x88] sm:$0xff] %v7638
    %7703 = vst [vmem:[#allocation13 + $0x90] sm:$0xff] %v7639
    %7704 = vst [vmem:[#allocation13 + $0x98] sm:$0xff] %v7640
    %7705 = vst [vmem:[#allocation13 + $0xa0] sm:$0xff] %v7641
    %7706 = vst [vmem:[#allocation13 + $0xa8] sm:$0xff] %v7642
    %7707 = vst [vmem:[#allocation13 + $0xb0] sm:$0xff] %v7643
    %7708 = vst [vmem:[#allocation13 + $0xb8] sm:$0xff] %v7644
    %7709 = vst [vmem:[#allocation13 + $0xc0] sm:$0xff] %v7645
    %7710 = vst [vmem:[#allocation13 + $0xc8] sm:$0xff] %v7646
    %7711 = vst [vmem:[#allocation13 + $0xd0] sm:$0xff] %v7647
    %7712 = vst [vmem:[#allocation13 + $0xd8] sm:$0xff] %v7648
    %7713 = vst [vmem:[#allocation13 + $0xe0] sm:$0xff] %v7649
    %7714 = vst [vmem:[#allocation13 + $0xe8] sm:$0xff] %v7650
    %7715 = vst [vmem:[#allocation13 + $0xf0] sm:$0xff] %v7651
    %7716 = vst [vmem:[#allocation13 + $0xf8] sm:$0xff] %v7652
    %7717 = vst [vmem:[#allocation13 + $0x100] sm:$0xff] %v7653
    %7718 = vst [vmem:[#allocation13 + $0x108] sm:$0xff] %v7654
    %7719 = vst [vmem:[#allocation13 + $0x110] sm:$0xff] %v7655
    %7720 = vst [vmem:[#allocation13 + $0x118] sm:$0xff] %v7656
    %7721 = vst [vmem:[#allocation13 + $0x120] sm:$0xff] %v7657
    %7722 = vst [vmem:[#allocation13 + $0x128] sm:$0xff] %v7658
    %7723 = vst [vmem:[#allocation13 + $0x130] sm:$0xff] %v7659
    %7724 = vst [vmem:[#allocation13 + $0x138] sm:$0xff] %v7660
    %7725 = vst [vmem:[#allocation13 + $0x140] sm:$0xff] %v7661
    %7726 = vst [vmem:[#allocation13 + $0x148] sm:$0xff] %v7662
    %7727 = vst [vmem:[#allocation13 + $0x150] sm:$0xff] %v7663
    %7728 = vst [vmem:[#allocation13 + $0x158] sm:$0xff] %v7664
    %7729 = vst [vmem:[#allocation13 + $0x160] sm:$0xff] %v7665
    %7730 = vst [vmem:[#allocation13 + $0x168] sm:$0xff] %v7666
    %7731 = vst [vmem:[#allocation13 + $0x170] sm:$0xff] %v7667
    %7732 = vst [vmem:[#allocation13 + $0x178] sm:$0xff] %v7668
    %7733 = vst [vmem:[#allocation13 + $0x180] sm:$0xff] %v7669
    %7734 = vst [vmem:[#allocation13 + $0x188] sm:$0xff] %v7670
    %7735 = vst [vmem:[#allocation13 + $0x190] sm:$0xff] %v7671
    %7736 = vst [vmem:[#allocation13 + $0x198] sm:$0xff] %v7672
    %7737 = vst [vmem:[#allocation13 + $0x1a0] sm:$0xff] %v7673
    %7738 = vst [vmem:[#allocation13 + $0x1a8] sm:$0xff] %v7674
    %7739 = vst [vmem:[#allocation13 + $0x1b0] sm:$0xff] %v7675
    %7740 = vst [vmem:[#allocation13 + $0x1b8] sm:$0xff] %v7676
    %7741 = vst [vmem:[#allocation13 + $0x1c0] sm:$0xff] %v7677
    %7742 = vst [vmem:[#allocation13 + $0x1c8] sm:$0xff] %v7678
    %7743 = vst [vmem:[#allocation13 + $0x1d0] sm:$0xff] %v7679
    %7744 = vst [vmem:[#allocation13 + $0x1d8] sm:$0xff] %v7680
    %7745 = vst [vmem:[#allocation13 + $0x1e0] sm:$0xff] %v7681
    %7746 = vst [vmem:[#allocation13 + $0x1e8] sm:$0xff] %v7682
    %7747 = vst [vmem:[#allocation13 + $0x1f0] sm:$0xff] %v7683
    %7748 = vst [vmem:[#allocation13 + $0x1f8] sm:$0xff] %v7684
    // Predicated region
    $region74: #{tpu_custom_call.1} parent=1 // pred_check
      _
    $region75: #{tpu_custom_call.1} parent=1 // pred_check_branch
      %7750 = sbr.rel (0) target = $region77
    $region76: #{tpu_custom_call.1} parent=1 // pred_region
      %7752 = vsyncadd [#allocation6], 0
      %s7753 = sshll.u32 [#allocation13], 4
      %s7754 = int_to_ptr.vmem [resolvable:$true] %s7753
      %s7755 = sshll.u32 %s13, 4
      %s7756 = int_to_ptr.hbm [resolvable:$true] %s7755
      %7761 = dma.vmem_to_hbm [thread:$0]  %s7754, 8192, %s7756, [#allocation6], 128, 128, 8
    $region77: #{tpu_custom_call.1} parent=1 // pred_fallthru
      _
    // Predicated region
    $region78: #{tpu_custom_call.1} parent=1 // pred_check
      _
    $region79: #{tpu_custom_call.1} parent=1 // pred_check_branch
      %7763 = sbr.rel (0) target = $region81
    $region80: #{tpu_custom_call.1} parent=1 // pred_region
      %7765 = dma.done [#allocation6], 8192
    $region81: #{tpu_custom_call.1} parent=1 // pred_fallthru
      _
    %7766 = vsyncpa [#allocation5], 1
    %7767 = vsyncpa [#allocation8], 1
    %7768 = vsyncpa [#allocation11], 1
    %7769 = vsyncpa [#allocation6], 1

</llo_original>
